<compile_context>
chip_gen: v5e
topology: v5e:2x2
jax: 0.10.0
libtpu: 0.0.40
codegen_flags: <defaults>
</compile_context>

<pallas_src>
import jax
import jax.numpy as jnp
from jax import lax
from jax.experimental import pallas as pl
from jax.experimental.pallas import tpu as pltpu

PAST_UNITS = 8        # sequence length ("past_units")
N_FEATURES = 16       # == hidden_units[0] == hidden_units[1]
N_LAYERS = 3
HIDDEN = (16, 16, 8)  # hidden_units
BATCH = 8


def _lstm_cell(x_t, h, c, w_ih, w_hh, b):
    """PyTorch-convention LSTM cell (gate order i, f, g, o) — reference only."""
    H = h.shape[-1]
    gates = (jnp.dot(x_t, w_ih, preferred_element_type=jnp.float32)
             + jnp.dot(h, w_hh, preferred_element_type=jnp.float32)
             + b)
    i = jax.nn.sigmoid(gates[:, 0 * H:1 * H])
    f = jax.nn.sigmoid(gates[:, 1 * H:2 * H])
    g = jnp.tanh(gates[:, 2 * H:3 * H])
    o = jax.nn.sigmoid(gates[:, 3 * H:4 * H])
    c_new = f * c + i * g
    h_new = o * jnp.tanh(c_new)
    return h_new, c_new


def _forecast_kernel(x_ref,
                     w1_ih_ref, w1_hh_ref, b1_ref,
                     w2_ih_ref, w2_hh_ref, b2_ref,
                     w3_ref, b3_ref,
                     w_head_ref, b_head_ref,
                     out_ref):
    B, T, F = x_ref.shape
    H = HIDDEN[0]
    G = 4 * H

    def cell(gates_in, h, c, w_hh):
        # gates_in already holds x_t @ W_ih + b; only h @ W_hh is on the
        # serial recurrence chain.
        gates = gates_in + jnp.dot(h, w_hh, preferred_element_type=jnp.float32)
        sg = jax.nn.sigmoid(gates)          # whole-tile EUP op
        tg = jnp.tanh(gates)                # whole-tile EUP op
        i = sg[:, 0 * H:1 * H]
        f = sg[:, 1 * H:2 * H]
        g = tg[:, 2 * H:3 * H]
        o = sg[:, 3 * H:4 * H]
        c_new = f * c + i * g
        h_new = o * jnp.tanh(c_new)
        return h_new, c_new

    x_bt = x_ref[...]                                    # (B, T, F)
    x_steps = [x_bt[:, t, :] for t in range(T)]          # T x (B, F)

    zeros = jnp.zeros((B, H), jnp.float32)

    # ---------------- lstm1: N_LAYERS stacked layers, zero init ---------------
    seq = x_steps
    h_fin, c_fin = [], []
    for layer in range(N_LAYERS):
        w_ih = w1_ih_ref[layer]                          # (F, 4H)
        w_hh = w1_hh_ref[layer]                          # (H, 4H)
        if layer == 0:
            # Hoisted input projection: one (T*B, F) matmul instead of T tiny ones.
            b_all = jnp.broadcast_to(b1_ref[layer], (B * T, G))
            g_all = jnp.dot(x_bt.reshape(B * T, F), w_ih,
                            preferred_element_type=jnp.float32) + b_all
            g_all = g_all.reshape(B, T, G)
            gates_in = [g_all[:, t, :] for t in range(T)]
        else:
            b_b = jnp.broadcast_to(b1_ref[layer], (B, G))
            gates_in = [jnp.dot(seq[t], w_ih,
                                preferred_element_type=jnp.float32) + b_b
                        for t in range(T)]
        h, c = zeros, zeros
        out_seq = []
        for t in range(T):                               # fully unrolled (T=8)
            h, c = cell(gates_in[t], h, c, w_hh)
            out_seq.append(h)
        seq = out_seq
        h_fin.append(h)
        c_fin.append(c)

    # -------- lstm2: per-layer initial state is lstm1's final (h_n, c_n) ------
    for layer in range(N_LAYERS):
        w_ih = w2_ih_ref[layer]
        w_hh = w2_hh_ref[layer]
        b_b = jnp.broadcast_to(b2_ref[layer], (B, G))
        gates_in = [jnp.dot(seq[t], w_ih,
                            preferred_element_type=jnp.float32) + b_b
                    for t in range(T)]
        h, c = h_fin[layer], c_fin[layer]
        last = layer == N_LAYERS - 1
        out_seq = []
        for t in range(T):
            h, c = cell(gates_in[t], h, c, w_hh)
            if not last:
                out_seq.append(h)                        # last layer: only h@T-1 needed
        seq = out_seq

    # Residual add; only the last timestep is consumed downstream
    # (x[:, -1, :]), and the final layer's last h IS its t = T-1 output.
    x_last = h + x_steps[T - 1]                          # (B, H)

    # fc3 + SiLU ; drop1 is identity at inference time.
    z = jnp.dot(x_last, w3_ref[...],
                preferred_element_type=jnp.float32) + b3_ref[...]
    z = z * jax.nn.sigmoid(z)                            # SiLU

    # Fused loc/scale head: one matmul, one (B, 2) store.
    out_ref[...] = (jnp.dot(z, w_head_ref[...],
                            preferred_element_type=jnp.float32)
                    + b_head_ref[...])


@jax.jit
def forecast_pnn_forward(x, params):
    """x: (B, past_units, n_features), batch-first (PyTorch convention).

    Returns (loc, scale), each (B, 1): the parameters of
    Independent(Normal(loc, scale), reinterpreted_batch_ndims=1).
    """
    B, T, F = x.shape
    H1, H2, H3 = HIDDEN
    assert F == H1 == H2, (
        "residual add / lstm2 init-state require "
        "n_features == hidden_units[0] == hidden_units[1]")

    vmem = pl.BlockSpec(memory_space=pltpu.MemorySpace.VMEM)
    out = pl.pallas_call(
        _forecast_kernel,
        out_shape=jax.ShapeDtypeStruct((B, 2), jnp.float32),
        in_specs=[vmem] * 11,
        out_specs=vmem,
        # For large batches, shard with grid=(B // TB,) over batch tiles and
        # dimension_semantics=("parallel",) to use v7x's second TensorCore;
        # pointless at B=8, so left ungridded.
    )(x.astype(jnp.float32),
      params["w1_ih"], params["w1_hh"], params["b1"],
      params["w2_ih"], params["w2_hh"], params["b2"],
      params["w3"], params["b3"],
      params["w_head"], params["b_head"])
    # TODO(synk): the PyTorch module wraps these in
    # Independent(Normal(df=..., loc, scale), 1); `df` is not a valid Normal
    # kwarg, `scale` has no positivity transform, and distribution objects
    # have no kernel equivalent, so the raw (loc, scale) are returned.
    return out[:, 0:1], out[:, 1:2]


def reference_forward(x, params):
    """Pure-JAX reference with identical math (for correctness checking)."""
    H1, _, _ = HIDDEN
    B = x.shape[0]
    seq0 = jnp.transpose(x, (1, 0, 2)).astype(jnp.float32)         # (T, B, F)

    def run_lstm(seq, w_ih_l, w_hh_l, b_l, h0_l, c0_l):
        hs, cs = [], []
        for l in range(N_LAYERS):
            def step(carry, x_t, w_ih=w_ih_l[l], w_hh=w_hh_l[l], b=b_l[l]):
                h, c = carry
                h, c = _lstm_cell(x_t, h, c, w_ih, w_hh, b)
                return (h, c), h
            (h, c), seq = lax.scan(step, (h0_l[l], c0_l[l]), seq)
            hs.append(h)
            cs.append(c)
        return seq, jnp.stack(hs), jnp.stack(cs)

    zeros = jnp.zeros((N_LAYERS, B, H1), jnp.float32)
    seq1, h_n, c_n = run_lstm(seq0, params["w1_ih"], params["w1_hh"],
                              params["b1"], zeros, zeros)
    seq2, _, _ = run_lstm(seq1, params["w2_ih"], params["w2_hh"],
                          params["b2"], h_n, c_n)
    x_last = (seq2 + seq0)[-1]
    z = x_last @ params["w3"] + params["b3"]
    z = z * jax.nn.sigmoid(z)
    loc = z @ params["w_loc"] + params["b_loc"]
    scale = z @ params["w_scale"] + params["b_scale"]
    return loc, scale


if __name__ == "__main__":
    key = jax.random.PRNGKey(0)
    keys = jax.random.split(key, 13)
    H1, H2, H3 = HIDDEN

    def uinit(k, shape, fan):
        bound = 1.0 / (fan ** 0.5)
        return jax.random.uniform(k, shape, jnp.float32, -bound, bound)

    # Deterministic synthetic parameters (PyTorch-style uniform init ranges),
    # weights pre-transposed to (in, out); LSTM biases are b_ih + b_hh folded.
    params = {
        "w1_ih": uinit(keys[0], (N_LAYERS, N_FEATURES, 4 * H1), H1),
        "w1_hh": uinit(keys[1], (N_LAYERS, H1, 4 * H1), H1),
        "b1":    uinit(keys[2], (N_LAYERS, 1, 4 * H1), H1),
        "w2_ih": uinit(keys[3], (N_LAYERS, H1, 4 * H2), H2),
        "w2_hh": uinit(keys[4], (N_LAYERS, H2, 4 * H2), H2),
        "b2":    uinit(keys[5], (N_LAYERS, 1, 4 * H2), H2),
        "w3":    uinit(keys[6], (H2, H3), H2),
        "b3":    uinit(keys[7], (1, H3), H2),
        "w_loc":   uinit(keys[8], (H3, 1), H3),
        "b_loc":   uinit(keys[9], (1, 1), H3),
        "w_scale": uinit(keys[10], (H3, 1), H3),
        "b_scale": uinit(keys[11], (1, 1), H3),
    }
    # Fused loc/scale head (one matmul + one store inside the kernel).
    params["w_head"] = jnp.concatenate([params["w_loc"], params["w_scale"]], axis=1)
    params["b_head"] = jnp.concatenate([params["b_loc"], params["b_scale"]], axis=1)

    x = jax.random.normal(keys[12], (BATCH, PAST_UNITS, N_FEATURES), jnp.float32)

    loc, scale = forecast_pnn_forward(x, params)
    jax.block_until_ready((loc, scale))

    ref_loc, ref_scale = reference_forward(x, params)
    assert jnp.allclose(loc, ref_loc, atol=1e-3, rtol=1e-3)
    assert jnp.allclose(scale, ref_scale, atol=1e-3, rtol=1e-3)
    print("KERNEL_OK")
</pallas_src>

<mosaic_0001>
module attributes {stable_mosaic.version = 11 : i64} {
  func.func @_forecast_kernel(%arg0: memref<8x8x16xf32, #tpu.memory_space<vmem>>, %arg1: memref<3x16x64xf32, #tpu.memory_space<vmem>>, %arg2: memref<3x16x64xf32, #tpu.memory_space<vmem>>, %arg3: memref<3x1x64xf32, #tpu.memory_space<vmem>>, %arg4: memref<3x16x64xf32, #tpu.memory_space<vmem>>, %arg5: memref<3x16x64xf32, #tpu.memory_space<vmem>>, %arg6: memref<3x1x64xf32, #tpu.memory_space<vmem>>, %arg7: memref<16x8xf32, #tpu.memory_space<vmem>>, %arg8: memref<1x8xf32, #tpu.memory_space<vmem>>, %arg9: memref<8x2xf32, #tpu.memory_space<vmem>>, %arg10: memref<1x2xf32, #tpu.memory_space<vmem>>, %arg11: memref<8x2xf32, #tpu.memory_space<vmem>>) attributes {dimension_semantics = [], scalar_prefetch = 0 : i64, scratch_operands = 0 : i64, tpu.core_type = #tpu.core_type<tc>} {
    %c0 = arith.constant 0 : index
    %c0_0 = arith.constant 0 : index
    %c0_1 = arith.constant 0 : index
    %0 = vector.load %arg0[%c0, %c0_0, %c0_1] : memref<8x8x16xf32, #tpu.memory_space<vmem>>, vector<8x8x16xf32>
    %1 = vector.extract_strided_slice %0 {offsets = [0, 7, 0], sizes = [8, 1, 16], strides = [1, 1, 1]} : vector<8x8x16xf32> to vector<8x1x16xf32>
    %2 = vector.shape_cast %1 : vector<8x1x16xf32> to vector<8x16xf32>
    %cst = arith.constant 0.000000e+00 : f32
    %3 = vector.broadcast %cst : f32 to vector<8x16xf32>
    %c0_2 = arith.constant 0 : index
    %c0_3 = arith.constant 0 : index
    %c0_4 = arith.constant 0 : index
    %4 = vector.load %arg1[%c0_2, %c0_3, %c0_4] : memref<3x16x64xf32, #tpu.memory_space<vmem>>, vector<1x16x64xf32>
    %5 = vector.shape_cast %4 : vector<1x16x64xf32> to vector<16x64xf32>
    %c0_5 = arith.constant 0 : index
    %c0_6 = arith.constant 0 : index
    %c0_7 = arith.constant 0 : index
    %6 = vector.load %arg2[%c0_5, %c0_6, %c0_7] : memref<3x16x64xf32, #tpu.memory_space<vmem>>, vector<1x16x64xf32>
    %7 = vector.shape_cast %6 : vector<1x16x64xf32> to vector<16x64xf32>
    %c0_8 = arith.constant 0 : index
    %c0_9 = arith.constant 0 : index
    %c0_10 = arith.constant 0 : index
    %8 = vector.load %arg3[%c0_8, %c0_9, %c0_10] : memref<3x1x64xf32, #tpu.memory_space<vmem>>, vector<1x1x64xf32>
    %9 = vector.shape_cast %8 : vector<1x1x64xf32> to vector<1x64xf32>
    %10 = vector.shape_cast %9 : vector<1x64xf32> to vector<1x64xf32>
    %11 = vector.broadcast %10 : vector<1x64xf32> to vector<64x64xf32>
    %12 = vector.shape_cast %0 : vector<8x8x16xf32> to vector<64x16xf32>
    %cst_11 = arith.constant dense<0.000000e+00> : vector<64x64xf32>
    %13 = tpu.matmul %12, %5, %cst_11 {dimension_numbers = #tpu.dot_dimension_numbers<[1], [0], [0], [1], [0, 0, 1, 1], [], []>} : vector<64x16xf32>, vector<16x64xf32>, vector<64x64xf32> -> vector<64x64xf32>
    %14 = arith.addf %13, %11 : vector<64x64xf32>
    %15 = vector.shape_cast %14 : vector<64x64xf32> to vector<8x8x64xf32>
    %16 = vector.extract_strided_slice %15 {offsets = [0, 0, 0], sizes = [8, 1, 64], strides = [1, 1, 1]} : vector<8x8x64xf32> to vector<8x1x64xf32>
    %17 = vector.shape_cast %16 : vector<8x1x64xf32> to vector<8x64xf32>
    %18 = vector.extract_strided_slice %15 {offsets = [0, 1, 0], sizes = [8, 1, 64], strides = [1, 1, 1]} : vector<8x8x64xf32> to vector<8x1x64xf32>
    %19 = vector.shape_cast %18 : vector<8x1x64xf32> to vector<8x64xf32>
    %20 = vector.extract_strided_slice %15 {offsets = [0, 2, 0], sizes = [8, 1, 64], strides = [1, 1, 1]} : vector<8x8x64xf32> to vector<8x1x64xf32>
    %21 = vector.shape_cast %20 : vector<8x1x64xf32> to vector<8x64xf32>
    %22 = vector.extract_strided_slice %15 {offsets = [0, 3, 0], sizes = [8, 1, 64], strides = [1, 1, 1]} : vector<8x8x64xf32> to vector<8x1x64xf32>
    %23 = vector.shape_cast %22 : vector<8x1x64xf32> to vector<8x64xf32>
    %24 = vector.extract_strided_slice %15 {offsets = [0, 4, 0], sizes = [8, 1, 64], strides = [1, 1, 1]} : vector<8x8x64xf32> to vector<8x1x64xf32>
    %25 = vector.shape_cast %24 : vector<8x1x64xf32> to vector<8x64xf32>
    %26 = vector.extract_strided_slice %15 {offsets = [0, 5, 0], sizes = [8, 1, 64], strides = [1, 1, 1]} : vector<8x8x64xf32> to vector<8x1x64xf32>
    %27 = vector.shape_cast %26 : vector<8x1x64xf32> to vector<8x64xf32>
    %28 = vector.extract_strided_slice %15 {offsets = [0, 6, 0], sizes = [8, 1, 64], strides = [1, 1, 1]} : vector<8x8x64xf32> to vector<8x1x64xf32>
    %29 = vector.shape_cast %28 : vector<8x1x64xf32> to vector<8x64xf32>
    %30 = vector.extract_strided_slice %15 {offsets = [0, 7, 0], sizes = [8, 1, 64], strides = [1, 1, 1]} : vector<8x8x64xf32> to vector<8x1x64xf32>
    %31 = vector.shape_cast %30 : vector<8x1x64xf32> to vector<8x64xf32>
    %cst_12 = arith.constant dense<0.000000e+00> : vector<8x64xf32>
    %32 = tpu.matmul %3, %7, %cst_12 {dimension_numbers = #tpu.dot_dimension_numbers<[1], [0], [0], [1], [0, 0, 1, 1], [], []>} : vector<8x16xf32>, vector<16x64xf32>, vector<8x64xf32> -> vector<8x64xf32>
    %33 = arith.addf %17, %32 : vector<8x64xf32>
    %34 = arith.negf %33 : vector<8x64xf32>
    %35 = math.exp %34 : vector<8x64xf32>
    %cst_13 = arith.constant 1.000000e+00 : f32
    %36 = vector.broadcast %cst_13 : f32 to vector<8x64xf32>
    %37 = arith.addf %36, %35 : vector<8x64xf32>
    %38 = arith.divf %36, %37 : vector<8x64xf32>
    %39 = math.tanh %33 : vector<8x64xf32>
    %40 = vector.extract_strided_slice %38 {offsets = [0, 0], sizes = [8, 16], strides = [1, 1]} : vector<8x64xf32> to vector<8x16xf32>
    %41 = vector.extract_strided_slice %38 {offsets = [0, 16], sizes = [8, 16], strides = [1, 1]} : vector<8x64xf32> to vector<8x16xf32>
    %42 = vector.extract_strided_slice %39 {offsets = [0, 32], sizes = [8, 16], strides = [1, 1]} : vector<8x64xf32> to vector<8x16xf32>
    %43 = vector.extract_strided_slice %38 {offsets = [0, 48], sizes = [8, 16], strides = [1, 1]} : vector<8x64xf32> to vector<8x16xf32>
    %44 = arith.mulf %41, %3 : vector<8x16xf32>
    %45 = arith.mulf %40, %42 : vector<8x16xf32>
    %46 = arith.addf %44, %45 : vector<8x16xf32>
    %47 = math.tanh %46 : vector<8x16xf32>
    %48 = arith.mulf %43, %47 : vector<8x16xf32>
    %cst_14 = arith.constant dense<0.000000e+00> : vector<8x64xf32>
    %49 = tpu.matmul %48, %7, %cst_14 {dimension_numbers = #tpu.dot_dimension_numbers<[1], [0], [0], [1], [0, 0, 1, 1], [], []>} : vector<8x16xf32>, vector<16x64xf32>, vector<8x64xf32> -> vector<8x64xf32>
    %50 = arith.addf %19, %49 : vector<8x64xf32>
    %51 = arith.negf %50 : vector<8x64xf32>
    %52 = math.exp %51 : vector<8x64xf32>
    %cst_15 = arith.constant 1.000000e+00 : f32
    %53 = vector.broadcast %cst_15 : f32 to vector<8x64xf32>
    %54 = arith.addf %53, %52 : vector<8x64xf32>
    %55 = arith.divf %53, %54 : vector<8x64xf32>
    %56 = math.tanh %50 : vector<8x64xf32>
    %57 = vector.extract_strided_slice %55 {offsets = [0, 0], sizes = [8, 16], strides = [1, 1]} : vector<8x64xf32> to vector<8x16xf32>
    %58 = vector.extract_strided_slice %55 {offsets = [0, 16], sizes = [8, 16], strides = [1, 1]} : vector<8x64xf32> to vector<8x16xf32>
    %59 = vector.extract_strided_slice %56 {offsets = [0, 32], sizes = [8, 16], strides = [1, 1]} : vector<8x64xf32> to vector<8x16xf32>
    %60 = vector.extract_strided_slice %55 {offsets = [0, 48], sizes = [8, 16], strides = [1, 1]} : vector<8x64xf32> to vector<8x16xf32>
    %61 = arith.mulf %58, %46 : vector<8x16xf32>
    %62 = arith.mulf %57, %59 : vector<8x16xf32>
    %63 = arith.addf %61, %62 : vector<8x16xf32>
    %64 = math.tanh %63 : vector<8x16xf32>
    %65 = arith.mulf %60, %64 : vector<8x16xf32>
    %cst_16 = arith.constant dense<0.000000e+00> : vector<8x64xf32>
    %66 = tpu.matmul %65, %7, %cst_16 {dimension_numbers = #tpu.dot_dimension_numbers<[1], [0], [0], [1], [0, 0, 1, 1], [], []>} : vector<8x16xf32>, vector<16x64xf32>, vector<8x64xf32> -> vector<8x64xf32>
    %67 = arith.addf %21, %66 : vector<8x64xf32>
    %68 = arith.negf %67 : vector<8x64xf32>
    %69 = math.exp %68 : vector<8x64xf32>
    %cst_17 = arith.constant 1.000000e+00 : f32
    %70 = vector.broadcast %cst_17 : f32 to vector<8x64xf32>
    %71 = arith.addf %70, %69 : vector<8x64xf32>
    %72 = arith.divf %70, %71 : vector<8x64xf32>
    %73 = math.tanh %67 : vector<8x64xf32>
    %74 = vector.extract_strided_slice %72 {offsets = [0, 0], sizes = [8, 16], strides = [1, 1]} : vector<8x64xf32> to vector<8x16xf32>
    %75 = vector.extract_strided_slice %72 {offsets = [0, 16], sizes = [8, 16], strides = [1, 1]} : vector<8x64xf32> to vector<8x16xf32>
    %76 = vector.extract_strided_slice %73 {offsets = [0, 32], sizes = [8, 16], strides = [1, 1]} : vector<8x64xf32> to vector<8x16xf32>
    %77 = vector.extract_strided_slice %72 {offsets = [0, 48], sizes = [8, 16], strides = [1, 1]} : vector<8x64xf32> to vector<8x16xf32>
    %78 = arith.mulf %75, %63 : vector<8x16xf32>
    %79 = arith.mulf %74, %76 : vector<8x16xf32>
    %80 = arith.addf %78, %79 : vector<8x16xf32>
    %81 = math.tanh %80 : vector<8x16xf32>
    %82 = arith.mulf %77, %81 : vector<8x16xf32>
    %cst_18 = arith.constant dense<0.000000e+00> : vector<8x64xf32>
    %83 = tpu.matmul %82, %7, %cst_18 {dimension_numbers = #tpu.dot_dimension_numbers<[1], [0], [0], [1], [0, 0, 1, 1], [], []>} : vector<8x16xf32>, vector<16x64xf32>, vector<8x64xf32> -> vector<8x64xf32>
    %84 = arith.addf %23, %83 : vector<8x64xf32>
    %85 = arith.negf %84 : vector<8x64xf32>
    %86 = math.exp %85 : vector<8x64xf32>
    %cst_19 = arith.constant 1.000000e+00 : f32
    %87 = vector.broadcast %cst_19 : f32 to vector<8x64xf32>
    %88 = arith.addf %87, %86 : vector<8x64xf32>
    %89 = arith.divf %87, %88 : vector<8x64xf32>
    %90 = math.tanh %84 : vector<8x64xf32>
    %91 = vector.extract_strided_slice %89 {offsets = [0, 0], sizes = [8, 16], strides = [1, 1]} : vector<8x64xf32> to vector<8x16xf32>
    %92 = vector.extract_strided_slice %89 {offsets = [0, 16], sizes = [8, 16], strides = [1, 1]} : vector<8x64xf32> to vector<8x16xf32>
    %93 = vector.extract_strided_slice %90 {offsets = [0, 32], sizes = [8, 16], strides = [1, 1]} : vector<8x64xf32> to vector<8x16xf32>
    %94 = vector.extract_strided_slice %89 {offsets = [0, 48], sizes = [8, 16], strides = [1, 1]} : vector<8x64xf32> to vector<8x16xf32>
    %95 = arith.mulf %92, %80 : vector<8x16xf32>
    %96 = arith.mulf %91, %93 : vector<8x16xf32>
    %97 = arith.addf %95, %96 : vector<8x16xf32>
    %98 = math.tanh %97 : vector<8x16xf32>
    %99 = arith.mulf %94, %98 : vector<8x16xf32>
    %cst_20 = arith.constant dense<0.000000e+00> : vector<8x64xf32>
    %100 = tpu.matmul %99, %7, %cst_20 {dimension_numbers = #tpu.dot_dimension_numbers<[1], [0], [0], [1], [0, 0, 1, 1], [], []>} : vector<8x16xf32>, vector<16x64xf32>, vector<8x64xf32> -> vector<8x64xf32>
    %101 = arith.addf %25, %100 : vector<8x64xf32>
    %102 = arith.negf %101 : vector<8x64xf32>
    %103 = math.exp %102 : vector<8x64xf32>
    %cst_21 = arith.constant 1.000000e+00 : f32
    %104 = vector.broadcast %cst_21 : f32 to vector<8x64xf32>
    %105 = arith.addf %104, %103 : vector<8x64xf32>
    %106 = arith.divf %104, %105 : vector<8x64xf32>
    %107 = math.tanh %101 : vector<8x64xf32>
    %108 = vector.extract_strided_slice %106 {offsets = [0, 0], sizes = [8, 16], strides = [1, 1]} : vector<8x64xf32> to vector<8x16xf32>
    %109 = vector.extract_strided_slice %106 {offsets = [0, 16], sizes = [8, 16], strides = [1, 1]} : vector<8x64xf32> to vector<8x16xf32>
    %110 = vector.extract_strided_slice %107 {offsets = [0, 32], sizes = [8, 16], strides = [1, 1]} : vector<8x64xf32> to vector<8x16xf32>
    %111 = vector.extract_strided_slice %106 {offsets = [0, 48], sizes = [8, 16], strides = [1, 1]} : vector<8x64xf32> to vector<8x16xf32>
    %112 = arith.mulf %109, %97 : vector<8x16xf32>
    %113 = arith.mulf %108, %110 : vector<8x16xf32>
    %114 = arith.addf %112, %113 : vector<8x16xf32>
    %115 = math.tanh %114 : vector<8x16xf32>
    %116 = arith.mulf %111, %115 : vector<8x16xf32>
    %cst_22 = arith.constant dense<0.000000e+00> : vector<8x64xf32>
    %117 = tpu.matmul %116, %7, %cst_22 {dimension_numbers = #tpu.dot_dimension_numbers<[1], [0], [0], [1], [0, 0, 1, 1], [], []>} : vector<8x16xf32>, vector<16x64xf32>, vector<8x64xf32> -> vector<8x64xf32>
    %118 = arith.addf %27, %117 : vector<8x64xf32>
    %119 = arith.negf %118 : vector<8x64xf32>
    %120 = math.exp %119 : vector<8x64xf32>
    %cst_23 = arith.constant 1.000000e+00 : f32
    %121 = vector.broadcast %cst_23 : f32 to vector<8x64xf32>
    %122 = arith.addf %121, %120 : vector<8x64xf32>
    %123 = arith.divf %121, %122 : vector<8x64xf32>
    %124 = math.tanh %118 : vector<8x64xf32>
    %125 = vector.extract_strided_slice %123 {offsets = [0, 0], sizes = [8, 16], strides = [1, 1]} : vector<8x64xf32> to vector<8x16xf32>
    %126 = vector.extract_strided_slice %123 {offsets = [0, 16], sizes = [8, 16], strides = [1, 1]} : vector<8x64xf32> to vector<8x16xf32>
    %127 = vector.extract_strided_slice %124 {offsets = [0, 32], sizes = [8, 16], strides = [1, 1]} : vector<8x64xf32> to vector<8x16xf32>
    %128 = vector.extract_strided_slice %123 {offsets = [0, 48], sizes = [8, 16], strides = [1, 1]} : vector<8x64xf32> to vector<8x16xf32>
    %129 = arith.mulf %126, %114 : vector<8x16xf32>
    %130 = arith.mulf %125, %127 : vector<8x16xf32>
    %131 = arith.addf %129, %130 : vector<8x16xf32>
    %132 = math.tanh %131 : vector<8x16xf32>
    %133 = arith.mulf %128, %132 : vector<8x16xf32>
    %cst_24 = arith.constant dense<0.000000e+00> : vector<8x64xf32>
    %134 = tpu.matmul %133, %7, %cst_24 {dimension_numbers = #tpu.dot_dimension_numbers<[1], [0], [0], [1], [0, 0, 1, 1], [], []>} : vector<8x16xf32>, vector<16x64xf32>, vector<8x64xf32> -> vector<8x64xf32>
    %135 = arith.addf %29, %134 : vector<8x64xf32>
    %136 = arith.negf %135 : vector<8x64xf32>
    %137 = math.exp %136 : vector<8x64xf32>
    %cst_25 = arith.constant 1.000000e+00 : f32
    %138 = vector.broadcast %cst_25 : f32 to vector<8x64xf32>
    %139 = arith.addf %138, %137 : vector<8x64xf32>
    %140 = arith.divf %138, %139 : vector<8x64xf32>
    %141 = math.tanh %135 : vector<8x64xf32>
    %142 = vector.extract_strided_slice %140 {offsets = [0, 0], sizes = [8, 16], strides = [1, 1]} : vector<8x64xf32> to vector<8x16xf32>
    %143 = vector.extract_strided_slice %140 {offsets = [0, 16], sizes = [8, 16], strides = [1, 1]} : vector<8x64xf32> to vector<8x16xf32>
    %144 = vector.extract_strided_slice %141 {offsets = [0, 32], sizes = [8, 16], strides = [1, 1]} : vector<8x64xf32> to vector<8x16xf32>
    %145 = vector.extract_strided_slice %140 {offsets = [0, 48], sizes = [8, 16], strides = [1, 1]} : vector<8x64xf32> to vector<8x16xf32>
    %146 = arith.mulf %143, %131 : vector<8x16xf32>
    %147 = arith.mulf %142, %144 : vector<8x16xf32>
    %148 = arith.addf %146, %147 : vector<8x16xf32>
    %149 = math.tanh %148 : vector<8x16xf32>
    %150 = arith.mulf %145, %149 : vector<8x16xf32>
    %cst_26 = arith.constant dense<0.000000e+00> : vector<8x64xf32>
    %151 = tpu.matmul %150, %7, %cst_26 {dimension_numbers = #tpu.dot_dimension_numbers<[1], [0], [0], [1], [0, 0, 1, 1], [], []>} : vector<8x16xf32>, vector<16x64xf32>, vector<8x64xf32> -> vector<8x64xf32>
    %152 = arith.addf %31, %151 : vector<8x64xf32>
    %153 = arith.negf %152 : vector<8x64xf32>
    %154 = math.exp %153 : vector<8x64xf32>
    %cst_27 = arith.constant 1.000000e+00 : f32
    %155 = vector.broadcast %cst_27 : f32 to vector<8x64xf32>
    %156 = arith.addf %155, %154 : vector<8x64xf32>
    %157 = arith.divf %155, %156 : vector<8x64xf32>
    %158 = math.tanh %152 : vector<8x64xf32>
    %159 = vector.extract_strided_slice %157 {offsets = [0, 0], sizes = [8, 16], strides = [1, 1]} : vector<8x64xf32> to vector<8x16xf32>
    %160 = vector.extract_strided_slice %157 {offsets = [0, 16], sizes = [8, 16], strides = [1, 1]} : vector<8x64xf32> to vector<8x16xf32>
    %161 = vector.extract_strided_slice %158 {offsets = [0, 32], sizes = [8, 16], strides = [1, 1]} : vector<8x64xf32> to vector<8x16xf32>
    %162 = vector.extract_strided_slice %157 {offsets = [0, 48], sizes = [8, 16], strides = [1, 1]} : vector<8x64xf32> to vector<8x16xf32>
    %163 = arith.mulf %160, %148 : vector<8x16xf32>
    %164 = arith.mulf %159, %161 : vector<8x16xf32>
    %165 = arith.addf %163, %164 : vector<8x16xf32>
    %166 = math.tanh %165 : vector<8x16xf32>
    %167 = arith.mulf %162, %166 : vector<8x16xf32>
    %c1 = arith.constant 1 : index
    %c0_28 = arith.constant 0 : index
    %c0_29 = arith.constant 0 : index
    %168 = vector.load %arg1[%c1, %c0_28, %c0_29] : memref<3x16x64xf32, #tpu.memory_space<vmem>>, vector<1x16x64xf32>
    %169 = vector.shape_cast %168 : vector<1x16x64xf32> to vector<16x64xf32>
    %c1_30 = arith.constant 1 : index
    %c0_31 = arith.constant 0 : index
    %c0_32 = arith.constant 0 : index
    %170 = vector.load %arg2[%c1_30, %c0_31, %c0_32] : memref<3x16x64xf32, #tpu.memory_space<vmem>>, vector<1x16x64xf32>
    %171 = vector.shape_cast %170 : vector<1x16x64xf32> to vector<16x64xf32>
    %c1_33 = arith.constant 1 : index
    %c0_34 = arith.constant 0 : index
    %c0_35 = arith.constant 0 : index
    %172 = vector.load %arg3[%c1_33, %c0_34, %c0_35] : memref<3x1x64xf32, #tpu.memory_space<vmem>>, vector<1x1x64xf32>
    %173 = vector.shape_cast %172 : vector<1x1x64xf32> to vector<1x64xf32>
    %174 = vector.shape_cast %173 : vector<1x64xf32> to vector<1x64xf32>
    %175 = vector.broadcast %174 : vector<1x64xf32> to vector<8x64xf32>
    %cst_36 = arith.constant dense<0.000000e+00> : vector<8x64xf32>
    %176 = tpu.matmul %48, %169, %cst_36 {dimension_numbers = #tpu.dot_dimension_numbers<[1], [0], [0], [1], [0, 0, 1, 1], [], []>} : vector<8x16xf32>, vector<16x64xf32>, vector<8x64xf32> -> vector<8x64xf32>
    %177 = arith.addf %176, %175 : vector<8x64xf32>
    %cst_37 = arith.constant dense<0.000000e+00> : vector<8x64xf32>
    %178 = tpu.matmul %65, %169, %cst_37 {dimension_numbers = #tpu.dot_dimension_numbers<[1], [0], [0], [1], [0, 0, 1, 1], [], []>} : vector<8x16xf32>, vector<16x64xf32>, vector<8x64xf32> -> vector<8x64xf32>
    %179 = arith.addf %178, %175 : vector<8x64xf32>
    %cst_38 = arith.constant dense<0.000000e+00> : vector<8x64xf32>
    %180 = tpu.matmul %82, %169, %cst_38 {dimension_numbers = #tpu.dot_dimension_numbers<[1], [0], [0], [1], [0, 0, 1, 1], [], []>} : vector<8x16xf32>, vector<16x64xf32>, vector<8x64xf32> -> vector<8x64xf32>
    %181 = arith.addf %180, %175 : vector<8x64xf32>
    %cst_39 = arith.constant dense<0.000000e+00> : vector<8x64xf32>
    %182 = tpu.matmul %99, %169, %cst_39 {dimension_numbers = #tpu.dot_dimension_numbers<[1], [0], [0], [1], [0, 0, 1, 1], [], []>} : vector<8x16xf32>, vector<16x64xf32>, vector<8x64xf32> -> vector<8x64xf32>
    %183 = arith.addf %182, %175 : vector<8x64xf32>
    %cst_40 = arith.constant dense<0.000000e+00> : vector<8x64xf32>
    %184 = tpu.matmul %116, %169, %cst_40 {dimension_numbers = #tpu.dot_dimension_numbers<[1], [0], [0], [1], [0, 0, 1, 1], [], []>} : vector<8x16xf32>, vector<16x64xf32>, vector<8x64xf32> -> vector<8x64xf32>
    %185 = arith.addf %184, %175 : vector<8x64xf32>
    %cst_41 = arith.constant dense<0.000000e+00> : vector<8x64xf32>
    %186 = tpu.matmul %133, %169, %cst_41 {dimension_numbers = #tpu.dot_dimension_numbers<[1], [0], [0], [1], [0, 0, 1, 1], [], []>} : vector<8x16xf32>, vector<16x64xf32>, vector<8x64xf32> -> vector<8x64xf32>
    %187 = arith.addf %186, %175 : vector<8x64xf32>
    %cst_42 = arith.constant dense<0.000000e+00> : vector<8x64xf32>
    %188 = tpu.matmul %150, %169, %cst_42 {dimension_numbers = #tpu.dot_dimension_numbers<[1], [0], [0], [1], [0, 0, 1, 1], [], []>} : vector<8x16xf32>, vector<16x64xf32>, vector<8x64xf32> -> vector<8x64xf32>
    %189 = arith.addf %188, %175 : vector<8x64xf32>
    %cst_43 = arith.constant dense<0.000000e+00> : vector<8x64xf32>
    %190 = tpu.matmul %167, %169, %cst_43 {dimension_numbers = #tpu.dot_dimension_numbers<[1], [0], [0], [1], [0, 0, 1, 1], [], []>} : vector<8x16xf32>, vector<16x64xf32>, vector<8x64xf32> -> vector<8x64xf32>
    %191 = arith.addf %190, %175 : vector<8x64xf32>
    %cst_44 = arith.constant dense<0.000000e+00> : vector<8x64xf32>
    %192 = tpu.matmul %3, %171, %cst_44 {dimension_numbers = #tpu.dot_dimension_numbers<[1], [0], [0], [1], [0, 0, 1, 1], [], []>} : vector<8x16xf32>, vector<16x64xf32>, vector<8x64xf32> -> vector<8x64xf32>
    %193 = arith.addf %177, %192 : vector<8x64xf32>
    %194 = arith.negf %193 : vector<8x64xf32>
    %195 = math.exp %194 : vector<8x64xf32>
    %cst_45 = arith.constant 1.000000e+00 : f32
    %196 = vector.broadcast %cst_45 : f32 to vector<8x64xf32>
    %197 = arith.addf %196, %195 : vector<8x64xf32>
    %198 = arith.divf %196, %197 : vector<8x64xf32>
    %199 = math.tanh %193 : vector<8x64xf32>
    %200 = vector.extract_strided_slice %198 {offsets = [0, 0], sizes = [8, 16], strides = [1, 1]} : vector<8x64xf32> to vector<8x16xf32>
    %201 = vector.extract_strided_slice %198 {offsets = [0, 16], sizes = [8, 16], strides = [1, 1]} : vector<8x64xf32> to vector<8x16xf32>
    %202 = vector.extract_strided_slice %199 {offsets = [0, 32], sizes = [8, 16], strides = [1, 1]} : vector<8x64xf32> to vector<8x16xf32>
    %203 = vector.extract_strided_slice %198 {offsets = [0, 48], sizes = [8, 16], strides = [1, 1]} : vector<8x64xf32> to vector<8x16xf32>
    %204 = arith.mulf %201, %3 : vector<8x16xf32>
    %205 = arith.mulf %200, %202 : vector<8x16xf32>
    %206 = arith.addf %204, %205 : vector<8x16xf32>
    %207 = math.tanh %206 : vector<8x16xf32>
    %208 = arith.mulf %203, %207 : vector<8x16xf32>
    %cst_46 = arith.constant dense<0.000000e+00> : vector<8x64xf32>
    %209 = tpu.matmul %208, %171, %cst_46 {dimension_numbers = #tpu.dot_dimension_numbers<[1], [0], [0], [1], [0, 0, 1, 1], [], []>} : vector<8x16xf32>, vector<16x64xf32>, vector<8x64xf32> -> vector<8x64xf32>
    %210 = arith.addf %179, %209 : vector<8x64xf32>
    %211 = arith.negf %210 : vector<8x64xf32>
    %212 = math.exp %211 : vector<8x64xf32>
    %cst_47 = arith.constant 1.000000e+00 : f32
    %213 = vector.broadcast %cst_47 : f32 to vector<8x64xf32>
    %214 = arith.addf %213, %212 : vector<8x64xf32>
    %215 = arith.divf %213, %214 : vector<8x64xf32>
    %216 = math.tanh %210 : vector<8x64xf32>
    %217 = vector.extract_strided_slice %215 {offsets = [0, 0], sizes = [8, 16], strides = [1, 1]} : vector<8x64xf32> to vector<8x16xf32>
    %218 = vector.extract_strided_slice %215 {offsets = [0, 16], sizes = [8, 16], strides = [1, 1]} : vector<8x64xf32> to vector<8x16xf32>
    %219 = vector.extract_strided_slice %216 {offsets = [0, 32], sizes = [8, 16], strides = [1, 1]} : vector<8x64xf32> to vector<8x16xf32>
    %220 = vector.extract_strided_slice %215 {offsets = [0, 48], sizes = [8, 16], strides = [1, 1]} : vector<8x64xf32> to vector<8x16xf32>
    %221 = arith.mulf %218, %206 : vector<8x16xf32>
    %222 = arith.mulf %217, %219 : vector<8x16xf32>
    %223 = arith.addf %221, %222 : vector<8x16xf32>
    %224 = math.tanh %223 : vector<8x16xf32>
    %225 = arith.mulf %220, %224 : vector<8x16xf32>
    %cst_48 = arith.constant dense<0.000000e+00> : vector<8x64xf32>
    %226 = tpu.matmul %225, %171, %cst_48 {dimension_numbers = #tpu.dot_dimension_numbers<[1], [0], [0], [1], [0, 0, 1, 1], [], []>} : vector<8x16xf32>, vector<16x64xf32>, vector<8x64xf32> -> vector<8x64xf32>
    %227 = arith.addf %181, %226 : vector<8x64xf32>
    %228 = arith.negf %227 : vector<8x64xf32>
    %229 = math.exp %228 : vector<8x64xf32>
    %cst_49 = arith.constant 1.000000e+00 : f32
    %230 = vector.broadcast %cst_49 : f32 to vector<8x64xf32>
    %231 = arith.addf %230, %229 : vector<8x64xf32>
    %232 = arith.divf %230, %231 : vector<8x64xf32>
    %233 = math.tanh %227 : vector<8x64xf32>
    %234 = vector.extract_strided_slice %232 {offsets = [0, 0], sizes = [8, 16], strides = [1, 1]} : vector<8x64xf32> to vector<8x16xf32>
    %235 = vector.extract_strided_slice %232 {offsets = [0, 16], sizes = [8, 16], strides = [1, 1]} : vector<8x64xf32> to vector<8x16xf32>
    %236 = vector.extract_strided_slice %233 {offsets = [0, 32], sizes = [8, 16], strides = [1, 1]} : vector<8x64xf32> to vector<8x16xf32>
    %237 = vector.extract_strided_slice %232 {offsets = [0, 48], sizes = [8, 16], strides = [1, 1]} : vector<8x64xf32> to vector<8x16xf32>
    %238 = arith.mulf %235, %223 : vector<8x16xf32>
    %239 = arith.mulf %234, %236 : vector<8x16xf32>
    %240 = arith.addf %238, %239 : vector<8x16xf32>
    %241 = math.tanh %240 : vector<8x16xf32>
    %242 = arith.mulf %237, %241 : vector<8x16xf32>
    %cst_50 = arith.constant dense<0.000000e+00> : vector<8x64xf32>
    %243 = tpu.matmul %242, %171, %cst_50 {dimension_numbers = #tpu.dot_dimension_numbers<[1], [0], [0], [1], [0, 0, 1, 1], [], []>} : vector<8x16xf32>, vector<16x64xf32>, vector<8x64xf32> -> vector<8x64xf32>
    %244 = arith.addf %183, %243 : vector<8x64xf32>
    %245 = arith.negf %244 : vector<8x64xf32>
    %246 = math.exp %245 : vector<8x64xf32>
    %cst_51 = arith.constant 1.000000e+00 : f32
    %247 = vector.broadcast %cst_51 : f32 to vector<8x64xf32>
    %248 = arith.addf %247, %246 : vector<8x64xf32>
    %249 = arith.divf %247, %248 : vector<8x64xf32>
    %250 = math.tanh %244 : vector<8x64xf32>
    %251 = vector.extract_strided_slice %249 {offsets = [0, 0], sizes = [8, 16], strides = [1, 1]} : vector<8x64xf32> to vector<8x16xf32>
    %252 = vector.extract_strided_slice %249 {offsets = [0, 16], sizes = [8, 16], strides = [1, 1]} : vector<8x64xf32> to vector<8x16xf32>
    %253 = vector.extract_strided_slice %250 {offsets = [0, 32], sizes = [8, 16], strides = [1, 1]} : vector<8x64xf32> to vector<8x16xf32>
    %254 = vector.extract_strided_slice %249 {offsets = [0, 48], sizes = [8, 16], strides = [1, 1]} : vector<8x64xf32> to vector<8x16xf32>
    %255 = arith.mulf %252, %240 : vector<8x16xf32>
    %256 = arith.mulf %251, %253 : vector<8x16xf32>
    %257 = arith.addf %255, %256 : vector<8x16xf32>
    %258 = math.tanh %257 : vector<8x16xf32>
    %259 = arith.mulf %254, %258 : vector<8x16xf32>
    %cst_52 = arith.constant dense<0.000000e+00> : vector<8x64xf32>
    %260 = tpu.matmul %259, %171, %cst_52 {dimension_numbers = #tpu.dot_dimension_numbers<[1], [0], [0], [1], [0, 0, 1, 1], [], []>} : vector<8x16xf32>, vector<16x64xf32>, vector<8x64xf32> -> vector<8x64xf32>
    %261 = arith.addf %185, %260 : vector<8x64xf32>
    %262 = arith.negf %261 : vector<8x64xf32>
    %263 = math.exp %262 : vector<8x64xf32>
    %cst_53 = arith.constant 1.000000e+00 : f32
    %264 = vector.broadcast %cst_53 : f32 to vector<8x64xf32>
    %265 = arith.addf %264, %263 : vector<8x64xf32>
    %266 = arith.divf %264, %265 : vector<8x64xf32>
    %267 = math.tanh %261 : vector<8x64xf32>
    %268 = vector.extract_strided_slice %266 {offsets = [0, 0], sizes = [8, 16], strides = [1, 1]} : vector<8x64xf32> to vector<8x16xf32>
    %269 = vector.extract_strided_slice %266 {offsets = [0, 16], sizes = [8, 16], strides = [1, 1]} : vector<8x64xf32> to vector<8x16xf32>
    %270 = vector.extract_strided_slice %267 {offsets = [0, 32], sizes = [8, 16], strides = [1, 1]} : vector<8x64xf32> to vector<8x16xf32>
    %271 = vector.extract_strided_slice %266 {offsets = [0, 48], sizes = [8, 16], strides = [1, 1]} : vector<8x64xf32> to vector<8x16xf32>
    %272 = arith.mulf %269, %257 : vector<8x16xf32>
    %273 = arith.mulf %268, %270 : vector<8x16xf32>
    %274 = arith.addf %272, %273 : vector<8x16xf32>
    %275 = math.tanh %274 : vector<8x16xf32>
    %276 = arith.mulf %271, %275 : vector<8x16xf32>
    %cst_54 = arith.constant dense<0.000000e+00> : vector<8x64xf32>
    %277 = tpu.matmul %276, %171, %cst_54 {dimension_numbers = #tpu.dot_dimension_numbers<[1], [0], [0], [1], [0, 0, 1, 1], [], []>} : vector<8x16xf32>, vector<16x64xf32>, vector<8x64xf32> -> vector<8x64xf32>
    %278 = arith.addf %187, %277 : vector<8x64xf32>
    %279 = arith.negf %278 : vector<8x64xf32>
    %280 = math.exp %279 : vector<8x64xf32>
    %cst_55 = arith.constant 1.000000e+00 : f32
    %281 = vector.broadcast %cst_55 : f32 to vector<8x64xf32>
    %282 = arith.addf %281, %280 : vector<8x64xf32>
    %283 = arith.divf %281, %282 : vector<8x64xf32>
    %284 = math.tanh %278 : vector<8x64xf32>
    %285 = vector.extract_strided_slice %283 {offsets = [0, 0], sizes = [8, 16], strides = [1, 1]} : vector<8x64xf32> to vector<8x16xf32>
    %286 = vector.extract_strided_slice %283 {offsets = [0, 16], sizes = [8, 16], strides = [1, 1]} : vector<8x64xf32> to vector<8x16xf32>
    %287 = vector.extract_strided_slice %284 {offsets = [0, 32], sizes = [8, 16], strides = [1, 1]} : vector<8x64xf32> to vector<8x16xf32>
    %288 = vector.extract_strided_slice %283 {offsets = [0, 48], sizes = [8, 16], strides = [1, 1]} : vector<8x64xf32> to vector<8x16xf32>
    %289 = arith.mulf %286, %274 : vector<8x16xf32>
    %290 = arith.mulf %285, %287 : vector<8x16xf32>
    %291 = arith.addf %289, %290 : vector<8x16xf32>
    %292 = math.tanh %291 : vector<8x16xf32>
    %293 = arith.mulf %288, %292 : vector<8x16xf32>
    %cst_56 = arith.constant dense<0.000000e+00> : vector<8x64xf32>
    %294 = tpu.matmul %293, %171, %cst_56 {dimension_numbers = #tpu.dot_dimension_numbers<[1], [0], [0], [1], [0, 0, 1, 1], [], []>} : vector<8x16xf32>, vector<16x64xf32>, vector<8x64xf32> -> vector<8x64xf32>
    %295 = arith.addf %189, %294 : vector<8x64xf32>
    %296 = arith.negf %295 : vector<8x64xf32>
    %297 = math.exp %296 : vector<8x64xf32>
    %cst_57 = arith.constant 1.000000e+00 : f32
    %298 = vector.broadcast %cst_57 : f32 to vector<8x64xf32>
    %299 = arith.addf %298, %297 : vector<8x64xf32>
    %300 = arith.divf %298, %299 : vector<8x64xf32>
    %301 = math.tanh %295 : vector<8x64xf32>
    %302 = vector.extract_strided_slice %300 {offsets = [0, 0], sizes = [8, 16], strides = [1, 1]} : vector<8x64xf32> to vector<8x16xf32>
    %303 = vector.extract_strided_slice %300 {offsets = [0, 16], sizes = [8, 16], strides = [1, 1]} : vector<8x64xf32> to vector<8x16xf32>
    %304 = vector.extract_strided_slice %301 {offsets = [0, 32], sizes = [8, 16], strides = [1, 1]} : vector<8x64xf32> to vector<8x16xf32>
    %305 = vector.extract_strided_slice %300 {offsets = [0, 48], sizes = [8, 16], strides = [1, 1]} : vector<8x64xf32> to vector<8x16xf32>
    %306 = arith.mulf %303, %291 : vector<8x16xf32>
    %307 = arith.mulf %302, %304 : vector<8x16xf32>
    %308 = arith.addf %306, %307 : vector<8x16xf32>
    %309 = math.tanh %308 : vector<8x16xf32>
    %310 = arith.mulf %305, %309 : vector<8x16xf32>
    %cst_58 = arith.constant dense<0.000000e+00> : vector<8x64xf32>
    %311 = tpu.matmul %310, %171, %cst_58 {dimension_numbers = #tpu.dot_dimension_numbers<[1], [0], [0], [1], [0, 0, 1, 1], [], []>} : vector<8x16xf32>, vector<16x64xf32>, vector<8x64xf32> -> vector<8x64xf32>
    %312 = arith.addf %191, %311 : vector<8x64xf32>
    %313 = arith.negf %312 : vector<8x64xf32>
    %314 = math.exp %313 : vector<8x64xf32>
    %cst_59 = arith.constant 1.000000e+00 : f32
    %315 = vector.broadcast %cst_59 : f32 to vector<8x64xf32>
    %316 = arith.addf %315, %314 : vector<8x64xf32>
    %317 = arith.divf %315, %316 : vector<8x64xf32>
    %318 = math.tanh %312 : vector<8x64xf32>
    %319 = vector.extract_strided_slice %317 {offsets = [0, 0], sizes = [8, 16], strides = [1, 1]} : vector<8x64xf32> to vector<8x16xf32>
    %320 = vector.extract_strided_slice %317 {offsets = [0, 16], sizes = [8, 16], strides = [1, 1]} : vector<8x64xf32> to vector<8x16xf32>
    %321 = vector.extract_strided_slice %318 {offsets = [0, 32], sizes = [8, 16], strides = [1, 1]} : vector<8x64xf32> to vector<8x16xf32>
    %322 = vector.extract_strided_slice %317 {offsets = [0, 48], sizes = [8, 16], strides = [1, 1]} : vector<8x64xf32> to vector<8x16xf32>
    %323 = arith.mulf %320, %308 : vector<8x16xf32>
    %324 = arith.mulf %319, %321 : vector<8x16xf32>
    %325 = arith.addf %323, %324 : vector<8x16xf32>
    %326 = math.tanh %325 : vector<8x16xf32>
    %327 = arith.mulf %322, %326 : vector<8x16xf32>
    %c2 = arith.constant 2 : index
    %c0_60 = arith.constant 0 : index
    %c0_61 = arith.constant 0 : index
    %328 = vector.load %arg1[%c2, %c0_60, %c0_61] : memref<3x16x64xf32, #tpu.memory_space<vmem>>, vector<1x16x64xf32>
    %329 = vector.shape_cast %328 : vector<1x16x64xf32> to vector<16x64xf32>
    %c2_62 = arith.constant 2 : index
    %c0_63 = arith.constant 0 : index
    %c0_64 = arith.constant 0 : index
    %330 = vector.load %arg2[%c2_62, %c0_63, %c0_64] : memref<3x16x64xf32, #tpu.memory_space<vmem>>, vector<1x16x64xf32>
    %331 = vector.shape_cast %330 : vector<1x16x64xf32> to vector<16x64xf32>
    %c2_65 = arith.constant 2 : index
    %c0_66 = arith.constant 0 : index
    %c0_67 = arith.constant 0 : index
    %332 = vector.load %arg3[%c2_65, %c0_66, %c0_67] : memref<3x1x64xf32, #tpu.memory_space<vmem>>, vector<1x1x64xf32>
    %333 = vector.shape_cast %332 : vector<1x1x64xf32> to vector<1x64xf32>
    %334 = vector.shape_cast %333 : vector<1x64xf32> to vector<1x64xf32>
    %335 = vector.broadcast %334 : vector<1x64xf32> to vector<8x64xf32>
    %cst_68 = arith.constant dense<0.000000e+00> : vector<8x64xf32>
    %336 = tpu.matmul %208, %329, %cst_68 {dimension_numbers = #tpu.dot_dimension_numbers<[1], [0], [0], [1], [0, 0, 1, 1], [], []>} : vector<8x16xf32>, vector<16x64xf32>, vector<8x64xf32> -> vector<8x64xf32>
    %337 = arith.addf %336, %335 : vector<8x64xf32>
    %cst_69 = arith.constant dense<0.000000e+00> : vector<8x64xf32>
    %338 = tpu.matmul %225, %329, %cst_69 {dimension_numbers = #tpu.dot_dimension_numbers<[1], [0], [0], [1], [0, 0, 1, 1], [], []>} : vector<8x16xf32>, vector<16x64xf32>, vector<8x64xf32> -> vector<8x64xf32>
    %339 = arith.addf %338, %335 : vector<8x64xf32>
    %cst_70 = arith.constant dense<0.000000e+00> : vector<8x64xf32>
    %340 = tpu.matmul %242, %329, %cst_70 {dimension_numbers = #tpu.dot_dimension_numbers<[1], [0], [0], [1], [0, 0, 1, 1], [], []>} : vector<8x16xf32>, vector<16x64xf32>, vector<8x64xf32> -> vector<8x64xf32>
    %341 = arith.addf %340, %335 : vector<8x64xf32>
    %cst_71 = arith.constant dense<0.000000e+00> : vector<8x64xf32>
    %342 = tpu.matmul %259, %329, %cst_71 {dimension_numbers = #tpu.dot_dimension_numbers<[1], [0], [0], [1], [0, 0, 1, 1], [], []>} : vector<8x16xf32>, vector<16x64xf32>, vector<8x64xf32> -> vector<8x64xf32>
    %343 = arith.addf %342, %335 : vector<8x64xf32>
    %cst_72 = arith.constant dense<0.000000e+00> : vector<8x64xf32>
    %344 = tpu.matmul %276, %329, %cst_72 {dimension_numbers = #tpu.dot_dimension_numbers<[1], [0], [0], [1], [0, 0, 1, 1], [], []>} : vector<8x16xf32>, vector<16x64xf32>, vector<8x64xf32> -> vector<8x64xf32>
    %345 = arith.addf %344, %335 : vector<8x64xf32>
    %cst_73 = arith.constant dense<0.000000e+00> : vector<8x64xf32>
    %346 = tpu.matmul %293, %329, %cst_73 {dimension_numbers = #tpu.dot_dimension_numbers<[1], [0], [0], [1], [0, 0, 1, 1], [], []>} : vector<8x16xf32>, vector<16x64xf32>, vector<8x64xf32> -> vector<8x64xf32>
    %347 = arith.addf %346, %335 : vector<8x64xf32>
    %cst_74 = arith.constant dense<0.000000e+00> : vector<8x64xf32>
    %348 = tpu.matmul %310, %329, %cst_74 {dimension_numbers = #tpu.dot_dimension_numbers<[1], [0], [0], [1], [0, 0, 1, 1], [], []>} : vector<8x16xf32>, vector<16x64xf32>, vector<8x64xf32> -> vector<8x64xf32>
    %349 = arith.addf %348, %335 : vector<8x64xf32>
    %cst_75 = arith.constant dense<0.000000e+00> : vector<8x64xf32>
    %350 = tpu.matmul %327, %329, %cst_75 {dimension_numbers = #tpu.dot_dimension_numbers<[1], [0], [0], [1], [0, 0, 1, 1], [], []>} : vector<8x16xf32>, vector<16x64xf32>, vector<8x64xf32> -> vector<8x64xf32>
    %351 = arith.addf %350, %335 : vector<8x64xf32>
    %cst_76 = arith.constant dense<0.000000e+00> : vector<8x64xf32>
    %352 = tpu.matmul %3, %331, %cst_76 {dimension_numbers = #tpu.dot_dimension_numbers<[1], [0], [0], [1], [0, 0, 1, 1], [], []>} : vector<8x16xf32>, vector<16x64xf32>, vector<8x64xf32> -> vector<8x64xf32>
    %353 = arith.addf %337, %352 : vector<8x64xf32>
    %354 = arith.negf %353 : vector<8x64xf32>
    %355 = math.exp %354 : vector<8x64xf32>
    %cst_77 = arith.constant 1.000000e+00 : f32
    %356 = vector.broadcast %cst_77 : f32 to vector<8x64xf32>
    %357 = arith.addf %356, %355 : vector<8x64xf32>
    %358 = arith.divf %356, %357 : vector<8x64xf32>
    %359 = math.tanh %353 : vector<8x64xf32>
    %360 = vector.extract_strided_slice %358 {offsets = [0, 0], sizes = [8, 16], strides = [1, 1]} : vector<8x64xf32> to vector<8x16xf32>
    %361 = vector.extract_strided_slice %358 {offsets = [0, 16], sizes = [8, 16], strides = [1, 1]} : vector<8x64xf32> to vector<8x16xf32>
    %362 = vector.extract_strided_slice %359 {offsets = [0, 32], sizes = [8, 16], strides = [1, 1]} : vector<8x64xf32> to vector<8x16xf32>
    %363 = vector.extract_strided_slice %358 {offsets = [0, 48], sizes = [8, 16], strides = [1, 1]} : vector<8x64xf32> to vector<8x16xf32>
    %364 = arith.mulf %361, %3 : vector<8x16xf32>
    %365 = arith.mulf %360, %362 : vector<8x16xf32>
    %366 = arith.addf %364, %365 : vector<8x16xf32>
    %367 = math.tanh %366 : vector<8x16xf32>
    %368 = arith.mulf %363, %367 : vector<8x16xf32>
    %cst_78 = arith.constant dense<0.000000e+00> : vector<8x64xf32>
    %369 = tpu.matmul %368, %331, %cst_78 {dimension_numbers = #tpu.dot_dimension_numbers<[1], [0], [0], [1], [0, 0, 1, 1], [], []>} : vector<8x16xf32>, vector<16x64xf32>, vector<8x64xf32> -> vector<8x64xf32>
    %370 = arith.addf %339, %369 : vector<8x64xf32>
    %371 = arith.negf %370 : vector<8x64xf32>
    %372 = math.exp %371 : vector<8x64xf32>
    %cst_79 = arith.constant 1.000000e+00 : f32
    %373 = vector.broadcast %cst_79 : f32 to vector<8x64xf32>
    %374 = arith.addf %373, %372 : vector<8x64xf32>
    %375 = arith.divf %373, %374 : vector<8x64xf32>
    %376 = math.tanh %370 : vector<8x64xf32>
    %377 = vector.extract_strided_slice %375 {offsets = [0, 0], sizes = [8, 16], strides = [1, 1]} : vector<8x64xf32> to vector<8x16xf32>
    %378 = vector.extract_strided_slice %375 {offsets = [0, 16], sizes = [8, 16], strides = [1, 1]} : vector<8x64xf32> to vector<8x16xf32>
    %379 = vector.extract_strided_slice %376 {offsets = [0, 32], sizes = [8, 16], strides = [1, 1]} : vector<8x64xf32> to vector<8x16xf32>
    %380 = vector.extract_strided_slice %375 {offsets = [0, 48], sizes = [8, 16], strides = [1, 1]} : vector<8x64xf32> to vector<8x16xf32>
    %381 = arith.mulf %378, %366 : vector<8x16xf32>
    %382 = arith.mulf %377, %379 : vector<8x16xf32>
    %383 = arith.addf %381, %382 : vector<8x16xf32>
    %384 = math.tanh %383 : vector<8x16xf32>
    %385 = arith.mulf %380, %384 : vector<8x16xf32>
    %cst_80 = arith.constant dense<0.000000e+00> : vector<8x64xf32>
    %386 = tpu.matmul %385, %331, %cst_80 {dimension_numbers = #tpu.dot_dimension_numbers<[1], [0], [0], [1], [0, 0, 1, 1], [], []>} : vector<8x16xf32>, vector<16x64xf32>, vector<8x64xf32> -> vector<8x64xf32>
    %387 = arith.addf %341, %386 : vector<8x64xf32>
    %388 = arith.negf %387 : vector<8x64xf32>
    %389 = math.exp %388 : vector<8x64xf32>
    %cst_81 = arith.constant 1.000000e+00 : f32
    %390 = vector.broadcast %cst_81 : f32 to vector<8x64xf32>
    %391 = arith.addf %390, %389 : vector<8x64xf32>
    %392 = arith.divf %390, %391 : vector<8x64xf32>
    %393 = math.tanh %387 : vector<8x64xf32>
    %394 = vector.extract_strided_slice %392 {offsets = [0, 0], sizes = [8, 16], strides = [1, 1]} : vector<8x64xf32> to vector<8x16xf32>
    %395 = vector.extract_strided_slice %392 {offsets = [0, 16], sizes = [8, 16], strides = [1, 1]} : vector<8x64xf32> to vector<8x16xf32>
    %396 = vector.extract_strided_slice %393 {offsets = [0, 32], sizes = [8, 16], strides = [1, 1]} : vector<8x64xf32> to vector<8x16xf32>
    %397 = vector.extract_strided_slice %392 {offsets = [0, 48], sizes = [8, 16], strides = [1, 1]} : vector<8x64xf32> to vector<8x16xf32>
    %398 = arith.mulf %395, %383 : vector<8x16xf32>
    %399 = arith.mulf %394, %396 : vector<8x16xf32>
    %400 = arith.addf %398, %399 : vector<8x16xf32>
    %401 = math.tanh %400 : vector<8x16xf32>
    %402 = arith.mulf %397, %401 : vector<8x16xf32>
    %cst_82 = arith.constant dense<0.000000e+00> : vector<8x64xf32>
    %403 = tpu.matmul %402, %331, %cst_82 {dimension_numbers = #tpu.dot_dimension_numbers<[1], [0], [0], [1], [0, 0, 1, 1], [], []>} : vector<8x16xf32>, vector<16x64xf32>, vector<8x64xf32> -> vector<8x64xf32>
    %404 = arith.addf %343, %403 : vector<8x64xf32>
    %405 = arith.negf %404 : vector<8x64xf32>
    %406 = math.exp %405 : vector<8x64xf32>
    %cst_83 = arith.constant 1.000000e+00 : f32
    %407 = vector.broadcast %cst_83 : f32 to vector<8x64xf32>
    %408 = arith.addf %407, %406 : vector<8x64xf32>
    %409 = arith.divf %407, %408 : vector<8x64xf32>
    %410 = math.tanh %404 : vector<8x64xf32>
    %411 = vector.extract_strided_slice %409 {offsets = [0, 0], sizes = [8, 16], strides = [1, 1]} : vector<8x64xf32> to vector<8x16xf32>
    %412 = vector.extract_strided_slice %409 {offsets = [0, 16], sizes = [8, 16], strides = [1, 1]} : vector<8x64xf32> to vector<8x16xf32>
    %413 = vector.extract_strided_slice %410 {offsets = [0, 32], sizes = [8, 16], strides = [1, 1]} : vector<8x64xf32> to vector<8x16xf32>
    %414 = vector.extract_strided_slice %409 {offsets = [0, 48], sizes = [8, 16], strides = [1, 1]} : vector<8x64xf32> to vector<8x16xf32>
    %415 = arith.mulf %412, %400 : vector<8x16xf32>
    %416 = arith.mulf %411, %413 : vector<8x16xf32>
    %417 = arith.addf %415, %416 : vector<8x16xf32>
    %418 = math.tanh %417 : vector<8x16xf32>
    %419 = arith.mulf %414, %418 : vector<8x16xf32>
    %cst_84 = arith.constant dense<0.000000e+00> : vector<8x64xf32>
    %420 = tpu.matmul %419, %331, %cst_84 {dimension_numbers = #tpu.dot_dimension_numbers<[1], [0], [0], [1], [0, 0, 1, 1], [], []>} : vector<8x16xf32>, vector<16x64xf32>, vector<8x64xf32> -> vector<8x64xf32>
    %421 = arith.addf %345, %420 : vector<8x64xf32>
    %422 = arith.negf %421 : vector<8x64xf32>
    %423 = math.exp %422 : vector<8x64xf32>
    %cst_85 = arith.constant 1.000000e+00 : f32
    %424 = vector.broadcast %cst_85 : f32 to vector<8x64xf32>
    %425 = arith.addf %424, %423 : vector<8x64xf32>
    %426 = arith.divf %424, %425 : vector<8x64xf32>
    %427 = math.tanh %421 : vector<8x64xf32>
    %428 = vector.extract_strided_slice %426 {offsets = [0, 0], sizes = [8, 16], strides = [1, 1]} : vector<8x64xf32> to vector<8x16xf32>
    %429 = vector.extract_strided_slice %426 {offsets = [0, 16], sizes = [8, 16], strides = [1, 1]} : vector<8x64xf32> to vector<8x16xf32>
    %430 = vector.extract_strided_slice %427 {offsets = [0, 32], sizes = [8, 16], strides = [1, 1]} : vector<8x64xf32> to vector<8x16xf32>
    %431 = vector.extract_strided_slice %426 {offsets = [0, 48], sizes = [8, 16], strides = [1, 1]} : vector<8x64xf32> to vector<8x16xf32>
    %432 = arith.mulf %429, %417 : vector<8x16xf32>
    %433 = arith.mulf %428, %430 : vector<8x16xf32>
    %434 = arith.addf %432, %433 : vector<8x16xf32>
    %435 = math.tanh %434 : vector<8x16xf32>
    %436 = arith.mulf %431, %435 : vector<8x16xf32>
    %cst_86 = arith.constant dense<0.000000e+00> : vector<8x64xf32>
    %437 = tpu.matmul %436, %331, %cst_86 {dimension_numbers = #tpu.dot_dimension_numbers<[1], [0], [0], [1], [0, 0, 1, 1], [], []>} : vector<8x16xf32>, vector<16x64xf32>, vector<8x64xf32> -> vector<8x64xf32>
    %438 = arith.addf %347, %437 : vector<8x64xf32>
    %439 = arith.negf %438 : vector<8x64xf32>
    %440 = math.exp %439 : vector<8x64xf32>
    %cst_87 = arith.constant 1.000000e+00 : f32
    %441 = vector.broadcast %cst_87 : f32 to vector<8x64xf32>
    %442 = arith.addf %441, %440 : vector<8x64xf32>
    %443 = arith.divf %441, %442 : vector<8x64xf32>
    %444 = math.tanh %438 : vector<8x64xf32>
    %445 = vector.extract_strided_slice %443 {offsets = [0, 0], sizes = [8, 16], strides = [1, 1]} : vector<8x64xf32> to vector<8x16xf32>
    %446 = vector.extract_strided_slice %443 {offsets = [0, 16], sizes = [8, 16], strides = [1, 1]} : vector<8x64xf32> to vector<8x16xf32>
    %447 = vector.extract_strided_slice %444 {offsets = [0, 32], sizes = [8, 16], strides = [1, 1]} : vector<8x64xf32> to vector<8x16xf32>
    %448 = vector.extract_strided_slice %443 {offsets = [0, 48], sizes = [8, 16], strides = [1, 1]} : vector<8x64xf32> to vector<8x16xf32>
    %449 = arith.mulf %446, %434 : vector<8x16xf32>
    %450 = arith.mulf %445, %447 : vector<8x16xf32>
    %451 = arith.addf %449, %450 : vector<8x16xf32>
    %452 = math.tanh %451 : vector<8x16xf32>
    %453 = arith.mulf %448, %452 : vector<8x16xf32>
    %cst_88 = arith.constant dense<0.000000e+00> : vector<8x64xf32>
    %454 = tpu.matmul %453, %331, %cst_88 {dimension_numbers = #tpu.dot_dimension_numbers<[1], [0], [0], [1], [0, 0, 1, 1], [], []>} : vector<8x16xf32>, vector<16x64xf32>, vector<8x64xf32> -> vector<8x64xf32>
    %455 = arith.addf %349, %454 : vector<8x64xf32>
    %456 = arith.negf %455 : vector<8x64xf32>
    %457 = math.exp %456 : vector<8x64xf32>
    %cst_89 = arith.constant 1.000000e+00 : f32
    %458 = vector.broadcast %cst_89 : f32 to vector<8x64xf32>
    %459 = arith.addf %458, %457 : vector<8x64xf32>
    %460 = arith.divf %458, %459 : vector<8x64xf32>
    %461 = math.tanh %455 : vector<8x64xf32>
    %462 = vector.extract_strided_slice %460 {offsets = [0, 0], sizes = [8, 16], strides = [1, 1]} : vector<8x64xf32> to vector<8x16xf32>
    %463 = vector.extract_strided_slice %460 {offsets = [0, 16], sizes = [8, 16], strides = [1, 1]} : vector<8x64xf32> to vector<8x16xf32>
    %464 = vector.extract_strided_slice %461 {offsets = [0, 32], sizes = [8, 16], strides = [1, 1]} : vector<8x64xf32> to vector<8x16xf32>
    %465 = vector.extract_strided_slice %460 {offsets = [0, 48], sizes = [8, 16], strides = [1, 1]} : vector<8x64xf32> to vector<8x16xf32>
    %466 = arith.mulf %463, %451 : vector<8x16xf32>
    %467 = arith.mulf %462, %464 : vector<8x16xf32>
    %468 = arith.addf %466, %467 : vector<8x16xf32>
    %469 = math.tanh %468 : vector<8x16xf32>
    %470 = arith.mulf %465, %469 : vector<8x16xf32>
    %cst_90 = arith.constant dense<0.000000e+00> : vector<8x64xf32>
    %471 = tpu.matmul %470, %331, %cst_90 {dimension_numbers = #tpu.dot_dimension_numbers<[1], [0], [0], [1], [0, 0, 1, 1], [], []>} : vector<8x16xf32>, vector<16x64xf32>, vector<8x64xf32> -> vector<8x64xf32>
    %472 = arith.addf %351, %471 : vector<8x64xf32>
    %473 = arith.negf %472 : vector<8x64xf32>
    %474 = math.exp %473 : vector<8x64xf32>
    %cst_91 = arith.constant 1.000000e+00 : f32
    %475 = vector.broadcast %cst_91 : f32 to vector<8x64xf32>
    %476 = arith.addf %475, %474 : vector<8x64xf32>
    %477 = arith.divf %475, %476 : vector<8x64xf32>
    %478 = math.tanh %472 : vector<8x64xf32>
    %479 = vector.extract_strided_slice %477 {offsets = [0, 0], sizes = [8, 16], strides = [1, 1]} : vector<8x64xf32> to vector<8x16xf32>
    %480 = vector.extract_strided_slice %477 {offsets = [0, 16], sizes = [8, 16], strides = [1, 1]} : vector<8x64xf32> to vector<8x16xf32>
    %481 = vector.extract_strided_slice %478 {offsets = [0, 32], sizes = [8, 16], strides = [1, 1]} : vector<8x64xf32> to vector<8x16xf32>
    %482 = vector.extract_strided_slice %477 {offsets = [0, 48], sizes = [8, 16], strides = [1, 1]} : vector<8x64xf32> to vector<8x16xf32>
    %483 = arith.mulf %480, %468 : vector<8x16xf32>
    %484 = arith.mulf %479, %481 : vector<8x16xf32>
    %485 = arith.addf %483, %484 : vector<8x16xf32>
    %486 = math.tanh %485 : vector<8x16xf32>
    %487 = arith.mulf %482, %486 : vector<8x16xf32>
    %c0_92 = arith.constant 0 : index
    %c0_93 = arith.constant 0 : index
    %c0_94 = arith.constant 0 : index
    %488 = vector.load %arg4[%c0_92, %c0_93, %c0_94] : memref<3x16x64xf32, #tpu.memory_space<vmem>>, vector<1x16x64xf32>
    %489 = vector.shape_cast %488 : vector<1x16x64xf32> to vector<16x64xf32>
    %c0_95 = arith.constant 0 : index
    %c0_96 = arith.constant 0 : index
    %c0_97 = arith.constant 0 : index
    %490 = vector.load %arg5[%c0_95, %c0_96, %c0_97] : memref<3x16x64xf32, #tpu.memory_space<vmem>>, vector<1x16x64xf32>
    %491 = vector.shape_cast %490 : vector<1x16x64xf32> to vector<16x64xf32>
    %c0_98 = arith.constant 0 : index
    %c0_99 = arith.constant 0 : index
    %c0_100 = arith.constant 0 : index
    %492 = vector.load %arg6[%c0_98, %c0_99, %c0_100] : memref<3x1x64xf32, #tpu.memory_space<vmem>>, vector<1x1x64xf32>
    %493 = vector.shape_cast %492 : vector<1x1x64xf32> to vector<1x64xf32>
    %494 = vector.shape_cast %493 : vector<1x64xf32> to vector<1x64xf32>
    %495 = vector.broadcast %494 : vector<1x64xf32> to vector<8x64xf32>
    %cst_101 = arith.constant dense<0.000000e+00> : vector<8x64xf32>
    %496 = tpu.matmul %368, %489, %cst_101 {dimension_numbers = #tpu.dot_dimension_numbers<[1], [0], [0], [1], [0, 0, 1, 1], [], []>} : vector<8x16xf32>, vector<16x64xf32>, vector<8x64xf32> -> vector<8x64xf32>
    %497 = arith.addf %496, %495 : vector<8x64xf32>
    %cst_102 = arith.constant dense<0.000000e+00> : vector<8x64xf32>
    %498 = tpu.matmul %385, %489, %cst_102 {dimension_numbers = #tpu.dot_dimension_numbers<[1], [0], [0], [1], [0, 0, 1, 1], [], []>} : vector<8x16xf32>, vector<16x64xf32>, vector<8x64xf32> -> vector<8x64xf32>
    %499 = arith.addf %498, %495 : vector<8x64xf32>
    %cst_103 = arith.constant dense<0.000000e+00> : vector<8x64xf32>
    %500 = tpu.matmul %402, %489, %cst_103 {dimension_numbers = #tpu.dot_dimension_numbers<[1], [0], [0], [1], [0, 0, 1, 1], [], []>} : vector<8x16xf32>, vector<16x64xf32>, vector<8x64xf32> -> vector<8x64xf32>
    %501 = arith.addf %500, %495 : vector<8x64xf32>
    %cst_104 = arith.constant dense<0.000000e+00> : vector<8x64xf32>
    %502 = tpu.matmul %419, %489, %cst_104 {dimension_numbers = #tpu.dot_dimension_numbers<[1], [0], [0], [1], [0, 0, 1, 1], [], []>} : vector<8x16xf32>, vector<16x64xf32>, vector<8x64xf32> -> vector<8x64xf32>
    %503 = arith.addf %502, %495 : vector<8x64xf32>
    %cst_105 = arith.constant dense<0.000000e+00> : vector<8x64xf32>
    %504 = tpu.matmul %436, %489, %cst_105 {dimension_numbers = #tpu.dot_dimension_numbers<[1], [0], [0], [1], [0, 0, 1, 1], [], []>} : vector<8x16xf32>, vector<16x64xf32>, vector<8x64xf32> -> vector<8x64xf32>
    %505 = arith.addf %504, %495 : vector<8x64xf32>
    %cst_106 = arith.constant dense<0.000000e+00> : vector<8x64xf32>
    %506 = tpu.matmul %453, %489, %cst_106 {dimension_numbers = #tpu.dot_dimension_numbers<[1], [0], [0], [1], [0, 0, 1, 1], [], []>} : vector<8x16xf32>, vector<16x64xf32>, vector<8x64xf32> -> vector<8x64xf32>
    %507 = arith.addf %506, %495 : vector<8x64xf32>
    %cst_107 = arith.constant dense<0.000000e+00> : vector<8x64xf32>
    %508 = tpu.matmul %470, %489, %cst_107 {dimension_numbers = #tpu.dot_dimension_numbers<[1], [0], [0], [1], [0, 0, 1, 1], [], []>} : vector<8x16xf32>, vector<16x64xf32>, vector<8x64xf32> -> vector<8x64xf32>
    %509 = arith.addf %508, %495 : vector<8x64xf32>
    %cst_108 = arith.constant dense<0.000000e+00> : vector<8x64xf32>
    %510 = tpu.matmul %487, %489, %cst_108 {dimension_numbers = #tpu.dot_dimension_numbers<[1], [0], [0], [1], [0, 0, 1, 1], [], []>} : vector<8x16xf32>, vector<16x64xf32>, vector<8x64xf32> -> vector<8x64xf32>
    %511 = arith.addf %510, %495 : vector<8x64xf32>
    %cst_109 = arith.constant dense<0.000000e+00> : vector<8x64xf32>
    %512 = tpu.matmul %167, %491, %cst_109 {dimension_numbers = #tpu.dot_dimension_numbers<[1], [0], [0], [1], [0, 0, 1, 1], [], []>} : vector<8x16xf32>, vector<16x64xf32>, vector<8x64xf32> -> vector<8x64xf32>
    %513 = arith.addf %497, %512 : vector<8x64xf32>
    %514 = arith.negf %513 : vector<8x64xf32>
    %515 = math.exp %514 : vector<8x64xf32>
    %cst_110 = arith.constant 1.000000e+00 : f32
    %516 = vector.broadcast %cst_110 : f32 to vector<8x64xf32>
    %517 = arith.addf %516, %515 : vector<8x64xf32>
    %518 = arith.divf %516, %517 : vector<8x64xf32>
    %519 = math.tanh %513 : vector<8x64xf32>
    %520 = vector.extract_strided_slice %518 {offsets = [0, 0], sizes = [8, 16], strides = [1, 1]} : vector<8x64xf32> to vector<8x16xf32>
    %521 = vector.extract_strided_slice %518 {offsets = [0, 16], sizes = [8, 16], strides = [1, 1]} : vector<8x64xf32> to vector<8x16xf32>
    %522 = vector.extract_strided_slice %519 {offsets = [0, 32], sizes = [8, 16], strides = [1, 1]} : vector<8x64xf32> to vector<8x16xf32>
    %523 = vector.extract_strided_slice %518 {offsets = [0, 48], sizes = [8, 16], strides = [1, 1]} : vector<8x64xf32> to vector<8x16xf32>
    %524 = arith.mulf %521, %165 : vector<8x16xf32>
    %525 = arith.mulf %520, %522 : vector<8x16xf32>
    %526 = arith.addf %524, %525 : vector<8x16xf32>
    %527 = math.tanh %526 : vector<8x16xf32>
    %528 = arith.mulf %523, %527 : vector<8x16xf32>
    %cst_111 = arith.constant dense<0.000000e+00> : vector<8x64xf32>
    %529 = tpu.matmul %528, %491, %cst_111 {dimension_numbers = #tpu.dot_dimension_numbers<[1], [0], [0], [1], [0, 0, 1, 1], [], []>} : vector<8x16xf32>, vector<16x64xf32>, vector<8x64xf32> -> vector<8x64xf32>
    %530 = arith.addf %499, %529 : vector<8x64xf32>
    %531 = arith.negf %530 : vector<8x64xf32>
    %532 = math.exp %531 : vector<8x64xf32>
    %cst_112 = arith.constant 1.000000e+00 : f32
    %533 = vector.broadcast %cst_112 : f32 to vector<8x64xf32>
    %534 = arith.addf %533, %532 : vector<8x64xf32>
    %535 = arith.divf %533, %534 : vector<8x64xf32>
    %536 = math.tanh %530 : vector<8x64xf32>
    %537 = vector.extract_strided_slice %535 {offsets = [0, 0], sizes = [8, 16], strides = [1, 1]} : vector<8x64xf32> to vector<8x16xf32>
    %538 = vector.extract_strided_slice %535 {offsets = [0, 16], sizes = [8, 16], strides = [1, 1]} : vector<8x64xf32> to vector<8x16xf32>
    %539 = vector.extract_strided_slice %536 {offsets = [0, 32], sizes = [8, 16], strides = [1, 1]} : vector<8x64xf32> to vector<8x16xf32>
    %540 = vector.extract_strided_slice %535 {offsets = [0, 48], sizes = [8, 16], strides = [1, 1]} : vector<8x64xf32> to vector<8x16xf32>
    %541 = arith.mulf %538, %526 : vector<8x16xf32>
    %542 = arith.mulf %537, %539 : vector<8x16xf32>
    %543 = arith.addf %541, %542 : vector<8x16xf32>
    %544 = math.tanh %543 : vector<8x16xf32>
    %545 = arith.mulf %540, %544 : vector<8x16xf32>
    %cst_113 = arith.constant dense<0.000000e+00> : vector<8x64xf32>
    %546 = tpu.matmul %545, %491, %cst_113 {dimension_numbers = #tpu.dot_dimension_numbers<[1], [0], [0], [1], [0, 0, 1, 1], [], []>} : vector<8x16xf32>, vector<16x64xf32>, vector<8x64xf32> -> vector<8x64xf32>
    %547 = arith.addf %501, %546 : vector<8x64xf32>
    %548 = arith.negf %547 : vector<8x64xf32>
    %549 = math.exp %548 : vector<8x64xf32>
    %cst_114 = arith.constant 1.000000e+00 : f32
    %550 = vector.broadcast %cst_114 : f32 to vector<8x64xf32>
    %551 = arith.addf %550, %549 : vector<8x64xf32>
    %552 = arith.divf %550, %551 : vector<8x64xf32>
    %553 = math.tanh %547 : vector<8x64xf32>
    %554 = vector.extract_strided_slice %552 {offsets = [0, 0], sizes = [8, 16], strides = [1, 1]} : vector<8x64xf32> to vector<8x16xf32>
    %555 = vector.extract_strided_slice %552 {offsets = [0, 16], sizes = [8, 16], strides = [1, 1]} : vector<8x64xf32> to vector<8x16xf32>
    %556 = vector.extract_strided_slice %553 {offsets = [0, 32], sizes = [8, 16], strides = [1, 1]} : vector<8x64xf32> to vector<8x16xf32>
    %557 = vector.extract_strided_slice %552 {offsets = [0, 48], sizes = [8, 16], strides = [1, 1]} : vector<8x64xf32> to vector<8x16xf32>
    %558 = arith.mulf %555, %543 : vector<8x16xf32>
    %559 = arith.mulf %554, %556 : vector<8x16xf32>
    %560 = arith.addf %558, %559 : vector<8x16xf32>
    %561 = math.tanh %560 : vector<8x16xf32>
    %562 = arith.mulf %557, %561 : vector<8x16xf32>
    %cst_115 = arith.constant dense<0.000000e+00> : vector<8x64xf32>
    %563 = tpu.matmul %562, %491, %cst_115 {dimension_numbers = #tpu.dot_dimension_numbers<[1], [0], [0], [1], [0, 0, 1, 1], [], []>} : vector<8x16xf32>, vector<16x64xf32>, vector<8x64xf32> -> vector<8x64xf32>
    %564 = arith.addf %503, %563 : vector<8x64xf32>
    %565 = arith.negf %564 : vector<8x64xf32>
    %566 = math.exp %565 : vector<8x64xf32>
    %cst_116 = arith.constant 1.000000e+00 : f32
    %567 = vector.broadcast %cst_116 : f32 to vector<8x64xf32>
    %568 = arith.addf %567, %566 : vector<8x64xf32>
    %569 = arith.divf %567, %568 : vector<8x64xf32>
    %570 = math.tanh %564 : vector<8x64xf32>
    %571 = vector.extract_strided_slice %569 {offsets = [0, 0], sizes = [8, 16], strides = [1, 1]} : vector<8x64xf32> to vector<8x16xf32>
    %572 = vector.extract_strided_slice %569 {offsets = [0, 16], sizes = [8, 16], strides = [1, 1]} : vector<8x64xf32> to vector<8x16xf32>
    %573 = vector.extract_strided_slice %570 {offsets = [0, 32], sizes = [8, 16], strides = [1, 1]} : vector<8x64xf32> to vector<8x16xf32>
    %574 = vector.extract_strided_slice %569 {offsets = [0, 48], sizes = [8, 16], strides = [1, 1]} : vector<8x64xf32> to vector<8x16xf32>
    %575 = arith.mulf %572, %560 : vector<8x16xf32>
    %576 = arith.mulf %571, %573 : vector<8x16xf32>
    %577 = arith.addf %575, %576 : vector<8x16xf32>
    %578 = math.tanh %577 : vector<8x16xf32>
    %579 = arith.mulf %574, %578 : vector<8x16xf32>
    %cst_117 = arith.constant dense<0.000000e+00> : vector<8x64xf32>
    %580 = tpu.matmul %579, %491, %cst_117 {dimension_numbers = #tpu.dot_dimension_numbers<[1], [0], [0], [1], [0, 0, 1, 1], [], []>} : vector<8x16xf32>, vector<16x64xf32>, vector<8x64xf32> -> vector<8x64xf32>
    %581 = arith.addf %505, %580 : vector<8x64xf32>
    %582 = arith.negf %581 : vector<8x64xf32>
    %583 = math.exp %582 : vector<8x64xf32>
    %cst_118 = arith.constant 1.000000e+00 : f32
    %584 = vector.broadcast %cst_118 : f32 to vector<8x64xf32>
    %585 = arith.addf %584, %583 : vector<8x64xf32>
    %586 = arith.divf %584, %585 : vector<8x64xf32>
    %587 = math.tanh %581 : vector<8x64xf32>
    %588 = vector.extract_strided_slice %586 {offsets = [0, 0], sizes = [8, 16], strides = [1, 1]} : vector<8x64xf32> to vector<8x16xf32>
    %589 = vector.extract_strided_slice %586 {offsets = [0, 16], sizes = [8, 16], strides = [1, 1]} : vector<8x64xf32> to vector<8x16xf32>
    %590 = vector.extract_strided_slice %587 {offsets = [0, 32], sizes = [8, 16], strides = [1, 1]} : vector<8x64xf32> to vector<8x16xf32>
    %591 = vector.extract_strided_slice %586 {offsets = [0, 48], sizes = [8, 16], strides = [1, 1]} : vector<8x64xf32> to vector<8x16xf32>
    %592 = arith.mulf %589, %577 : vector<8x16xf32>
    %593 = arith.mulf %588, %590 : vector<8x16xf32>
    %594 = arith.addf %592, %593 : vector<8x16xf32>
    %595 = math.tanh %594 : vector<8x16xf32>
    %596 = arith.mulf %591, %595 : vector<8x16xf32>
    %cst_119 = arith.constant dense<0.000000e+00> : vector<8x64xf32>
    %597 = tpu.matmul %596, %491, %cst_119 {dimension_numbers = #tpu.dot_dimension_numbers<[1], [0], [0], [1], [0, 0, 1, 1], [], []>} : vector<8x16xf32>, vector<16x64xf32>, vector<8x64xf32> -> vector<8x64xf32>
    %598 = arith.addf %507, %597 : vector<8x64xf32>
    %599 = arith.negf %598 : vector<8x64xf32>
    %600 = math.exp %599 : vector<8x64xf32>
    %cst_120 = arith.constant 1.000000e+00 : f32
    %601 = vector.broadcast %cst_120 : f32 to vector<8x64xf32>
    %602 = arith.addf %601, %600 : vector<8x64xf32>
    %603 = arith.divf %601, %602 : vector<8x64xf32>
    %604 = math.tanh %598 : vector<8x64xf32>
    %605 = vector.extract_strided_slice %603 {offsets = [0, 0], sizes = [8, 16], strides = [1, 1]} : vector<8x64xf32> to vector<8x16xf32>
    %606 = vector.extract_strided_slice %603 {offsets = [0, 16], sizes = [8, 16], strides = [1, 1]} : vector<8x64xf32> to vector<8x16xf32>
    %607 = vector.extract_strided_slice %604 {offsets = [0, 32], sizes = [8, 16], strides = [1, 1]} : vector<8x64xf32> to vector<8x16xf32>
    %608 = vector.extract_strided_slice %603 {offsets = [0, 48], sizes = [8, 16], strides = [1, 1]} : vector<8x64xf32> to vector<8x16xf32>
    %609 = arith.mulf %606, %594 : vector<8x16xf32>
    %610 = arith.mulf %605, %607 : vector<8x16xf32>
    %611 = arith.addf %609, %610 : vector<8x16xf32>
    %612 = math.tanh %611 : vector<8x16xf32>
    %613 = arith.mulf %608, %612 : vector<8x16xf32>
    %cst_121 = arith.constant dense<0.000000e+00> : vector<8x64xf32>
    %614 = tpu.matmul %613, %491, %cst_121 {dimension_numbers = #tpu.dot_dimension_numbers<[1], [0], [0], [1], [0, 0, 1, 1], [], []>} : vector<8x16xf32>, vector<16x64xf32>, vector<8x64xf32> -> vector<8x64xf32>
    %615 = arith.addf %509, %614 : vector<8x64xf32>
    %616 = arith.negf %615 : vector<8x64xf32>
    %617 = math.exp %616 : vector<8x64xf32>
    %cst_122 = arith.constant 1.000000e+00 : f32
    %618 = vector.broadcast %cst_122 : f32 to vector<8x64xf32>
    %619 = arith.addf %618, %617 : vector<8x64xf32>
    %620 = arith.divf %618, %619 : vector<8x64xf32>
    %621 = math.tanh %615 : vector<8x64xf32>
    %622 = vector.extract_strided_slice %620 {offsets = [0, 0], sizes = [8, 16], strides = [1, 1]} : vector<8x64xf32> to vector<8x16xf32>
    %623 = vector.extract_strided_slice %620 {offsets = [0, 16], sizes = [8, 16], strides = [1, 1]} : vector<8x64xf32> to vector<8x16xf32>
    %624 = vector.extract_strided_slice %621 {offsets = [0, 32], sizes = [8, 16], strides = [1, 1]} : vector<8x64xf32> to vector<8x16xf32>
    %625 = vector.extract_strided_slice %620 {offsets = [0, 48], sizes = [8, 16], strides = [1, 1]} : vector<8x64xf32> to vector<8x16xf32>
    %626 = arith.mulf %623, %611 : vector<8x16xf32>
    %627 = arith.mulf %622, %624 : vector<8x16xf32>
    %628 = arith.addf %626, %627 : vector<8x16xf32>
    %629 = math.tanh %628 : vector<8x16xf32>
    %630 = arith.mulf %625, %629 : vector<8x16xf32>
    %cst_123 = arith.constant dense<0.000000e+00> : vector<8x64xf32>
    %631 = tpu.matmul %630, %491, %cst_123 {dimension_numbers = #tpu.dot_dimension_numbers<[1], [0], [0], [1], [0, 0, 1, 1], [], []>} : vector<8x16xf32>, vector<16x64xf32>, vector<8x64xf32> -> vector<8x64xf32>
    %632 = arith.addf %511, %631 : vector<8x64xf32>
    %633 = arith.negf %632 : vector<8x64xf32>
    %634 = math.exp %633 : vector<8x64xf32>
    %cst_124 = arith.constant 1.000000e+00 : f32
    %635 = vector.broadcast %cst_124 : f32 to vector<8x64xf32>
    %636 = arith.addf %635, %634 : vector<8x64xf32>
    %637 = arith.divf %635, %636 : vector<8x64xf32>
    %638 = math.tanh %632 : vector<8x64xf32>
    %639 = vector.extract_strided_slice %637 {offsets = [0, 0], sizes = [8, 16], strides = [1, 1]} : vector<8x64xf32> to vector<8x16xf32>
    %640 = vector.extract_strided_slice %637 {offsets = [0, 16], sizes = [8, 16], strides = [1, 1]} : vector<8x64xf32> to vector<8x16xf32>
    %641 = vector.extract_strided_slice %638 {offsets = [0, 32], sizes = [8, 16], strides = [1, 1]} : vector<8x64xf32> to vector<8x16xf32>
    %642 = vector.extract_strided_slice %637 {offsets = [0, 48], sizes = [8, 16], strides = [1, 1]} : vector<8x64xf32> to vector<8x16xf32>
    %643 = arith.mulf %640, %628 : vector<8x16xf32>
    %644 = arith.mulf %639, %641 : vector<8x16xf32>
    %645 = arith.addf %643, %644 : vector<8x16xf32>
    %646 = math.tanh %645 : vector<8x16xf32>
    %647 = arith.mulf %642, %646 : vector<8x16xf32>
    %c1_125 = arith.constant 1 : index
    %c0_126 = arith.constant 0 : index
    %c0_127 = arith.constant 0 : index
    %648 = vector.load %arg4[%c1_125, %c0_126, %c0_127] : memref<3x16x64xf32, #tpu.memory_space<vmem>>, vector<1x16x64xf32>
    %649 = vector.shape_cast %648 : vector<1x16x64xf32> to vector<16x64xf32>
    %c1_128 = arith.constant 1 : index
    %c0_129 = arith.constant 0 : index
    %c0_130 = arith.constant 0 : index
    %650 = vector.load %arg5[%c1_128, %c0_129, %c0_130] : memref<3x16x64xf32, #tpu.memory_space<vmem>>, vector<1x16x64xf32>
    %651 = vector.shape_cast %650 : vector<1x16x64xf32> to vector<16x64xf32>
    %c1_131 = arith.constant 1 : index
    %c0_132 = arith.constant 0 : index
    %c0_133 = arith.constant 0 : index
    %652 = vector.load %arg6[%c1_131, %c0_132, %c0_133] : memref<3x1x64xf32, #tpu.memory_space<vmem>>, vector<1x1x64xf32>
    %653 = vector.shape_cast %652 : vector<1x1x64xf32> to vector<1x64xf32>
    %654 = vector.shape_cast %653 : vector<1x64xf32> to vector<1x64xf32>
    %655 = vector.broadcast %654 : vector<1x64xf32> to vector<8x64xf32>
    %cst_134 = arith.constant dense<0.000000e+00> : vector<8x64xf32>
    %656 = tpu.matmul %528, %649, %cst_134 {dimension_numbers = #tpu.dot_dimension_numbers<[1], [0], [0], [1], [0, 0, 1, 1], [], []>} : vector<8x16xf32>, vector<16x64xf32>, vector<8x64xf32> -> vector<8x64xf32>
    %657 = arith.addf %656, %655 : vector<8x64xf32>
    %cst_135 = arith.constant dense<0.000000e+00> : vector<8x64xf32>
    %658 = tpu.matmul %545, %649, %cst_135 {dimension_numbers = #tpu.dot_dimension_numbers<[1], [0], [0], [1], [0, 0, 1, 1], [], []>} : vector<8x16xf32>, vector<16x64xf32>, vector<8x64xf32> -> vector<8x64xf32>
    %659 = arith.addf %658, %655 : vector<8x64xf32>
    %cst_136 = arith.constant dense<0.000000e+00> : vector<8x64xf32>
    %660 = tpu.matmul %562, %649, %cst_136 {dimension_numbers = #tpu.dot_dimension_numbers<[1], [0], [0], [1], [0, 0, 1, 1], [], []>} : vector<8x16xf32>, vector<16x64xf32>, vector<8x64xf32> -> vector<8x64xf32>
    %661 = arith.addf %660, %655 : vector<8x64xf32>
    %cst_137 = arith.constant dense<0.000000e+00> : vector<8x64xf32>
    %662 = tpu.matmul %579, %649, %cst_137 {dimension_numbers = #tpu.dot_dimension_numbers<[1], [0], [0], [1], [0, 0, 1, 1], [], []>} : vector<8x16xf32>, vector<16x64xf32>, vector<8x64xf32> -> vector<8x64xf32>
    %663 = arith.addf %662, %655 : vector<8x64xf32>
    %cst_138 = arith.constant dense<0.000000e+00> : vector<8x64xf32>
    %664 = tpu.matmul %596, %649, %cst_138 {dimension_numbers = #tpu.dot_dimension_numbers<[1], [0], [0], [1], [0, 0, 1, 1], [], []>} : vector<8x16xf32>, vector<16x64xf32>, vector<8x64xf32> -> vector<8x64xf32>
    %665 = arith.addf %664, %655 : vector<8x64xf32>
    %cst_139 = arith.constant dense<0.000000e+00> : vector<8x64xf32>
    %666 = tpu.matmul %613, %649, %cst_139 {dimension_numbers = #tpu.dot_dimension_numbers<[1], [0], [0], [1], [0, 0, 1, 1], [], []>} : vector<8x16xf32>, vector<16x64xf32>, vector<8x64xf32> -> vector<8x64xf32>
    %667 = arith.addf %666, %655 : vector<8x64xf32>
    %cst_140 = arith.constant dense<0.000000e+00> : vector<8x64xf32>
    %668 = tpu.matmul %630, %649, %cst_140 {dimension_numbers = #tpu.dot_dimension_numbers<[1], [0], [0], [1], [0, 0, 1, 1], [], []>} : vector<8x16xf32>, vector<16x64xf32>, vector<8x64xf32> -> vector<8x64xf32>
    %669 = arith.addf %668, %655 : vector<8x64xf32>
    %cst_141 = arith.constant dense<0.000000e+00> : vector<8x64xf32>
    %670 = tpu.matmul %647, %649, %cst_141 {dimension_numbers = #tpu.dot_dimension_numbers<[1], [0], [0], [1], [0, 0, 1, 1], [], []>} : vector<8x16xf32>, vector<16x64xf32>, vector<8x64xf32> -> vector<8x64xf32>
    %671 = arith.addf %670, %655 : vector<8x64xf32>
    %cst_142 = arith.constant dense<0.000000e+00> : vector<8x64xf32>
    %672 = tpu.matmul %327, %651, %cst_142 {dimension_numbers = #tpu.dot_dimension_numbers<[1], [0], [0], [1], [0, 0, 1, 1], [], []>} : vector<8x16xf32>, vector<16x64xf32>, vector<8x64xf32> -> vector<8x64xf32>
    %673 = arith.addf %657, %672 : vector<8x64xf32>
    %674 = arith.negf %673 : vector<8x64xf32>
    %675 = math.exp %674 : vector<8x64xf32>
    %cst_143 = arith.constant 1.000000e+00 : f32
    %676 = vector.broadcast %cst_143 : f32 to vector<8x64xf32>
    %677 = arith.addf %676, %675 : vector<8x64xf32>
    %678 = arith.divf %676, %677 : vector<8x64xf32>
    %679 = math.tanh %673 : vector<8x64xf32>
    %680 = vector.extract_strided_slice %678 {offsets = [0, 0], sizes = [8, 16], strides = [1, 1]} : vector<8x64xf32> to vector<8x16xf32>
    %681 = vector.extract_strided_slice %678 {offsets = [0, 16], sizes = [8, 16], strides = [1, 1]} : vector<8x64xf32> to vector<8x16xf32>
    %682 = vector.extract_strided_slice %679 {offsets = [0, 32], sizes = [8, 16], strides = [1, 1]} : vector<8x64xf32> to vector<8x16xf32>
    %683 = vector.extract_strided_slice %678 {offsets = [0, 48], sizes = [8, 16], strides = [1, 1]} : vector<8x64xf32> to vector<8x16xf32>
    %684 = arith.mulf %681, %325 : vector<8x16xf32>
    %685 = arith.mulf %680, %682 : vector<8x16xf32>
    %686 = arith.addf %684, %685 : vector<8x16xf32>
    %687 = math.tanh %686 : vector<8x16xf32>
    %688 = arith.mulf %683, %687 : vector<8x16xf32>
    %cst_144 = arith.constant dense<0.000000e+00> : vector<8x64xf32>
    %689 = tpu.matmul %688, %651, %cst_144 {dimension_numbers = #tpu.dot_dimension_numbers<[1], [0], [0], [1], [0, 0, 1, 1], [], []>} : vector<8x16xf32>, vector<16x64xf32>, vector<8x64xf32> -> vector<8x64xf32>
    %690 = arith.addf %659, %689 : vector<8x64xf32>
    %691 = arith.negf %690 : vector<8x64xf32>
    %692 = math.exp %691 : vector<8x64xf32>
    %cst_145 = arith.constant 1.000000e+00 : f32
    %693 = vector.broadcast %cst_145 : f32 to vector<8x64xf32>
    %694 = arith.addf %693, %692 : vector<8x64xf32>
    %695 = arith.divf %693, %694 : vector<8x64xf32>
    %696 = math.tanh %690 : vector<8x64xf32>
    %697 = vector.extract_strided_slice %695 {offsets = [0, 0], sizes = [8, 16], strides = [1, 1]} : vector<8x64xf32> to vector<8x16xf32>
    %698 = vector.extract_strided_slice %695 {offsets = [0, 16], sizes = [8, 16], strides = [1, 1]} : vector<8x64xf32> to vector<8x16xf32>
    %699 = vector.extract_strided_slice %696 {offsets = [0, 32], sizes = [8, 16], strides = [1, 1]} : vector<8x64xf32> to vector<8x16xf32>
    %700 = vector.extract_strided_slice %695 {offsets = [0, 48], sizes = [8, 16], strides = [1, 1]} : vector<8x64xf32> to vector<8x16xf32>
    %701 = arith.mulf %698, %686 : vector<8x16xf32>
    %702 = arith.mulf %697, %699 : vector<8x16xf32>
    %703 = arith.addf %701, %702 : vector<8x16xf32>
    %704 = math.tanh %703 : vector<8x16xf32>
    %705 = arith.mulf %700, %704 : vector<8x16xf32>
    %cst_146 = arith.constant dense<0.000000e+00> : vector<8x64xf32>
    %706 = tpu.matmul %705, %651, %cst_146 {dimension_numbers = #tpu.dot_dimension_numbers<[1], [0], [0], [1], [0, 0, 1, 1], [], []>} : vector<8x16xf32>, vector<16x64xf32>, vector<8x64xf32> -> vector<8x64xf32>
    %707 = arith.addf %661, %706 : vector<8x64xf32>
    %708 = arith.negf %707 : vector<8x64xf32>
    %709 = math.exp %708 : vector<8x64xf32>
    %cst_147 = arith.constant 1.000000e+00 : f32
    %710 = vector.broadcast %cst_147 : f32 to vector<8x64xf32>
    %711 = arith.addf %710, %709 : vector<8x64xf32>
    %712 = arith.divf %710, %711 : vector<8x64xf32>
    %713 = math.tanh %707 : vector<8x64xf32>
    %714 = vector.extract_strided_slice %712 {offsets = [0, 0], sizes = [8, 16], strides = [1, 1]} : vector<8x64xf32> to vector<8x16xf32>
    %715 = vector.extract_strided_slice %712 {offsets = [0, 16], sizes = [8, 16], strides = [1, 1]} : vector<8x64xf32> to vector<8x16xf32>
    %716 = vector.extract_strided_slice %713 {offsets = [0, 32], sizes = [8, 16], strides = [1, 1]} : vector<8x64xf32> to vector<8x16xf32>
    %717 = vector.extract_strided_slice %712 {offsets = [0, 48], sizes = [8, 16], strides = [1, 1]} : vector<8x64xf32> to vector<8x16xf32>
    %718 = arith.mulf %715, %703 : vector<8x16xf32>
    %719 = arith.mulf %714, %716 : vector<8x16xf32>
    %720 = arith.addf %718, %719 : vector<8x16xf32>
    %721 = math.tanh %720 : vector<8x16xf32>
    %722 = arith.mulf %717, %721 : vector<8x16xf32>
    %cst_148 = arith.constant dense<0.000000e+00> : vector<8x64xf32>
    %723 = tpu.matmul %722, %651, %cst_148 {dimension_numbers = #tpu.dot_dimension_numbers<[1], [0], [0], [1], [0, 0, 1, 1], [], []>} : vector<8x16xf32>, vector<16x64xf32>, vector<8x64xf32> -> vector<8x64xf32>
    %724 = arith.addf %663, %723 : vector<8x64xf32>
    %725 = arith.negf %724 : vector<8x64xf32>
    %726 = math.exp %725 : vector<8x64xf32>
    %cst_149 = arith.constant 1.000000e+00 : f32
    %727 = vector.broadcast %cst_149 : f32 to vector<8x64xf32>
    %728 = arith.addf %727, %726 : vector<8x64xf32>
    %729 = arith.divf %727, %728 : vector<8x64xf32>
    %730 = math.tanh %724 : vector<8x64xf32>
    %731 = vector.extract_strided_slice %729 {offsets = [0, 0], sizes = [8, 16], strides = [1, 1]} : vector<8x64xf32> to vector<8x16xf32>
    %732 = vector.extract_strided_slice %729 {offsets = [0, 16], sizes = [8, 16], strides = [1, 1]} : vector<8x64xf32> to vector<8x16xf32>
    %733 = vector.extract_strided_slice %730 {offsets = [0, 32], sizes = [8, 16], strides = [1, 1]} : vector<8x64xf32> to vector<8x16xf32>
    %734 = vector.extract_strided_slice %729 {offsets = [0, 48], sizes = [8, 16], strides = [1, 1]} : vector<8x64xf32> to vector<8x16xf32>
    %735 = arith.mulf %732, %720 : vector<8x16xf32>
    %736 = arith.mulf %731, %733 : vector<8x16xf32>
    %737 = arith.addf %735, %736 : vector<8x16xf32>
    %738 = math.tanh %737 : vector<8x16xf32>
    %739 = arith.mulf %734, %738 : vector<8x16xf32>
    %cst_150 = arith.constant dense<0.000000e+00> : vector<8x64xf32>
    %740 = tpu.matmul %739, %651, %cst_150 {dimension_numbers = #tpu.dot_dimension_numbers<[1], [0], [0], [1], [0, 0, 1, 1], [], []>} : vector<8x16xf32>, vector<16x64xf32>, vector<8x64xf32> -> vector<8x64xf32>
    %741 = arith.addf %665, %740 : vector<8x64xf32>
    %742 = arith.negf %741 : vector<8x64xf32>
    %743 = math.exp %742 : vector<8x64xf32>
    %cst_151 = arith.constant 1.000000e+00 : f32
    %744 = vector.broadcast %cst_151 : f32 to vector<8x64xf32>
    %745 = arith.addf %744, %743 : vector<8x64xf32>
    %746 = arith.divf %744, %745 : vector<8x64xf32>
    %747 = math.tanh %741 : vector<8x64xf32>
    %748 = vector.extract_strided_slice %746 {offsets = [0, 0], sizes = [8, 16], strides = [1, 1]} : vector<8x64xf32> to vector<8x16xf32>
    %749 = vector.extract_strided_slice %746 {offsets = [0, 16], sizes = [8, 16], strides = [1, 1]} : vector<8x64xf32> to vector<8x16xf32>
    %750 = vector.extract_strided_slice %747 {offsets = [0, 32], sizes = [8, 16], strides = [1, 1]} : vector<8x64xf32> to vector<8x16xf32>
    %751 = vector.extract_strided_slice %746 {offsets = [0, 48], sizes = [8, 16], strides = [1, 1]} : vector<8x64xf32> to vector<8x16xf32>
    %752 = arith.mulf %749, %737 : vector<8x16xf32>
    %753 = arith.mulf %748, %750 : vector<8x16xf32>
    %754 = arith.addf %752, %753 : vector<8x16xf32>
    %755 = math.tanh %754 : vector<8x16xf32>
    %756 = arith.mulf %751, %755 : vector<8x16xf32>
    %cst_152 = arith.constant dense<0.000000e+00> : vector<8x64xf32>
    %757 = tpu.matmul %756, %651, %cst_152 {dimension_numbers = #tpu.dot_dimension_numbers<[1], [0], [0], [1], [0, 0, 1, 1], [], []>} : vector<8x16xf32>, vector<16x64xf32>, vector<8x64xf32> -> vector<8x64xf32>
    %758 = arith.addf %667, %757 : vector<8x64xf32>
    %759 = arith.negf %758 : vector<8x64xf32>
    %760 = math.exp %759 : vector<8x64xf32>
    %cst_153 = arith.constant 1.000000e+00 : f32
    %761 = vector.broadcast %cst_153 : f32 to vector<8x64xf32>
    %762 = arith.addf %761, %760 : vector<8x64xf32>
    %763 = arith.divf %761, %762 : vector<8x64xf32>
    %764 = math.tanh %758 : vector<8x64xf32>
    %765 = vector.extract_strided_slice %763 {offsets = [0, 0], sizes = [8, 16], strides = [1, 1]} : vector<8x64xf32> to vector<8x16xf32>
    %766 = vector.extract_strided_slice %763 {offsets = [0, 16], sizes = [8, 16], strides = [1, 1]} : vector<8x64xf32> to vector<8x16xf32>
    %767 = vector.extract_strided_slice %764 {offsets = [0, 32], sizes = [8, 16], strides = [1, 1]} : vector<8x64xf32> to vector<8x16xf32>
    %768 = vector.extract_strided_slice %763 {offsets = [0, 48], sizes = [8, 16], strides = [1, 1]} : vector<8x64xf32> to vector<8x16xf32>
    %769 = arith.mulf %766, %754 : vector<8x16xf32>
    %770 = arith.mulf %765, %767 : vector<8x16xf32>
    %771 = arith.addf %769, %770 : vector<8x16xf32>
    %772 = math.tanh %771 : vector<8x16xf32>
    %773 = arith.mulf %768, %772 : vector<8x16xf32>
    %cst_154 = arith.constant dense<0.000000e+00> : vector<8x64xf32>
    %774 = tpu.matmul %773, %651, %cst_154 {dimension_numbers = #tpu.dot_dimension_numbers<[1], [0], [0], [1], [0, 0, 1, 1], [], []>} : vector<8x16xf32>, vector<16x64xf32>, vector<8x64xf32> -> vector<8x64xf32>
    %775 = arith.addf %669, %774 : vector<8x64xf32>
    %776 = arith.negf %775 : vector<8x64xf32>
    %777 = math.exp %776 : vector<8x64xf32>
    %cst_155 = arith.constant 1.000000e+00 : f32
    %778 = vector.broadcast %cst_155 : f32 to vector<8x64xf32>
    %779 = arith.addf %778, %777 : vector<8x64xf32>
    %780 = arith.divf %778, %779 : vector<8x64xf32>
    %781 = math.tanh %775 : vector<8x64xf32>
    %782 = vector.extract_strided_slice %780 {offsets = [0, 0], sizes = [8, 16], strides = [1, 1]} : vector<8x64xf32> to vector<8x16xf32>
    %783 = vector.extract_strided_slice %780 {offsets = [0, 16], sizes = [8, 16], strides = [1, 1]} : vector<8x64xf32> to vector<8x16xf32>
    %784 = vector.extract_strided_slice %781 {offsets = [0, 32], sizes = [8, 16], strides = [1, 1]} : vector<8x64xf32> to vector<8x16xf32>
    %785 = vector.extract_strided_slice %780 {offsets = [0, 48], sizes = [8, 16], strides = [1, 1]} : vector<8x64xf32> to vector<8x16xf32>
    %786 = arith.mulf %783, %771 : vector<8x16xf32>
    %787 = arith.mulf %782, %784 : vector<8x16xf32>
    %788 = arith.addf %786, %787 : vector<8x16xf32>
    %789 = math.tanh %788 : vector<8x16xf32>
    %790 = arith.mulf %785, %789 : vector<8x16xf32>
    %cst_156 = arith.constant dense<0.000000e+00> : vector<8x64xf32>
    %791 = tpu.matmul %790, %651, %cst_156 {dimension_numbers = #tpu.dot_dimension_numbers<[1], [0], [0], [1], [0, 0, 1, 1], [], []>} : vector<8x16xf32>, vector<16x64xf32>, vector<8x64xf32> -> vector<8x64xf32>
    %792 = arith.addf %671, %791 : vector<8x64xf32>
    %793 = arith.negf %792 : vector<8x64xf32>
    %794 = math.exp %793 : vector<8x64xf32>
    %cst_157 = arith.constant 1.000000e+00 : f32
    %795 = vector.broadcast %cst_157 : f32 to vector<8x64xf32>
    %796 = arith.addf %795, %794 : vector<8x64xf32>
    %797 = arith.divf %795, %796 : vector<8x64xf32>
    %798 = math.tanh %792 : vector<8x64xf32>
    %799 = vector.extract_strided_slice %797 {offsets = [0, 0], sizes = [8, 16], strides = [1, 1]} : vector<8x64xf32> to vector<8x16xf32>
    %800 = vector.extract_strided_slice %797 {offsets = [0, 16], sizes = [8, 16], strides = [1, 1]} : vector<8x64xf32> to vector<8x16xf32>
    %801 = vector.extract_strided_slice %798 {offsets = [0, 32], sizes = [8, 16], strides = [1, 1]} : vector<8x64xf32> to vector<8x16xf32>
    %802 = vector.extract_strided_slice %797 {offsets = [0, 48], sizes = [8, 16], strides = [1, 1]} : vector<8x64xf32> to vector<8x16xf32>
    %803 = arith.mulf %800, %788 : vector<8x16xf32>
    %804 = arith.mulf %799, %801 : vector<8x16xf32>
    %805 = arith.addf %803, %804 : vector<8x16xf32>
    %806 = math.tanh %805 : vector<8x16xf32>
    %807 = arith.mulf %802, %806 : vector<8x16xf32>
    %c2_158 = arith.constant 2 : index
    %c0_159 = arith.constant 0 : index
    %c0_160 = arith.constant 0 : index
    %808 = vector.load %arg4[%c2_158, %c0_159, %c0_160] : memref<3x16x64xf32, #tpu.memory_space<vmem>>, vector<1x16x64xf32>
    %809 = vector.shape_cast %808 : vector<1x16x64xf32> to vector<16x64xf32>
    %c2_161 = arith.constant 2 : index
    %c0_162 = arith.constant 0 : index
    %c0_163 = arith.constant 0 : index
    %810 = vector.load %arg5[%c2_161, %c0_162, %c0_163] : memref<3x16x64xf32, #tpu.memory_space<vmem>>, vector<1x16x64xf32>
    %811 = vector.shape_cast %810 : vector<1x16x64xf32> to vector<16x64xf32>
    %c2_164 = arith.constant 2 : index
    %c0_165 = arith.constant 0 : index
    %c0_166 = arith.constant 0 : index
    %812 = vector.load %arg6[%c2_164, %c0_165, %c0_166] : memref<3x1x64xf32, #tpu.memory_space<vmem>>, vector<1x1x64xf32>
    %813 = vector.shape_cast %812 : vector<1x1x64xf32> to vector<1x64xf32>
    %814 = vector.shape_cast %813 : vector<1x64xf32> to vector<1x64xf32>
    %815 = vector.broadcast %814 : vector<1x64xf32> to vector<8x64xf32>
    %cst_167 = arith.constant dense<0.000000e+00> : vector<8x64xf32>
    %816 = tpu.matmul %688, %809, %cst_167 {dimension_numbers = #tpu.dot_dimension_numbers<[1], [0], [0], [1], [0, 0, 1, 1], [], []>} : vector<8x16xf32>, vector<16x64xf32>, vector<8x64xf32> -> vector<8x64xf32>
    %817 = arith.addf %816, %815 : vector<8x64xf32>
    %cst_168 = arith.constant dense<0.000000e+00> : vector<8x64xf32>
    %818 = tpu.matmul %705, %809, %cst_168 {dimension_numbers = #tpu.dot_dimension_numbers<[1], [0], [0], [1], [0, 0, 1, 1], [], []>} : vector<8x16xf32>, vector<16x64xf32>, vector<8x64xf32> -> vector<8x64xf32>
    %819 = arith.addf %818, %815 : vector<8x64xf32>
    %cst_169 = arith.constant dense<0.000000e+00> : vector<8x64xf32>
    %820 = tpu.matmul %722, %809, %cst_169 {dimension_numbers = #tpu.dot_dimension_numbers<[1], [0], [0], [1], [0, 0, 1, 1], [], []>} : vector<8x16xf32>, vector<16x64xf32>, vector<8x64xf32> -> vector<8x64xf32>
    %821 = arith.addf %820, %815 : vector<8x64xf32>
    %cst_170 = arith.constant dense<0.000000e+00> : vector<8x64xf32>
    %822 = tpu.matmul %739, %809, %cst_170 {dimension_numbers = #tpu.dot_dimension_numbers<[1], [0], [0], [1], [0, 0, 1, 1], [], []>} : vector<8x16xf32>, vector<16x64xf32>, vector<8x64xf32> -> vector<8x64xf32>
    %823 = arith.addf %822, %815 : vector<8x64xf32>
    %cst_171 = arith.constant dense<0.000000e+00> : vector<8x64xf32>
    %824 = tpu.matmul %756, %809, %cst_171 {dimension_numbers = #tpu.dot_dimension_numbers<[1], [0], [0], [1], [0, 0, 1, 1], [], []>} : vector<8x16xf32>, vector<16x64xf32>, vector<8x64xf32> -> vector<8x64xf32>
    %825 = arith.addf %824, %815 : vector<8x64xf32>
    %cst_172 = arith.constant dense<0.000000e+00> : vector<8x64xf32>
    %826 = tpu.matmul %773, %809, %cst_172 {dimension_numbers = #tpu.dot_dimension_numbers<[1], [0], [0], [1], [0, 0, 1, 1], [], []>} : vector<8x16xf32>, vector<16x64xf32>, vector<8x64xf32> -> vector<8x64xf32>
    %827 = arith.addf %826, %815 : vector<8x64xf32>
    %cst_173 = arith.constant dense<0.000000e+00> : vector<8x64xf32>
    %828 = tpu.matmul %790, %809, %cst_173 {dimension_numbers = #tpu.dot_dimension_numbers<[1], [0], [0], [1], [0, 0, 1, 1], [], []>} : vector<8x16xf32>, vector<16x64xf32>, vector<8x64xf32> -> vector<8x64xf32>
    %829 = arith.addf %828, %815 : vector<8x64xf32>
    %cst_174 = arith.constant dense<0.000000e+00> : vector<8x64xf32>
    %830 = tpu.matmul %807, %809, %cst_174 {dimension_numbers = #tpu.dot_dimension_numbers<[1], [0], [0], [1], [0, 0, 1, 1], [], []>} : vector<8x16xf32>, vector<16x64xf32>, vector<8x64xf32> -> vector<8x64xf32>
    %831 = arith.addf %830, %815 : vector<8x64xf32>
    %cst_175 = arith.constant dense<0.000000e+00> : vector<8x64xf32>
    %832 = tpu.matmul %487, %811, %cst_175 {dimension_numbers = #tpu.dot_dimension_numbers<[1], [0], [0], [1], [0, 0, 1, 1], [], []>} : vector<8x16xf32>, vector<16x64xf32>, vector<8x64xf32> -> vector<8x64xf32>
    %833 = arith.addf %817, %832 : vector<8x64xf32>
    %834 = arith.negf %833 : vector<8x64xf32>
    %835 = math.exp %834 : vector<8x64xf32>
    %cst_176 = arith.constant 1.000000e+00 : f32
    %836 = vector.broadcast %cst_176 : f32 to vector<8x64xf32>
    %837 = arith.addf %836, %835 : vector<8x64xf32>
    %838 = arith.divf %836, %837 : vector<8x64xf32>
    %839 = math.tanh %833 : vector<8x64xf32>
    %840 = vector.extract_strided_slice %838 {offsets = [0, 0], sizes = [8, 16], strides = [1, 1]} : vector<8x64xf32> to vector<8x16xf32>
    %841 = vector.extract_strided_slice %838 {offsets = [0, 16], sizes = [8, 16], strides = [1, 1]} : vector<8x64xf32> to vector<8x16xf32>
    %842 = vector.extract_strided_slice %839 {offsets = [0, 32], sizes = [8, 16], strides = [1, 1]} : vector<8x64xf32> to vector<8x16xf32>
    %843 = vector.extract_strided_slice %838 {offsets = [0, 48], sizes = [8, 16], strides = [1, 1]} : vector<8x64xf32> to vector<8x16xf32>
    %844 = arith.mulf %841, %485 : vector<8x16xf32>
    %845 = arith.mulf %840, %842 : vector<8x16xf32>
    %846 = arith.addf %844, %845 : vector<8x16xf32>
    %847 = math.tanh %846 : vector<8x16xf32>
    %848 = arith.mulf %843, %847 : vector<8x16xf32>
    %cst_177 = arith.constant dense<0.000000e+00> : vector<8x64xf32>
    %849 = tpu.matmul %848, %811, %cst_177 {dimension_numbers = #tpu.dot_dimension_numbers<[1], [0], [0], [1], [0, 0, 1, 1], [], []>} : vector<8x16xf32>, vector<16x64xf32>, vector<8x64xf32> -> vector<8x64xf32>
    %850 = arith.addf %819, %849 : vector<8x64xf32>
    %851 = arith.negf %850 : vector<8x64xf32>
    %852 = math.exp %851 : vector<8x64xf32>
    %cst_178 = arith.constant 1.000000e+00 : f32
    %853 = vector.broadcast %cst_178 : f32 to vector<8x64xf32>
    %854 = arith.addf %853, %852 : vector<8x64xf32>
    %855 = arith.divf %853, %854 : vector<8x64xf32>
    %856 = math.tanh %850 : vector<8x64xf32>
    %857 = vector.extract_strided_slice %855 {offsets = [0, 0], sizes = [8, 16], strides = [1, 1]} : vector<8x64xf32> to vector<8x16xf32>
    %858 = vector.extract_strided_slice %855 {offsets = [0, 16], sizes = [8, 16], strides = [1, 1]} : vector<8x64xf32> to vector<8x16xf32>
    %859 = vector.extract_strided_slice %856 {offsets = [0, 32], sizes = [8, 16], strides = [1, 1]} : vector<8x64xf32> to vector<8x16xf32>
    %860 = vector.extract_strided_slice %855 {offsets = [0, 48], sizes = [8, 16], strides = [1, 1]} : vector<8x64xf32> to vector<8x16xf32>
    %861 = arith.mulf %858, %846 : vector<8x16xf32>
    %862 = arith.mulf %857, %859 : vector<8x16xf32>
    %863 = arith.addf %861, %862 : vector<8x16xf32>
    %864 = math.tanh %863 : vector<8x16xf32>
    %865 = arith.mulf %860, %864 : vector<8x16xf32>
    %cst_179 = arith.constant dense<0.000000e+00> : vector<8x64xf32>
    %866 = tpu.matmul %865, %811, %cst_179 {dimension_numbers = #tpu.dot_dimension_numbers<[1], [0], [0], [1], [0, 0, 1, 1], [], []>} : vector<8x16xf32>, vector<16x64xf32>, vector<8x64xf32> -> vector<8x64xf32>
    %867 = arith.addf %821, %866 : vector<8x64xf32>
    %868 = arith.negf %867 : vector<8x64xf32>
    %869 = math.exp %868 : vector<8x64xf32>
    %cst_180 = arith.constant 1.000000e+00 : f32
    %870 = vector.broadcast %cst_180 : f32 to vector<8x64xf32>
    %871 = arith.addf %870, %869 : vector<8x64xf32>
    %872 = arith.divf %870, %871 : vector<8x64xf32>
    %873 = math.tanh %867 : vector<8x64xf32>
    %874 = vector.extract_strided_slice %872 {offsets = [0, 0], sizes = [8, 16], strides = [1, 1]} : vector<8x64xf32> to vector<8x16xf32>
    %875 = vector.extract_strided_slice %872 {offsets = [0, 16], sizes = [8, 16], strides = [1, 1]} : vector<8x64xf32> to vector<8x16xf32>
    %876 = vector.extract_strided_slice %873 {offsets = [0, 32], sizes = [8, 16], strides = [1, 1]} : vector<8x64xf32> to vector<8x16xf32>
    %877 = vector.extract_strided_slice %872 {offsets = [0, 48], sizes = [8, 16], strides = [1, 1]} : vector<8x64xf32> to vector<8x16xf32>
    %878 = arith.mulf %875, %863 : vector<8x16xf32>
    %879 = arith.mulf %874, %876 : vector<8x16xf32>
    %880 = arith.addf %878, %879 : vector<8x16xf32>
    %881 = math.tanh %880 : vector<8x16xf32>
    %882 = arith.mulf %877, %881 : vector<8x16xf32>
    %cst_181 = arith.constant dense<0.000000e+00> : vector<8x64xf32>
    %883 = tpu.matmul %882, %811, %cst_181 {dimension_numbers = #tpu.dot_dimension_numbers<[1], [0], [0], [1], [0, 0, 1, 1], [], []>} : vector<8x16xf32>, vector<16x64xf32>, vector<8x64xf32> -> vector<8x64xf32>
    %884 = arith.addf %823, %883 : vector<8x64xf32>
    %885 = arith.negf %884 : vector<8x64xf32>
    %886 = math.exp %885 : vector<8x64xf32>
    %cst_182 = arith.constant 1.000000e+00 : f32
    %887 = vector.broadcast %cst_182 : f32 to vector<8x64xf32>
    %888 = arith.addf %887, %886 : vector<8x64xf32>
    %889 = arith.divf %887, %888 : vector<8x64xf32>
    %890 = math.tanh %884 : vector<8x64xf32>
    %891 = vector.extract_strided_slice %889 {offsets = [0, 0], sizes = [8, 16], strides = [1, 1]} : vector<8x64xf32> to vector<8x16xf32>
    %892 = vector.extract_strided_slice %889 {offsets = [0, 16], sizes = [8, 16], strides = [1, 1]} : vector<8x64xf32> to vector<8x16xf32>
    %893 = vector.extract_strided_slice %890 {offsets = [0, 32], sizes = [8, 16], strides = [1, 1]} : vector<8x64xf32> to vector<8x16xf32>
    %894 = vector.extract_strided_slice %889 {offsets = [0, 48], sizes = [8, 16], strides = [1, 1]} : vector<8x64xf32> to vector<8x16xf32>
    %895 = arith.mulf %892, %880 : vector<8x16xf32>
    %896 = arith.mulf %891, %893 : vector<8x16xf32>
    %897 = arith.addf %895, %896 : vector<8x16xf32>
    %898 = math.tanh %897 : vector<8x16xf32>
    %899 = arith.mulf %894, %898 : vector<8x16xf32>
    %cst_183 = arith.constant dense<0.000000e+00> : vector<8x64xf32>
    %900 = tpu.matmul %899, %811, %cst_183 {dimension_numbers = #tpu.dot_dimension_numbers<[1], [0], [0], [1], [0, 0, 1, 1], [], []>} : vector<8x16xf32>, vector<16x64xf32>, vector<8x64xf32> -> vector<8x64xf32>
    %901 = arith.addf %825, %900 : vector<8x64xf32>
    %902 = arith.negf %901 : vector<8x64xf32>
    %903 = math.exp %902 : vector<8x64xf32>
    %cst_184 = arith.constant 1.000000e+00 : f32
    %904 = vector.broadcast %cst_184 : f32 to vector<8x64xf32>
    %905 = arith.addf %904, %903 : vector<8x64xf32>
    %906 = arith.divf %904, %905 : vector<8x64xf32>
    %907 = math.tanh %901 : vector<8x64xf32>
    %908 = vector.extract_strided_slice %906 {offsets = [0, 0], sizes = [8, 16], strides = [1, 1]} : vector<8x64xf32> to vector<8x16xf32>
    %909 = vector.extract_strided_slice %906 {offsets = [0, 16], sizes = [8, 16], strides = [1, 1]} : vector<8x64xf32> to vector<8x16xf32>
    %910 = vector.extract_strided_slice %907 {offsets = [0, 32], sizes = [8, 16], strides = [1, 1]} : vector<8x64xf32> to vector<8x16xf32>
    %911 = vector.extract_strided_slice %906 {offsets = [0, 48], sizes = [8, 16], strides = [1, 1]} : vector<8x64xf32> to vector<8x16xf32>
    %912 = arith.mulf %909, %897 : vector<8x16xf32>
    %913 = arith.mulf %908, %910 : vector<8x16xf32>
    %914 = arith.addf %912, %913 : vector<8x16xf32>
    %915 = math.tanh %914 : vector<8x16xf32>
    %916 = arith.mulf %911, %915 : vector<8x16xf32>
    %cst_185 = arith.constant dense<0.000000e+00> : vector<8x64xf32>
    %917 = tpu.matmul %916, %811, %cst_185 {dimension_numbers = #tpu.dot_dimension_numbers<[1], [0], [0], [1], [0, 0, 1, 1], [], []>} : vector<8x16xf32>, vector<16x64xf32>, vector<8x64xf32> -> vector<8x64xf32>
    %918 = arith.addf %827, %917 : vector<8x64xf32>
    %919 = arith.negf %918 : vector<8x64xf32>
    %920 = math.exp %919 : vector<8x64xf32>
    %cst_186 = arith.constant 1.000000e+00 : f32
    %921 = vector.broadcast %cst_186 : f32 to vector<8x64xf32>
    %922 = arith.addf %921, %920 : vector<8x64xf32>
    %923 = arith.divf %921, %922 : vector<8x64xf32>
    %924 = math.tanh %918 : vector<8x64xf32>
    %925 = vector.extract_strided_slice %923 {offsets = [0, 0], sizes = [8, 16], strides = [1, 1]} : vector<8x64xf32> to vector<8x16xf32>
    %926 = vector.extract_strided_slice %923 {offsets = [0, 16], sizes = [8, 16], strides = [1, 1]} : vector<8x64xf32> to vector<8x16xf32>
    %927 = vector.extract_strided_slice %924 {offsets = [0, 32], sizes = [8, 16], strides = [1, 1]} : vector<8x64xf32> to vector<8x16xf32>
    %928 = vector.extract_strided_slice %923 {offsets = [0, 48], sizes = [8, 16], strides = [1, 1]} : vector<8x64xf32> to vector<8x16xf32>
    %929 = arith.mulf %926, %914 : vector<8x16xf32>
    %930 = arith.mulf %925, %927 : vector<8x16xf32>
    %931 = arith.addf %929, %930 : vector<8x16xf32>
    %932 = math.tanh %931 : vector<8x16xf32>
    %933 = arith.mulf %928, %932 : vector<8x16xf32>
    %cst_187 = arith.constant dense<0.000000e+00> : vector<8x64xf32>
    %934 = tpu.matmul %933, %811, %cst_187 {dimension_numbers = #tpu.dot_dimension_numbers<[1], [0], [0], [1], [0, 0, 1, 1], [], []>} : vector<8x16xf32>, vector<16x64xf32>, vector<8x64xf32> -> vector<8x64xf32>
    %935 = arith.addf %829, %934 : vector<8x64xf32>
    %936 = arith.negf %935 : vector<8x64xf32>
    %937 = math.exp %936 : vector<8x64xf32>
    %cst_188 = arith.constant 1.000000e+00 : f32
    %938 = vector.broadcast %cst_188 : f32 to vector<8x64xf32>
    %939 = arith.addf %938, %937 : vector<8x64xf32>
    %940 = arith.divf %938, %939 : vector<8x64xf32>
    %941 = math.tanh %935 : vector<8x64xf32>
    %942 = vector.extract_strided_slice %940 {offsets = [0, 0], sizes = [8, 16], strides = [1, 1]} : vector<8x64xf32> to vector<8x16xf32>
    %943 = vector.extract_strided_slice %940 {offsets = [0, 16], sizes = [8, 16], strides = [1, 1]} : vector<8x64xf32> to vector<8x16xf32>
    %944 = vector.extract_strided_slice %941 {offsets = [0, 32], sizes = [8, 16], strides = [1, 1]} : vector<8x64xf32> to vector<8x16xf32>
    %945 = vector.extract_strided_slice %940 {offsets = [0, 48], sizes = [8, 16], strides = [1, 1]} : vector<8x64xf32> to vector<8x16xf32>
    %946 = arith.mulf %943, %931 : vector<8x16xf32>
    %947 = arith.mulf %942, %944 : vector<8x16xf32>
    %948 = arith.addf %946, %947 : vector<8x16xf32>
    %949 = math.tanh %948 : vector<8x16xf32>
    %950 = arith.mulf %945, %949 : vector<8x16xf32>
    %cst_189 = arith.constant dense<0.000000e+00> : vector<8x64xf32>
    %951 = tpu.matmul %950, %811, %cst_189 {dimension_numbers = #tpu.dot_dimension_numbers<[1], [0], [0], [1], [0, 0, 1, 1], [], []>} : vector<8x16xf32>, vector<16x64xf32>, vector<8x64xf32> -> vector<8x64xf32>
    %952 = arith.addf %831, %951 : vector<8x64xf32>
    %953 = arith.negf %952 : vector<8x64xf32>
    %954 = math.exp %953 : vector<8x64xf32>
    %cst_190 = arith.constant 1.000000e+00 : f32
    %955 = vector.broadcast %cst_190 : f32 to vector<8x64xf32>
    %956 = arith.addf %955, %954 : vector<8x64xf32>
    %957 = arith.divf %955, %956 : vector<8x64xf32>
    %958 = math.tanh %952 : vector<8x64xf32>
    %959 = vector.extract_strided_slice %957 {offsets = [0, 0], sizes = [8, 16], strides = [1, 1]} : vector<8x64xf32> to vector<8x16xf32>
    %960 = vector.extract_strided_slice %957 {offsets = [0, 16], sizes = [8, 16], strides = [1, 1]} : vector<8x64xf32> to vector<8x16xf32>
    %961 = vector.extract_strided_slice %958 {offsets = [0, 32], sizes = [8, 16], strides = [1, 1]} : vector<8x64xf32> to vector<8x16xf32>
    %962 = vector.extract_strided_slice %957 {offsets = [0, 48], sizes = [8, 16], strides = [1, 1]} : vector<8x64xf32> to vector<8x16xf32>
    %963 = arith.mulf %960, %948 : vector<8x16xf32>
    %964 = arith.mulf %959, %961 : vector<8x16xf32>
    %965 = arith.addf %963, %964 : vector<8x16xf32>
    %966 = math.tanh %965 : vector<8x16xf32>
    %967 = arith.mulf %962, %966 : vector<8x16xf32>
    %968 = arith.addf %967, %2 : vector<8x16xf32>
    %c0_191 = arith.constant 0 : index
    %c0_192 = arith.constant 0 : index
    %969 = vector.load %arg7[%c0_191, %c0_192] : memref<16x8xf32, #tpu.memory_space<vmem>>, vector<16x8xf32>
    %cst_193 = arith.constant dense<0.000000e+00> : vector<8x8xf32>
    %970 = tpu.matmul %968, %969, %cst_193 {dimension_numbers = #tpu.dot_dimension_numbers<[1], [0], [0], [1], [0, 0, 1, 1], [], []>} : vector<8x16xf32>, vector<16x8xf32>, vector<8x8xf32> -> vector<8x8xf32>
    %c0_194 = arith.constant 0 : index
    %c0_195 = arith.constant 0 : index
    %971 = vector.load %arg8[%c0_194, %c0_195] : memref<1x8xf32, #tpu.memory_space<vmem>>, vector<1x8xf32>
    %972 = vector.broadcast %971 : vector<1x8xf32> to vector<8x8xf32>
    %973 = arith.addf %970, %972 : vector<8x8xf32>
    %974 = arith.negf %973 : vector<8x8xf32>
    %975 = math.exp %974 : vector<8x8xf32>
    %cst_196 = arith.constant 1.000000e+00 : f32
    %976 = vector.broadcast %cst_196 : f32 to vector<8x8xf32>
    %977 = arith.addf %976, %975 : vector<8x8xf32>
    %978 = arith.divf %976, %977 : vector<8x8xf32>
    %979 = arith.mulf %973, %978 : vector<8x8xf32>
    %c0_197 = arith.constant 0 : index
    %c0_198 = arith.constant 0 : index
    %980 = vector.load %arg9[%c0_197, %c0_198] : memref<8x2xf32, #tpu.memory_space<vmem>>, vector<8x2xf32>
    %cst_199 = arith.constant dense<0.000000e+00> : vector<8x2xf32>
    %981 = tpu.matmul %979, %980, %cst_199 {dimension_numbers = #tpu.dot_dimension_numbers<[1], [0], [0], [1], [0, 0, 1, 1], [], []>} : vector<8x8xf32>, vector<8x2xf32>, vector<8x2xf32> -> vector<8x2xf32>
    %c0_200 = arith.constant 0 : index
    %c0_201 = arith.constant 0 : index
    %982 = vector.load %arg10[%c0_200, %c0_201] : memref<1x2xf32, #tpu.memory_space<vmem>>, vector<1x2xf32>
    %983 = vector.broadcast %982 : vector<1x2xf32> to vector<8x2xf32>
    %984 = arith.addf %981, %983 : vector<8x2xf32>
    %c0_202 = arith.constant 0 : index
    %c0_203 = arith.constant 0 : index
    %985 = vector.load %arg11[%c0_202, %c0_203] : memref<8x2xf32, #tpu.memory_space<vmem>>, vector<8x2xf32>
    tpu.vector_store %arg11[%c0_202, %c0_203], %984 {strides = array<i32>} : memref<8x2xf32, #tpu.memory_space<vmem>>, vector<8x2xf32>,
    return
  }
}

</mosaic_0001>

<llo_original>
// kernel: forecast_pnn_forward.1
$region0: #{forecast_pnn_forward.1}
  #allocation0 [shape = 'u32[]', space=smem, size = 0x4, offset = 0x4, fixed_abs, tag = 'smem constant byte address 0x4 - core index']
  #allocation1 [shape = 'u32[72,128]{1,0:T(1,128)}', space=vmem, size = 0x9000, scoped, tag = 'internal scratch']
  %s0 = inlined_call_operand.hbm [shape: f32[8,8,16], index: 0, kind: input, shape index: {}]
  %s1 = inlined_call_operand.hbm [shape: f32[3,16,64], index: 1, kind: input, shape index: {}]
  %s2 = inlined_call_operand.hbm [shape: f32[3,16,64], index: 2, kind: input, shape index: {}]
  %s3 = inlined_call_operand.vmem [shape: f32[3,1,64], index: 3, kind: input, shape index: {}]
  %s4 = inlined_call_operand.hbm [shape: f32[3,16,64], index: 4, kind: input, shape index: {}]
  %s5 = inlined_call_operand.hbm [shape: f32[3,16,64], index: 5, kind: input, shape index: {}]
  %s6 = inlined_call_operand.vmem [shape: f32[3,1,64], index: 6, kind: input, shape index: {}]
  %s7 = inlined_call_operand.vmem [shape: f32[16,8], index: 7, kind: input, shape index: {}]
  %s8 = inlined_call_operand.vmem [shape: f32[1,8], index: 8, kind: input, shape index: {}]
  %s9 = inlined_call_operand.vmem [shape: f32[8,2], index: 9, kind: input, shape index: {}]
  %s10 = inlined_call_operand.vmem [shape: f32[1,2], index: 10, kind: input, shape index: {}]
  %s11 = inlined_call_operand.vmem [shape: f32[8,2], index: 11, kind: output, shape index: {}]
  %s12 = sld [smem:[#allocation0]]
  $region74: #{forecast_pnn_forward.1} parent=0
    _
  %s14 = ssub.s32 1, %s12
  %s15 = scalar_select 0, %s14, %s12
  $region1: #{forecast_pnn_forward.1} parent=0
    #allocation2 [shape = 'u8[32768]{0}', space=vmem, size = 0x8000, scoped, tag = 'input window, operand 0, single buffered']
    #allocation3 [shape = 's32[1]{0}', space=sflag, size = 0x4, scoped, tag = 'scoped memory for forecast_pnn_forward.1']
    #allocation4 [shape = 'u8[24576]{0}', space=vmem, size = 0x6000, scoped, tag = 'input window, operand 1, single buffered']
    #allocation5 [shape = 's32[1]{0}', space=sflag, size = 0x4, scoped, tag = 'scoped memory for forecast_pnn_forward.1']
    #allocation6 [shape = 'u8[24576]{0}', space=vmem, size = 0x6000, scoped, tag = 'input window, operand 2, single buffered']
    #allocation7 [shape = 'u8[24576]{0}', space=vmem, size = 0x6000, scoped, tag = 'input window, operand 4, single buffered']
    #allocation8 [shape = 's32[1]{0}', space=sflag, size = 0x4, scoped, tag = 'scoped memory for forecast_pnn_forward.1']
    #allocation9 [shape = 'u8[24576]{0}', space=vmem, size = 0x6000, scoped, tag = 'input window, operand 5, single buffered']
    %16 = vsyncpa [#allocation3], 0
    %17 = vsyncpa [#allocation5], 0
    %18 = vsyncpa [#allocation8], 0
    // Predicated region
    $region2: #{forecast_pnn_forward.1} parent=1 // pred_check
      _
    $region3: #{forecast_pnn_forward.1} parent=1 // pred_check_branch
      %20 = sbr.rel (0) target = $region5
    $region4: #{forecast_pnn_forward.1} parent=1 // pred_region
      %22 = vsyncadd [#allocation3], 0
      %s23 = sshll.u32 %s0, 4
      %s24 = int_to_ptr.hbm [resolvable:$true] %s23
      %s25 = sshll.u32 [#allocation2], 4
      %s26 = int_to_ptr.vmem [resolvable:$true] %s25
      %31 = dma.hbm_to_vmem [thread:$0]  %s24, 1024, %s26, [#allocation3], 128, 128, 8
    $region5: #{forecast_pnn_forward.1} parent=1 // pred_fallthru
      _
    // Predicated region
    $region6: #{forecast_pnn_forward.1} parent=1 // pred_check
      _
    $region7: #{forecast_pnn_forward.1} parent=1 // pred_check_branch
      %33 = sbr.rel (0) target = $region9
    $region8: #{forecast_pnn_forward.1} parent=1 // pred_region
      %35 = vsyncadd [#allocation5], 0
      %s36 = sshll.u32 %s1, 4
      %s37 = int_to_ptr.hbm [resolvable:$true] %s36
      %s38 = sshll.u32 [#allocation4], 4
      %s39 = int_to_ptr.vmem [resolvable:$true] %s38
      %44 = dma.hbm_to_vmem [thread:$0]  %s37, 768, %s39, [#allocation5], 128, 128, 8
    $region9: #{forecast_pnn_forward.1} parent=1 // pred_fallthru
      _
    // Predicated region
    $region10: #{forecast_pnn_forward.1} parent=1 // pred_check
      _
    $region11: #{forecast_pnn_forward.1} parent=1 // pred_check_branch
      %46 = sbr.rel (0) target = $region13
    $region12: #{forecast_pnn_forward.1} parent=1 // pred_region
      %48 = vsyncadd [#allocation5], 0
      %s49 = sshll.u32 %s2, 4
      %s50 = int_to_ptr.hbm [resolvable:$true] %s49
      %s51 = sshll.u32 [#allocation6], 4
      %s52 = int_to_ptr.vmem [resolvable:$true] %s51
      %57 = dma.hbm_to_vmem [thread:$0]  %s50, 768, %s52, [#allocation5], 128, 128, 8
    $region13: #{forecast_pnn_forward.1} parent=1 // pred_fallthru
      _
    // Predicated region
    $region14: #{forecast_pnn_forward.1} parent=1 // pred_check
      _
    $region15: #{forecast_pnn_forward.1} parent=1 // pred_check_branch
      %59 = sbr.rel (0) target = $region17
    $region16: #{forecast_pnn_forward.1} parent=1 // pred_region
      _
    $region17: #{forecast_pnn_forward.1} parent=1 // pred_fallthru
      _
    // Predicated region
    $region18: #{forecast_pnn_forward.1} parent=1 // pred_check
      _
    $region19: #{forecast_pnn_forward.1} parent=1 // pred_check_branch
      %61 = sbr.rel (0) target = $region21
    $region20: #{forecast_pnn_forward.1} parent=1 // pred_region
      %63 = vsyncadd [#allocation8], 0
      %s64 = sshll.u32 %s4, 4
      %s65 = int_to_ptr.hbm [resolvable:$true] %s64
      %s66 = sshll.u32 [#allocation7], 4
      %s67 = int_to_ptr.vmem [resolvable:$true] %s66
      %72 = dma.hbm_to_vmem [thread:$0]  %s65, 768, %s67, [#allocation8], 128, 128, 8
    $region21: #{forecast_pnn_forward.1} parent=1 // pred_fallthru
      _
    // Predicated region
    $region22: #{forecast_pnn_forward.1} parent=1 // pred_check
      _
    $region23: #{forecast_pnn_forward.1} parent=1 // pred_check_branch
      %74 = sbr.rel (0) target = $region25
    $region24: #{forecast_pnn_forward.1} parent=1 // pred_region
      %76 = vsyncadd [#allocation8], 0
      %s77 = sshll.u32 %s5, 4
      %s78 = int_to_ptr.hbm [resolvable:$true] %s77
      %s79 = sshll.u32 [#allocation9], 4
      %s80 = int_to_ptr.vmem [resolvable:$true] %s79
      %85 = dma.hbm_to_vmem [thread:$0]  %s78, 768, %s80, [#allocation8], 128, 128, 8
    $region25: #{forecast_pnn_forward.1} parent=1 // pred_fallthru
      _
    // Predicated region
    $region26: #{forecast_pnn_forward.1} parent=1 // pred_check
      _
    $region27: #{forecast_pnn_forward.1} parent=1 // pred_check_branch
      %87 = sbr.rel (0) target = $region29
    $region28: #{forecast_pnn_forward.1} parent=1 // pred_region
      _
    $region29: #{forecast_pnn_forward.1} parent=1 // pred_fallthru
      _
    // Predicated region
    $region30: #{forecast_pnn_forward.1} parent=1 // pred_check
      _
    $region31: #{forecast_pnn_forward.1} parent=1 // pred_check_branch
      %89 = sbr.rel (0) target = $region33
    $region32: #{forecast_pnn_forward.1} parent=1 // pred_region
      _
    $region33: #{forecast_pnn_forward.1} parent=1 // pred_fallthru
      _
    // Predicated region
    $region34: #{forecast_pnn_forward.1} parent=1 // pred_check
      _
    $region35: #{forecast_pnn_forward.1} parent=1 // pred_check_branch
      %91 = sbr.rel (0) target = $region37
    $region36: #{forecast_pnn_forward.1} parent=1 // pred_region
      _
    $region37: #{forecast_pnn_forward.1} parent=1 // pred_fallthru
      _
    // Predicated region
    $region38: #{forecast_pnn_forward.1} parent=1 // pred_check
      _
    $region39: #{forecast_pnn_forward.1} parent=1 // pred_check_branch
      %93 = sbr.rel (0) target = $region41
    $region40: #{forecast_pnn_forward.1} parent=1 // pred_region
      _
    $region41: #{forecast_pnn_forward.1} parent=1 // pred_fallthru
      _
    // Predicated region
    $region42: #{forecast_pnn_forward.1} parent=1 // pred_check
      _
    $region43: #{forecast_pnn_forward.1} parent=1 // pred_check_branch
      %95 = sbr.rel (0) target = $region45
    $region44: #{forecast_pnn_forward.1} parent=1 // pred_region
      _
    $region45: #{forecast_pnn_forward.1} parent=1 // pred_fallthru
      _
    // Predicated region
    $region46: #{forecast_pnn_forward.1} parent=1 // pred_check
      _
    $region47: #{forecast_pnn_forward.1} parent=1 // pred_check_branch
      %97 = sbr.rel (0) target = $region49
    $region48: #{forecast_pnn_forward.1} parent=1 // pred_region
      %99 = dma.done [#allocation3], 1024
    $region49: #{forecast_pnn_forward.1} parent=1 // pred_fallthru
      _
    // Predicated region
    $region50: #{forecast_pnn_forward.1} parent=1 // pred_check
      _
    $region51: #{forecast_pnn_forward.1} parent=1 // pred_check_branch
      %101 = sbr.rel (0) target = $region53
    $region52: #{forecast_pnn_forward.1} parent=1 // pred_region
      %103 = dma.done [#allocation5], 768
    $region53: #{forecast_pnn_forward.1} parent=1 // pred_fallthru
      _
    // Predicated region
    $region54: #{forecast_pnn_forward.1} parent=1 // pred_check
      _
    $region55: #{forecast_pnn_forward.1} parent=1 // pred_check_branch
      %105 = sbr.rel (0) target = $region57
    $region56: #{forecast_pnn_forward.1} parent=1 // pred_region
      %107 = dma.done [#allocation5], 768
    $region57: #{forecast_pnn_forward.1} parent=1 // pred_fallthru
      _
    // Predicated region
    $region58: #{forecast_pnn_forward.1} parent=1 // pred_check
      _
    $region59: #{forecast_pnn_forward.1} parent=1 // pred_check_branch
      %109 = sbr.rel (0) target = $region61
    $region60: #{forecast_pnn_forward.1} parent=1 // pred_region
      %111 = dma.done [#allocation8], 768
    $region61: #{forecast_pnn_forward.1} parent=1 // pred_fallthru
      _
    // Predicated region
    $region62: #{forecast_pnn_forward.1} parent=1 // pred_check
      _
    $region63: #{forecast_pnn_forward.1} parent=1 // pred_check_branch
      %113 = sbr.rel (0) target = $region65
    $region64: #{forecast_pnn_forward.1} parent=1 // pred_region
      %115 = dma.done [#allocation8], 768
    $region65: #{forecast_pnn_forward.1} parent=1 // pred_fallthru
      _
    %v116 = vld [vmem:[#allocation2] sm:$0xff]
    %v117 = vld [vmem:[#allocation2 + $0x8] sm:$0xff]
    %v118 = vld [vmem:[#allocation2 + $0x10] sm:$0xff]
    %v119 = vld [vmem:[#allocation2 + $0x18] sm:$0xff]
    %v120 = vld [vmem:[#allocation2 + $0x20] sm:$0xff]
    %v121 = vld [vmem:[#allocation2 + $0x28] sm:$0xff]
    %v122 = vld [vmem:[#allocation2 + $0x30] sm:$0xff]
    %v123 = vld [vmem:[#allocation2 + $0x38] sm:$0xff]
    %v124 = vld [vmem:[#allocation4] sm:$0xff]
    %v125 = vld [vmem:[#allocation4 + $0x8] sm:$0xff]
    %v126 = vld [vmem:[#allocation6] sm:$0xff]
    %v127 = vld [vmem:[#allocation6 + $0x8] sm:$0xff]
    %v128 = vld [vmem:[%s3] sm:$0x1]
    %v130 = vperm.slane %v128, 0
    %vm132 = vcmask 130048
    %v134 = vsel %vm132, %v116, 0
    %v137 = vsel %vm132, %v117, 0
    %v140 = vsel %vm132, %v118, 0
    %v143 = vsel %vm132, %v119, 0
    %v146 = vsel %vm132, %v120, 0
    %v149 = vsel %vm132, %v121, 0
    %v152 = vsel %vm132, %v122, 0
    %v155 = vsel %vm132, %v123, 0
    %157 = vmatpush.msra.mxu0 0.0
    %158 = vmatpush.msra.mxu0 0.0
    %159 = vmatpush.msra.mxu0 0.0
    %160 = vmatpush.msra.mxu0 0.0
    %161 = vmatpush.msra.mxu0 0.0
    %162 = vmatpush.msra.mxu0 0.0
    %163 = vmatpush.msra.mxu0 0.0
    %164 = vmatpush.msra.mxu0 0.0
    %165 = vmatpush.msra.mxu0 0.0
    %166 = vmatpush.msra.mxu0 0.0
    %167 = vmatpush.msra.mxu0 0.0
    %168 = vmatpush.msra.mxu0 0.0
    %169 = vmatpush.msra.mxu0 0.0
    %170 = vmatpush.msra.mxu0 0.0
    %171 = vmatpush.msra.mxu0 %v125
    %172 = vmatpush.msra.mxu0 %v124
    %173 = vmatmul.f32.gmra.mxu0 %v134
    %v174 = vpop.f32.mrf.mxu0
    %v175 = vadd.f32 %v130, %v174
    %176 = vmatmul.f32.gmra.mxu0 %v137
    %v177 = vpop.f32.mrf.mxu0
    %v178 = vadd.f32 %v130, %v177
    %179 = vmatmul.f32.gmra.mxu0 %v140
    %v180 = vpop.f32.mrf.mxu0
    %v181 = vadd.f32 %v130, %v180
    %182 = vmatmul.f32.gmra.mxu0 %v143
    %v183 = vpop.f32.mrf.mxu0
    %v184 = vadd.f32 %v130, %v183
    %185 = vmatmul.f32.gmra.mxu0 %v146
    %v186 = vpop.f32.mrf.mxu0
    %v187 = vadd.f32 %v130, %v186
    %188 = vmatmul.f32.gmra.mxu0 %v149
    %v189 = vpop.f32.mrf.mxu0
    %v190 = vadd.f32 %v130, %v189
    %191 = vmatmul.f32.gmra.mxu0 %v152
    %v192 = vpop.f32.mrf.mxu0
    %v193 = vadd.f32 %v130, %v192
    %194 = vmatmul.f32.gmra.mxu0 %v155
    %v195 = vpop.f32.mrf.mxu0
    %v196 = vadd.f32 %v130, %v195
    %197 = vdwg.mxu0
    %v199 = vsel %vm132, 0.0, 0
    %201 = vmatpush.msra.mxu0 0.0
    %202 = vmatpush.msra.mxu0 0.0
    %203 = vmatpush.msra.mxu0 0.0
    %204 = vmatpush.msra.mxu0 0.0
    %205 = vmatpush.msra.mxu0 0.0
    %206 = vmatpush.msra.mxu0 0.0
    %207 = vmatpush.msra.mxu0 0.0
    %208 = vmatpush.msra.mxu0 0.0
    %209 = vmatpush.msra.mxu0 0.0
    %210 = vmatpush.msra.mxu0 0.0
    %211 = vmatpush.msra.mxu0 0.0
    %212 = vmatpush.msra.mxu0 0.0
    %213 = vmatpush.msra.mxu0 0.0
    %214 = vmatpush.msra.mxu0 0.0
    %215 = vmatpush.msra.mxu0 %v127
    %216 = vmatpush.msra.mxu0 %v126
    %217 = vmatmul.f32.gmra.mxu0 %v199
    %v218 = vpop.f32.mrf.mxu0
    %v219 = vadd.f32 0.0, %v218
    %220 = vdwg.mxu0
    %v222 = vrot.slane %v219, 1
    %v223 = vrot.slane %v219, 2
    %v224 = vrot.slane %v219, 3
    %v225 = vrot.slane %v219, 4
    %v226 = vrot.slane %v219, 5
    %v227 = vrot.slane %v219, 6
    %v228 = vrot.slane %v219, 7
    %v237 = vadd.f32 %v175, %v219
    %v238 = vadd.f32 %v178, %v222
    %v239 = vadd.f32 %v181, %v223
    %v240 = vadd.f32 %v184, %v224
    %v241 = vadd.f32 %v187, %v225
    %v242 = vadd.f32 %v190, %v226
    %v243 = vadd.f32 %v193, %v227
    %v244 = vadd.f32 %v196, %v228
    %v245 = vxor.u32 %v237, 2147483648
    %v246 = vxor.u32 %v238, 2147483648
    %v247 = vxor.u32 %v239, 2147483648
    %v248 = vxor.u32 %v240, 2147483648
    %v249 = vxor.u32 %v241, 2147483648
    %v250 = vxor.u32 %v242, 2147483648
    %v251 = vxor.u32 %v243, 2147483648
    %v252 = vxor.u32 %v244, 2147483648
    %v253 = vmul.f32 %v245, 1.442695
    %v254 = vpow.pop %v253
    %v255 = vmul.f32 %v246, 1.442695
    %v256 = vpow.pop %v255
    %v257 = vmul.f32 %v247, 1.442695
    %v258 = vpow.pop %v257
    %v259 = vmul.f32 %v248, 1.442695
    %v260 = vpow.pop %v259
    %v261 = vmul.f32 %v249, 1.442695
    %v262 = vpow.pop %v261
    %v263 = vmul.f32 %v250, 1.442695
    %v264 = vpow.pop %v263
    %v265 = vmul.f32 %v251, 1.442695
    %v266 = vpow.pop %v265
    %v267 = vmul.f32 %v252, 1.442695
    %v268 = vpow.pop %v267
    %v269 = vadd.f32 %v254, 1.0
    %v270 = vadd.f32 %v256, 1.0
    %v271 = vadd.f32 %v258, 1.0
    %v272 = vadd.f32 %v260, 1.0
    %v273 = vadd.f32 %v262, 1.0
    %v274 = vadd.f32 %v264, 1.0
    %v275 = vadd.f32 %v266, 1.0
    %v276 = vadd.f32 %v268, 1.0
    %v277 = vrcp.pop %v269
    %v278 = vmul.f32 %v269, %v277
    %v279 = vsub.f32 1.0, %v278
    %v280 = vmul.f32 %v277, %v279
    %v281 = vadd.f32 %v277, %v280
    %vm282 = vweird.f32 %v269
    %vm283 = vweird.f32 %v277
    %vm284 = vmor %vm282, %vm283
    %v285 = vsel %vm284, %v277, %v281
    %v286 = vand.u32 2147483647, %v269
    %vm287 = vcmp.eq.f32.partialorder %v286, 8.507059e+37
    %v288 = vand.u32 %v269, 2147483648
    %v289 = vor.u32 1.1754944e-38, %v288
    %v290 = vsel %vm287, %v289, %v285
    %v291 = vmul.f32 1.0, %v290
    %v292 = vrcp.pop %v270
    %v293 = vmul.f32 %v270, %v292
    %v294 = vsub.f32 1.0, %v293
    %v295 = vmul.f32 %v292, %v294
    %v296 = vadd.f32 %v292, %v295
    %vm297 = vweird.f32 %v270
    %vm298 = vweird.f32 %v292
    %vm299 = vmor %vm297, %vm298
    %v300 = vsel %vm299, %v292, %v296
    %v301 = vand.u32 2147483647, %v270
    %vm302 = vcmp.eq.f32.partialorder %v301, 8.507059e+37
    %v303 = vand.u32 %v270, 2147483648
    %v304 = vor.u32 1.1754944e-38, %v303
    %v305 = vsel %vm302, %v304, %v300
    %v306 = vmul.f32 1.0, %v305
    %v307 = vrcp.pop %v271
    %v308 = vmul.f32 %v271, %v307
    %v309 = vsub.f32 1.0, %v308
    %v310 = vmul.f32 %v307, %v309
    %v311 = vadd.f32 %v307, %v310
    %vm312 = vweird.f32 %v271
    %vm313 = vweird.f32 %v307
    %vm314 = vmor %vm312, %vm313
    %v315 = vsel %vm314, %v307, %v311
    %v316 = vand.u32 2147483647, %v271
    %vm317 = vcmp.eq.f32.partialorder %v316, 8.507059e+37
    %v318 = vand.u32 %v271, 2147483648
    %v319 = vor.u32 1.1754944e-38, %v318
    %v320 = vsel %vm317, %v319, %v315
    %v321 = vmul.f32 1.0, %v320
    %v322 = vrcp.pop %v272
    %v323 = vmul.f32 %v272, %v322
    %v324 = vsub.f32 1.0, %v323
    %v325 = vmul.f32 %v322, %v324
    %v326 = vadd.f32 %v322, %v325
    %vm327 = vweird.f32 %v272
    %vm328 = vweird.f32 %v322
    %vm329 = vmor %vm327, %vm328
    %v330 = vsel %vm329, %v322, %v326
    %v331 = vand.u32 2147483647, %v272
    %vm332 = vcmp.eq.f32.partialorder %v331, 8.507059e+37
    %v333 = vand.u32 %v272, 2147483648
    %v334 = vor.u32 1.1754944e-38, %v333
    %v335 = vsel %vm332, %v334, %v330
    %v336 = vmul.f32 1.0, %v335
    %v337 = vrcp.pop %v273
    %v338 = vmul.f32 %v273, %v337
    %v339 = vsub.f32 1.0, %v338
    %v340 = vmul.f32 %v337, %v339
    %v341 = vadd.f32 %v337, %v340
    %vm342 = vweird.f32 %v273
    %vm343 = vweird.f32 %v337
    %vm344 = vmor %vm342, %vm343
    %v345 = vsel %vm344, %v337, %v341
    %v346 = vand.u32 2147483647, %v273
    %vm347 = vcmp.eq.f32.partialorder %v346, 8.507059e+37
    %v348 = vand.u32 %v273, 2147483648
    %v349 = vor.u32 1.1754944e-38, %v348
    %v350 = vsel %vm347, %v349, %v345
    %v351 = vmul.f32 1.0, %v350
    %v352 = vrcp.pop %v274
    %v353 = vmul.f32 %v274, %v352
    %v354 = vsub.f32 1.0, %v353
    %v355 = vmul.f32 %v352, %v354
    %v356 = vadd.f32 %v352, %v355
    %vm357 = vweird.f32 %v274
    %vm358 = vweird.f32 %v352
    %vm359 = vmor %vm357, %vm358
    %v360 = vsel %vm359, %v352, %v356
    %v361 = vand.u32 2147483647, %v274
    %vm362 = vcmp.eq.f32.partialorder %v361, 8.507059e+37
    %v363 = vand.u32 %v274, 2147483648
    %v364 = vor.u32 1.1754944e-38, %v363
    %v365 = vsel %vm362, %v364, %v360
    %v366 = vmul.f32 1.0, %v365
    %v367 = vrcp.pop %v275
    %v368 = vmul.f32 %v275, %v367
    %v369 = vsub.f32 1.0, %v368
    %v370 = vmul.f32 %v367, %v369
    %v371 = vadd.f32 %v367, %v370
    %vm372 = vweird.f32 %v275
    %vm373 = vweird.f32 %v367
    %vm374 = vmor %vm372, %vm373
    %v375 = vsel %vm374, %v367, %v371
    %v376 = vand.u32 2147483647, %v275
    %vm377 = vcmp.eq.f32.partialorder %v376, 8.507059e+37
    %v378 = vand.u32 %v275, 2147483648
    %v379 = vor.u32 1.1754944e-38, %v378
    %v380 = vsel %vm377, %v379, %v375
    %v381 = vmul.f32 1.0, %v380
    %v382 = vrcp.pop %v276
    %v383 = vmul.f32 %v276, %v382
    %v384 = vsub.f32 1.0, %v383
    %v385 = vmul.f32 %v382, %v384
    %v386 = vadd.f32 %v382, %v385
    %vm387 = vweird.f32 %v276
    %vm388 = vweird.f32 %v382
    %vm389 = vmor %vm387, %vm388
    %v390 = vsel %vm389, %v382, %v386
    %v391 = vand.u32 2147483647, %v276
    %vm392 = vcmp.eq.f32.partialorder %v391, 8.507059e+37
    %v393 = vand.u32 %v276, 2147483648
    %v394 = vor.u32 1.1754944e-38, %v393
    %v395 = vsel %vm392, %v394, %v390
    %v396 = vmul.f32 1.0, %v395
    %v397 = vtanh.pop %v237
    %v398 = vtanh.pop %v238
    %v399 = vtanh.pop %v239
    %v400 = vtanh.pop %v240
    %v401 = vtanh.pop %v241
    %v402 = vtanh.pop %v242
    %v403 = vtanh.pop %v243
    %v404 = vtanh.pop %v244
    %v405 = vmul.f32 %v291, 0.0
    %v406 = vmul.f32 %v306, 0.0
    %v407 = vmul.f32 %v321, 0.0
    %v408 = vmul.f32 %v336, 0.0
    %v409 = vmul.f32 %v351, 0.0
    %v410 = vmul.f32 %v366, 0.0
    %v411 = vmul.f32 %v381, 0.0
    %v412 = vmul.f32 %v396, 0.0
    %421 = vrot.lane.b32.xlu0 %v397, 96
    %v422 = vpop.permute.xlu0 %421
    %423 = vrot.lane.b32.xlu0 %v398, 96
    %v424 = vpop.permute.xlu0 %423
    %425 = vrot.lane.b32.xlu0 %v399, 96
    %v426 = vpop.permute.xlu0 %425
    %427 = vrot.lane.b32.xlu0 %v400, 96
    %v428 = vpop.permute.xlu0 %427
    %429 = vrot.lane.b32.xlu0 %v401, 96
    %v430 = vpop.permute.xlu0 %429
    %431 = vrot.lane.b32.xlu0 %v402, 96
    %v432 = vpop.permute.xlu0 %431
    %433 = vrot.lane.b32.xlu0 %v403, 96
    %v434 = vpop.permute.xlu0 %433
    %435 = vrot.lane.b32.xlu0 %v404, 96
    %v436 = vpop.permute.xlu0 %435
    %v445 = vmul.f32 %v291, %v422
    %v446 = vmul.f32 %v306, %v424
    %v447 = vmul.f32 %v321, %v426
    %v448 = vmul.f32 %v336, %v428
    %v449 = vmul.f32 %v351, %v430
    %v450 = vmul.f32 %v366, %v432
    %v451 = vmul.f32 %v381, %v434
    %v452 = vmul.f32 %v396, %v436
    %461 = vrot.lane.b32.xlu0 %v445, 16
    %v462 = vpop.permute.xlu0 %461
    %463 = vrot.lane.b32.xlu0 %v446, 16
    %v464 = vpop.permute.xlu0 %463
    %465 = vrot.lane.b32.xlu0 %v447, 16
    %v466 = vpop.permute.xlu0 %465
    %467 = vrot.lane.b32.xlu0 %v448, 16
    %v468 = vpop.permute.xlu0 %467
    %469 = vrot.lane.b32.xlu0 %v449, 16
    %v470 = vpop.permute.xlu0 %469
    %471 = vrot.lane.b32.xlu0 %v450, 16
    %v472 = vpop.permute.xlu0 %471
    %473 = vrot.lane.b32.xlu0 %v451, 16
    %v474 = vpop.permute.xlu0 %473
    %475 = vrot.lane.b32.xlu0 %v452, 16
    %v476 = vpop.permute.xlu0 %475
    %v485 = vadd.f32 %v405, %v462
    %v486 = vadd.f32 %v406, %v464
    %v487 = vadd.f32 %v407, %v466
    %v488 = vadd.f32 %v408, %v468
    %v489 = vadd.f32 %v409, %v470
    %v490 = vadd.f32 %v410, %v472
    %v491 = vadd.f32 %v411, %v474
    %v492 = vadd.f32 %v412, %v476
    %v493 = vtanh.pop %v485
    %v494 = vtanh.pop %v486
    %v495 = vtanh.pop %v487
    %v496 = vtanh.pop %v488
    %v497 = vtanh.pop %v489
    %v498 = vtanh.pop %v490
    %v499 = vtanh.pop %v491
    %v500 = vtanh.pop %v492
    %509 = vrot.lane.b32.xlu0 %v493, 32
    %v510 = vpop.permute.xlu0 %509
    %511 = vrot.lane.b32.xlu0 %v494, 32
    %v512 = vpop.permute.xlu0 %511
    %513 = vrot.lane.b32.xlu0 %v495, 32
    %v514 = vpop.permute.xlu0 %513
    %515 = vrot.lane.b32.xlu0 %v496, 32
    %v516 = vpop.permute.xlu0 %515
    %517 = vrot.lane.b32.xlu0 %v497, 32
    %v518 = vpop.permute.xlu0 %517
    %519 = vrot.lane.b32.xlu0 %v498, 32
    %v520 = vpop.permute.xlu0 %519
    %521 = vrot.lane.b32.xlu0 %v499, 32
    %v522 = vpop.permute.xlu0 %521
    %523 = vrot.lane.b32.xlu0 %v500, 32
    %v524 = vpop.permute.xlu0 %523
    %v533 = vmul.f32 %v291, %v510
    %v534 = vmul.f32 %v306, %v512
    %v535 = vmul.f32 %v321, %v514
    %v536 = vmul.f32 %v336, %v516
    %v537 = vmul.f32 %v351, %v518
    %v538 = vmul.f32 %v366, %v520
    %v539 = vmul.f32 %v381, %v522
    %v540 = vmul.f32 %v396, %v524
    %v549 = vrot.slane %v534, 7
    %vm550 = vcmask 1041409
    %v551 = vsel %vm550, %v549, %v533
    %v552 = vrot.slane %v535, 6
    %vm553 = vcmask 1042434
    %v554 = vsel %vm553, %v552, %v551
    %v555 = vrot.slane %v536, 5
    %vm556 = vcmask 1043459
    %v557 = vsel %vm556, %v555, %v554
    %v558 = vrot.slane %v537, 4
    %vm559 = vcmask 1044484
    %v560 = vsel %vm559, %v558, %v557
    %v561 = vrot.slane %v538, 3
    %vm562 = vcmask 1045509
    %v563 = vsel %vm562, %v561, %v560
    %v564 = vrot.slane %v539, 2
    %vm565 = vcmask 1046534
    %v566 = vsel %vm565, %v564, %v563
    %v567 = vrot.slane %v540, 1
    %vm568 = vcmask 1047559
    %v569 = vsel %vm568, %v567, %v566
    %570 = vrot.lane.b32.xlu0 %v569, 80
    %v571 = vpop.permute.xlu0 %570
    %v572 = vsel %vm132, %v571, 0
    %574 = vmatpush.msra.mxu0 0.0
    %575 = vmatpush.msra.mxu0 0.0
    %576 = vmatpush.msra.mxu0 0.0
    %577 = vmatpush.msra.mxu0 0.0
    %578 = vmatpush.msra.mxu0 0.0
    %579 = vmatpush.msra.mxu0 0.0
    %580 = vmatpush.msra.mxu0 0.0
    %581 = vmatpush.msra.mxu0 0.0
    %582 = vmatpush.msra.mxu0 0.0
    %583 = vmatpush.msra.mxu0 0.0
    %584 = vmatpush.msra.mxu0 0.0
    %585 = vmatpush.msra.mxu0 0.0
    %586 = vmatpush.msra.mxu0 0.0
    %587 = vmatpush.msra.mxu0 0.0
    %588 = vmatpush.msra.mxu0 %v127
    %589 = vmatpush.msra.mxu0 %v126
    %590 = vmatmul.f32.gmra.mxu0 %v572
    %v591 = vpop.f32.mrf.mxu0
    %v592 = vadd.f32 0.0, %v591
    %593 = vdwg.mxu0
    %v595 = vrot.slane %v592, 7
    %v596 = vrot.slane %v592, 1
    %v597 = vrot.slane %v592, 2
    %v598 = vrot.slane %v592, 3
    %v599 = vrot.slane %v592, 4
    %v600 = vrot.slane %v592, 5
    %v601 = vrot.slane %v592, 6
    %v610 = vadd.f32 %v175, %v595
    %v611 = vadd.f32 %v178, %v592
    %v612 = vadd.f32 %v181, %v596
    %v613 = vadd.f32 %v184, %v597
    %v614 = vadd.f32 %v187, %v598
    %v615 = vadd.f32 %v190, %v599
    %v616 = vadd.f32 %v193, %v600
    %v617 = vadd.f32 %v196, %v601
    %v618 = vxor.u32 %v610, 2147483648
    %v619 = vxor.u32 %v611, 2147483648
    %v620 = vxor.u32 %v612, 2147483648
    %v621 = vxor.u32 %v613, 2147483648
    %v622 = vxor.u32 %v614, 2147483648
    %v623 = vxor.u32 %v615, 2147483648
    %v624 = vxor.u32 %v616, 2147483648
    %v625 = vxor.u32 %v617, 2147483648
    %v626 = vmul.f32 %v618, 1.442695
    %v627 = vpow.pop %v626
    %v628 = vmul.f32 %v619, 1.442695
    %v629 = vpow.pop %v628
    %v630 = vmul.f32 %v620, 1.442695
    %v631 = vpow.pop %v630
    %v632 = vmul.f32 %v621, 1.442695
    %v633 = vpow.pop %v632
    %v634 = vmul.f32 %v622, 1.442695
    %v635 = vpow.pop %v634
    %v636 = vmul.f32 %v623, 1.442695
    %v637 = vpow.pop %v636
    %v638 = vmul.f32 %v624, 1.442695
    %v639 = vpow.pop %v638
    %v640 = vmul.f32 %v625, 1.442695
    %v641 = vpow.pop %v640
    %v642 = vadd.f32 %v627, 1.0
    %v643 = vadd.f32 %v629, 1.0
    %v644 = vadd.f32 %v631, 1.0
    %v645 = vadd.f32 %v633, 1.0
    %v646 = vadd.f32 %v635, 1.0
    %v647 = vadd.f32 %v637, 1.0
    %v648 = vadd.f32 %v639, 1.0
    %v649 = vadd.f32 %v641, 1.0
    %v650 = vrcp.pop %v642
    %v651 = vmul.f32 %v642, %v650
    %v652 = vsub.f32 1.0, %v651
    %v653 = vmul.f32 %v650, %v652
    %v654 = vadd.f32 %v650, %v653
    %vm655 = vweird.f32 %v642
    %vm656 = vweird.f32 %v650
    %vm657 = vmor %vm655, %vm656
    %v658 = vsel %vm657, %v650, %v654
    %v659 = vand.u32 2147483647, %v642
    %vm660 = vcmp.eq.f32.partialorder %v659, 8.507059e+37
    %v661 = vand.u32 %v642, 2147483648
    %v662 = vor.u32 1.1754944e-38, %v661
    %v663 = vsel %vm660, %v662, %v658
    %v664 = vmul.f32 1.0, %v663
    %v665 = vrcp.pop %v643
    %v666 = vmul.f32 %v643, %v665
    %v667 = vsub.f32 1.0, %v666
    %v668 = vmul.f32 %v665, %v667
    %v669 = vadd.f32 %v665, %v668
    %vm670 = vweird.f32 %v643
    %vm671 = vweird.f32 %v665
    %vm672 = vmor %vm670, %vm671
    %v673 = vsel %vm672, %v665, %v669
    %v674 = vand.u32 2147483647, %v643
    %vm675 = vcmp.eq.f32.partialorder %v674, 8.507059e+37
    %v676 = vand.u32 %v643, 2147483648
    %v677 = vor.u32 1.1754944e-38, %v676
    %v678 = vsel %vm675, %v677, %v673
    %v679 = vmul.f32 1.0, %v678
    %v680 = vrcp.pop %v644
    %v681 = vmul.f32 %v644, %v680
    %v682 = vsub.f32 1.0, %v681
    %v683 = vmul.f32 %v680, %v682
    %v684 = vadd.f32 %v680, %v683
    %vm685 = vweird.f32 %v644
    %vm686 = vweird.f32 %v680
    %vm687 = vmor %vm685, %vm686
    %v688 = vsel %vm687, %v680, %v684
    %v689 = vand.u32 2147483647, %v644
    %vm690 = vcmp.eq.f32.partialorder %v689, 8.507059e+37
    %v691 = vand.u32 %v644, 2147483648
    %v692 = vor.u32 1.1754944e-38, %v691
    %v693 = vsel %vm690, %v692, %v688
    %v694 = vmul.f32 1.0, %v693
    %v695 = vrcp.pop %v645
    %v696 = vmul.f32 %v645, %v695
    %v697 = vsub.f32 1.0, %v696
    %v698 = vmul.f32 %v695, %v697
    %v699 = vadd.f32 %v695, %v698
    %vm700 = vweird.f32 %v645
    %vm701 = vweird.f32 %v695
    %vm702 = vmor %vm700, %vm701
    %v703 = vsel %vm702, %v695, %v699
    %v704 = vand.u32 2147483647, %v645
    %vm705 = vcmp.eq.f32.partialorder %v704, 8.507059e+37
    %v706 = vand.u32 %v645, 2147483648
    %v707 = vor.u32 1.1754944e-38, %v706
    %v708 = vsel %vm705, %v707, %v703
    %v709 = vmul.f32 1.0, %v708
    %v710 = vrcp.pop %v646
    %v711 = vmul.f32 %v646, %v710
    %v712 = vsub.f32 1.0, %v711
    %v713 = vmul.f32 %v710, %v712
    %v714 = vadd.f32 %v710, %v713
    %vm715 = vweird.f32 %v646
    %vm716 = vweird.f32 %v710
    %vm717 = vmor %vm715, %vm716
    %v718 = vsel %vm717, %v710, %v714
    %v719 = vand.u32 2147483647, %v646
    %vm720 = vcmp.eq.f32.partialorder %v719, 8.507059e+37
    %v721 = vand.u32 %v646, 2147483648
    %v722 = vor.u32 1.1754944e-38, %v721
    %v723 = vsel %vm720, %v722, %v718
    %v724 = vmul.f32 1.0, %v723
    %v725 = vrcp.pop %v647
    %v726 = vmul.f32 %v647, %v725
    %v727 = vsub.f32 1.0, %v726
    %v728 = vmul.f32 %v725, %v727
    %v729 = vadd.f32 %v725, %v728
    %vm730 = vweird.f32 %v647
    %vm731 = vweird.f32 %v725
    %vm732 = vmor %vm730, %vm731
    %v733 = vsel %vm732, %v725, %v729
    %v734 = vand.u32 2147483647, %v647
    %vm735 = vcmp.eq.f32.partialorder %v734, 8.507059e+37
    %v736 = vand.u32 %v647, 2147483648
    %v737 = vor.u32 1.1754944e-38, %v736
    %v738 = vsel %vm735, %v737, %v733
    %v739 = vmul.f32 1.0, %v738
    %v740 = vrcp.pop %v648
    %v741 = vmul.f32 %v648, %v740
    %v742 = vsub.f32 1.0, %v741
    %v743 = vmul.f32 %v740, %v742
    %v744 = vadd.f32 %v740, %v743
    %vm745 = vweird.f32 %v648
    %vm746 = vweird.f32 %v740
    %vm747 = vmor %vm745, %vm746
    %v748 = vsel %vm747, %v740, %v744
    %v749 = vand.u32 2147483647, %v648
    %vm750 = vcmp.eq.f32.partialorder %v749, 8.507059e+37
    %v751 = vand.u32 %v648, 2147483648
    %v752 = vor.u32 1.1754944e-38, %v751
    %v753 = vsel %vm750, %v752, %v748
    %v754 = vmul.f32 1.0, %v753
    %v755 = vrcp.pop %v649
    %v756 = vmul.f32 %v649, %v755
    %v757 = vsub.f32 1.0, %v756
    %v758 = vmul.f32 %v755, %v757
    %v759 = vadd.f32 %v755, %v758
    %vm760 = vweird.f32 %v649
    %vm761 = vweird.f32 %v755
    %vm762 = vmor %vm760, %vm761
    %v763 = vsel %vm762, %v755, %v759
    %v764 = vand.u32 2147483647, %v649
    %vm765 = vcmp.eq.f32.partialorder %v764, 8.507059e+37
    %v766 = vand.u32 %v649, 2147483648
    %v767 = vor.u32 1.1754944e-38, %v766
    %v768 = vsel %vm765, %v767, %v763
    %v769 = vmul.f32 1.0, %v768
    %v770 = vtanh.pop %v610
    %v771 = vtanh.pop %v611
    %v772 = vtanh.pop %v612
    %v773 = vtanh.pop %v613
    %v774 = vtanh.pop %v614
    %v775 = vtanh.pop %v615
    %v776 = vtanh.pop %v616
    %v777 = vtanh.pop %v617
    %v786 = vrot.slane %v485, 7
    %v787 = vrot.slane %v486, 7
    %v788 = vrot.slane %v487, 7
    %v789 = vrot.slane %v488, 7
    %v790 = vrot.slane %v489, 7
    %v791 = vrot.slane %v490, 7
    %v792 = vrot.slane %v491, 7
    %v793 = vrot.slane %v492, 7
    %v802 = vmul.f32 %v664, %v786
    %v803 = vmul.f32 %v679, %v787
    %v804 = vmul.f32 %v694, %v788
    %v805 = vmul.f32 %v709, %v789
    %v806 = vmul.f32 %v724, %v790
    %v807 = vmul.f32 %v739, %v791
    %v808 = vmul.f32 %v754, %v792
    %v809 = vmul.f32 %v769, %v793
    %818 = vrot.lane.b32.xlu0 %v770, 96
    %v819 = vpop.permute.xlu0 %818
    %820 = vrot.lane.b32.xlu0 %v771, 96
    %v821 = vpop.permute.xlu0 %820
    %822 = vrot.lane.b32.xlu0 %v772, 96
    %v823 = vpop.permute.xlu0 %822
    %824 = vrot.lane.b32.xlu0 %v773, 96
    %v825 = vpop.permute.xlu0 %824
    %826 = vrot.lane.b32.xlu0 %v774, 96
    %v827 = vpop.permute.xlu0 %826
    %828 = vrot.lane.b32.xlu0 %v775, 96
    %v829 = vpop.permute.xlu0 %828
    %830 = vrot.lane.b32.xlu0 %v776, 96
    %v831 = vpop.permute.xlu0 %830
    %832 = vrot.lane.b32.xlu0 %v777, 96
    %v833 = vpop.permute.xlu0 %832
    %v842 = vmul.f32 %v664, %v819
    %v843 = vmul.f32 %v679, %v821
    %v844 = vmul.f32 %v694, %v823
    %v845 = vmul.f32 %v709, %v825
    %v846 = vmul.f32 %v724, %v827
    %v847 = vmul.f32 %v739, %v829
    %v848 = vmul.f32 %v754, %v831
    %v849 = vmul.f32 %v769, %v833
    %858 = vrot.lane.b32.xlu0 %v842, 16
    %v859 = vpop.permute.xlu0 %858
    %860 = vrot.lane.b32.xlu0 %v843, 16
    %v861 = vpop.permute.xlu0 %860
    %862 = vrot.lane.b32.xlu0 %v844, 16
    %v863 = vpop.permute.xlu0 %862
    %864 = vrot.lane.b32.xlu0 %v845, 16
    %v865 = vpop.permute.xlu0 %864
    %866 = vrot.lane.b32.xlu0 %v846, 16
    %v867 = vpop.permute.xlu0 %866
    %868 = vrot.lane.b32.xlu0 %v847, 16
    %v869 = vpop.permute.xlu0 %868
    %870 = vrot.lane.b32.xlu0 %v848, 16
    %v871 = vpop.permute.xlu0 %870
    %872 = vrot.lane.b32.xlu0 %v849, 16
    %v873 = vpop.permute.xlu0 %872
    %v882 = vadd.f32 %v802, %v859
    %v883 = vadd.f32 %v803, %v861
    %v884 = vadd.f32 %v804, %v863
    %v885 = vadd.f32 %v805, %v865
    %v886 = vadd.f32 %v806, %v867
    %v887 = vadd.f32 %v807, %v869
    %v888 = vadd.f32 %v808, %v871
    %v889 = vadd.f32 %v809, %v873
    %v890 = vtanh.pop %v882
    %v891 = vtanh.pop %v883
    %v892 = vtanh.pop %v884
    %v893 = vtanh.pop %v885
    %v894 = vtanh.pop %v886
    %v895 = vtanh.pop %v887
    %v896 = vtanh.pop %v888
    %v897 = vtanh.pop %v889
    %906 = vrot.lane.b32.xlu0 %v890, 32
    %v907 = vpop.permute.xlu0 %906
    %908 = vrot.lane.b32.xlu0 %v891, 32
    %v909 = vpop.permute.xlu0 %908
    %910 = vrot.lane.b32.xlu0 %v892, 32
    %v911 = vpop.permute.xlu0 %910
    %912 = vrot.lane.b32.xlu0 %v893, 32
    %v913 = vpop.permute.xlu0 %912
    %914 = vrot.lane.b32.xlu0 %v894, 32
    %v915 = vpop.permute.xlu0 %914
    %916 = vrot.lane.b32.xlu0 %v895, 32
    %v917 = vpop.permute.xlu0 %916
    %918 = vrot.lane.b32.xlu0 %v896, 32
    %v919 = vpop.permute.xlu0 %918
    %920 = vrot.lane.b32.xlu0 %v897, 32
    %v921 = vpop.permute.xlu0 %920
    %v930 = vmul.f32 %v664, %v907
    %v931 = vmul.f32 %v679, %v909
    %v932 = vmul.f32 %v694, %v911
    %v933 = vmul.f32 %v709, %v913
    %v934 = vmul.f32 %v724, %v915
    %v935 = vmul.f32 %v739, %v917
    %v936 = vmul.f32 %v754, %v919
    %v937 = vmul.f32 %v769, %v921
    %v946 = vrot.slane %v930, 1
    %v947 = vsel %vm550, %v931, %v946
    %v948 = vrot.slane %v932, 7
    %v949 = vsel %vm553, %v948, %v947
    %v950 = vrot.slane %v933, 6
    %v951 = vsel %vm556, %v950, %v949
    %v952 = vrot.slane %v934, 5
    %v953 = vsel %vm559, %v952, %v951
    %v954 = vrot.slane %v935, 4
    %v955 = vsel %vm562, %v954, %v953
    %v956 = vrot.slane %v936, 3
    %v957 = vsel %vm565, %v956, %v955
    %v958 = vrot.slane %v937, 2
    %v959 = vsel %vm568, %v958, %v957
    %960 = vrot.lane.b32.xlu0 %v959, 80
    %v961 = vpop.permute.xlu0 %960
    %v962 = vsel %vm132, %v961, 0
    %964 = vmatpush.msra.mxu0 0.0
    %965 = vmatpush.msra.mxu0 0.0
    %966 = vmatpush.msra.mxu0 0.0
    %967 = vmatpush.msra.mxu0 0.0
    %968 = vmatpush.msra.mxu0 0.0
    %969 = vmatpush.msra.mxu0 0.0
    %970 = vmatpush.msra.mxu0 0.0
    %971 = vmatpush.msra.mxu0 0.0
    %972 = vmatpush.msra.mxu0 0.0
    %973 = vmatpush.msra.mxu0 0.0
    %974 = vmatpush.msra.mxu0 0.0
    %975 = vmatpush.msra.mxu0 0.0
    %976 = vmatpush.msra.mxu0 0.0
    %977 = vmatpush.msra.mxu0 0.0
    %978 = vmatpush.msra.mxu0 %v127
    %979 = vmatpush.msra.mxu0 %v126
    %980 = vmatmul.f32.gmra.mxu0 %v962
    %v981 = vpop.f32.mrf.mxu0
    %v982 = vadd.f32 0.0, %v981
    %983 = vdwg.mxu0
    %v985 = vrot.slane %v982, 6
    %v986 = vrot.slane %v982, 7
    %v987 = vrot.slane %v982, 1
    %v988 = vrot.slane %v982, 2
    %v989 = vrot.slane %v982, 3
    %v990 = vrot.slane %v982, 4
    %v991 = vrot.slane %v982, 5
    %v1000 = vadd.f32 %v175, %v985
    %v1001 = vadd.f32 %v178, %v986
    %v1002 = vadd.f32 %v181, %v982
    %v1003 = vadd.f32 %v184, %v987
    %v1004 = vadd.f32 %v187, %v988
    %v1005 = vadd.f32 %v190, %v989
    %v1006 = vadd.f32 %v193, %v990
    %v1007 = vadd.f32 %v196, %v991
    %v1008 = vxor.u32 %v1000, 2147483648
    %v1009 = vxor.u32 %v1001, 2147483648
    %v1010 = vxor.u32 %v1002, 2147483648
    %v1011 = vxor.u32 %v1003, 2147483648
    %v1012 = vxor.u32 %v1004, 2147483648
    %v1013 = vxor.u32 %v1005, 2147483648
    %v1014 = vxor.u32 %v1006, 2147483648
    %v1015 = vxor.u32 %v1007, 2147483648
    %v1016 = vmul.f32 %v1008, 1.442695
    %v1017 = vpow.pop %v1016
    %v1018 = vmul.f32 %v1009, 1.442695
    %v1019 = vpow.pop %v1018
    %v1020 = vmul.f32 %v1010, 1.442695
    %v1021 = vpow.pop %v1020
    %v1022 = vmul.f32 %v1011, 1.442695
    %v1023 = vpow.pop %v1022
    %v1024 = vmul.f32 %v1012, 1.442695
    %v1025 = vpow.pop %v1024
    %v1026 = vmul.f32 %v1013, 1.442695
    %v1027 = vpow.pop %v1026
    %v1028 = vmul.f32 %v1014, 1.442695
    %v1029 = vpow.pop %v1028
    %v1030 = vmul.f32 %v1015, 1.442695
    %v1031 = vpow.pop %v1030
    %v1032 = vadd.f32 %v1017, 1.0
    %v1033 = vadd.f32 %v1019, 1.0
    %v1034 = vadd.f32 %v1021, 1.0
    %v1035 = vadd.f32 %v1023, 1.0
    %v1036 = vadd.f32 %v1025, 1.0
    %v1037 = vadd.f32 %v1027, 1.0
    %v1038 = vadd.f32 %v1029, 1.0
    %v1039 = vadd.f32 %v1031, 1.0
    %v1040 = vrcp.pop %v1032
    %v1041 = vmul.f32 %v1032, %v1040
    %v1042 = vsub.f32 1.0, %v1041
    %v1043 = vmul.f32 %v1040, %v1042
    %v1044 = vadd.f32 %v1040, %v1043
    %vm1045 = vweird.f32 %v1032
    %vm1046 = vweird.f32 %v1040
    %vm1047 = vmor %vm1045, %vm1046
    %v1048 = vsel %vm1047, %v1040, %v1044
    %v1049 = vand.u32 2147483647, %v1032
    %vm1050 = vcmp.eq.f32.partialorder %v1049, 8.507059e+37
    %v1051 = vand.u32 %v1032, 2147483648
    %v1052 = vor.u32 1.1754944e-38, %v1051
    %v1053 = vsel %vm1050, %v1052, %v1048
    %v1054 = vmul.f32 1.0, %v1053
    %v1055 = vrcp.pop %v1033
    %v1056 = vmul.f32 %v1033, %v1055
    %v1057 = vsub.f32 1.0, %v1056
    %v1058 = vmul.f32 %v1055, %v1057
    %v1059 = vadd.f32 %v1055, %v1058
    %vm1060 = vweird.f32 %v1033
    %vm1061 = vweird.f32 %v1055
    %vm1062 = vmor %vm1060, %vm1061
    %v1063 = vsel %vm1062, %v1055, %v1059
    %v1064 = vand.u32 2147483647, %v1033
    %vm1065 = vcmp.eq.f32.partialorder %v1064, 8.507059e+37
    %v1066 = vand.u32 %v1033, 2147483648
    %v1067 = vor.u32 1.1754944e-38, %v1066
    %v1068 = vsel %vm1065, %v1067, %v1063
    %v1069 = vmul.f32 1.0, %v1068
    %v1070 = vrcp.pop %v1034
    %v1071 = vmul.f32 %v1034, %v1070
    %v1072 = vsub.f32 1.0, %v1071
    %v1073 = vmul.f32 %v1070, %v1072
    %v1074 = vadd.f32 %v1070, %v1073
    %vm1075 = vweird.f32 %v1034
    %vm1076 = vweird.f32 %v1070
    %vm1077 = vmor %vm1075, %vm1076
    %v1078 = vsel %vm1077, %v1070, %v1074
    %v1079 = vand.u32 2147483647, %v1034
    %vm1080 = vcmp.eq.f32.partialorder %v1079, 8.507059e+37
    %v1081 = vand.u32 %v1034, 2147483648
    %v1082 = vor.u32 1.1754944e-38, %v1081
    %v1083 = vsel %vm1080, %v1082, %v1078
    %v1084 = vmul.f32 1.0, %v1083
    %v1085 = vrcp.pop %v1035
    %v1086 = vmul.f32 %v1035, %v1085
    %v1087 = vsub.f32 1.0, %v1086
    %v1088 = vmul.f32 %v1085, %v1087
    %v1089 = vadd.f32 %v1085, %v1088
    %vm1090 = vweird.f32 %v1035
    %vm1091 = vweird.f32 %v1085
    %vm1092 = vmor %vm1090, %vm1091
    %v1093 = vsel %vm1092, %v1085, %v1089
    %v1094 = vand.u32 2147483647, %v1035
    %vm1095 = vcmp.eq.f32.partialorder %v1094, 8.507059e+37
    %v1096 = vand.u32 %v1035, 2147483648
    %v1097 = vor.u32 1.1754944e-38, %v1096
    %v1098 = vsel %vm1095, %v1097, %v1093
    %v1099 = vmul.f32 1.0, %v1098
    %v1100 = vrcp.pop %v1036
    %v1101 = vmul.f32 %v1036, %v1100
    %v1102 = vsub.f32 1.0, %v1101
    %v1103 = vmul.f32 %v1100, %v1102
    %v1104 = vadd.f32 %v1100, %v1103
    %vm1105 = vweird.f32 %v1036
    %vm1106 = vweird.f32 %v1100
    %vm1107 = vmor %vm1105, %vm1106
    %v1108 = vsel %vm1107, %v1100, %v1104
    %v1109 = vand.u32 2147483647, %v1036
    %vm1110 = vcmp.eq.f32.partialorder %v1109, 8.507059e+37
    %v1111 = vand.u32 %v1036, 2147483648
    %v1112 = vor.u32 1.1754944e-38, %v1111
    %v1113 = vsel %vm1110, %v1112, %v1108
    %v1114 = vmul.f32 1.0, %v1113
    %v1115 = vrcp.pop %v1037
    %v1116 = vmul.f32 %v1037, %v1115
    %v1117 = vsub.f32 1.0, %v1116
    %v1118 = vmul.f32 %v1115, %v1117
    %v1119 = vadd.f32 %v1115, %v1118
    %vm1120 = vweird.f32 %v1037
    %vm1121 = vweird.f32 %v1115
    %vm1122 = vmor %vm1120, %vm1121
    %v1123 = vsel %vm1122, %v1115, %v1119
    %v1124 = vand.u32 2147483647, %v1037
    %vm1125 = vcmp.eq.f32.partialorder %v1124, 8.507059e+37
    %v1126 = vand.u32 %v1037, 2147483648
    %v1127 = vor.u32 1.1754944e-38, %v1126
    %v1128 = vsel %vm1125, %v1127, %v1123
    %v1129 = vmul.f32 1.0, %v1128
    %v1130 = vrcp.pop %v1038
    %v1131 = vmul.f32 %v1038, %v1130
    %v1132 = vsub.f32 1.0, %v1131
    %v1133 = vmul.f32 %v1130, %v1132
    %v1134 = vadd.f32 %v1130, %v1133
    %vm1135 = vweird.f32 %v1038
    %vm1136 = vweird.f32 %v1130
    %vm1137 = vmor %vm1135, %vm1136
    %v1138 = vsel %vm1137, %v1130, %v1134
    %v1139 = vand.u32 2147483647, %v1038
    %vm1140 = vcmp.eq.f32.partialorder %v1139, 8.507059e+37
    %v1141 = vand.u32 %v1038, 2147483648
    %v1142 = vor.u32 1.1754944e-38, %v1141
    %v1143 = vsel %vm1140, %v1142, %v1138
    %v1144 = vmul.f32 1.0, %v1143
    %v1145 = vrcp.pop %v1039
    %v1146 = vmul.f32 %v1039, %v1145
    %v1147 = vsub.f32 1.0, %v1146
    %v1148 = vmul.f32 %v1145, %v1147
    %v1149 = vadd.f32 %v1145, %v1148
    %vm1150 = vweird.f32 %v1039
    %vm1151 = vweird.f32 %v1145
    %vm1152 = vmor %vm1150, %vm1151
    %v1153 = vsel %vm1152, %v1145, %v1149
    %v1154 = vand.u32 2147483647, %v1039
    %vm1155 = vcmp.eq.f32.partialorder %v1154, 8.507059e+37
    %v1156 = vand.u32 %v1039, 2147483648
    %v1157 = vor.u32 1.1754944e-38, %v1156
    %v1158 = vsel %vm1155, %v1157, %v1153
    %v1159 = vmul.f32 1.0, %v1158
    %v1160 = vtanh.pop %v1000
    %v1161 = vtanh.pop %v1001
    %v1162 = vtanh.pop %v1002
    %v1163 = vtanh.pop %v1003
    %v1164 = vtanh.pop %v1004
    %v1165 = vtanh.pop %v1005
    %v1166 = vtanh.pop %v1006
    %v1167 = vtanh.pop %v1007
    %v1176 = vrot.slane %v882, 7
    %v1177 = vrot.slane %v883, 7
    %v1178 = vrot.slane %v884, 7
    %v1179 = vrot.slane %v885, 7
    %v1180 = vrot.slane %v886, 7
    %v1181 = vrot.slane %v887, 7
    %v1182 = vrot.slane %v888, 7
    %v1183 = vrot.slane %v889, 7
    %v1192 = vmul.f32 %v1054, %v1176
    %v1193 = vmul.f32 %v1069, %v1177
    %v1194 = vmul.f32 %v1084, %v1178
    %v1195 = vmul.f32 %v1099, %v1179
    %v1196 = vmul.f32 %v1114, %v1180
    %v1197 = vmul.f32 %v1129, %v1181
    %v1198 = vmul.f32 %v1144, %v1182
    %v1199 = vmul.f32 %v1159, %v1183
    %1208 = vrot.lane.b32.xlu0 %v1160, 96
    %v1209 = vpop.permute.xlu0 %1208
    %1210 = vrot.lane.b32.xlu0 %v1161, 96
    %v1211 = vpop.permute.xlu0 %1210
    %1212 = vrot.lane.b32.xlu0 %v1162, 96
    %v1213 = vpop.permute.xlu0 %1212
    %1214 = vrot.lane.b32.xlu0 %v1163, 96
    %v1215 = vpop.permute.xlu0 %1214
    %1216 = vrot.lane.b32.xlu0 %v1164, 96
    %v1217 = vpop.permute.xlu0 %1216
    %1218 = vrot.lane.b32.xlu0 %v1165, 96
    %v1219 = vpop.permute.xlu0 %1218
    %1220 = vrot.lane.b32.xlu0 %v1166, 96
    %v1221 = vpop.permute.xlu0 %1220
    %1222 = vrot.lane.b32.xlu0 %v1167, 96
    %v1223 = vpop.permute.xlu0 %1222
    %v1232 = vmul.f32 %v1054, %v1209
    %v1233 = vmul.f32 %v1069, %v1211
    %v1234 = vmul.f32 %v1084, %v1213
    %v1235 = vmul.f32 %v1099, %v1215
    %v1236 = vmul.f32 %v1114, %v1217
    %v1237 = vmul.f32 %v1129, %v1219
    %v1238 = vmul.f32 %v1144, %v1221
    %v1239 = vmul.f32 %v1159, %v1223
    %1248 = vrot.lane.b32.xlu0 %v1232, 16
    %v1249 = vpop.permute.xlu0 %1248
    %1250 = vrot.lane.b32.xlu0 %v1233, 16
    %v1251 = vpop.permute.xlu0 %1250
    %1252 = vrot.lane.b32.xlu0 %v1234, 16
    %v1253 = vpop.permute.xlu0 %1252
    %1254 = vrot.lane.b32.xlu0 %v1235, 16
    %v1255 = vpop.permute.xlu0 %1254
    %1256 = vrot.lane.b32.xlu0 %v1236, 16
    %v1257 = vpop.permute.xlu0 %1256
    %1258 = vrot.lane.b32.xlu0 %v1237, 16
    %v1259 = vpop.permute.xlu0 %1258
    %1260 = vrot.lane.b32.xlu0 %v1238, 16
    %v1261 = vpop.permute.xlu0 %1260
    %1262 = vrot.lane.b32.xlu0 %v1239, 16
    %v1263 = vpop.permute.xlu0 %1262
    %v1272 = vadd.f32 %v1192, %v1249
    %v1273 = vadd.f32 %v1193, %v1251
    %v1274 = vadd.f32 %v1194, %v1253
    %v1275 = vadd.f32 %v1195, %v1255
    %v1276 = vadd.f32 %v1196, %v1257
    %v1277 = vadd.f32 %v1197, %v1259
    %v1278 = vadd.f32 %v1198, %v1261
    %v1279 = vadd.f32 %v1199, %v1263
    %v1280 = vtanh.pop %v1272
    %v1281 = vtanh.pop %v1273
    %v1282 = vtanh.pop %v1274
    %v1283 = vtanh.pop %v1275
    %v1284 = vtanh.pop %v1276
    %v1285 = vtanh.pop %v1277
    %v1286 = vtanh.pop %v1278
    %v1287 = vtanh.pop %v1279
    %1296 = vrot.lane.b32.xlu0 %v1280, 32
    %v1297 = vpop.permute.xlu0 %1296
    %1298 = vrot.lane.b32.xlu0 %v1281, 32
    %v1299 = vpop.permute.xlu0 %1298
    %1300 = vrot.lane.b32.xlu0 %v1282, 32
    %v1301 = vpop.permute.xlu0 %1300
    %1302 = vrot.lane.b32.xlu0 %v1283, 32
    %v1303 = vpop.permute.xlu0 %1302
    %1304 = vrot.lane.b32.xlu0 %v1284, 32
    %v1305 = vpop.permute.xlu0 %1304
    %1306 = vrot.lane.b32.xlu0 %v1285, 32
    %v1307 = vpop.permute.xlu0 %1306
    %1308 = vrot.lane.b32.xlu0 %v1286, 32
    %v1309 = vpop.permute.xlu0 %1308
    %1310 = vrot.lane.b32.xlu0 %v1287, 32
    %v1311 = vpop.permute.xlu0 %1310
    %v1320 = vmul.f32 %v1054, %v1297
    %v1321 = vmul.f32 %v1069, %v1299
    %v1322 = vmul.f32 %v1084, %v1301
    %v1323 = vmul.f32 %v1099, %v1303
    %v1324 = vmul.f32 %v1114, %v1305
    %v1325 = vmul.f32 %v1129, %v1307
    %v1326 = vmul.f32 %v1144, %v1309
    %v1327 = vmul.f32 %v1159, %v1311
    %v1336 = vrot.slane %v1320, 2
    %v1337 = vrot.slane %v1321, 1
    %v1338 = vsel %vm550, %v1337, %v1336
    %v1339 = vsel %vm553, %v1322, %v1338
    %v1340 = vrot.slane %v1323, 7
    %v1341 = vsel %vm556, %v1340, %v1339
    %v1342 = vrot.slane %v1324, 6
    %v1343 = vsel %vm559, %v1342, %v1341
    %v1344 = vrot.slane %v1325, 5
    %v1345 = vsel %vm562, %v1344, %v1343
    %v1346 = vrot.slane %v1326, 4
    %v1347 = vsel %vm565, %v1346, %v1345
    %v1348 = vrot.slane %v1327, 3
    %v1349 = vsel %vm568, %v1348, %v1347
    %1350 = vrot.lane.b32.xlu0 %v1349, 80
    %v1351 = vpop.permute.xlu0 %1350
    %v1352 = vsel %vm132, %v1351, 0
    %1354 = vmatpush.msra.mxu0 0.0
    %1355 = vmatpush.msra.mxu0 0.0
    %1356 = vmatpush.msra.mxu0 0.0
    %1357 = vmatpush.msra.mxu0 0.0
    %1358 = vmatpush.msra.mxu0 0.0
    %1359 = vmatpush.msra.mxu0 0.0
    %1360 = vmatpush.msra.mxu0 0.0
    %1361 = vmatpush.msra.mxu0 0.0
    %1362 = vmatpush.msra.mxu0 0.0
    %1363 = vmatpush.msra.mxu0 0.0
    %1364 = vmatpush.msra.mxu0 0.0
    %1365 = vmatpush.msra.mxu0 0.0
    %1366 = vmatpush.msra.mxu0 0.0
    %1367 = vmatpush.msra.mxu0 0.0
    %1368 = vmatpush.msra.mxu0 %v127
    %1369 = vmatpush.msra.mxu0 %v126
    %1370 = vmatmul.f32.gmra.mxu0 %v1352
    %v1371 = vpop.f32.mrf.mxu0
    %v1372 = vadd.f32 0.0, %v1371
    %1373 = vdwg.mxu0
    %v1375 = vrot.slane %v1372, 5
    %v1376 = vrot.slane %v1372, 6
    %v1377 = vrot.slane %v1372, 7
    %v1378 = vrot.slane %v1372, 1
    %v1379 = vrot.slane %v1372, 2
    %v1380 = vrot.slane %v1372, 3
    %v1381 = vrot.slane %v1372, 4
    %v1390 = vadd.f32 %v175, %v1375
    %v1391 = vadd.f32 %v178, %v1376
    %v1392 = vadd.f32 %v181, %v1377
    %v1393 = vadd.f32 %v184, %v1372
    %v1394 = vadd.f32 %v187, %v1378
    %v1395 = vadd.f32 %v190, %v1379
    %v1396 = vadd.f32 %v193, %v1380
    %v1397 = vadd.f32 %v196, %v1381
    %v1398 = vxor.u32 %v1390, 2147483648
    %v1399 = vxor.u32 %v1391, 2147483648
    %v1400 = vxor.u32 %v1392, 2147483648
    %v1401 = vxor.u32 %v1393, 2147483648
    %v1402 = vxor.u32 %v1394, 2147483648
    %v1403 = vxor.u32 %v1395, 2147483648
    %v1404 = vxor.u32 %v1396, 2147483648
    %v1405 = vxor.u32 %v1397, 2147483648
    %v1406 = vmul.f32 %v1398, 1.442695
    %v1407 = vpow.pop %v1406
    %v1408 = vmul.f32 %v1399, 1.442695
    %v1409 = vpow.pop %v1408
    %v1410 = vmul.f32 %v1400, 1.442695
    %v1411 = vpow.pop %v1410
    %v1412 = vmul.f32 %v1401, 1.442695
    %v1413 = vpow.pop %v1412
    %v1414 = vmul.f32 %v1402, 1.442695
    %v1415 = vpow.pop %v1414
    %v1416 = vmul.f32 %v1403, 1.442695
    %v1417 = vpow.pop %v1416
    %v1418 = vmul.f32 %v1404, 1.442695
    %v1419 = vpow.pop %v1418
    %v1420 = vmul.f32 %v1405, 1.442695
    %v1421 = vpow.pop %v1420
    %v1422 = vadd.f32 %v1407, 1.0
    %v1423 = vadd.f32 %v1409, 1.0
    %v1424 = vadd.f32 %v1411, 1.0
    %v1425 = vadd.f32 %v1413, 1.0
    %v1426 = vadd.f32 %v1415, 1.0
    %v1427 = vadd.f32 %v1417, 1.0
    %v1428 = vadd.f32 %v1419, 1.0
    %v1429 = vadd.f32 %v1421, 1.0
    %v1430 = vrcp.pop %v1422
    %v1431 = vmul.f32 %v1422, %v1430
    %v1432 = vsub.f32 1.0, %v1431
    %v1433 = vmul.f32 %v1430, %v1432
    %v1434 = vadd.f32 %v1430, %v1433
    %vm1435 = vweird.f32 %v1422
    %vm1436 = vweird.f32 %v1430
    %vm1437 = vmor %vm1435, %vm1436
    %v1438 = vsel %vm1437, %v1430, %v1434
    %v1439 = vand.u32 2147483647, %v1422
    %vm1440 = vcmp.eq.f32.partialorder %v1439, 8.507059e+37
    %v1441 = vand.u32 %v1422, 2147483648
    %v1442 = vor.u32 1.1754944e-38, %v1441
    %v1443 = vsel %vm1440, %v1442, %v1438
    %v1444 = vmul.f32 1.0, %v1443
    %v1445 = vrcp.pop %v1423
    %v1446 = vmul.f32 %v1423, %v1445
    %v1447 = vsub.f32 1.0, %v1446
    %v1448 = vmul.f32 %v1445, %v1447
    %v1449 = vadd.f32 %v1445, %v1448
    %vm1450 = vweird.f32 %v1423
    %vm1451 = vweird.f32 %v1445
    %vm1452 = vmor %vm1450, %vm1451
    %v1453 = vsel %vm1452, %v1445, %v1449
    %v1454 = vand.u32 2147483647, %v1423
    %vm1455 = vcmp.eq.f32.partialorder %v1454, 8.507059e+37
    %v1456 = vand.u32 %v1423, 2147483648
    %v1457 = vor.u32 1.1754944e-38, %v1456
    %v1458 = vsel %vm1455, %v1457, %v1453
    %v1459 = vmul.f32 1.0, %v1458
    %v1460 = vrcp.pop %v1424
    %v1461 = vmul.f32 %v1424, %v1460
    %v1462 = vsub.f32 1.0, %v1461
    %v1463 = vmul.f32 %v1460, %v1462
    %v1464 = vadd.f32 %v1460, %v1463
    %vm1465 = vweird.f32 %v1424
    %vm1466 = vweird.f32 %v1460
    %vm1467 = vmor %vm1465, %vm1466
    %v1468 = vsel %vm1467, %v1460, %v1464
    %v1469 = vand.u32 2147483647, %v1424
    %vm1470 = vcmp.eq.f32.partialorder %v1469, 8.507059e+37
    %v1471 = vand.u32 %v1424, 2147483648
    %v1472 = vor.u32 1.1754944e-38, %v1471
    %v1473 = vsel %vm1470, %v1472, %v1468
    %v1474 = vmul.f32 1.0, %v1473
    %v1475 = vrcp.pop %v1425
    %v1476 = vmul.f32 %v1425, %v1475
    %v1477 = vsub.f32 1.0, %v1476
    %v1478 = vmul.f32 %v1475, %v1477
    %v1479 = vadd.f32 %v1475, %v1478
    %vm1480 = vweird.f32 %v1425
    %vm1481 = vweird.f32 %v1475
    %vm1482 = vmor %vm1480, %vm1481
    %v1483 = vsel %vm1482, %v1475, %v1479
    %v1484 = vand.u32 2147483647, %v1425
    %vm1485 = vcmp.eq.f32.partialorder %v1484, 8.507059e+37
    %v1486 = vand.u32 %v1425, 2147483648
    %v1487 = vor.u32 1.1754944e-38, %v1486
    %v1488 = vsel %vm1485, %v1487, %v1483
    %v1489 = vmul.f32 1.0, %v1488
    %v1490 = vrcp.pop %v1426
    %v1491 = vmul.f32 %v1426, %v1490
    %v1492 = vsub.f32 1.0, %v1491
    %v1493 = vmul.f32 %v1490, %v1492
    %v1494 = vadd.f32 %v1490, %v1493
    %vm1495 = vweird.f32 %v1426
    %vm1496 = vweird.f32 %v1490
    %vm1497 = vmor %vm1495, %vm1496
    %v1498 = vsel %vm1497, %v1490, %v1494
    %v1499 = vand.u32 2147483647, %v1426
    %vm1500 = vcmp.eq.f32.partialorder %v1499, 8.507059e+37
    %v1501 = vand.u32 %v1426, 2147483648
    %v1502 = vor.u32 1.1754944e-38, %v1501
    %v1503 = vsel %vm1500, %v1502, %v1498
    %v1504 = vmul.f32 1.0, %v1503
    %v1505 = vrcp.pop %v1427
    %v1506 = vmul.f32 %v1427, %v1505
    %v1507 = vsub.f32 1.0, %v1506
    %v1508 = vmul.f32 %v1505, %v1507
    %v1509 = vadd.f32 %v1505, %v1508
    %vm1510 = vweird.f32 %v1427
    %vm1511 = vweird.f32 %v1505
    %vm1512 = vmor %vm1510, %vm1511
    %v1513 = vsel %vm1512, %v1505, %v1509
    %v1514 = vand.u32 2147483647, %v1427
    %vm1515 = vcmp.eq.f32.partialorder %v1514, 8.507059e+37
    %v1516 = vand.u32 %v1427, 2147483648
    %v1517 = vor.u32 1.1754944e-38, %v1516
    %v1518 = vsel %vm1515, %v1517, %v1513
    %v1519 = vmul.f32 1.0, %v1518
    %v1520 = vrcp.pop %v1428
    %v1521 = vmul.f32 %v1428, %v1520
    %v1522 = vsub.f32 1.0, %v1521
    %v1523 = vmul.f32 %v1520, %v1522
    %v1524 = vadd.f32 %v1520, %v1523
    %vm1525 = vweird.f32 %v1428
    %vm1526 = vweird.f32 %v1520
    %vm1527 = vmor %vm1525, %vm1526
    %v1528 = vsel %vm1527, %v1520, %v1524
    %v1529 = vand.u32 2147483647, %v1428
    %vm1530 = vcmp.eq.f32.partialorder %v1529, 8.507059e+37
    %v1531 = vand.u32 %v1428, 2147483648
    %v1532 = vor.u32 1.1754944e-38, %v1531
    %v1533 = vsel %vm1530, %v1532, %v1528
    %v1534 = vmul.f32 1.0, %v1533
    %v1535 = vrcp.pop %v1429
    %v1536 = vmul.f32 %v1429, %v1535
    %v1537 = vsub.f32 1.0, %v1536
    %v1538 = vmul.f32 %v1535, %v1537
    %v1539 = vadd.f32 %v1535, %v1538
    %vm1540 = vweird.f32 %v1429
    %vm1541 = vweird.f32 %v1535
    %vm1542 = vmor %vm1540, %vm1541
    %v1543 = vsel %vm1542, %v1535, %v1539
    %v1544 = vand.u32 2147483647, %v1429
    %vm1545 = vcmp.eq.f32.partialorder %v1544, 8.507059e+37
    %v1546 = vand.u32 %v1429, 2147483648
    %v1547 = vor.u32 1.1754944e-38, %v1546
    %v1548 = vsel %vm1545, %v1547, %v1543
    %v1549 = vmul.f32 1.0, %v1548
    %v1550 = vtanh.pop %v1390
    %v1551 = vtanh.pop %v1391
    %v1552 = vtanh.pop %v1392
    %v1553 = vtanh.pop %v1393
    %v1554 = vtanh.pop %v1394
    %v1555 = vtanh.pop %v1395
    %v1556 = vtanh.pop %v1396
    %v1557 = vtanh.pop %v1397
    %v1566 = vrot.slane %v1272, 7
    %v1567 = vrot.slane %v1273, 7
    %v1568 = vrot.slane %v1274, 7
    %v1569 = vrot.slane %v1275, 7
    %v1570 = vrot.slane %v1276, 7
    %v1571 = vrot.slane %v1277, 7
    %v1572 = vrot.slane %v1278, 7
    %v1573 = vrot.slane %v1279, 7
    %v1582 = vmul.f32 %v1444, %v1566
    %v1583 = vmul.f32 %v1459, %v1567
    %v1584 = vmul.f32 %v1474, %v1568
    %v1585 = vmul.f32 %v1489, %v1569
    %v1586 = vmul.f32 %v1504, %v1570
    %v1587 = vmul.f32 %v1519, %v1571
    %v1588 = vmul.f32 %v1534, %v1572
    %v1589 = vmul.f32 %v1549, %v1573
    %1598 = vrot.lane.b32.xlu0 %v1550, 96
    %v1599 = vpop.permute.xlu0 %1598
    %1600 = vrot.lane.b32.xlu0 %v1551, 96
    %v1601 = vpop.permute.xlu0 %1600
    %1602 = vrot.lane.b32.xlu0 %v1552, 96
    %v1603 = vpop.permute.xlu0 %1602
    %1604 = vrot.lane.b32.xlu0 %v1553, 96
    %v1605 = vpop.permute.xlu0 %1604
    %1606 = vrot.lane.b32.xlu0 %v1554, 96
    %v1607 = vpop.permute.xlu0 %1606
    %1608 = vrot.lane.b32.xlu0 %v1555, 96
    %v1609 = vpop.permute.xlu0 %1608
    %1610 = vrot.lane.b32.xlu0 %v1556, 96
    %v1611 = vpop.permute.xlu0 %1610
    %1612 = vrot.lane.b32.xlu0 %v1557, 96
    %v1613 = vpop.permute.xlu0 %1612
    %v1622 = vmul.f32 %v1444, %v1599
    %v1623 = vmul.f32 %v1459, %v1601
    %v1624 = vmul.f32 %v1474, %v1603
    %v1625 = vmul.f32 %v1489, %v1605
    %v1626 = vmul.f32 %v1504, %v1607
    %v1627 = vmul.f32 %v1519, %v1609
    %v1628 = vmul.f32 %v1534, %v1611
    %v1629 = vmul.f32 %v1549, %v1613
    %1638 = vrot.lane.b32.xlu0 %v1622, 16
    %v1639 = vpop.permute.xlu0 %1638
    %1640 = vrot.lane.b32.xlu0 %v1623, 16
    %v1641 = vpop.permute.xlu0 %1640
    %1642 = vrot.lane.b32.xlu0 %v1624, 16
    %v1643 = vpop.permute.xlu0 %1642
    %1644 = vrot.lane.b32.xlu0 %v1625, 16
    %v1645 = vpop.permute.xlu0 %1644
    %1646 = vrot.lane.b32.xlu0 %v1626, 16
    %v1647 = vpop.permute.xlu0 %1646
    %1648 = vrot.lane.b32.xlu0 %v1627, 16
    %v1649 = vpop.permute.xlu0 %1648
    %1650 = vrot.lane.b32.xlu0 %v1628, 16
    %v1651 = vpop.permute.xlu0 %1650
    %1652 = vrot.lane.b32.xlu0 %v1629, 16
    %v1653 = vpop.permute.xlu0 %1652
    %v1662 = vadd.f32 %v1582, %v1639
    %v1663 = vadd.f32 %v1583, %v1641
    %v1664 = vadd.f32 %v1584, %v1643
    %v1665 = vadd.f32 %v1585, %v1645
    %v1666 = vadd.f32 %v1586, %v1647
    %v1667 = vadd.f32 %v1587, %v1649
    %v1668 = vadd.f32 %v1588, %v1651
    %v1669 = vadd.f32 %v1589, %v1653
    %v1670 = vtanh.pop %v1662
    %v1671 = vtanh.pop %v1663
    %v1672 = vtanh.pop %v1664
    %v1673 = vtanh.pop %v1665
    %v1674 = vtanh.pop %v1666
    %v1675 = vtanh.pop %v1667
    %v1676 = vtanh.pop %v1668
    %v1677 = vtanh.pop %v1669
    %1686 = vrot.lane.b32.xlu0 %v1670, 32
    %v1687 = vpop.permute.xlu0 %1686
    %1688 = vrot.lane.b32.xlu0 %v1671, 32
    %v1689 = vpop.permute.xlu0 %1688
    %1690 = vrot.lane.b32.xlu0 %v1672, 32
    %v1691 = vpop.permute.xlu0 %1690
    %1692 = vrot.lane.b32.xlu0 %v1673, 32
    %v1693 = vpop.permute.xlu0 %1692
    %1694 = vrot.lane.b32.xlu0 %v1674, 32
    %v1695 = vpop.permute.xlu0 %1694
    %1696 = vrot.lane.b32.xlu0 %v1675, 32
    %v1697 = vpop.permute.xlu0 %1696
    %1698 = vrot.lane.b32.xlu0 %v1676, 32
    %v1699 = vpop.permute.xlu0 %1698
    %1700 = vrot.lane.b32.xlu0 %v1677, 32
    %v1701 = vpop.permute.xlu0 %1700
    %v1710 = vmul.f32 %v1444, %v1687
    %v1711 = vmul.f32 %v1459, %v1689
    %v1712 = vmul.f32 %v1474, %v1691
    %v1713 = vmul.f32 %v1489, %v1693
    %v1714 = vmul.f32 %v1504, %v1695
    %v1715 = vmul.f32 %v1519, %v1697
    %v1716 = vmul.f32 %v1534, %v1699
    %v1717 = vmul.f32 %v1549, %v1701
    %v1726 = vrot.slane %v1710, 3
    %v1727 = vrot.slane %v1711, 2
    %v1728 = vsel %vm550, %v1727, %v1726
    %v1729 = vrot.slane %v1712, 1
    %v1730 = vsel %vm553, %v1729, %v1728
    %v1731 = vsel %vm556, %v1713, %v1730
    %v1732 = vrot.slane %v1714, 7
    %v1733 = vsel %vm559, %v1732, %v1731
    %v1734 = vrot.slane %v1715, 6
    %v1735 = vsel %vm562, %v1734, %v1733
    %v1736 = vrot.slane %v1716, 5
    %v1737 = vsel %vm565, %v1736, %v1735
    %v1738 = vrot.slane %v1717, 4
    %v1739 = vsel %vm568, %v1738, %v1737
    %1740 = vrot.lane.b32.xlu0 %v1739, 80
    %v1741 = vpop.permute.xlu0 %1740
    %v1742 = vsel %vm132, %v1741, 0
    %1744 = vmatpush.msra.mxu0 0.0
    %1745 = vmatpush.msra.mxu0 0.0
    %1746 = vmatpush.msra.mxu0 0.0
    %1747 = vmatpush.msra.mxu0 0.0
    %1748 = vmatpush.msra.mxu0 0.0
    %1749 = vmatpush.msra.mxu0 0.0
    %1750 = vmatpush.msra.mxu0 0.0
    %1751 = vmatpush.msra.mxu0 0.0
    %1752 = vmatpush.msra.mxu0 0.0
    %1753 = vmatpush.msra.mxu0 0.0
    %1754 = vmatpush.msra.mxu0 0.0
    %1755 = vmatpush.msra.mxu0 0.0
    %1756 = vmatpush.msra.mxu0 0.0
    %1757 = vmatpush.msra.mxu0 0.0
    %1758 = vmatpush.msra.mxu0 %v127
    %1759 = vmatpush.msra.mxu0 %v126
    %1760 = vmatmul.f32.gmra.mxu0 %v1742
    %v1761 = vpop.f32.mrf.mxu0
    %v1762 = vadd.f32 0.0, %v1761
    %1763 = vdwg.mxu0
    %v1765 = vrot.slane %v1762, 4
    %v1766 = vrot.slane %v1762, 5
    %v1767 = vrot.slane %v1762, 6
    %v1768 = vrot.slane %v1762, 7
    %v1769 = vrot.slane %v1762, 1
    %v1770 = vrot.slane %v1762, 2
    %v1771 = vrot.slane %v1762, 3
    %v1780 = vadd.f32 %v175, %v1765
    %v1781 = vadd.f32 %v178, %v1766
    %v1782 = vadd.f32 %v181, %v1767
    %v1783 = vadd.f32 %v184, %v1768
    %v1784 = vadd.f32 %v187, %v1762
    %v1785 = vadd.f32 %v190, %v1769
    %v1786 = vadd.f32 %v193, %v1770
    %v1787 = vadd.f32 %v196, %v1771
    %v1788 = vxor.u32 %v1780, 2147483648
    %v1789 = vxor.u32 %v1781, 2147483648
    %v1790 = vxor.u32 %v1782, 2147483648
    %v1791 = vxor.u32 %v1783, 2147483648
    %v1792 = vxor.u32 %v1784, 2147483648
    %v1793 = vxor.u32 %v1785, 2147483648
    %v1794 = vxor.u32 %v1786, 2147483648
    %v1795 = vxor.u32 %v1787, 2147483648
    %v1796 = vmul.f32 %v1788, 1.442695
    %v1797 = vpow.pop %v1796
    %v1798 = vmul.f32 %v1789, 1.442695
    %v1799 = vpow.pop %v1798
    %v1800 = vmul.f32 %v1790, 1.442695
    %v1801 = vpow.pop %v1800
    %v1802 = vmul.f32 %v1791, 1.442695
    %v1803 = vpow.pop %v1802
    %v1804 = vmul.f32 %v1792, 1.442695
    %v1805 = vpow.pop %v1804
    %v1806 = vmul.f32 %v1793, 1.442695
    %v1807 = vpow.pop %v1806
    %v1808 = vmul.f32 %v1794, 1.442695
    %v1809 = vpow.pop %v1808
    %v1810 = vmul.f32 %v1795, 1.442695
    %v1811 = vpow.pop %v1810
    %v1812 = vadd.f32 %v1797, 1.0
    %v1813 = vadd.f32 %v1799, 1.0
    %v1814 = vadd.f32 %v1801, 1.0
    %v1815 = vadd.f32 %v1803, 1.0
    %v1816 = vadd.f32 %v1805, 1.0
    %v1817 = vadd.f32 %v1807, 1.0
    %v1818 = vadd.f32 %v1809, 1.0
    %v1819 = vadd.f32 %v1811, 1.0
    %v1820 = vrcp.pop %v1812
    %v1821 = vmul.f32 %v1812, %v1820
    %v1822 = vsub.f32 1.0, %v1821
    %v1823 = vmul.f32 %v1820, %v1822
    %v1824 = vadd.f32 %v1820, %v1823
    %vm1825 = vweird.f32 %v1812
    %vm1826 = vweird.f32 %v1820
    %vm1827 = vmor %vm1825, %vm1826
    %v1828 = vsel %vm1827, %v1820, %v1824
    %v1829 = vand.u32 2147483647, %v1812
    %vm1830 = vcmp.eq.f32.partialorder %v1829, 8.507059e+37
    %v1831 = vand.u32 %v1812, 2147483648
    %v1832 = vor.u32 1.1754944e-38, %v1831
    %v1833 = vsel %vm1830, %v1832, %v1828
    %v1834 = vmul.f32 1.0, %v1833
    %v1835 = vrcp.pop %v1813
    %v1836 = vmul.f32 %v1813, %v1835
    %v1837 = vsub.f32 1.0, %v1836
    %v1838 = vmul.f32 %v1835, %v1837
    %v1839 = vadd.f32 %v1835, %v1838
    %vm1840 = vweird.f32 %v1813
    %vm1841 = vweird.f32 %v1835
    %vm1842 = vmor %vm1840, %vm1841
    %v1843 = vsel %vm1842, %v1835, %v1839
    %v1844 = vand.u32 2147483647, %v1813
    %vm1845 = vcmp.eq.f32.partialorder %v1844, 8.507059e+37
    %v1846 = vand.u32 %v1813, 2147483648
    %v1847 = vor.u32 1.1754944e-38, %v1846
    %v1848 = vsel %vm1845, %v1847, %v1843
    %v1849 = vmul.f32 1.0, %v1848
    %v1850 = vrcp.pop %v1814
    %v1851 = vmul.f32 %v1814, %v1850
    %v1852 = vsub.f32 1.0, %v1851
    %v1853 = vmul.f32 %v1850, %v1852
    %v1854 = vadd.f32 %v1850, %v1853
    %vm1855 = vweird.f32 %v1814
    %vm1856 = vweird.f32 %v1850
    %vm1857 = vmor %vm1855, %vm1856
    %v1858 = vsel %vm1857, %v1850, %v1854
    %v1859 = vand.u32 2147483647, %v1814
    %vm1860 = vcmp.eq.f32.partialorder %v1859, 8.507059e+37
    %v1861 = vand.u32 %v1814, 2147483648
    %v1862 = vor.u32 1.1754944e-38, %v1861
    %v1863 = vsel %vm1860, %v1862, %v1858
    %v1864 = vmul.f32 1.0, %v1863
    %v1865 = vrcp.pop %v1815
    %v1866 = vmul.f32 %v1815, %v1865
    %v1867 = vsub.f32 1.0, %v1866
    %v1868 = vmul.f32 %v1865, %v1867
    %v1869 = vadd.f32 %v1865, %v1868
    %vm1870 = vweird.f32 %v1815
    %vm1871 = vweird.f32 %v1865
    %vm1872 = vmor %vm1870, %vm1871
    %v1873 = vsel %vm1872, %v1865, %v1869
    %v1874 = vand.u32 2147483647, %v1815
    %vm1875 = vcmp.eq.f32.partialorder %v1874, 8.507059e+37
    %v1876 = vand.u32 %v1815, 2147483648
    %v1877 = vor.u32 1.1754944e-38, %v1876
    %v1878 = vsel %vm1875, %v1877, %v1873
    %v1879 = vmul.f32 1.0, %v1878
    %v1880 = vrcp.pop %v1816
    %v1881 = vmul.f32 %v1816, %v1880
    %v1882 = vsub.f32 1.0, %v1881
    %v1883 = vmul.f32 %v1880, %v1882
    %v1884 = vadd.f32 %v1880, %v1883
    %vm1885 = vweird.f32 %v1816
    %vm1886 = vweird.f32 %v1880
    %vm1887 = vmor %vm1885, %vm1886
    %v1888 = vsel %vm1887, %v1880, %v1884
    %v1889 = vand.u32 2147483647, %v1816
    %vm1890 = vcmp.eq.f32.partialorder %v1889, 8.507059e+37
    %v1891 = vand.u32 %v1816, 2147483648
    %v1892 = vor.u32 1.1754944e-38, %v1891
    %v1893 = vsel %vm1890, %v1892, %v1888
    %v1894 = vmul.f32 1.0, %v1893
    %v1895 = vrcp.pop %v1817
    %v1896 = vmul.f32 %v1817, %v1895
    %v1897 = vsub.f32 1.0, %v1896
    %v1898 = vmul.f32 %v1895, %v1897
    %v1899 = vadd.f32 %v1895, %v1898
    %vm1900 = vweird.f32 %v1817
    %vm1901 = vweird.f32 %v1895
    %vm1902 = vmor %vm1900, %vm1901
    %v1903 = vsel %vm1902, %v1895, %v1899
    %v1904 = vand.u32 2147483647, %v1817
    %vm1905 = vcmp.eq.f32.partialorder %v1904, 8.507059e+37
    %v1906 = vand.u32 %v1817, 2147483648
    %v1907 = vor.u32 1.1754944e-38, %v1906
    %v1908 = vsel %vm1905, %v1907, %v1903
    %v1909 = vmul.f32 1.0, %v1908
    %v1910 = vrcp.pop %v1818
    %v1911 = vmul.f32 %v1818, %v1910
    %v1912 = vsub.f32 1.0, %v1911
    %v1913 = vmul.f32 %v1910, %v1912
    %v1914 = vadd.f32 %v1910, %v1913
    %vm1915 = vweird.f32 %v1818
    %vm1916 = vweird.f32 %v1910
    %vm1917 = vmor %vm1915, %vm1916
    %v1918 = vsel %vm1917, %v1910, %v1914
    %v1919 = vand.u32 2147483647, %v1818
    %vm1920 = vcmp.eq.f32.partialorder %v1919, 8.507059e+37
    %v1921 = vand.u32 %v1818, 2147483648
    %v1922 = vor.u32 1.1754944e-38, %v1921
    %v1923 = vsel %vm1920, %v1922, %v1918
    %v1924 = vmul.f32 1.0, %v1923
    %v1925 = vrcp.pop %v1819
    %v1926 = vmul.f32 %v1819, %v1925
    %v1927 = vsub.f32 1.0, %v1926
    %v1928 = vmul.f32 %v1925, %v1927
    %v1929 = vadd.f32 %v1925, %v1928
    %vm1930 = vweird.f32 %v1819
    %vm1931 = vweird.f32 %v1925
    %vm1932 = vmor %vm1930, %vm1931
    %v1933 = vsel %vm1932, %v1925, %v1929
    %v1934 = vand.u32 2147483647, %v1819
    %vm1935 = vcmp.eq.f32.partialorder %v1934, 8.507059e+37
    %v1936 = vand.u32 %v1819, 2147483648
    %v1937 = vor.u32 1.1754944e-38, %v1936
    %v1938 = vsel %vm1935, %v1937, %v1933
    %v1939 = vmul.f32 1.0, %v1938
    %v1940 = vtanh.pop %v1780
    %v1941 = vtanh.pop %v1781
    %v1942 = vtanh.pop %v1782
    %v1943 = vtanh.pop %v1783
    %v1944 = vtanh.pop %v1784
    %v1945 = vtanh.pop %v1785
    %v1946 = vtanh.pop %v1786
    %v1947 = vtanh.pop %v1787
    %v1956 = vrot.slane %v1662, 7
    %v1957 = vrot.slane %v1663, 7
    %v1958 = vrot.slane %v1664, 7
    %v1959 = vrot.slane %v1665, 7
    %v1960 = vrot.slane %v1666, 7
    %v1961 = vrot.slane %v1667, 7
    %v1962 = vrot.slane %v1668, 7
    %v1963 = vrot.slane %v1669, 7
    %v1972 = vmul.f32 %v1834, %v1956
    %v1973 = vmul.f32 %v1849, %v1957
    %v1974 = vmul.f32 %v1864, %v1958
    %v1975 = vmul.f32 %v1879, %v1959
    %v1976 = vmul.f32 %v1894, %v1960
    %v1977 = vmul.f32 %v1909, %v1961
    %v1978 = vmul.f32 %v1924, %v1962
    %v1979 = vmul.f32 %v1939, %v1963
    %1988 = vrot.lane.b32.xlu0 %v1940, 96
    %v1989 = vpop.permute.xlu0 %1988
    %1990 = vrot.lane.b32.xlu0 %v1941, 96
    %v1991 = vpop.permute.xlu0 %1990
    %1992 = vrot.lane.b32.xlu0 %v1942, 96
    %v1993 = vpop.permute.xlu0 %1992
    %1994 = vrot.lane.b32.xlu0 %v1943, 96
    %v1995 = vpop.permute.xlu0 %1994
    %1996 = vrot.lane.b32.xlu0 %v1944, 96
    %v1997 = vpop.permute.xlu0 %1996
    %1998 = vrot.lane.b32.xlu0 %v1945, 96
    %v1999 = vpop.permute.xlu0 %1998
    %2000 = vrot.lane.b32.xlu0 %v1946, 96
    %v2001 = vpop.permute.xlu0 %2000
    %2002 = vrot.lane.b32.xlu0 %v1947, 96
    %v2003 = vpop.permute.xlu0 %2002
    %v2012 = vmul.f32 %v1834, %v1989
    %v2013 = vmul.f32 %v1849, %v1991
    %v2014 = vmul.f32 %v1864, %v1993
    %v2015 = vmul.f32 %v1879, %v1995
    %v2016 = vmul.f32 %v1894, %v1997
    %v2017 = vmul.f32 %v1909, %v1999
    %v2018 = vmul.f32 %v1924, %v2001
    %v2019 = vmul.f32 %v1939, %v2003
    %2028 = vrot.lane.b32.xlu0 %v2012, 16
    %v2029 = vpop.permute.xlu0 %2028
    %2030 = vrot.lane.b32.xlu0 %v2013, 16
    %v2031 = vpop.permute.xlu0 %2030
    %2032 = vrot.lane.b32.xlu0 %v2014, 16
    %v2033 = vpop.permute.xlu0 %2032
    %2034 = vrot.lane.b32.xlu0 %v2015, 16
    %v2035 = vpop.permute.xlu0 %2034
    %2036 = vrot.lane.b32.xlu0 %v2016, 16
    %v2037 = vpop.permute.xlu0 %2036
    %2038 = vrot.lane.b32.xlu0 %v2017, 16
    %v2039 = vpop.permute.xlu0 %2038
    %2040 = vrot.lane.b32.xlu0 %v2018, 16
    %v2041 = vpop.permute.xlu0 %2040
    %2042 = vrot.lane.b32.xlu0 %v2019, 16
    %v2043 = vpop.permute.xlu0 %2042
    %v2052 = vadd.f32 %v1972, %v2029
    %v2053 = vadd.f32 %v1973, %v2031
    %v2054 = vadd.f32 %v1974, %v2033
    %v2055 = vadd.f32 %v1975, %v2035
    %v2056 = vadd.f32 %v1976, %v2037
    %v2057 = vadd.f32 %v1977, %v2039
    %v2058 = vadd.f32 %v1978, %v2041
    %v2059 = vadd.f32 %v1979, %v2043
    %v2060 = vtanh.pop %v2052
    %v2061 = vtanh.pop %v2053
    %v2062 = vtanh.pop %v2054
    %v2063 = vtanh.pop %v2055
    %v2064 = vtanh.pop %v2056
    %v2065 = vtanh.pop %v2057
    %v2066 = vtanh.pop %v2058
    %v2067 = vtanh.pop %v2059
    %2076 = vrot.lane.b32.xlu0 %v2060, 32
    %v2077 = vpop.permute.xlu0 %2076
    %2078 = vrot.lane.b32.xlu0 %v2061, 32
    %v2079 = vpop.permute.xlu0 %2078
    %2080 = vrot.lane.b32.xlu0 %v2062, 32
    %v2081 = vpop.permute.xlu0 %2080
    %2082 = vrot.lane.b32.xlu0 %v2063, 32
    %v2083 = vpop.permute.xlu0 %2082
    %2084 = vrot.lane.b32.xlu0 %v2064, 32
    %v2085 = vpop.permute.xlu0 %2084
    %2086 = vrot.lane.b32.xlu0 %v2065, 32
    %v2087 = vpop.permute.xlu0 %2086
    %2088 = vrot.lane.b32.xlu0 %v2066, 32
    %v2089 = vpop.permute.xlu0 %2088
    %2090 = vrot.lane.b32.xlu0 %v2067, 32
    %v2091 = vpop.permute.xlu0 %2090
    %v2100 = vmul.f32 %v1834, %v2077
    %v2101 = vmul.f32 %v1849, %v2079
    %v2102 = vmul.f32 %v1864, %v2081
    %v2103 = vmul.f32 %v1879, %v2083
    %v2104 = vmul.f32 %v1894, %v2085
    %v2105 = vmul.f32 %v1909, %v2087
    %v2106 = vmul.f32 %v1924, %v2089
    %v2107 = vmul.f32 %v1939, %v2091
    %v2116 = vrot.slane %v2100, 4
    %v2117 = vrot.slane %v2101, 3
    %v2118 = vsel %vm550, %v2117, %v2116
    %v2119 = vrot.slane %v2102, 2
    %v2120 = vsel %vm553, %v2119, %v2118
    %v2121 = vrot.slane %v2103, 1
    %v2122 = vsel %vm556, %v2121, %v2120
    %v2123 = vsel %vm559, %v2104, %v2122
    %v2124 = vrot.slane %v2105, 7
    %v2125 = vsel %vm562, %v2124, %v2123
    %v2126 = vrot.slane %v2106, 6
    %v2127 = vsel %vm565, %v2126, %v2125
    %v2128 = vrot.slane %v2107, 5
    %v2129 = vsel %vm568, %v2128, %v2127
    %2130 = vrot.lane.b32.xlu0 %v2129, 80
    %v2131 = vpop.permute.xlu0 %2130
    %v2132 = vsel %vm132, %v2131, 0
    %2134 = vmatpush.msra.mxu0 0.0
    %2135 = vmatpush.msra.mxu0 0.0
    %2136 = vmatpush.msra.mxu0 0.0
    %2137 = vmatpush.msra.mxu0 0.0
    %2138 = vmatpush.msra.mxu0 0.0
    %2139 = vmatpush.msra.mxu0 0.0
    %2140 = vmatpush.msra.mxu0 0.0
    %2141 = vmatpush.msra.mxu0 0.0
    %2142 = vmatpush.msra.mxu0 0.0
    %2143 = vmatpush.msra.mxu0 0.0
    %2144 = vmatpush.msra.mxu0 0.0
    %2145 = vmatpush.msra.mxu0 0.0
    %2146 = vmatpush.msra.mxu0 0.0
    %2147 = vmatpush.msra.mxu0 0.0
    %2148 = vmatpush.msra.mxu0 %v127
    %2149 = vmatpush.msra.mxu0 %v126
    %2150 = vmatmul.f32.gmra.mxu0 %v2132
    %v2151 = vpop.f32.mrf.mxu0
    %v2152 = vadd.f32 0.0, %v2151
    %2153 = vdwg.mxu0
    %v2155 = vrot.slane %v2152, 3
    %v2156 = vrot.slane %v2152, 4
    %v2157 = vrot.slane %v2152, 5
    %v2158 = vrot.slane %v2152, 6
    %v2159 = vrot.slane %v2152, 7
    %v2160 = vrot.slane %v2152, 1
    %v2161 = vrot.slane %v2152, 2
    %v2170 = vadd.f32 %v175, %v2155
    %v2171 = vadd.f32 %v178, %v2156
    %v2172 = vadd.f32 %v181, %v2157
    %v2173 = vadd.f32 %v184, %v2158
    %v2174 = vadd.f32 %v187, %v2159
    %v2175 = vadd.f32 %v190, %v2152
    %v2176 = vadd.f32 %v193, %v2160
    %v2177 = vadd.f32 %v196, %v2161
    %v2178 = vxor.u32 %v2170, 2147483648
    %v2179 = vxor.u32 %v2171, 2147483648
    %v2180 = vxor.u32 %v2172, 2147483648
    %v2181 = vxor.u32 %v2173, 2147483648
    %v2182 = vxor.u32 %v2174, 2147483648
    %v2183 = vxor.u32 %v2175, 2147483648
    %v2184 = vxor.u32 %v2176, 2147483648
    %v2185 = vxor.u32 %v2177, 2147483648
    %v2186 = vmul.f32 %v2178, 1.442695
    %v2187 = vpow.pop %v2186
    %v2188 = vmul.f32 %v2179, 1.442695
    %v2189 = vpow.pop %v2188
    %v2190 = vmul.f32 %v2180, 1.442695
    %v2191 = vpow.pop %v2190
    %v2192 = vmul.f32 %v2181, 1.442695
    %v2193 = vpow.pop %v2192
    %v2194 = vmul.f32 %v2182, 1.442695
    %v2195 = vpow.pop %v2194
    %v2196 = vmul.f32 %v2183, 1.442695
    %v2197 = vpow.pop %v2196
    %v2198 = vmul.f32 %v2184, 1.442695
    %v2199 = vpow.pop %v2198
    %v2200 = vmul.f32 %v2185, 1.442695
    %v2201 = vpow.pop %v2200
    %v2202 = vadd.f32 %v2187, 1.0
    %v2203 = vadd.f32 %v2189, 1.0
    %v2204 = vadd.f32 %v2191, 1.0
    %v2205 = vadd.f32 %v2193, 1.0
    %v2206 = vadd.f32 %v2195, 1.0
    %v2207 = vadd.f32 %v2197, 1.0
    %v2208 = vadd.f32 %v2199, 1.0
    %v2209 = vadd.f32 %v2201, 1.0
    %v2210 = vrcp.pop %v2202
    %v2211 = vmul.f32 %v2202, %v2210
    %v2212 = vsub.f32 1.0, %v2211
    %v2213 = vmul.f32 %v2210, %v2212
    %v2214 = vadd.f32 %v2210, %v2213
    %vm2215 = vweird.f32 %v2202
    %vm2216 = vweird.f32 %v2210
    %vm2217 = vmor %vm2215, %vm2216
    %v2218 = vsel %vm2217, %v2210, %v2214
    %v2219 = vand.u32 2147483647, %v2202
    %vm2220 = vcmp.eq.f32.partialorder %v2219, 8.507059e+37
    %v2221 = vand.u32 %v2202, 2147483648
    %v2222 = vor.u32 1.1754944e-38, %v2221
    %v2223 = vsel %vm2220, %v2222, %v2218
    %v2224 = vmul.f32 1.0, %v2223
    %v2225 = vrcp.pop %v2203
    %v2226 = vmul.f32 %v2203, %v2225
    %v2227 = vsub.f32 1.0, %v2226
    %v2228 = vmul.f32 %v2225, %v2227
    %v2229 = vadd.f32 %v2225, %v2228
    %vm2230 = vweird.f32 %v2203
    %vm2231 = vweird.f32 %v2225
    %vm2232 = vmor %vm2230, %vm2231
    %v2233 = vsel %vm2232, %v2225, %v2229
    %v2234 = vand.u32 2147483647, %v2203
    %vm2235 = vcmp.eq.f32.partialorder %v2234, 8.507059e+37
    %v2236 = vand.u32 %v2203, 2147483648
    %v2237 = vor.u32 1.1754944e-38, %v2236
    %v2238 = vsel %vm2235, %v2237, %v2233
    %v2239 = vmul.f32 1.0, %v2238
    %v2240 = vrcp.pop %v2204
    %v2241 = vmul.f32 %v2204, %v2240
    %v2242 = vsub.f32 1.0, %v2241
    %v2243 = vmul.f32 %v2240, %v2242
    %v2244 = vadd.f32 %v2240, %v2243
    %vm2245 = vweird.f32 %v2204
    %vm2246 = vweird.f32 %v2240
    %vm2247 = vmor %vm2245, %vm2246
    %v2248 = vsel %vm2247, %v2240, %v2244
    %v2249 = vand.u32 2147483647, %v2204
    %vm2250 = vcmp.eq.f32.partialorder %v2249, 8.507059e+37
    %v2251 = vand.u32 %v2204, 2147483648
    %v2252 = vor.u32 1.1754944e-38, %v2251
    %v2253 = vsel %vm2250, %v2252, %v2248
    %v2254 = vmul.f32 1.0, %v2253
    %v2255 = vrcp.pop %v2205
    %v2256 = vmul.f32 %v2205, %v2255
    %v2257 = vsub.f32 1.0, %v2256
    %v2258 = vmul.f32 %v2255, %v2257
    %v2259 = vadd.f32 %v2255, %v2258
    %vm2260 = vweird.f32 %v2205
    %vm2261 = vweird.f32 %v2255
    %vm2262 = vmor %vm2260, %vm2261
    %v2263 = vsel %vm2262, %v2255, %v2259
    %v2264 = vand.u32 2147483647, %v2205
    %vm2265 = vcmp.eq.f32.partialorder %v2264, 8.507059e+37
    %v2266 = vand.u32 %v2205, 2147483648
    %v2267 = vor.u32 1.1754944e-38, %v2266
    %v2268 = vsel %vm2265, %v2267, %v2263
    %v2269 = vmul.f32 1.0, %v2268
    %v2270 = vrcp.pop %v2206
    %v2271 = vmul.f32 %v2206, %v2270
    %v2272 = vsub.f32 1.0, %v2271
    %v2273 = vmul.f32 %v2270, %v2272
    %v2274 = vadd.f32 %v2270, %v2273
    %vm2275 = vweird.f32 %v2206
    %vm2276 = vweird.f32 %v2270
    %vm2277 = vmor %vm2275, %vm2276
    %v2278 = vsel %vm2277, %v2270, %v2274
    %v2279 = vand.u32 2147483647, %v2206
    %vm2280 = vcmp.eq.f32.partialorder %v2279, 8.507059e+37
    %v2281 = vand.u32 %v2206, 2147483648
    %v2282 = vor.u32 1.1754944e-38, %v2281
    %v2283 = vsel %vm2280, %v2282, %v2278
    %v2284 = vmul.f32 1.0, %v2283
    %v2285 = vrcp.pop %v2207
    %v2286 = vmul.f32 %v2207, %v2285
    %v2287 = vsub.f32 1.0, %v2286
    %v2288 = vmul.f32 %v2285, %v2287
    %v2289 = vadd.f32 %v2285, %v2288
    %vm2290 = vweird.f32 %v2207
    %vm2291 = vweird.f32 %v2285
    %vm2292 = vmor %vm2290, %vm2291
    %v2293 = vsel %vm2292, %v2285, %v2289
    %v2294 = vand.u32 2147483647, %v2207
    %vm2295 = vcmp.eq.f32.partialorder %v2294, 8.507059e+37
    %v2296 = vand.u32 %v2207, 2147483648
    %v2297 = vor.u32 1.1754944e-38, %v2296
    %v2298 = vsel %vm2295, %v2297, %v2293
    %v2299 = vmul.f32 1.0, %v2298
    %v2300 = vrcp.pop %v2208
    %v2301 = vmul.f32 %v2208, %v2300
    %v2302 = vsub.f32 1.0, %v2301
    %v2303 = vmul.f32 %v2300, %v2302
    %v2304 = vadd.f32 %v2300, %v2303
    %vm2305 = vweird.f32 %v2208
    %vm2306 = vweird.f32 %v2300
    %vm2307 = vmor %vm2305, %vm2306
    %v2308 = vsel %vm2307, %v2300, %v2304
    %v2309 = vand.u32 2147483647, %v2208
    %vm2310 = vcmp.eq.f32.partialorder %v2309, 8.507059e+37
    %v2311 = vand.u32 %v2208, 2147483648
    %v2312 = vor.u32 1.1754944e-38, %v2311
    %v2313 = vsel %vm2310, %v2312, %v2308
    %v2314 = vmul.f32 1.0, %v2313
    %v2315 = vrcp.pop %v2209
    %v2316 = vmul.f32 %v2209, %v2315
    %v2317 = vsub.f32 1.0, %v2316
    %v2318 = vmul.f32 %v2315, %v2317
    %v2319 = vadd.f32 %v2315, %v2318
    %vm2320 = vweird.f32 %v2209
    %vm2321 = vweird.f32 %v2315
    %vm2322 = vmor %vm2320, %vm2321
    %v2323 = vsel %vm2322, %v2315, %v2319
    %v2324 = vand.u32 2147483647, %v2209
    %vm2325 = vcmp.eq.f32.partialorder %v2324, 8.507059e+37
    %v2326 = vand.u32 %v2209, 2147483648
    %v2327 = vor.u32 1.1754944e-38, %v2326
    %v2328 = vsel %vm2325, %v2327, %v2323
    %v2329 = vmul.f32 1.0, %v2328
    %v2330 = vtanh.pop %v2170
    %v2331 = vtanh.pop %v2171
    %v2332 = vtanh.pop %v2172
    %v2333 = vtanh.pop %v2173
    %v2334 = vtanh.pop %v2174
    %v2335 = vtanh.pop %v2175
    %v2336 = vtanh.pop %v2176
    %v2337 = vtanh.pop %v2177
    %v2346 = vrot.slane %v2052, 7
    %v2347 = vrot.slane %v2053, 7
    %v2348 = vrot.slane %v2054, 7
    %v2349 = vrot.slane %v2055, 7
    %v2350 = vrot.slane %v2056, 7
    %v2351 = vrot.slane %v2057, 7
    %v2352 = vrot.slane %v2058, 7
    %v2353 = vrot.slane %v2059, 7
    %v2362 = vmul.f32 %v2224, %v2346
    %v2363 = vmul.f32 %v2239, %v2347
    %v2364 = vmul.f32 %v2254, %v2348
    %v2365 = vmul.f32 %v2269, %v2349
    %v2366 = vmul.f32 %v2284, %v2350
    %v2367 = vmul.f32 %v2299, %v2351
    %v2368 = vmul.f32 %v2314, %v2352
    %v2369 = vmul.f32 %v2329, %v2353
    %2378 = vrot.lane.b32.xlu0 %v2330, 96
    %v2379 = vpop.permute.xlu0 %2378
    %2380 = vrot.lane.b32.xlu0 %v2331, 96
    %v2381 = vpop.permute.xlu0 %2380
    %2382 = vrot.lane.b32.xlu0 %v2332, 96
    %v2383 = vpop.permute.xlu0 %2382
    %2384 = vrot.lane.b32.xlu0 %v2333, 96
    %v2385 = vpop.permute.xlu0 %2384
    %2386 = vrot.lane.b32.xlu0 %v2334, 96
    %v2387 = vpop.permute.xlu0 %2386
    %2388 = vrot.lane.b32.xlu0 %v2335, 96
    %v2389 = vpop.permute.xlu0 %2388
    %2390 = vrot.lane.b32.xlu0 %v2336, 96
    %v2391 = vpop.permute.xlu0 %2390
    %2392 = vrot.lane.b32.xlu0 %v2337, 96
    %v2393 = vpop.permute.xlu0 %2392
    %v2402 = vmul.f32 %v2224, %v2379
    %v2403 = vmul.f32 %v2239, %v2381
    %v2404 = vmul.f32 %v2254, %v2383
    %v2405 = vmul.f32 %v2269, %v2385
    %v2406 = vmul.f32 %v2284, %v2387
    %v2407 = vmul.f32 %v2299, %v2389
    %v2408 = vmul.f32 %v2314, %v2391
    %v2409 = vmul.f32 %v2329, %v2393
    %2418 = vrot.lane.b32.xlu0 %v2402, 16
    %v2419 = vpop.permute.xlu0 %2418
    %2420 = vrot.lane.b32.xlu0 %v2403, 16
    %v2421 = vpop.permute.xlu0 %2420
    %2422 = vrot.lane.b32.xlu0 %v2404, 16
    %v2423 = vpop.permute.xlu0 %2422
    %2424 = vrot.lane.b32.xlu0 %v2405, 16
    %v2425 = vpop.permute.xlu0 %2424
    %2426 = vrot.lane.b32.xlu0 %v2406, 16
    %v2427 = vpop.permute.xlu0 %2426
    %2428 = vrot.lane.b32.xlu0 %v2407, 16
    %v2429 = vpop.permute.xlu0 %2428
    %2430 = vrot.lane.b32.xlu0 %v2408, 16
    %v2431 = vpop.permute.xlu0 %2430
    %2432 = vrot.lane.b32.xlu0 %v2409, 16
    %v2433 = vpop.permute.xlu0 %2432
    %v2442 = vadd.f32 %v2362, %v2419
    %v2443 = vadd.f32 %v2363, %v2421
    %v2444 = vadd.f32 %v2364, %v2423
    %v2445 = vadd.f32 %v2365, %v2425
    %v2446 = vadd.f32 %v2366, %v2427
    %v2447 = vadd.f32 %v2367, %v2429
    %v2448 = vadd.f32 %v2368, %v2431
    %v2449 = vadd.f32 %v2369, %v2433
    %v2450 = vtanh.pop %v2442
    %v2451 = vtanh.pop %v2443
    %v2452 = vtanh.pop %v2444
    %v2453 = vtanh.pop %v2445
    %v2454 = vtanh.pop %v2446
    %v2455 = vtanh.pop %v2447
    %v2456 = vtanh.pop %v2448
    %v2457 = vtanh.pop %v2449
    %2466 = vrot.lane.b32.xlu0 %v2450, 32
    %v2467 = vpop.permute.xlu0 %2466
    %2468 = vrot.lane.b32.xlu0 %v2451, 32
    %v2469 = vpop.permute.xlu0 %2468
    %2470 = vrot.lane.b32.xlu0 %v2452, 32
    %v2471 = vpop.permute.xlu0 %2470
    %2472 = vrot.lane.b32.xlu0 %v2453, 32
    %v2473 = vpop.permute.xlu0 %2472
    %2474 = vrot.lane.b32.xlu0 %v2454, 32
    %v2475 = vpop.permute.xlu0 %2474
    %2476 = vrot.lane.b32.xlu0 %v2455, 32
    %v2477 = vpop.permute.xlu0 %2476
    %2478 = vrot.lane.b32.xlu0 %v2456, 32
    %v2479 = vpop.permute.xlu0 %2478
    %2480 = vrot.lane.b32.xlu0 %v2457, 32
    %v2481 = vpop.permute.xlu0 %2480
    %v2490 = vmul.f32 %v2224, %v2467
    %v2491 = vmul.f32 %v2239, %v2469
    %v2492 = vmul.f32 %v2254, %v2471
    %v2493 = vmul.f32 %v2269, %v2473
    %v2494 = vmul.f32 %v2284, %v2475
    %v2495 = vmul.f32 %v2299, %v2477
    %v2496 = vmul.f32 %v2314, %v2479
    %v2497 = vmul.f32 %v2329, %v2481
    %v2506 = vrot.slane %v2490, 5
    %v2507 = vrot.slane %v2491, 4
    %v2508 = vsel %vm550, %v2507, %v2506
    %v2509 = vrot.slane %v2492, 3
    %v2510 = vsel %vm553, %v2509, %v2508
    %v2511 = vrot.slane %v2493, 2
    %v2512 = vsel %vm556, %v2511, %v2510
    %v2513 = vrot.slane %v2494, 1
    %v2514 = vsel %vm559, %v2513, %v2512
    %v2515 = vsel %vm562, %v2495, %v2514
    %v2516 = vrot.slane %v2496, 7
    %v2517 = vsel %vm565, %v2516, %v2515
    %v2518 = vrot.slane %v2497, 6
    %v2519 = vsel %vm568, %v2518, %v2517
    %2520 = vrot.lane.b32.xlu0 %v2519, 80
    %v2521 = vpop.permute.xlu0 %2520
    %v2522 = vsel %vm132, %v2521, 0
    %2524 = vmatpush.msra.mxu0 0.0
    %2525 = vmatpush.msra.mxu0 0.0
    %2526 = vmatpush.msra.mxu0 0.0
    %2527 = vmatpush.msra.mxu0 0.0
    %2528 = vmatpush.msra.mxu0 0.0
    %2529 = vmatpush.msra.mxu0 0.0
    %2530 = vmatpush.msra.mxu0 0.0
    %2531 = vmatpush.msra.mxu0 0.0
    %2532 = vmatpush.msra.mxu0 0.0
    %2533 = vmatpush.msra.mxu0 0.0
    %2534 = vmatpush.msra.mxu0 0.0
    %2535 = vmatpush.msra.mxu0 0.0
    %2536 = vmatpush.msra.mxu0 0.0
    %2537 = vmatpush.msra.mxu0 0.0
    %2538 = vmatpush.msra.mxu0 %v127
    %2539 = vmatpush.msra.mxu0 %v126
    %2540 = vmatmul.f32.gmra.mxu0 %v2522
    %v2541 = vpop.f32.mrf.mxu0
    %v2542 = vadd.f32 0.0, %v2541
    %2543 = vdwg.mxu0
    %v2545 = vrot.slane %v2542, 2
    %v2546 = vrot.slane %v2542, 3
    %v2547 = vrot.slane %v2542, 4
    %v2548 = vrot.slane %v2542, 5
    %v2549 = vrot.slane %v2542, 6
    %v2550 = vrot.slane %v2542, 7
    %v2551 = vrot.slane %v2542, 1
    %v2560 = vadd.f32 %v175, %v2545
    %v2561 = vadd.f32 %v178, %v2546
    %v2562 = vadd.f32 %v181, %v2547
    %v2563 = vadd.f32 %v184, %v2548
    %v2564 = vadd.f32 %v187, %v2549
    %v2565 = vadd.f32 %v190, %v2550
    %v2566 = vadd.f32 %v193, %v2542
    %v2567 = vadd.f32 %v196, %v2551
    %v2568 = vxor.u32 %v2560, 2147483648
    %v2569 = vxor.u32 %v2561, 2147483648
    %v2570 = vxor.u32 %v2562, 2147483648
    %v2571 = vxor.u32 %v2563, 2147483648
    %v2572 = vxor.u32 %v2564, 2147483648
    %v2573 = vxor.u32 %v2565, 2147483648
    %v2574 = vxor.u32 %v2566, 2147483648
    %v2575 = vxor.u32 %v2567, 2147483648
    %v2576 = vmul.f32 %v2568, 1.442695
    %v2577 = vpow.pop %v2576
    %v2578 = vmul.f32 %v2569, 1.442695
    %v2579 = vpow.pop %v2578
    %v2580 = vmul.f32 %v2570, 1.442695
    %v2581 = vpow.pop %v2580
    %v2582 = vmul.f32 %v2571, 1.442695
    %v2583 = vpow.pop %v2582
    %v2584 = vmul.f32 %v2572, 1.442695
    %v2585 = vpow.pop %v2584
    %v2586 = vmul.f32 %v2573, 1.442695
    %v2587 = vpow.pop %v2586
    %v2588 = vmul.f32 %v2574, 1.442695
    %v2589 = vpow.pop %v2588
    %v2590 = vmul.f32 %v2575, 1.442695
    %v2591 = vpow.pop %v2590
    %v2592 = vadd.f32 %v2577, 1.0
    %v2593 = vadd.f32 %v2579, 1.0
    %v2594 = vadd.f32 %v2581, 1.0
    %v2595 = vadd.f32 %v2583, 1.0
    %v2596 = vadd.f32 %v2585, 1.0
    %v2597 = vadd.f32 %v2587, 1.0
    %v2598 = vadd.f32 %v2589, 1.0
    %v2599 = vadd.f32 %v2591, 1.0
    %v2600 = vrcp.pop %v2592
    %v2601 = vmul.f32 %v2592, %v2600
    %v2602 = vsub.f32 1.0, %v2601
    %v2603 = vmul.f32 %v2600, %v2602
    %v2604 = vadd.f32 %v2600, %v2603
    %vm2605 = vweird.f32 %v2592
    %vm2606 = vweird.f32 %v2600
    %vm2607 = vmor %vm2605, %vm2606
    %v2608 = vsel %vm2607, %v2600, %v2604
    %v2609 = vand.u32 2147483647, %v2592
    %vm2610 = vcmp.eq.f32.partialorder %v2609, 8.507059e+37
    %v2611 = vand.u32 %v2592, 2147483648
    %v2612 = vor.u32 1.1754944e-38, %v2611
    %v2613 = vsel %vm2610, %v2612, %v2608
    %v2614 = vmul.f32 1.0, %v2613
    %v2615 = vrcp.pop %v2593
    %v2616 = vmul.f32 %v2593, %v2615
    %v2617 = vsub.f32 1.0, %v2616
    %v2618 = vmul.f32 %v2615, %v2617
    %v2619 = vadd.f32 %v2615, %v2618
    %vm2620 = vweird.f32 %v2593
    %vm2621 = vweird.f32 %v2615
    %vm2622 = vmor %vm2620, %vm2621
    %v2623 = vsel %vm2622, %v2615, %v2619
    %v2624 = vand.u32 2147483647, %v2593
    %vm2625 = vcmp.eq.f32.partialorder %v2624, 8.507059e+37
    %v2626 = vand.u32 %v2593, 2147483648
    %v2627 = vor.u32 1.1754944e-38, %v2626
    %v2628 = vsel %vm2625, %v2627, %v2623
    %v2629 = vmul.f32 1.0, %v2628
    %v2630 = vrcp.pop %v2594
    %v2631 = vmul.f32 %v2594, %v2630
    %v2632 = vsub.f32 1.0, %v2631
    %v2633 = vmul.f32 %v2630, %v2632
    %v2634 = vadd.f32 %v2630, %v2633
    %vm2635 = vweird.f32 %v2594
    %vm2636 = vweird.f32 %v2630
    %vm2637 = vmor %vm2635, %vm2636
    %v2638 = vsel %vm2637, %v2630, %v2634
    %v2639 = vand.u32 2147483647, %v2594
    %vm2640 = vcmp.eq.f32.partialorder %v2639, 8.507059e+37
    %v2641 = vand.u32 %v2594, 2147483648
    %v2642 = vor.u32 1.1754944e-38, %v2641
    %v2643 = vsel %vm2640, %v2642, %v2638
    %v2644 = vmul.f32 1.0, %v2643
    %v2645 = vrcp.pop %v2595
    %v2646 = vmul.f32 %v2595, %v2645
    %v2647 = vsub.f32 1.0, %v2646
    %v2648 = vmul.f32 %v2645, %v2647
    %v2649 = vadd.f32 %v2645, %v2648
    %vm2650 = vweird.f32 %v2595
    %vm2651 = vweird.f32 %v2645
    %vm2652 = vmor %vm2650, %vm2651
    %v2653 = vsel %vm2652, %v2645, %v2649
    %v2654 = vand.u32 2147483647, %v2595
    %vm2655 = vcmp.eq.f32.partialorder %v2654, 8.507059e+37
    %v2656 = vand.u32 %v2595, 2147483648
    %v2657 = vor.u32 1.1754944e-38, %v2656
    %v2658 = vsel %vm2655, %v2657, %v2653
    %v2659 = vmul.f32 1.0, %v2658
    %v2660 = vrcp.pop %v2596
    %v2661 = vmul.f32 %v2596, %v2660
    %v2662 = vsub.f32 1.0, %v2661
    %v2663 = vmul.f32 %v2660, %v2662
    %v2664 = vadd.f32 %v2660, %v2663
    %vm2665 = vweird.f32 %v2596
    %vm2666 = vweird.f32 %v2660
    %vm2667 = vmor %vm2665, %vm2666
    %v2668 = vsel %vm2667, %v2660, %v2664
    %v2669 = vand.u32 2147483647, %v2596
    %vm2670 = vcmp.eq.f32.partialorder %v2669, 8.507059e+37
    %v2671 = vand.u32 %v2596, 2147483648
    %v2672 = vor.u32 1.1754944e-38, %v2671
    %v2673 = vsel %vm2670, %v2672, %v2668
    %v2674 = vmul.f32 1.0, %v2673
    %v2675 = vrcp.pop %v2597
    %v2676 = vmul.f32 %v2597, %v2675
    %v2677 = vsub.f32 1.0, %v2676
    %v2678 = vmul.f32 %v2675, %v2677
    %v2679 = vadd.f32 %v2675, %v2678
    %vm2680 = vweird.f32 %v2597
    %vm2681 = vweird.f32 %v2675
    %vm2682 = vmor %vm2680, %vm2681
    %v2683 = vsel %vm2682, %v2675, %v2679
    %v2684 = vand.u32 2147483647, %v2597
    %vm2685 = vcmp.eq.f32.partialorder %v2684, 8.507059e+37
    %v2686 = vand.u32 %v2597, 2147483648
    %v2687 = vor.u32 1.1754944e-38, %v2686
    %v2688 = vsel %vm2685, %v2687, %v2683
    %v2689 = vmul.f32 1.0, %v2688
    %v2690 = vrcp.pop %v2598
    %v2691 = vmul.f32 %v2598, %v2690
    %v2692 = vsub.f32 1.0, %v2691
    %v2693 = vmul.f32 %v2690, %v2692
    %v2694 = vadd.f32 %v2690, %v2693
    %vm2695 = vweird.f32 %v2598
    %vm2696 = vweird.f32 %v2690
    %vm2697 = vmor %vm2695, %vm2696
    %v2698 = vsel %vm2697, %v2690, %v2694
    %v2699 = vand.u32 2147483647, %v2598
    %vm2700 = vcmp.eq.f32.partialorder %v2699, 8.507059e+37
    %v2701 = vand.u32 %v2598, 2147483648
    %v2702 = vor.u32 1.1754944e-38, %v2701
    %v2703 = vsel %vm2700, %v2702, %v2698
    %v2704 = vmul.f32 1.0, %v2703
    %v2705 = vrcp.pop %v2599
    %v2706 = vmul.f32 %v2599, %v2705
    %v2707 = vsub.f32 1.0, %v2706
    %v2708 = vmul.f32 %v2705, %v2707
    %v2709 = vadd.f32 %v2705, %v2708
    %vm2710 = vweird.f32 %v2599
    %vm2711 = vweird.f32 %v2705
    %vm2712 = vmor %vm2710, %vm2711
    %v2713 = vsel %vm2712, %v2705, %v2709
    %v2714 = vand.u32 2147483647, %v2599
    %vm2715 = vcmp.eq.f32.partialorder %v2714, 8.507059e+37
    %v2716 = vand.u32 %v2599, 2147483648
    %v2717 = vor.u32 1.1754944e-38, %v2716
    %v2718 = vsel %vm2715, %v2717, %v2713
    %v2719 = vmul.f32 1.0, %v2718
    %v2720 = vtanh.pop %v2560
    %v2721 = vtanh.pop %v2561
    %v2722 = vtanh.pop %v2562
    %v2723 = vtanh.pop %v2563
    %v2724 = vtanh.pop %v2564
    %v2725 = vtanh.pop %v2565
    %v2726 = vtanh.pop %v2566
    %v2727 = vtanh.pop %v2567
    %v2736 = vrot.slane %v2442, 7
    %v2737 = vrot.slane %v2443, 7
    %v2738 = vrot.slane %v2444, 7
    %v2739 = vrot.slane %v2445, 7
    %v2740 = vrot.slane %v2446, 7
    %v2741 = vrot.slane %v2447, 7
    %v2742 = vrot.slane %v2448, 7
    %v2743 = vrot.slane %v2449, 7
    %v2752 = vmul.f32 %v2614, %v2736
    %v2753 = vmul.f32 %v2629, %v2737
    %v2754 = vmul.f32 %v2644, %v2738
    %v2755 = vmul.f32 %v2659, %v2739
    %v2756 = vmul.f32 %v2674, %v2740
    %v2757 = vmul.f32 %v2689, %v2741
    %v2758 = vmul.f32 %v2704, %v2742
    %v2759 = vmul.f32 %v2719, %v2743
    %2768 = vrot.lane.b32.xlu0 %v2720, 96
    %v2769 = vpop.permute.xlu0 %2768
    %2770 = vrot.lane.b32.xlu0 %v2721, 96
    %v2771 = vpop.permute.xlu0 %2770
    %2772 = vrot.lane.b32.xlu0 %v2722, 96
    %v2773 = vpop.permute.xlu0 %2772
    %2774 = vrot.lane.b32.xlu0 %v2723, 96
    %v2775 = vpop.permute.xlu0 %2774
    %2776 = vrot.lane.b32.xlu0 %v2724, 96
    %v2777 = vpop.permute.xlu0 %2776
    %2778 = vrot.lane.b32.xlu0 %v2725, 96
    %v2779 = vpop.permute.xlu0 %2778
    %2780 = vrot.lane.b32.xlu0 %v2726, 96
    %v2781 = vpop.permute.xlu0 %2780
    %2782 = vrot.lane.b32.xlu0 %v2727, 96
    %v2783 = vpop.permute.xlu0 %2782
    %v2792 = vmul.f32 %v2614, %v2769
    %v2793 = vmul.f32 %v2629, %v2771
    %v2794 = vmul.f32 %v2644, %v2773
    %v2795 = vmul.f32 %v2659, %v2775
    %v2796 = vmul.f32 %v2674, %v2777
    %v2797 = vmul.f32 %v2689, %v2779
    %v2798 = vmul.f32 %v2704, %v2781
    %v2799 = vmul.f32 %v2719, %v2783
    %2808 = vrot.lane.b32.xlu0 %v2792, 16
    %v2809 = vpop.permute.xlu0 %2808
    %2810 = vrot.lane.b32.xlu0 %v2793, 16
    %v2811 = vpop.permute.xlu0 %2810
    %2812 = vrot.lane.b32.xlu0 %v2794, 16
    %v2813 = vpop.permute.xlu0 %2812
    %2814 = vrot.lane.b32.xlu0 %v2795, 16
    %v2815 = vpop.permute.xlu0 %2814
    %2816 = vrot.lane.b32.xlu0 %v2796, 16
    %v2817 = vpop.permute.xlu0 %2816
    %2818 = vrot.lane.b32.xlu0 %v2797, 16
    %v2819 = vpop.permute.xlu0 %2818
    %2820 = vrot.lane.b32.xlu0 %v2798, 16
    %v2821 = vpop.permute.xlu0 %2820
    %2822 = vrot.lane.b32.xlu0 %v2799, 16
    %v2823 = vpop.permute.xlu0 %2822
    %v2832 = vadd.f32 %v2752, %v2809
    %v2833 = vadd.f32 %v2753, %v2811
    %v2834 = vadd.f32 %v2754, %v2813
    %v2835 = vadd.f32 %v2755, %v2815
    %v2836 = vadd.f32 %v2756, %v2817
    %v2837 = vadd.f32 %v2757, %v2819
    %v2838 = vadd.f32 %v2758, %v2821
    %v2839 = vadd.f32 %v2759, %v2823
    %v2840 = vtanh.pop %v2832
    %v2841 = vtanh.pop %v2833
    %v2842 = vtanh.pop %v2834
    %v2843 = vtanh.pop %v2835
    %v2844 = vtanh.pop %v2836
    %v2845 = vtanh.pop %v2837
    %v2846 = vtanh.pop %v2838
    %v2847 = vtanh.pop %v2839
    %2856 = vrot.lane.b32.xlu0 %v2840, 32
    %v2857 = vpop.permute.xlu0 %2856
    %2858 = vrot.lane.b32.xlu0 %v2841, 32
    %v2859 = vpop.permute.xlu0 %2858
    %2860 = vrot.lane.b32.xlu0 %v2842, 32
    %v2861 = vpop.permute.xlu0 %2860
    %2862 = vrot.lane.b32.xlu0 %v2843, 32
    %v2863 = vpop.permute.xlu0 %2862
    %2864 = vrot.lane.b32.xlu0 %v2844, 32
    %v2865 = vpop.permute.xlu0 %2864
    %2866 = vrot.lane.b32.xlu0 %v2845, 32
    %v2867 = vpop.permute.xlu0 %2866
    %2868 = vrot.lane.b32.xlu0 %v2846, 32
    %v2869 = vpop.permute.xlu0 %2868
    %2870 = vrot.lane.b32.xlu0 %v2847, 32
    %v2871 = vpop.permute.xlu0 %2870
    %v2880 = vmul.f32 %v2614, %v2857
    %v2881 = vmul.f32 %v2629, %v2859
    %v2882 = vmul.f32 %v2644, %v2861
    %v2883 = vmul.f32 %v2659, %v2863
    %v2884 = vmul.f32 %v2674, %v2865
    %v2885 = vmul.f32 %v2689, %v2867
    %v2886 = vmul.f32 %v2704, %v2869
    %v2887 = vmul.f32 %v2719, %v2871
    %v2896 = vrot.slane %v2880, 6
    %v2897 = vrot.slane %v2881, 5
    %v2898 = vsel %vm550, %v2897, %v2896
    %v2899 = vrot.slane %v2882, 4
    %v2900 = vsel %vm553, %v2899, %v2898
    %v2901 = vrot.slane %v2883, 3
    %v2902 = vsel %vm556, %v2901, %v2900
    %v2903 = vrot.slane %v2884, 2
    %v2904 = vsel %vm559, %v2903, %v2902
    %v2905 = vrot.slane %v2885, 1
    %v2906 = vsel %vm562, %v2905, %v2904
    %v2907 = vsel %vm565, %v2886, %v2906
    %v2908 = vrot.slane %v2887, 7
    %v2909 = vsel %vm568, %v2908, %v2907
    %2910 = vrot.lane.b32.xlu0 %v2909, 80
    %v2911 = vpop.permute.xlu0 %2910
    %v2912 = vsel %vm132, %v2911, 0
    %2914 = vmatpush.msra.mxu0 0.0
    %2915 = vmatpush.msra.mxu0 0.0
    %2916 = vmatpush.msra.mxu0 0.0
    %2917 = vmatpush.msra.mxu0 0.0
    %2918 = vmatpush.msra.mxu0 0.0
    %2919 = vmatpush.msra.mxu0 0.0
    %2920 = vmatpush.msra.mxu0 0.0
    %2921 = vmatpush.msra.mxu0 0.0
    %2922 = vmatpush.msra.mxu0 0.0
    %2923 = vmatpush.msra.mxu0 0.0
    %2924 = vmatpush.msra.mxu0 0.0
    %2925 = vmatpush.msra.mxu0 0.0
    %2926 = vmatpush.msra.mxu0 0.0
    %2927 = vmatpush.msra.mxu0 0.0
    %2928 = vmatpush.msra.mxu0 %v127
    %2929 = vmatpush.msra.mxu0 %v126
    %2930 = vmatmul.f32.gmra.mxu0 %v2912
    %v2931 = vpop.f32.mrf.mxu0
    %v2932 = vadd.f32 0.0, %v2931
    %2933 = vdwg.mxu0
    %v2935 = vrot.slane %v2932, 1
    %v2936 = vrot.slane %v2932, 2
    %v2937 = vrot.slane %v2932, 3
    %v2938 = vrot.slane %v2932, 4
    %v2939 = vrot.slane %v2932, 5
    %v2940 = vrot.slane %v2932, 6
    %v2941 = vrot.slane %v2932, 7
    %v2950 = vadd.f32 %v175, %v2935
    %v2951 = vadd.f32 %v178, %v2936
    %v2952 = vadd.f32 %v181, %v2937
    %v2953 = vadd.f32 %v184, %v2938
    %v2954 = vadd.f32 %v187, %v2939
    %v2955 = vadd.f32 %v190, %v2940
    %v2956 = vadd.f32 %v193, %v2941
    %v2957 = vadd.f32 %v196, %v2932
    %v2958 = vxor.u32 %v2950, 2147483648
    %v2959 = vxor.u32 %v2951, 2147483648
    %v2960 = vxor.u32 %v2952, 2147483648
    %v2961 = vxor.u32 %v2953, 2147483648
    %v2962 = vxor.u32 %v2954, 2147483648
    %v2963 = vxor.u32 %v2955, 2147483648
    %v2964 = vxor.u32 %v2956, 2147483648
    %v2965 = vxor.u32 %v2957, 2147483648
    %v2966 = vmul.f32 %v2958, 1.442695
    %v2967 = vpow.pop %v2966
    %v2968 = vmul.f32 %v2959, 1.442695
    %v2969 = vpow.pop %v2968
    %v2970 = vmul.f32 %v2960, 1.442695
    %v2971 = vpow.pop %v2970
    %v2972 = vmul.f32 %v2961, 1.442695
    %v2973 = vpow.pop %v2972
    %v2974 = vmul.f32 %v2962, 1.442695
    %v2975 = vpow.pop %v2974
    %v2976 = vmul.f32 %v2963, 1.442695
    %v2977 = vpow.pop %v2976
    %v2978 = vmul.f32 %v2964, 1.442695
    %v2979 = vpow.pop %v2978
    %v2980 = vmul.f32 %v2965, 1.442695
    %v2981 = vpow.pop %v2980
    %v2982 = vadd.f32 %v2967, 1.0
    %v2983 = vadd.f32 %v2969, 1.0
    %v2984 = vadd.f32 %v2971, 1.0
    %v2985 = vadd.f32 %v2973, 1.0
    %v2986 = vadd.f32 %v2975, 1.0
    %v2987 = vadd.f32 %v2977, 1.0
    %v2988 = vadd.f32 %v2979, 1.0
    %v2989 = vadd.f32 %v2981, 1.0
    %v2990 = vrcp.pop %v2982
    %v2991 = vmul.f32 %v2982, %v2990
    %v2992 = vsub.f32 1.0, %v2991
    %v2993 = vmul.f32 %v2990, %v2992
    %v2994 = vadd.f32 %v2990, %v2993
    %vm2995 = vweird.f32 %v2982
    %vm2996 = vweird.f32 %v2990
    %vm2997 = vmor %vm2995, %vm2996
    %v2998 = vsel %vm2997, %v2990, %v2994
    %v2999 = vand.u32 2147483647, %v2982
    %vm3000 = vcmp.eq.f32.partialorder %v2999, 8.507059e+37
    %v3001 = vand.u32 %v2982, 2147483648
    %v3002 = vor.u32 1.1754944e-38, %v3001
    %v3003 = vsel %vm3000, %v3002, %v2998
    %v3004 = vmul.f32 1.0, %v3003
    %v3005 = vrcp.pop %v2983
    %v3006 = vmul.f32 %v2983, %v3005
    %v3007 = vsub.f32 1.0, %v3006
    %v3008 = vmul.f32 %v3005, %v3007
    %v3009 = vadd.f32 %v3005, %v3008
    %vm3010 = vweird.f32 %v2983
    %vm3011 = vweird.f32 %v3005
    %vm3012 = vmor %vm3010, %vm3011
    %v3013 = vsel %vm3012, %v3005, %v3009
    %v3014 = vand.u32 2147483647, %v2983
    %vm3015 = vcmp.eq.f32.partialorder %v3014, 8.507059e+37
    %v3016 = vand.u32 %v2983, 2147483648
    %v3017 = vor.u32 1.1754944e-38, %v3016
    %v3018 = vsel %vm3015, %v3017, %v3013
    %v3019 = vmul.f32 1.0, %v3018
    %v3020 = vrcp.pop %v2984
    %v3021 = vmul.f32 %v2984, %v3020
    %v3022 = vsub.f32 1.0, %v3021
    %v3023 = vmul.f32 %v3020, %v3022
    %v3024 = vadd.f32 %v3020, %v3023
    %vm3025 = vweird.f32 %v2984
    %vm3026 = vweird.f32 %v3020
    %vm3027 = vmor %vm3025, %vm3026
    %v3028 = vsel %vm3027, %v3020, %v3024
    %v3029 = vand.u32 2147483647, %v2984
    %vm3030 = vcmp.eq.f32.partialorder %v3029, 8.507059e+37
    %v3031 = vand.u32 %v2984, 2147483648
    %v3032 = vor.u32 1.1754944e-38, %v3031
    %v3033 = vsel %vm3030, %v3032, %v3028
    %v3034 = vmul.f32 1.0, %v3033
    %v3035 = vrcp.pop %v2985
    %v3036 = vmul.f32 %v2985, %v3035
    %v3037 = vsub.f32 1.0, %v3036
    %v3038 = vmul.f32 %v3035, %v3037
    %v3039 = vadd.f32 %v3035, %v3038
    %vm3040 = vweird.f32 %v2985
    %vm3041 = vweird.f32 %v3035
    %vm3042 = vmor %vm3040, %vm3041
    %v3043 = vsel %vm3042, %v3035, %v3039
    %v3044 = vand.u32 2147483647, %v2985
    %vm3045 = vcmp.eq.f32.partialorder %v3044, 8.507059e+37
    %v3046 = vand.u32 %v2985, 2147483648
    %v3047 = vor.u32 1.1754944e-38, %v3046
    %v3048 = vsel %vm3045, %v3047, %v3043
    %v3049 = vmul.f32 1.0, %v3048
    %v3050 = vrcp.pop %v2986
    %v3051 = vmul.f32 %v2986, %v3050
    %v3052 = vsub.f32 1.0, %v3051
    %v3053 = vmul.f32 %v3050, %v3052
    %v3054 = vadd.f32 %v3050, %v3053
    %vm3055 = vweird.f32 %v2986
    %vm3056 = vweird.f32 %v3050
    %vm3057 = vmor %vm3055, %vm3056
    %v3058 = vsel %vm3057, %v3050, %v3054
    %v3059 = vand.u32 2147483647, %v2986
    %vm3060 = vcmp.eq.f32.partialorder %v3059, 8.507059e+37
    %v3061 = vand.u32 %v2986, 2147483648
    %v3062 = vor.u32 1.1754944e-38, %v3061
    %v3063 = vsel %vm3060, %v3062, %v3058
    %v3064 = vmul.f32 1.0, %v3063
    %v3065 = vrcp.pop %v2987
    %v3066 = vmul.f32 %v2987, %v3065
    %v3067 = vsub.f32 1.0, %v3066
    %v3068 = vmul.f32 %v3065, %v3067
    %v3069 = vadd.f32 %v3065, %v3068
    %vm3070 = vweird.f32 %v2987
    %vm3071 = vweird.f32 %v3065
    %vm3072 = vmor %vm3070, %vm3071
    %v3073 = vsel %vm3072, %v3065, %v3069
    %v3074 = vand.u32 2147483647, %v2987
    %vm3075 = vcmp.eq.f32.partialorder %v3074, 8.507059e+37
    %v3076 = vand.u32 %v2987, 2147483648
    %v3077 = vor.u32 1.1754944e-38, %v3076
    %v3078 = vsel %vm3075, %v3077, %v3073
    %v3079 = vmul.f32 1.0, %v3078
    %v3080 = vrcp.pop %v2988
    %v3081 = vmul.f32 %v2988, %v3080
    %v3082 = vsub.f32 1.0, %v3081
    %v3083 = vmul.f32 %v3080, %v3082
    %v3084 = vadd.f32 %v3080, %v3083
    %vm3085 = vweird.f32 %v2988
    %vm3086 = vweird.f32 %v3080
    %vm3087 = vmor %vm3085, %vm3086
    %v3088 = vsel %vm3087, %v3080, %v3084
    %v3089 = vand.u32 2147483647, %v2988
    %vm3090 = vcmp.eq.f32.partialorder %v3089, 8.507059e+37
    %v3091 = vand.u32 %v2988, 2147483648
    %v3092 = vor.u32 1.1754944e-38, %v3091
    %v3093 = vsel %vm3090, %v3092, %v3088
    %v3094 = vmul.f32 1.0, %v3093
    %v3095 = vrcp.pop %v2989
    %v3096 = vmul.f32 %v2989, %v3095
    %v3097 = vsub.f32 1.0, %v3096
    %v3098 = vmul.f32 %v3095, %v3097
    %v3099 = vadd.f32 %v3095, %v3098
    %vm3100 = vweird.f32 %v2989
    %vm3101 = vweird.f32 %v3095
    %vm3102 = vmor %vm3100, %vm3101
    %v3103 = vsel %vm3102, %v3095, %v3099
    %v3104 = vand.u32 2147483647, %v2989
    %vm3105 = vcmp.eq.f32.partialorder %v3104, 8.507059e+37
    %v3106 = vand.u32 %v2989, 2147483648
    %v3107 = vor.u32 1.1754944e-38, %v3106
    %v3108 = vsel %vm3105, %v3107, %v3103
    %v3109 = vmul.f32 1.0, %v3108
    %v3110 = vtanh.pop %v2950
    %v3111 = vtanh.pop %v2951
    %v3112 = vtanh.pop %v2952
    %v3113 = vtanh.pop %v2953
    %v3114 = vtanh.pop %v2954
    %v3115 = vtanh.pop %v2955
    %v3116 = vtanh.pop %v2956
    %v3117 = vtanh.pop %v2957
    %v3126 = vrot.slane %v2832, 7
    %v3127 = vrot.slane %v2833, 7
    %v3128 = vrot.slane %v2834, 7
    %v3129 = vrot.slane %v2835, 7
    %v3130 = vrot.slane %v2836, 7
    %v3131 = vrot.slane %v2837, 7
    %v3132 = vrot.slane %v2838, 7
    %v3133 = vrot.slane %v2839, 7
    %v3142 = vmul.f32 %v3004, %v3126
    %v3143 = vmul.f32 %v3019, %v3127
    %v3144 = vmul.f32 %v3034, %v3128
    %v3145 = vmul.f32 %v3049, %v3129
    %v3146 = vmul.f32 %v3064, %v3130
    %v3147 = vmul.f32 %v3079, %v3131
    %v3148 = vmul.f32 %v3094, %v3132
    %v3149 = vmul.f32 %v3109, %v3133
    %3158 = vrot.lane.b32.xlu0 %v3110, 96
    %v3159 = vpop.permute.xlu0 %3158
    %3160 = vrot.lane.b32.xlu0 %v3111, 96
    %v3161 = vpop.permute.xlu0 %3160
    %3162 = vrot.lane.b32.xlu0 %v3112, 96
    %v3163 = vpop.permute.xlu0 %3162
    %3164 = vrot.lane.b32.xlu0 %v3113, 96
    %v3165 = vpop.permute.xlu0 %3164
    %3166 = vrot.lane.b32.xlu0 %v3114, 96
    %v3167 = vpop.permute.xlu0 %3166
    %3168 = vrot.lane.b32.xlu0 %v3115, 96
    %v3169 = vpop.permute.xlu0 %3168
    %3170 = vrot.lane.b32.xlu0 %v3116, 96
    %v3171 = vpop.permute.xlu0 %3170
    %3172 = vrot.lane.b32.xlu0 %v3117, 96
    %v3173 = vpop.permute.xlu0 %3172
    %v3182 = vmul.f32 %v3004, %v3159
    %v3183 = vmul.f32 %v3019, %v3161
    %v3184 = vmul.f32 %v3034, %v3163
    %v3185 = vmul.f32 %v3049, %v3165
    %v3186 = vmul.f32 %v3064, %v3167
    %v3187 = vmul.f32 %v3079, %v3169
    %v3188 = vmul.f32 %v3094, %v3171
    %v3189 = vmul.f32 %v3109, %v3173
    %3198 = vrot.lane.b32.xlu0 %v3182, 16
    %v3199 = vpop.permute.xlu0 %3198
    %3200 = vrot.lane.b32.xlu0 %v3183, 16
    %v3201 = vpop.permute.xlu0 %3200
    %3202 = vrot.lane.b32.xlu0 %v3184, 16
    %v3203 = vpop.permute.xlu0 %3202
    %3204 = vrot.lane.b32.xlu0 %v3185, 16
    %v3205 = vpop.permute.xlu0 %3204
    %3206 = vrot.lane.b32.xlu0 %v3186, 16
    %v3207 = vpop.permute.xlu0 %3206
    %3208 = vrot.lane.b32.xlu0 %v3187, 16
    %v3209 = vpop.permute.xlu0 %3208
    %3210 = vrot.lane.b32.xlu0 %v3188, 16
    %v3211 = vpop.permute.xlu0 %3210
    %3212 = vrot.lane.b32.xlu0 %v3189, 16
    %v3213 = vpop.permute.xlu0 %3212
    %v3222 = vadd.f32 %v3142, %v3199
    %v3223 = vadd.f32 %v3143, %v3201
    %v3224 = vadd.f32 %v3144, %v3203
    %v3225 = vadd.f32 %v3145, %v3205
    %v3226 = vadd.f32 %v3146, %v3207
    %v3227 = vadd.f32 %v3147, %v3209
    %v3228 = vadd.f32 %v3148, %v3211
    %v3229 = vadd.f32 %v3149, %v3213
    %v3230 = vtanh.pop %v3222
    %v3231 = vtanh.pop %v3223
    %v3232 = vtanh.pop %v3224
    %v3233 = vtanh.pop %v3225
    %v3234 = vtanh.pop %v3226
    %v3235 = vtanh.pop %v3227
    %v3236 = vtanh.pop %v3228
    %v3237 = vtanh.pop %v3229
    %3246 = vrot.lane.b32.xlu0 %v3230, 32
    %v3247 = vpop.permute.xlu0 %3246
    %3248 = vrot.lane.b32.xlu0 %v3231, 32
    %v3249 = vpop.permute.xlu0 %3248
    %3250 = vrot.lane.b32.xlu0 %v3232, 32
    %v3251 = vpop.permute.xlu0 %3250
    %3252 = vrot.lane.b32.xlu0 %v3233, 32
    %v3253 = vpop.permute.xlu0 %3252
    %3254 = vrot.lane.b32.xlu0 %v3234, 32
    %v3255 = vpop.permute.xlu0 %3254
    %3256 = vrot.lane.b32.xlu0 %v3235, 32
    %v3257 = vpop.permute.xlu0 %3256
    %3258 = vrot.lane.b32.xlu0 %v3236, 32
    %v3259 = vpop.permute.xlu0 %3258
    %3260 = vrot.lane.b32.xlu0 %v3237, 32
    %v3261 = vpop.permute.xlu0 %3260
    %v3270 = vmul.f32 %v3004, %v3247
    %v3271 = vmul.f32 %v3019, %v3249
    %v3272 = vmul.f32 %v3034, %v3251
    %v3273 = vmul.f32 %v3049, %v3253
    %v3274 = vmul.f32 %v3064, %v3255
    %v3275 = vmul.f32 %v3079, %v3257
    %v3276 = vmul.f32 %v3094, %v3259
    %v3277 = vmul.f32 %v3109, %v3261
    %s3278 = scalar_lea.vmem [#allocation4], 16
    %v3279 = vld [vmem:[%s3278] sm:$0xff]
    %v3280 = vld [vmem:[%s3278 + $0x8] sm:$0xff]
    %s3281 = scalar_lea.vmem [#allocation6], 16
    %v3282 = vld [vmem:[%s3281] sm:$0xff]
    %v3283 = vld [vmem:[%s3281 + $0x8] sm:$0xff]
    %s3284 = scalar_lea.vmem %s3, 1
    %v3285 = vld [vmem:[%s3284] sm:$0x1]
    %v3287 = vperm.slane %v3285, 0
    %3289 = vmatpush.msra.mxu0 0.0
    %3290 = vmatpush.msra.mxu0 0.0
    %3291 = vmatpush.msra.mxu0 0.0
    %3292 = vmatpush.msra.mxu0 0.0
    %3293 = vmatpush.msra.mxu0 0.0
    %3294 = vmatpush.msra.mxu0 0.0
    %3295 = vmatpush.msra.mxu0 0.0
    %3296 = vmatpush.msra.mxu0 0.0
    %3297 = vmatpush.msra.mxu0 0.0
    %3298 = vmatpush.msra.mxu0 0.0
    %3299 = vmatpush.msra.mxu0 0.0
    %3300 = vmatpush.msra.mxu0 0.0
    %3301 = vmatpush.msra.mxu0 0.0
    %3302 = vmatpush.msra.mxu0 0.0
    %3303 = vmatpush.msra.mxu0 %v3280
    %3304 = vmatpush.msra.mxu0 %v3279
    %3305 = vmatmul.f32.gmra.mxu0 %v572
    %v3306 = vpop.f32.mrf.mxu0
    %v3307 = vadd.f32 %v3287, %v3306
    %3308 = vdwg.mxu0
    %3309 = vmatpush.msra.mxu0 0.0
    %3310 = vmatpush.msra.mxu0 0.0
    %3311 = vmatpush.msra.mxu0 0.0
    %3312 = vmatpush.msra.mxu0 0.0
    %3313 = vmatpush.msra.mxu0 0.0
    %3314 = vmatpush.msra.mxu0 0.0
    %3315 = vmatpush.msra.mxu0 0.0
    %3316 = vmatpush.msra.mxu0 0.0
    %3317 = vmatpush.msra.mxu0 0.0
    %3318 = vmatpush.msra.mxu0 0.0
    %3319 = vmatpush.msra.mxu0 0.0
    %3320 = vmatpush.msra.mxu0 0.0
    %3321 = vmatpush.msra.mxu0 0.0
    %3322 = vmatpush.msra.mxu0 0.0
    %3323 = vmatpush.msra.mxu0 %v3280
    %3324 = vmatpush.msra.mxu0 %v3279
    %3325 = vmatmul.f32.gmra.mxu0 %v962
    %v3326 = vpop.f32.mrf.mxu0
    %v3327 = vadd.f32 %v3287, %v3326
    %3328 = vdwg.mxu0
    %3329 = vmatpush.msra.mxu0 0.0
    %3330 = vmatpush.msra.mxu0 0.0
    %3331 = vmatpush.msra.mxu0 0.0
    %3332 = vmatpush.msra.mxu0 0.0
    %3333 = vmatpush.msra.mxu0 0.0
    %3334 = vmatpush.msra.mxu0 0.0
    %3335 = vmatpush.msra.mxu0 0.0
    %3336 = vmatpush.msra.mxu0 0.0
    %3337 = vmatpush.msra.mxu0 0.0
    %3338 = vmatpush.msra.mxu0 0.0
    %3339 = vmatpush.msra.mxu0 0.0
    %3340 = vmatpush.msra.mxu0 0.0
    %3341 = vmatpush.msra.mxu0 0.0
    %3342 = vmatpush.msra.mxu0 0.0
    %3343 = vmatpush.msra.mxu0 %v3280
    %3344 = vmatpush.msra.mxu0 %v3279
    %3345 = vmatmul.f32.gmra.mxu0 %v1352
    %v3346 = vpop.f32.mrf.mxu0
    %v3347 = vadd.f32 %v3287, %v3346
    %3348 = vdwg.mxu0
    %3349 = vmatpush.msra.mxu0 0.0
    %3350 = vmatpush.msra.mxu0 0.0
    %3351 = vmatpush.msra.mxu0 0.0
    %3352 = vmatpush.msra.mxu0 0.0
    %3353 = vmatpush.msra.mxu0 0.0
    %3354 = vmatpush.msra.mxu0 0.0
    %3355 = vmatpush.msra.mxu0 0.0
    %3356 = vmatpush.msra.mxu0 0.0
    %3357 = vmatpush.msra.mxu0 0.0
    %3358 = vmatpush.msra.mxu0 0.0
    %3359 = vmatpush.msra.mxu0 0.0
    %3360 = vmatpush.msra.mxu0 0.0
    %3361 = vmatpush.msra.mxu0 0.0
    %3362 = vmatpush.msra.mxu0 0.0
    %3363 = vmatpush.msra.mxu0 %v3280
    %3364 = vmatpush.msra.mxu0 %v3279
    %3365 = vmatmul.f32.gmra.mxu0 %v1742
    %v3366 = vpop.f32.mrf.mxu0
    %v3367 = vadd.f32 %v3287, %v3366
    %3368 = vdwg.mxu0
    %3369 = vmatpush.msra.mxu0 0.0
    %3370 = vmatpush.msra.mxu0 0.0
    %3371 = vmatpush.msra.mxu0 0.0
    %3372 = vmatpush.msra.mxu0 0.0
    %3373 = vmatpush.msra.mxu0 0.0
    %3374 = vmatpush.msra.mxu0 0.0
    %3375 = vmatpush.msra.mxu0 0.0
    %3376 = vmatpush.msra.mxu0 0.0
    %3377 = vmatpush.msra.mxu0 0.0
    %3378 = vmatpush.msra.mxu0 0.0
    %3379 = vmatpush.msra.mxu0 0.0
    %3380 = vmatpush.msra.mxu0 0.0
    %3381 = vmatpush.msra.mxu0 0.0
    %3382 = vmatpush.msra.mxu0 0.0
    %3383 = vmatpush.msra.mxu0 %v3280
    %3384 = vmatpush.msra.mxu0 %v3279
    %3385 = vmatmul.f32.gmra.mxu0 %v2132
    %v3386 = vpop.f32.mrf.mxu0
    %v3387 = vadd.f32 %v3287, %v3386
    %3388 = vdwg.mxu0
    %3389 = vmatpush.msra.mxu0 0.0
    %3390 = vmatpush.msra.mxu0 0.0
    %3391 = vmatpush.msra.mxu0 0.0
    %3392 = vmatpush.msra.mxu0 0.0
    %3393 = vmatpush.msra.mxu0 0.0
    %3394 = vmatpush.msra.mxu0 0.0
    %3395 = vmatpush.msra.mxu0 0.0
    %3396 = vmatpush.msra.mxu0 0.0
    %3397 = vmatpush.msra.mxu0 0.0
    %3398 = vmatpush.msra.mxu0 0.0
    %3399 = vmatpush.msra.mxu0 0.0
    %3400 = vmatpush.msra.mxu0 0.0
    %3401 = vmatpush.msra.mxu0 0.0
    %3402 = vmatpush.msra.mxu0 0.0
    %3403 = vmatpush.msra.mxu0 %v3280
    %3404 = vmatpush.msra.mxu0 %v3279
    %3405 = vmatmul.f32.gmra.mxu0 %v2522
    %v3406 = vpop.f32.mrf.mxu0
    %v3407 = vadd.f32 %v3287, %v3406
    %3408 = vdwg.mxu0
    %3409 = vmatpush.msra.mxu0 0.0
    %3410 = vmatpush.msra.mxu0 0.0
    %3411 = vmatpush.msra.mxu0 0.0
    %3412 = vmatpush.msra.mxu0 0.0
    %3413 = vmatpush.msra.mxu0 0.0
    %3414 = vmatpush.msra.mxu0 0.0
    %3415 = vmatpush.msra.mxu0 0.0
    %3416 = vmatpush.msra.mxu0 0.0
    %3417 = vmatpush.msra.mxu0 0.0
    %3418 = vmatpush.msra.mxu0 0.0
    %3419 = vmatpush.msra.mxu0 0.0
    %3420 = vmatpush.msra.mxu0 0.0
    %3421 = vmatpush.msra.mxu0 0.0
    %3422 = vmatpush.msra.mxu0 0.0
    %3423 = vmatpush.msra.mxu0 %v3280
    %3424 = vmatpush.msra.mxu0 %v3279
    %3425 = vmatmul.f32.gmra.mxu0 %v2912
    %v3426 = vpop.f32.mrf.mxu0
    %v3427 = vadd.f32 %v3287, %v3426
    %3428 = vdwg.mxu0
    %v3437 = vrot.slane %v3270, 7
    %v3438 = vrot.slane %v3271, 6
    %v3439 = vsel %vm550, %v3438, %v3437
    %v3440 = vrot.slane %v3272, 5
    %v3441 = vsel %vm553, %v3440, %v3439
    %v3442 = vrot.slane %v3273, 4
    %v3443 = vsel %vm556, %v3442, %v3441
    %v3444 = vrot.slane %v3274, 3
    %v3445 = vsel %vm559, %v3444, %v3443
    %v3446 = vrot.slane %v3275, 2
    %v3447 = vsel %vm562, %v3446, %v3445
    %v3448 = vrot.slane %v3276, 1
    %v3449 = vsel %vm565, %v3448, %v3447
    %v3450 = vsel %vm568, %v3277, %v3449
    %3451 = vrot.lane.b32.xlu0 %v3450, 80
    %v3452 = vpop.permute.xlu0 %3451
    %v3453 = vsel %vm132, %v3452, 0
    %3455 = vmatpush.msra.mxu0 0.0
    %3456 = vmatpush.msra.mxu0 0.0
    %3457 = vmatpush.msra.mxu0 0.0
    %3458 = vmatpush.msra.mxu0 0.0
    %3459 = vmatpush.msra.mxu0 0.0
    %3460 = vmatpush.msra.mxu0 0.0
    %3461 = vmatpush.msra.mxu0 0.0
    %3462 = vmatpush.msra.mxu0 0.0
    %3463 = vmatpush.msra.mxu0 0.0
    %3464 = vmatpush.msra.mxu0 0.0
    %3465 = vmatpush.msra.mxu0 0.0
    %3466 = vmatpush.msra.mxu0 0.0
    %3467 = vmatpush.msra.mxu0 0.0
    %3468 = vmatpush.msra.mxu0 0.0
    %3469 = vmatpush.msra.mxu0 %v3280
    %3470 = vmatpush.msra.mxu0 %v3279
    %3471 = vmatmul.f32.gmra.mxu0 %v3453
    %v3472 = vpop.f32.mrf.mxu0
    %v3473 = vadd.f32 %v3287, %v3472
    %3474 = vdwg.mxu0
    %3475 = vmatpush.msra.mxu0 0.0
    %3476 = vmatpush.msra.mxu0 0.0
    %3477 = vmatpush.msra.mxu0 0.0
    %3478 = vmatpush.msra.mxu0 0.0
    %3479 = vmatpush.msra.mxu0 0.0
    %3480 = vmatpush.msra.mxu0 0.0
    %3481 = vmatpush.msra.mxu0 0.0
    %3482 = vmatpush.msra.mxu0 0.0
    %3483 = vmatpush.msra.mxu0 0.0
    %3484 = vmatpush.msra.mxu0 0.0
    %3485 = vmatpush.msra.mxu0 0.0
    %3486 = vmatpush.msra.mxu0 0.0
    %3487 = vmatpush.msra.mxu0 0.0
    %3488 = vmatpush.msra.mxu0 0.0
    %3489 = vmatpush.msra.mxu0 %v3283
    %3490 = vmatpush.msra.mxu0 %v3282
    %3491 = vmatmul.f32.gmra.mxu0 %v199
    %v3492 = vpop.f32.mrf.mxu0
    %v3493 = vadd.f32 0.0, %v3492
    %3494 = vdwg.mxu0
    %v3495 = vadd.f32 %v3307, %v3493
    %v3496 = vxor.u32 %v3495, 2147483648
    %v3497 = vmul.f32 %v3496, 1.442695
    %v3498 = vpow.pop %v3497
    %v3499 = vadd.f32 %v3498, 1.0
    %v3500 = vrcp.pop %v3499
    %v3501 = vmul.f32 %v3499, %v3500
    %v3502 = vsub.f32 1.0, %v3501
    %v3503 = vmul.f32 %v3500, %v3502
    %v3504 = vadd.f32 %v3500, %v3503
    %vm3505 = vweird.f32 %v3499
    %vm3506 = vweird.f32 %v3500
    %vm3507 = vmor %vm3505, %vm3506
    %v3508 = vsel %vm3507, %v3500, %v3504
    %v3509 = vand.u32 2147483647, %v3499
    %vm3510 = vcmp.eq.f32.partialorder %v3509, 8.507059e+37
    %v3511 = vand.u32 %v3499, 2147483648
    %v3512 = vor.u32 1.1754944e-38, %v3511
    %v3513 = vsel %vm3510, %v3512, %v3508
    %v3514 = vmul.f32 1.0, %v3513
    %v3515 = vtanh.pop %v3495
    %v3516 = vmul.f32 %v3514, 0.0
    %3518 = vrot.lane.b32.xlu0 %v3515, 96
    %v3519 = vpop.permute.xlu0 %3518
    %v3521 = vmul.f32 %v3514, %v3519
    %3523 = vrot.lane.b32.xlu0 %v3521, 16
    %v3524 = vpop.permute.xlu0 %3523
    %v3526 = vadd.f32 %v3516, %v3524
    %v3527 = vtanh.pop %v3526
    %3529 = vrot.lane.b32.xlu0 %v3527, 32
    %v3530 = vpop.permute.xlu0 %3529
    %v3532 = vmul.f32 %v3514, %v3530
    %3534 = vrot.lane.b32.xlu0 %v3532, 80
    %v3535 = vpop.permute.xlu0 %3534
    %v3536 = vsel %vm132, %v3535, 0
    %3538 = vmatpush.msra.mxu0 0.0
    %3539 = vmatpush.msra.mxu0 0.0
    %3540 = vmatpush.msra.mxu0 0.0
    %3541 = vmatpush.msra.mxu0 0.0
    %3542 = vmatpush.msra.mxu0 0.0
    %3543 = vmatpush.msra.mxu0 0.0
    %3544 = vmatpush.msra.mxu0 0.0
    %3545 = vmatpush.msra.mxu0 0.0
    %3546 = vmatpush.msra.mxu0 0.0
    %3547 = vmatpush.msra.mxu0 0.0
    %3548 = vmatpush.msra.mxu0 0.0
    %3549 = vmatpush.msra.mxu0 0.0
    %3550 = vmatpush.msra.mxu0 0.0
    %3551 = vmatpush.msra.mxu0 0.0
    %3552 = vmatpush.msra.mxu0 %v3283
    %3553 = vmatpush.msra.mxu0 %v3282
    %3554 = vmatmul.f32.gmra.mxu0 %v3536
    %v3555 = vpop.f32.mrf.mxu0
    %v3556 = vadd.f32 0.0, %v3555
    %3557 = vdwg.mxu0
    %v3558 = vadd.f32 %v3327, %v3556
    %v3559 = vxor.u32 %v3558, 2147483648
    %v3560 = vmul.f32 %v3559, 1.442695
    %v3561 = vpow.pop %v3560
    %v3562 = vadd.f32 %v3561, 1.0
    %v3563 = vrcp.pop %v3562
    %v3564 = vmul.f32 %v3562, %v3563
    %v3565 = vsub.f32 1.0, %v3564
    %v3566 = vmul.f32 %v3563, %v3565
    %v3567 = vadd.f32 %v3563, %v3566
    %vm3568 = vweird.f32 %v3562
    %vm3569 = vweird.f32 %v3563
    %vm3570 = vmor %vm3568, %vm3569
    %v3571 = vsel %vm3570, %v3563, %v3567
    %v3572 = vand.u32 2147483647, %v3562
    %vm3573 = vcmp.eq.f32.partialorder %v3572, 8.507059e+37
    %v3574 = vand.u32 %v3562, 2147483648
    %v3575 = vor.u32 1.1754944e-38, %v3574
    %v3576 = vsel %vm3573, %v3575, %v3571
    %v3577 = vmul.f32 1.0, %v3576
    %v3578 = vtanh.pop %v3558
    %v3579 = vmul.f32 %v3577, %v3526
    %3581 = vrot.lane.b32.xlu0 %v3578, 96
    %v3582 = vpop.permute.xlu0 %3581
    %v3584 = vmul.f32 %v3577, %v3582
    %3586 = vrot.lane.b32.xlu0 %v3584, 16
    %v3587 = vpop.permute.xlu0 %3586
    %v3589 = vadd.f32 %v3579, %v3587
    %v3590 = vtanh.pop %v3589
    %3592 = vrot.lane.b32.xlu0 %v3590, 32
    %v3593 = vpop.permute.xlu0 %3592
    %v3595 = vmul.f32 %v3577, %v3593
    %3597 = vrot.lane.b32.xlu0 %v3595, 80
    %v3598 = vpop.permute.xlu0 %3597
    %v3599 = vsel %vm132, %v3598, 0
    %3601 = vmatpush.msra.mxu0 0.0
    %3602 = vmatpush.msra.mxu0 0.0
    %3603 = vmatpush.msra.mxu0 0.0
    %3604 = vmatpush.msra.mxu0 0.0
    %3605 = vmatpush.msra.mxu0 0.0
    %3606 = vmatpush.msra.mxu0 0.0
    %3607 = vmatpush.msra.mxu0 0.0
    %3608 = vmatpush.msra.mxu0 0.0
    %3609 = vmatpush.msra.mxu0 0.0
    %3610 = vmatpush.msra.mxu0 0.0
    %3611 = vmatpush.msra.mxu0 0.0
    %3612 = vmatpush.msra.mxu0 0.0
    %3613 = vmatpush.msra.mxu0 0.0
    %3614 = vmatpush.msra.mxu0 0.0
    %3615 = vmatpush.msra.mxu0 %v3283
    %3616 = vmatpush.msra.mxu0 %v3282
    %3617 = vmatmul.f32.gmra.mxu0 %v3599
    %v3618 = vpop.f32.mrf.mxu0
    %v3619 = vadd.f32 0.0, %v3618
    %3620 = vdwg.mxu0
    %v3621 = vadd.f32 %v3347, %v3619
    %v3622 = vxor.u32 %v3621, 2147483648
    %v3623 = vmul.f32 %v3622, 1.442695
    %v3624 = vpow.pop %v3623
    %v3625 = vadd.f32 %v3624, 1.0
    %v3626 = vrcp.pop %v3625
    %v3627 = vmul.f32 %v3625, %v3626
    %v3628 = vsub.f32 1.0, %v3627
    %v3629 = vmul.f32 %v3626, %v3628
    %v3630 = vadd.f32 %v3626, %v3629
    %vm3631 = vweird.f32 %v3625
    %vm3632 = vweird.f32 %v3626
    %vm3633 = vmor %vm3631, %vm3632
    %v3634 = vsel %vm3633, %v3626, %v3630
    %v3635 = vand.u32 2147483647, %v3625
    %vm3636 = vcmp.eq.f32.partialorder %v3635, 8.507059e+37
    %v3637 = vand.u32 %v3625, 2147483648
    %v3638 = vor.u32 1.1754944e-38, %v3637
    %v3639 = vsel %vm3636, %v3638, %v3634
    %v3640 = vmul.f32 1.0, %v3639
    %v3641 = vtanh.pop %v3621
    %v3642 = vmul.f32 %v3640, %v3589
    %3644 = vrot.lane.b32.xlu0 %v3641, 96
    %v3645 = vpop.permute.xlu0 %3644
    %v3647 = vmul.f32 %v3640, %v3645
    %3649 = vrot.lane.b32.xlu0 %v3647, 16
    %v3650 = vpop.permute.xlu0 %3649
    %v3652 = vadd.f32 %v3642, %v3650
    %v3653 = vtanh.pop %v3652
    %3655 = vrot.lane.b32.xlu0 %v3653, 32
    %v3656 = vpop.permute.xlu0 %3655
    %v3658 = vmul.f32 %v3640, %v3656
    %3660 = vrot.lane.b32.xlu0 %v3658, 80
    %v3661 = vpop.permute.xlu0 %3660
    %v3662 = vsel %vm132, %v3661, 0
    %3664 = vmatpush.msra.mxu0 0.0
    %3665 = vmatpush.msra.mxu0 0.0
    %3666 = vmatpush.msra.mxu0 0.0
    %3667 = vmatpush.msra.mxu0 0.0
    %3668 = vmatpush.msra.mxu0 0.0
    %3669 = vmatpush.msra.mxu0 0.0
    %3670 = vmatpush.msra.mxu0 0.0
    %3671 = vmatpush.msra.mxu0 0.0
    %3672 = vmatpush.msra.mxu0 0.0
    %3673 = vmatpush.msra.mxu0 0.0
    %3674 = vmatpush.msra.mxu0 0.0
    %3675 = vmatpush.msra.mxu0 0.0
    %3676 = vmatpush.msra.mxu0 0.0
    %3677 = vmatpush.msra.mxu0 0.0
    %3678 = vmatpush.msra.mxu0 %v3283
    %3679 = vmatpush.msra.mxu0 %v3282
    %3680 = vmatmul.f32.gmra.mxu0 %v3662
    %v3681 = vpop.f32.mrf.mxu0
    %v3682 = vadd.f32 0.0, %v3681
    %3683 = vdwg.mxu0
    %v3684 = vadd.f32 %v3367, %v3682
    %v3685 = vxor.u32 %v3684, 2147483648
    %v3686 = vmul.f32 %v3685, 1.442695
    %v3687 = vpow.pop %v3686
    %v3688 = vadd.f32 %v3687, 1.0
    %v3689 = vrcp.pop %v3688
    %v3690 = vmul.f32 %v3688, %v3689
    %v3691 = vsub.f32 1.0, %v3690
    %v3692 = vmul.f32 %v3689, %v3691
    %v3693 = vadd.f32 %v3689, %v3692
    %vm3694 = vweird.f32 %v3688
    %vm3695 = vweird.f32 %v3689
    %vm3696 = vmor %vm3694, %vm3695
    %v3697 = vsel %vm3696, %v3689, %v3693
    %v3698 = vand.u32 2147483647, %v3688
    %vm3699 = vcmp.eq.f32.partialorder %v3698, 8.507059e+37
    %v3700 = vand.u32 %v3688, 2147483648
    %v3701 = vor.u32 1.1754944e-38, %v3700
    %v3702 = vsel %vm3699, %v3701, %v3697
    %v3703 = vmul.f32 1.0, %v3702
    %v3704 = vtanh.pop %v3684
    %v3705 = vmul.f32 %v3703, %v3652
    %3707 = vrot.lane.b32.xlu0 %v3704, 96
    %v3708 = vpop.permute.xlu0 %3707
    %v3710 = vmul.f32 %v3703, %v3708
    %3712 = vrot.lane.b32.xlu0 %v3710, 16
    %v3713 = vpop.permute.xlu0 %3712
    %v3715 = vadd.f32 %v3705, %v3713
    %v3716 = vtanh.pop %v3715
    %3718 = vrot.lane.b32.xlu0 %v3716, 32
    %v3719 = vpop.permute.xlu0 %3718
    %v3721 = vmul.f32 %v3703, %v3719
    %3723 = vrot.lane.b32.xlu0 %v3721, 80
    %v3724 = vpop.permute.xlu0 %3723
    %v3725 = vsel %vm132, %v3724, 0
    %3727 = vmatpush.msra.mxu0 0.0
    %3728 = vmatpush.msra.mxu0 0.0
    %3729 = vmatpush.msra.mxu0 0.0
    %3730 = vmatpush.msra.mxu0 0.0
    %3731 = vmatpush.msra.mxu0 0.0
    %3732 = vmatpush.msra.mxu0 0.0
    %3733 = vmatpush.msra.mxu0 0.0
    %3734 = vmatpush.msra.mxu0 0.0
    %3735 = vmatpush.msra.mxu0 0.0
    %3736 = vmatpush.msra.mxu0 0.0
    %3737 = vmatpush.msra.mxu0 0.0
    %3738 = vmatpush.msra.mxu0 0.0
    %3739 = vmatpush.msra.mxu0 0.0
    %3740 = vmatpush.msra.mxu0 0.0
    %3741 = vmatpush.msra.mxu0 %v3283
    %3742 = vmatpush.msra.mxu0 %v3282
    %3743 = vmatmul.f32.gmra.mxu0 %v3725
    %v3744 = vpop.f32.mrf.mxu0
    %v3745 = vadd.f32 0.0, %v3744
    %3746 = vdwg.mxu0
    %v3747 = vadd.f32 %v3387, %v3745
    %v3748 = vxor.u32 %v3747, 2147483648
    %v3749 = vmul.f32 %v3748, 1.442695
    %v3750 = vpow.pop %v3749
    %v3751 = vadd.f32 %v3750, 1.0
    %v3752 = vrcp.pop %v3751
    %v3753 = vmul.f32 %v3751, %v3752
    %v3754 = vsub.f32 1.0, %v3753
    %v3755 = vmul.f32 %v3752, %v3754
    %v3756 = vadd.f32 %v3752, %v3755
    %vm3757 = vweird.f32 %v3751
    %vm3758 = vweird.f32 %v3752
    %vm3759 = vmor %vm3757, %vm3758
    %v3760 = vsel %vm3759, %v3752, %v3756
    %v3761 = vand.u32 2147483647, %v3751
    %vm3762 = vcmp.eq.f32.partialorder %v3761, 8.507059e+37
    %v3763 = vand.u32 %v3751, 2147483648
    %v3764 = vor.u32 1.1754944e-38, %v3763
    %v3765 = vsel %vm3762, %v3764, %v3760
    %v3766 = vmul.f32 1.0, %v3765
    %v3767 = vtanh.pop %v3747
    %v3768 = vmul.f32 %v3766, %v3715
    %3770 = vrot.lane.b32.xlu0 %v3767, 96
    %v3771 = vpop.permute.xlu0 %3770
    %v3773 = vmul.f32 %v3766, %v3771
    %3775 = vrot.lane.b32.xlu0 %v3773, 16
    %v3776 = vpop.permute.xlu0 %3775
    %v3778 = vadd.f32 %v3768, %v3776
    %v3779 = vtanh.pop %v3778
    %3781 = vrot.lane.b32.xlu0 %v3779, 32
    %v3782 = vpop.permute.xlu0 %3781
    %v3784 = vmul.f32 %v3766, %v3782
    %3786 = vrot.lane.b32.xlu0 %v3784, 80
    %v3787 = vpop.permute.xlu0 %3786
    %v3788 = vsel %vm132, %v3787, 0
    %3790 = vmatpush.msra.mxu0 0.0
    %3791 = vmatpush.msra.mxu0 0.0
    %3792 = vmatpush.msra.mxu0 0.0
    %3793 = vmatpush.msra.mxu0 0.0
    %3794 = vmatpush.msra.mxu0 0.0
    %3795 = vmatpush.msra.mxu0 0.0
    %3796 = vmatpush.msra.mxu0 0.0
    %3797 = vmatpush.msra.mxu0 0.0
    %3798 = vmatpush.msra.mxu0 0.0
    %3799 = vmatpush.msra.mxu0 0.0
    %3800 = vmatpush.msra.mxu0 0.0
    %3801 = vmatpush.msra.mxu0 0.0
    %3802 = vmatpush.msra.mxu0 0.0
    %3803 = vmatpush.msra.mxu0 0.0
    %3804 = vmatpush.msra.mxu0 %v3283
    %3805 = vmatpush.msra.mxu0 %v3282
    %3806 = vmatmul.f32.gmra.mxu0 %v3788
    %v3807 = vpop.f32.mrf.mxu0
    %v3808 = vadd.f32 0.0, %v3807
    %3809 = vdwg.mxu0
    %v3810 = vadd.f32 %v3407, %v3808
    %v3811 = vxor.u32 %v3810, 2147483648
    %v3812 = vmul.f32 %v3811, 1.442695
    %v3813 = vpow.pop %v3812
    %v3814 = vadd.f32 %v3813, 1.0
    %v3815 = vrcp.pop %v3814
    %v3816 = vmul.f32 %v3814, %v3815
    %v3817 = vsub.f32 1.0, %v3816
    %v3818 = vmul.f32 %v3815, %v3817
    %v3819 = vadd.f32 %v3815, %v3818
    %vm3820 = vweird.f32 %v3814
    %vm3821 = vweird.f32 %v3815
    %vm3822 = vmor %vm3820, %vm3821
    %v3823 = vsel %vm3822, %v3815, %v3819
    %v3824 = vand.u32 2147483647, %v3814
    %vm3825 = vcmp.eq.f32.partialorder %v3824, 8.507059e+37
    %v3826 = vand.u32 %v3814, 2147483648
    %v3827 = vor.u32 1.1754944e-38, %v3826
    %v3828 = vsel %vm3825, %v3827, %v3823
    %v3829 = vmul.f32 1.0, %v3828
    %v3830 = vtanh.pop %v3810
    %v3831 = vmul.f32 %v3829, %v3778
    %3833 = vrot.lane.b32.xlu0 %v3830, 96
    %v3834 = vpop.permute.xlu0 %3833
    %v3836 = vmul.f32 %v3829, %v3834
    %3838 = vrot.lane.b32.xlu0 %v3836, 16
    %v3839 = vpop.permute.xlu0 %3838
    %v3841 = vadd.f32 %v3831, %v3839
    %v3842 = vtanh.pop %v3841
    %3844 = vrot.lane.b32.xlu0 %v3842, 32
    %v3845 = vpop.permute.xlu0 %3844
    %v3847 = vmul.f32 %v3829, %v3845
    %3849 = vrot.lane.b32.xlu0 %v3847, 80
    %v3850 = vpop.permute.xlu0 %3849
    %v3851 = vsel %vm132, %v3850, 0
    %3853 = vmatpush.msra.mxu0 0.0
    %3854 = vmatpush.msra.mxu0 0.0
    %3855 = vmatpush.msra.mxu0 0.0
    %3856 = vmatpush.msra.mxu0 0.0
    %3857 = vmatpush.msra.mxu0 0.0
    %3858 = vmatpush.msra.mxu0 0.0
    %3859 = vmatpush.msra.mxu0 0.0
    %3860 = vmatpush.msra.mxu0 0.0
    %3861 = vmatpush.msra.mxu0 0.0
    %3862 = vmatpush.msra.mxu0 0.0
    %3863 = vmatpush.msra.mxu0 0.0
    %3864 = vmatpush.msra.mxu0 0.0
    %3865 = vmatpush.msra.mxu0 0.0
    %3866 = vmatpush.msra.mxu0 0.0
    %3867 = vmatpush.msra.mxu0 %v3283
    %3868 = vmatpush.msra.mxu0 %v3282
    %3869 = vmatmul.f32.gmra.mxu0 %v3851
    %v3870 = vpop.f32.mrf.mxu0
    %v3871 = vadd.f32 0.0, %v3870
    %3872 = vdwg.mxu0
    %v3873 = vadd.f32 %v3427, %v3871
    %v3874 = vxor.u32 %v3873, 2147483648
    %v3875 = vmul.f32 %v3874, 1.442695
    %v3876 = vpow.pop %v3875
    %v3877 = vadd.f32 %v3876, 1.0
    %v3878 = vrcp.pop %v3877
    %v3879 = vmul.f32 %v3877, %v3878
    %v3880 = vsub.f32 1.0, %v3879
    %v3881 = vmul.f32 %v3878, %v3880
    %v3882 = vadd.f32 %v3878, %v3881
    %vm3883 = vweird.f32 %v3877
    %vm3884 = vweird.f32 %v3878
    %vm3885 = vmor %vm3883, %vm3884
    %v3886 = vsel %vm3885, %v3878, %v3882
    %v3887 = vand.u32 2147483647, %v3877
    %vm3888 = vcmp.eq.f32.partialorder %v3887, 8.507059e+37
    %v3889 = vand.u32 %v3877, 2147483648
    %v3890 = vor.u32 1.1754944e-38, %v3889
    %v3891 = vsel %vm3888, %v3890, %v3886
    %v3892 = vmul.f32 1.0, %v3891
    %v3893 = vtanh.pop %v3873
    %v3894 = vmul.f32 %v3892, %v3841
    %3896 = vrot.lane.b32.xlu0 %v3893, 96
    %v3897 = vpop.permute.xlu0 %3896
    %v3899 = vmul.f32 %v3892, %v3897
    %3901 = vrot.lane.b32.xlu0 %v3899, 16
    %v3902 = vpop.permute.xlu0 %3901
    %v3904 = vadd.f32 %v3894, %v3902
    %v3905 = vtanh.pop %v3904
    %3907 = vrot.lane.b32.xlu0 %v3905, 32
    %v3908 = vpop.permute.xlu0 %3907
    %v3910 = vmul.f32 %v3892, %v3908
    %3912 = vrot.lane.b32.xlu0 %v3910, 80
    %v3913 = vpop.permute.xlu0 %3912
    %v3914 = vsel %vm132, %v3913, 0
    %3916 = vmatpush.msra.mxu0 0.0
    %3917 = vmatpush.msra.mxu0 0.0
    %3918 = vmatpush.msra.mxu0 0.0
    %3919 = vmatpush.msra.mxu0 0.0
    %3920 = vmatpush.msra.mxu0 0.0
    %3921 = vmatpush.msra.mxu0 0.0
    %3922 = vmatpush.msra.mxu0 0.0
    %3923 = vmatpush.msra.mxu0 0.0
    %3924 = vmatpush.msra.mxu0 0.0
    %3925 = vmatpush.msra.mxu0 0.0
    %3926 = vmatpush.msra.mxu0 0.0
    %3927 = vmatpush.msra.mxu0 0.0
    %3928 = vmatpush.msra.mxu0 0.0
    %3929 = vmatpush.msra.mxu0 0.0
    %3930 = vmatpush.msra.mxu0 %v3283
    %3931 = vmatpush.msra.mxu0 %v3282
    %3932 = vmatmul.f32.gmra.mxu0 %v3914
    %v3933 = vpop.f32.mrf.mxu0
    %v3934 = vadd.f32 0.0, %v3933
    %3935 = vdwg.mxu0
    %v3936 = vadd.f32 %v3473, %v3934
    %v3937 = vxor.u32 %v3936, 2147483648
    %v3938 = vmul.f32 %v3937, 1.442695
    %v3939 = vpow.pop %v3938
    %v3940 = vadd.f32 %v3939, 1.0
    %v3941 = vrcp.pop %v3940
    %v3942 = vmul.f32 %v3940, %v3941
    %v3943 = vsub.f32 1.0, %v3942
    %v3944 = vmul.f32 %v3941, %v3943
    %v3945 = vadd.f32 %v3941, %v3944
    %vm3946 = vweird.f32 %v3940
    %vm3947 = vweird.f32 %v3941
    %vm3948 = vmor %vm3946, %vm3947
    %v3949 = vsel %vm3948, %v3941, %v3945
    %v3950 = vand.u32 2147483647, %v3940
    %vm3951 = vcmp.eq.f32.partialorder %v3950, 8.507059e+37
    %v3952 = vand.u32 %v3940, 2147483648
    %v3953 = vor.u32 1.1754944e-38, %v3952
    %v3954 = vsel %vm3951, %v3953, %v3949
    %v3955 = vmul.f32 1.0, %v3954
    %v3956 = vtanh.pop %v3936
    %v3957 = vmul.f32 %v3955, %v3904
    %3959 = vrot.lane.b32.xlu0 %v3956, 96
    %v3960 = vpop.permute.xlu0 %3959
    %v3962 = vmul.f32 %v3955, %v3960
    %3964 = vrot.lane.b32.xlu0 %v3962, 16
    %v3965 = vpop.permute.xlu0 %3964
    %v3967 = vadd.f32 %v3957, %v3965
    %v3968 = vtanh.pop %v3967
    %3970 = vrot.lane.b32.xlu0 %v3968, 32
    %v3971 = vpop.permute.xlu0 %3970
    %v3973 = vmul.f32 %v3955, %v3971
    %s3974 = scalar_lea.vmem [#allocation4], 32
    %v3975 = vld [vmem:[%s3974] sm:$0xff]
    %v3976 = vld [vmem:[%s3974 + $0x8] sm:$0xff]
    %s3977 = scalar_lea.vmem [#allocation6], 32
    %v3978 = vld [vmem:[%s3977] sm:$0xff]
    %v3979 = vld [vmem:[%s3977 + $0x8] sm:$0xff]
    %s3980 = scalar_lea.vmem %s3, 2
    %v3981 = vld [vmem:[%s3980] sm:$0x1]
    %v3983 = vperm.slane %v3981, 0
    %3985 = vmatpush.msra.mxu0 0.0
    %3986 = vmatpush.msra.mxu0 0.0
    %3987 = vmatpush.msra.mxu0 0.0
    %3988 = vmatpush.msra.mxu0 0.0
    %3989 = vmatpush.msra.mxu0 0.0
    %3990 = vmatpush.msra.mxu0 0.0
    %3991 = vmatpush.msra.mxu0 0.0
    %3992 = vmatpush.msra.mxu0 0.0
    %3993 = vmatpush.msra.mxu0 0.0
    %3994 = vmatpush.msra.mxu0 0.0
    %3995 = vmatpush.msra.mxu0 0.0
    %3996 = vmatpush.msra.mxu0 0.0
    %3997 = vmatpush.msra.mxu0 0.0
    %3998 = vmatpush.msra.mxu0 0.0
    %3999 = vmatpush.msra.mxu0 %v3976
    %4000 = vmatpush.msra.mxu0 %v3975
    %4001 = vmatmul.f32.gmra.mxu0 %v3536
    %v4002 = vpop.f32.mrf.mxu0
    %v4003 = vadd.f32 %v3983, %v4002
    %4004 = vdwg.mxu0
    %4005 = vmatpush.msra.mxu0 0.0
    %4006 = vmatpush.msra.mxu0 0.0
    %4007 = vmatpush.msra.mxu0 0.0
    %4008 = vmatpush.msra.mxu0 0.0
    %4009 = vmatpush.msra.mxu0 0.0
    %4010 = vmatpush.msra.mxu0 0.0
    %4011 = vmatpush.msra.mxu0 0.0
    %4012 = vmatpush.msra.mxu0 0.0
    %4013 = vmatpush.msra.mxu0 0.0
    %4014 = vmatpush.msra.mxu0 0.0
    %4015 = vmatpush.msra.mxu0 0.0
    %4016 = vmatpush.msra.mxu0 0.0
    %4017 = vmatpush.msra.mxu0 0.0
    %4018 = vmatpush.msra.mxu0 0.0
    %4019 = vmatpush.msra.mxu0 %v3976
    %4020 = vmatpush.msra.mxu0 %v3975
    %4021 = vmatmul.f32.gmra.mxu0 %v3599
    %v4022 = vpop.f32.mrf.mxu0
    %v4023 = vadd.f32 %v3983, %v4022
    %4024 = vdwg.mxu0
    %4025 = vmatpush.msra.mxu0 0.0
    %4026 = vmatpush.msra.mxu0 0.0
    %4027 = vmatpush.msra.mxu0 0.0
    %4028 = vmatpush.msra.mxu0 0.0
    %4029 = vmatpush.msra.mxu0 0.0
    %4030 = vmatpush.msra.mxu0 0.0
    %4031 = vmatpush.msra.mxu0 0.0
    %4032 = vmatpush.msra.mxu0 0.0
    %4033 = vmatpush.msra.mxu0 0.0
    %4034 = vmatpush.msra.mxu0 0.0
    %4035 = vmatpush.msra.mxu0 0.0
    %4036 = vmatpush.msra.mxu0 0.0
    %4037 = vmatpush.msra.mxu0 0.0
    %4038 = vmatpush.msra.mxu0 0.0
    %4039 = vmatpush.msra.mxu0 %v3976
    %4040 = vmatpush.msra.mxu0 %v3975
    %4041 = vmatmul.f32.gmra.mxu0 %v3662
    %v4042 = vpop.f32.mrf.mxu0
    %v4043 = vadd.f32 %v3983, %v4042
    %4044 = vdwg.mxu0
    %4045 = vmatpush.msra.mxu0 0.0
    %4046 = vmatpush.msra.mxu0 0.0
    %4047 = vmatpush.msra.mxu0 0.0
    %4048 = vmatpush.msra.mxu0 0.0
    %4049 = vmatpush.msra.mxu0 0.0
    %4050 = vmatpush.msra.mxu0 0.0
    %4051 = vmatpush.msra.mxu0 0.0
    %4052 = vmatpush.msra.mxu0 0.0
    %4053 = vmatpush.msra.mxu0 0.0
    %4054 = vmatpush.msra.mxu0 0.0
    %4055 = vmatpush.msra.mxu0 0.0
    %4056 = vmatpush.msra.mxu0 0.0
    %4057 = vmatpush.msra.mxu0 0.0
    %4058 = vmatpush.msra.mxu0 0.0
    %4059 = vmatpush.msra.mxu0 %v3976
    %4060 = vmatpush.msra.mxu0 %v3975
    %4061 = vmatmul.f32.gmra.mxu0 %v3725
    %v4062 = vpop.f32.mrf.mxu0
    %v4063 = vadd.f32 %v3983, %v4062
    %4064 = vdwg.mxu0
    %4065 = vmatpush.msra.mxu0 0.0
    %4066 = vmatpush.msra.mxu0 0.0
    %4067 = vmatpush.msra.mxu0 0.0
    %4068 = vmatpush.msra.mxu0 0.0
    %4069 = vmatpush.msra.mxu0 0.0
    %4070 = vmatpush.msra.mxu0 0.0
    %4071 = vmatpush.msra.mxu0 0.0
    %4072 = vmatpush.msra.mxu0 0.0
    %4073 = vmatpush.msra.mxu0 0.0
    %4074 = vmatpush.msra.mxu0 0.0
    %4075 = vmatpush.msra.mxu0 0.0
    %4076 = vmatpush.msra.mxu0 0.0
    %4077 = vmatpush.msra.mxu0 0.0
    %4078 = vmatpush.msra.mxu0 0.0
    %4079 = vmatpush.msra.mxu0 %v3976
    %4080 = vmatpush.msra.mxu0 %v3975
    %4081 = vmatmul.f32.gmra.mxu0 %v3788
    %v4082 = vpop.f32.mrf.mxu0
    %v4083 = vadd.f32 %v3983, %v4082
    %4084 = vdwg.mxu0
    %4085 = vmatpush.msra.mxu0 0.0
    %4086 = vmatpush.msra.mxu0 0.0
    %4087 = vmatpush.msra.mxu0 0.0
    %4088 = vmatpush.msra.mxu0 0.0
    %4089 = vmatpush.msra.mxu0 0.0
    %4090 = vmatpush.msra.mxu0 0.0
    %4091 = vmatpush.msra.mxu0 0.0
    %4092 = vmatpush.msra.mxu0 0.0
    %4093 = vmatpush.msra.mxu0 0.0
    %4094 = vmatpush.msra.mxu0 0.0
    %4095 = vmatpush.msra.mxu0 0.0
    %4096 = vmatpush.msra.mxu0 0.0
    %4097 = vmatpush.msra.mxu0 0.0
    %4098 = vmatpush.msra.mxu0 0.0
    %4099 = vmatpush.msra.mxu0 %v3976
    %4100 = vmatpush.msra.mxu0 %v3975
    %4101 = vmatmul.f32.gmra.mxu0 %v3851
    %v4102 = vpop.f32.mrf.mxu0
    %v4103 = vadd.f32 %v3983, %v4102
    %4104 = vdwg.mxu0
    %4105 = vmatpush.msra.mxu0 0.0
    %4106 = vmatpush.msra.mxu0 0.0
    %4107 = vmatpush.msra.mxu0 0.0
    %4108 = vmatpush.msra.mxu0 0.0
    %4109 = vmatpush.msra.mxu0 0.0
    %4110 = vmatpush.msra.mxu0 0.0
    %4111 = vmatpush.msra.mxu0 0.0
    %4112 = vmatpush.msra.mxu0 0.0
    %4113 = vmatpush.msra.mxu0 0.0
    %4114 = vmatpush.msra.mxu0 0.0
    %4115 = vmatpush.msra.mxu0 0.0
    %4116 = vmatpush.msra.mxu0 0.0
    %4117 = vmatpush.msra.mxu0 0.0
    %4118 = vmatpush.msra.mxu0 0.0
    %4119 = vmatpush.msra.mxu0 %v3976
    %4120 = vmatpush.msra.mxu0 %v3975
    %4121 = vmatmul.f32.gmra.mxu0 %v3914
    %v4122 = vpop.f32.mrf.mxu0
    %v4123 = vadd.f32 %v3983, %v4122
    %4124 = vdwg.mxu0
    %4126 = vrot.lane.b32.xlu0 %v3973, 80
    %v4127 = vpop.permute.xlu0 %4126
    %v4128 = vsel %vm132, %v4127, 0
    %4130 = vmatpush.msra.mxu0 0.0
    %4131 = vmatpush.msra.mxu0 0.0
    %4132 = vmatpush.msra.mxu0 0.0
    %4133 = vmatpush.msra.mxu0 0.0
    %4134 = vmatpush.msra.mxu0 0.0
    %4135 = vmatpush.msra.mxu0 0.0
    %4136 = vmatpush.msra.mxu0 0.0
    %4137 = vmatpush.msra.mxu0 0.0
    %4138 = vmatpush.msra.mxu0 0.0
    %4139 = vmatpush.msra.mxu0 0.0
    %4140 = vmatpush.msra.mxu0 0.0
    %4141 = vmatpush.msra.mxu0 0.0
    %4142 = vmatpush.msra.mxu0 0.0
    %4143 = vmatpush.msra.mxu0 0.0
    %4144 = vmatpush.msra.mxu0 %v3976
    %4145 = vmatpush.msra.mxu0 %v3975
    %4146 = vmatmul.f32.gmra.mxu0 %v4128
    %v4147 = vpop.f32.mrf.mxu0
    %v4148 = vadd.f32 %v3983, %v4147
    %4149 = vdwg.mxu0
    %4150 = vmatpush.msra.mxu0 0.0
    %4151 = vmatpush.msra.mxu0 0.0
    %4152 = vmatpush.msra.mxu0 0.0
    %4153 = vmatpush.msra.mxu0 0.0
    %4154 = vmatpush.msra.mxu0 0.0
    %4155 = vmatpush.msra.mxu0 0.0
    %4156 = vmatpush.msra.mxu0 0.0
    %4157 = vmatpush.msra.mxu0 0.0
    %4158 = vmatpush.msra.mxu0 0.0
    %4159 = vmatpush.msra.mxu0 0.0
    %4160 = vmatpush.msra.mxu0 0.0
    %4161 = vmatpush.msra.mxu0 0.0
    %4162 = vmatpush.msra.mxu0 0.0
    %4163 = vmatpush.msra.mxu0 0.0
    %4164 = vmatpush.msra.mxu0 %v3979
    %4165 = vmatpush.msra.mxu0 %v3978
    %4166 = vmatmul.f32.gmra.mxu0 %v199
    %v4167 = vpop.f32.mrf.mxu0
    %v4168 = vadd.f32 0.0, %v4167
    %4169 = vdwg.mxu0
    %v4170 = vadd.f32 %v4003, %v4168
    %v4171 = vxor.u32 %v4170, 2147483648
    %v4172 = vmul.f32 %v4171, 1.442695
    %v4173 = vpow.pop %v4172
    %v4174 = vadd.f32 %v4173, 1.0
    %v4175 = vrcp.pop %v4174
    %v4176 = vmul.f32 %v4174, %v4175
    %v4177 = vsub.f32 1.0, %v4176
    %v4178 = vmul.f32 %v4175, %v4177
    %v4179 = vadd.f32 %v4175, %v4178
    %vm4180 = vweird.f32 %v4174
    %vm4181 = vweird.f32 %v4175
    %vm4182 = vmor %vm4180, %vm4181
    %v4183 = vsel %vm4182, %v4175, %v4179
    %v4184 = vand.u32 2147483647, %v4174
    %vm4185 = vcmp.eq.f32.partialorder %v4184, 8.507059e+37
    %v4186 = vand.u32 %v4174, 2147483648
    %v4187 = vor.u32 1.1754944e-38, %v4186
    %v4188 = vsel %vm4185, %v4187, %v4183
    %v4189 = vmul.f32 1.0, %v4188
    %v4190 = vtanh.pop %v4170
    %v4191 = vmul.f32 %v4189, 0.0
    %4193 = vrot.lane.b32.xlu0 %v4190, 96
    %v4194 = vpop.permute.xlu0 %4193
    %v4196 = vmul.f32 %v4189, %v4194
    %4198 = vrot.lane.b32.xlu0 %v4196, 16
    %v4199 = vpop.permute.xlu0 %4198
    %v4201 = vadd.f32 %v4191, %v4199
    %v4202 = vtanh.pop %v4201
    %4204 = vrot.lane.b32.xlu0 %v4202, 32
    %v4205 = vpop.permute.xlu0 %4204
    %v4207 = vmul.f32 %v4189, %v4205
    %4209 = vrot.lane.b32.xlu0 %v4207, 80
    %v4210 = vpop.permute.xlu0 %4209
    %v4211 = vsel %vm132, %v4210, 0
    %4213 = vmatpush.msra.mxu0 0.0
    %4214 = vmatpush.msra.mxu0 0.0
    %4215 = vmatpush.msra.mxu0 0.0
    %4216 = vmatpush.msra.mxu0 0.0
    %4217 = vmatpush.msra.mxu0 0.0
    %4218 = vmatpush.msra.mxu0 0.0
    %4219 = vmatpush.msra.mxu0 0.0
    %4220 = vmatpush.msra.mxu0 0.0
    %4221 = vmatpush.msra.mxu0 0.0
    %4222 = vmatpush.msra.mxu0 0.0
    %4223 = vmatpush.msra.mxu0 0.0
    %4224 = vmatpush.msra.mxu0 0.0
    %4225 = vmatpush.msra.mxu0 0.0
    %4226 = vmatpush.msra.mxu0 0.0
    %4227 = vmatpush.msra.mxu0 %v3979
    %4228 = vmatpush.msra.mxu0 %v3978
    %4229 = vmatmul.f32.gmra.mxu0 %v4211
    %v4230 = vpop.f32.mrf.mxu0
    %v4231 = vadd.f32 0.0, %v4230
    %4232 = vdwg.mxu0
    %v4233 = vadd.f32 %v4023, %v4231
    %v4234 = vxor.u32 %v4233, 2147483648
    %v4235 = vmul.f32 %v4234, 1.442695
    %v4236 = vpow.pop %v4235
    %v4237 = vadd.f32 %v4236, 1.0
    %v4238 = vrcp.pop %v4237
    %v4239 = vmul.f32 %v4237, %v4238
    %v4240 = vsub.f32 1.0, %v4239
    %v4241 = vmul.f32 %v4238, %v4240
    %v4242 = vadd.f32 %v4238, %v4241
    %vm4243 = vweird.f32 %v4237
    %vm4244 = vweird.f32 %v4238
    %vm4245 = vmor %vm4243, %vm4244
    %v4246 = vsel %vm4245, %v4238, %v4242
    %v4247 = vand.u32 2147483647, %v4237
    %vm4248 = vcmp.eq.f32.partialorder %v4247, 8.507059e+37
    %v4249 = vand.u32 %v4237, 2147483648
    %v4250 = vor.u32 1.1754944e-38, %v4249
    %v4251 = vsel %vm4248, %v4250, %v4246
    %v4252 = vmul.f32 1.0, %v4251
    %v4253 = vtanh.pop %v4233
    %v4254 = vmul.f32 %v4252, %v4201
    %4256 = vrot.lane.b32.xlu0 %v4253, 96
    %v4257 = vpop.permute.xlu0 %4256
    %v4259 = vmul.f32 %v4252, %v4257
    %4261 = vrot.lane.b32.xlu0 %v4259, 16
    %v4262 = vpop.permute.xlu0 %4261
    %v4264 = vadd.f32 %v4254, %v4262
    %v4265 = vtanh.pop %v4264
    %4267 = vrot.lane.b32.xlu0 %v4265, 32
    %v4268 = vpop.permute.xlu0 %4267
    %v4270 = vmul.f32 %v4252, %v4268
    %4272 = vrot.lane.b32.xlu0 %v4270, 80
    %v4273 = vpop.permute.xlu0 %4272
    %v4274 = vsel %vm132, %v4273, 0
    %4276 = vmatpush.msra.mxu0 0.0
    %4277 = vmatpush.msra.mxu0 0.0
    %4278 = vmatpush.msra.mxu0 0.0
    %4279 = vmatpush.msra.mxu0 0.0
    %4280 = vmatpush.msra.mxu0 0.0
    %4281 = vmatpush.msra.mxu0 0.0
    %4282 = vmatpush.msra.mxu0 0.0
    %4283 = vmatpush.msra.mxu0 0.0
    %4284 = vmatpush.msra.mxu0 0.0
    %4285 = vmatpush.msra.mxu0 0.0
    %4286 = vmatpush.msra.mxu0 0.0
    %4287 = vmatpush.msra.mxu0 0.0
    %4288 = vmatpush.msra.mxu0 0.0
    %4289 = vmatpush.msra.mxu0 0.0
    %4290 = vmatpush.msra.mxu0 %v3979
    %4291 = vmatpush.msra.mxu0 %v3978
    %4292 = vmatmul.f32.gmra.mxu0 %v4274
    %v4293 = vpop.f32.mrf.mxu0
    %v4294 = vadd.f32 0.0, %v4293
    %4295 = vdwg.mxu0
    %v4296 = vadd.f32 %v4043, %v4294
    %v4297 = vxor.u32 %v4296, 2147483648
    %v4298 = vmul.f32 %v4297, 1.442695
    %v4299 = vpow.pop %v4298
    %v4300 = vadd.f32 %v4299, 1.0
    %v4301 = vrcp.pop %v4300
    %v4302 = vmul.f32 %v4300, %v4301
    %v4303 = vsub.f32 1.0, %v4302
    %v4304 = vmul.f32 %v4301, %v4303
    %v4305 = vadd.f32 %v4301, %v4304
    %vm4306 = vweird.f32 %v4300
    %vm4307 = vweird.f32 %v4301
    %vm4308 = vmor %vm4306, %vm4307
    %v4309 = vsel %vm4308, %v4301, %v4305
    %v4310 = vand.u32 2147483647, %v4300
    %vm4311 = vcmp.eq.f32.partialorder %v4310, 8.507059e+37
    %v4312 = vand.u32 %v4300, 2147483648
    %v4313 = vor.u32 1.1754944e-38, %v4312
    %v4314 = vsel %vm4311, %v4313, %v4309
    %v4315 = vmul.f32 1.0, %v4314
    %v4316 = vtanh.pop %v4296
    %v4317 = vmul.f32 %v4315, %v4264
    %4319 = vrot.lane.b32.xlu0 %v4316, 96
    %v4320 = vpop.permute.xlu0 %4319
    %v4322 = vmul.f32 %v4315, %v4320
    %4324 = vrot.lane.b32.xlu0 %v4322, 16
    %v4325 = vpop.permute.xlu0 %4324
    %v4327 = vadd.f32 %v4317, %v4325
    %v4328 = vtanh.pop %v4327
    %4330 = vrot.lane.b32.xlu0 %v4328, 32
    %v4331 = vpop.permute.xlu0 %4330
    %v4333 = vmul.f32 %v4315, %v4331
    %4335 = vrot.lane.b32.xlu0 %v4333, 80
    %v4336 = vpop.permute.xlu0 %4335
    %v4337 = vsel %vm132, %v4336, 0
    %4339 = vmatpush.msra.mxu0 0.0
    %4340 = vmatpush.msra.mxu0 0.0
    %4341 = vmatpush.msra.mxu0 0.0
    %4342 = vmatpush.msra.mxu0 0.0
    %4343 = vmatpush.msra.mxu0 0.0
    %4344 = vmatpush.msra.mxu0 0.0
    %4345 = vmatpush.msra.mxu0 0.0
    %4346 = vmatpush.msra.mxu0 0.0
    %4347 = vmatpush.msra.mxu0 0.0
    %4348 = vmatpush.msra.mxu0 0.0
    %4349 = vmatpush.msra.mxu0 0.0
    %4350 = vmatpush.msra.mxu0 0.0
    %4351 = vmatpush.msra.mxu0 0.0
    %4352 = vmatpush.msra.mxu0 0.0
    %4353 = vmatpush.msra.mxu0 %v3979
    %4354 = vmatpush.msra.mxu0 %v3978
    %4355 = vmatmul.f32.gmra.mxu0 %v4337
    %v4356 = vpop.f32.mrf.mxu0
    %v4357 = vadd.f32 0.0, %v4356
    %4358 = vdwg.mxu0
    %v4359 = vadd.f32 %v4063, %v4357
    %v4360 = vxor.u32 %v4359, 2147483648
    %v4361 = vmul.f32 %v4360, 1.442695
    %v4362 = vpow.pop %v4361
    %v4363 = vadd.f32 %v4362, 1.0
    %v4364 = vrcp.pop %v4363
    %v4365 = vmul.f32 %v4363, %v4364
    %v4366 = vsub.f32 1.0, %v4365
    %v4367 = vmul.f32 %v4364, %v4366
    %v4368 = vadd.f32 %v4364, %v4367
    %vm4369 = vweird.f32 %v4363
    %vm4370 = vweird.f32 %v4364
    %vm4371 = vmor %vm4369, %vm4370
    %v4372 = vsel %vm4371, %v4364, %v4368
    %v4373 = vand.u32 2147483647, %v4363
    %vm4374 = vcmp.eq.f32.partialorder %v4373, 8.507059e+37
    %v4375 = vand.u32 %v4363, 2147483648
    %v4376 = vor.u32 1.1754944e-38, %v4375
    %v4377 = vsel %vm4374, %v4376, %v4372
    %v4378 = vmul.f32 1.0, %v4377
    %v4379 = vtanh.pop %v4359
    %v4380 = vmul.f32 %v4378, %v4327
    %4382 = vrot.lane.b32.xlu0 %v4379, 96
    %v4383 = vpop.permute.xlu0 %4382
    %v4385 = vmul.f32 %v4378, %v4383
    %4387 = vrot.lane.b32.xlu0 %v4385, 16
    %v4388 = vpop.permute.xlu0 %4387
    %v4390 = vadd.f32 %v4380, %v4388
    %v4391 = vtanh.pop %v4390
    %4393 = vrot.lane.b32.xlu0 %v4391, 32
    %v4394 = vpop.permute.xlu0 %4393
    %v4396 = vmul.f32 %v4378, %v4394
    %4398 = vrot.lane.b32.xlu0 %v4396, 80
    %v4399 = vpop.permute.xlu0 %4398
    %v4400 = vsel %vm132, %v4399, 0
    %4402 = vmatpush.msra.mxu0 0.0
    %4403 = vmatpush.msra.mxu0 0.0
    %4404 = vmatpush.msra.mxu0 0.0
    %4405 = vmatpush.msra.mxu0 0.0
    %4406 = vmatpush.msra.mxu0 0.0
    %4407 = vmatpush.msra.mxu0 0.0
    %4408 = vmatpush.msra.mxu0 0.0
    %4409 = vmatpush.msra.mxu0 0.0
    %4410 = vmatpush.msra.mxu0 0.0
    %4411 = vmatpush.msra.mxu0 0.0
    %4412 = vmatpush.msra.mxu0 0.0
    %4413 = vmatpush.msra.mxu0 0.0
    %4414 = vmatpush.msra.mxu0 0.0
    %4415 = vmatpush.msra.mxu0 0.0
    %4416 = vmatpush.msra.mxu0 %v3979
    %4417 = vmatpush.msra.mxu0 %v3978
    %4418 = vmatmul.f32.gmra.mxu0 %v4400
    %v4419 = vpop.f32.mrf.mxu0
    %v4420 = vadd.f32 0.0, %v4419
    %4421 = vdwg.mxu0
    %v4422 = vadd.f32 %v4083, %v4420
    %v4423 = vxor.u32 %v4422, 2147483648
    %v4424 = vmul.f32 %v4423, 1.442695
    %v4425 = vpow.pop %v4424
    %v4426 = vadd.f32 %v4425, 1.0
    %v4427 = vrcp.pop %v4426
    %v4428 = vmul.f32 %v4426, %v4427
    %v4429 = vsub.f32 1.0, %v4428
    %v4430 = vmul.f32 %v4427, %v4429
    %v4431 = vadd.f32 %v4427, %v4430
    %vm4432 = vweird.f32 %v4426
    %vm4433 = vweird.f32 %v4427
    %vm4434 = vmor %vm4432, %vm4433
    %v4435 = vsel %vm4434, %v4427, %v4431
    %v4436 = vand.u32 2147483647, %v4426
    %vm4437 = vcmp.eq.f32.partialorder %v4436, 8.507059e+37
    %v4438 = vand.u32 %v4426, 2147483648
    %v4439 = vor.u32 1.1754944e-38, %v4438
    %v4440 = vsel %vm4437, %v4439, %v4435
    %v4441 = vmul.f32 1.0, %v4440
    %v4442 = vtanh.pop %v4422
    %v4443 = vmul.f32 %v4441, %v4390
    %4445 = vrot.lane.b32.xlu0 %v4442, 96
    %v4446 = vpop.permute.xlu0 %4445
    %v4448 = vmul.f32 %v4441, %v4446
    %4450 = vrot.lane.b32.xlu0 %v4448, 16
    %v4451 = vpop.permute.xlu0 %4450
    %v4453 = vadd.f32 %v4443, %v4451
    %v4454 = vtanh.pop %v4453
    %4456 = vrot.lane.b32.xlu0 %v4454, 32
    %v4457 = vpop.permute.xlu0 %4456
    %v4459 = vmul.f32 %v4441, %v4457
    %4461 = vrot.lane.b32.xlu0 %v4459, 80
    %v4462 = vpop.permute.xlu0 %4461
    %v4463 = vsel %vm132, %v4462, 0
    %4465 = vmatpush.msra.mxu0 0.0
    %4466 = vmatpush.msra.mxu0 0.0
    %4467 = vmatpush.msra.mxu0 0.0
    %4468 = vmatpush.msra.mxu0 0.0
    %4469 = vmatpush.msra.mxu0 0.0
    %4470 = vmatpush.msra.mxu0 0.0
    %4471 = vmatpush.msra.mxu0 0.0
    %4472 = vmatpush.msra.mxu0 0.0
    %4473 = vmatpush.msra.mxu0 0.0
    %4474 = vmatpush.msra.mxu0 0.0
    %4475 = vmatpush.msra.mxu0 0.0
    %4476 = vmatpush.msra.mxu0 0.0
    %4477 = vmatpush.msra.mxu0 0.0
    %4478 = vmatpush.msra.mxu0 0.0
    %4479 = vmatpush.msra.mxu0 %v3979
    %4480 = vmatpush.msra.mxu0 %v3978
    %4481 = vmatmul.f32.gmra.mxu0 %v4463
    %v4482 = vpop.f32.mrf.mxu0
    %v4483 = vadd.f32 0.0, %v4482
    %4484 = vdwg.mxu0
    %v4485 = vadd.f32 %v4103, %v4483
    %v4486 = vxor.u32 %v4485, 2147483648
    %v4487 = vmul.f32 %v4486, 1.442695
    %v4488 = vpow.pop %v4487
    %v4489 = vadd.f32 %v4488, 1.0
    %v4490 = vrcp.pop %v4489
    %v4491 = vmul.f32 %v4489, %v4490
    %v4492 = vsub.f32 1.0, %v4491
    %v4493 = vmul.f32 %v4490, %v4492
    %v4494 = vadd.f32 %v4490, %v4493
    %vm4495 = vweird.f32 %v4489
    %vm4496 = vweird.f32 %v4490
    %vm4497 = vmor %vm4495, %vm4496
    %v4498 = vsel %vm4497, %v4490, %v4494
    %v4499 = vand.u32 2147483647, %v4489
    %vm4500 = vcmp.eq.f32.partialorder %v4499, 8.507059e+37
    %v4501 = vand.u32 %v4489, 2147483648
    %v4502 = vor.u32 1.1754944e-38, %v4501
    %v4503 = vsel %vm4500, %v4502, %v4498
    %v4504 = vmul.f32 1.0, %v4503
    %v4505 = vtanh.pop %v4485
    %v4506 = vmul.f32 %v4504, %v4453
    %4508 = vrot.lane.b32.xlu0 %v4505, 96
    %v4509 = vpop.permute.xlu0 %4508
    %v4511 = vmul.f32 %v4504, %v4509
    %4513 = vrot.lane.b32.xlu0 %v4511, 16
    %v4514 = vpop.permute.xlu0 %4513
    %v4516 = vadd.f32 %v4506, %v4514
    %v4517 = vtanh.pop %v4516
    %4519 = vrot.lane.b32.xlu0 %v4517, 32
    %v4520 = vpop.permute.xlu0 %4519
    %v4522 = vmul.f32 %v4504, %v4520
    %4524 = vrot.lane.b32.xlu0 %v4522, 80
    %v4525 = vpop.permute.xlu0 %4524
    %v4526 = vsel %vm132, %v4525, 0
    %4528 = vmatpush.msra.mxu0 0.0
    %4529 = vmatpush.msra.mxu0 0.0
    %4530 = vmatpush.msra.mxu0 0.0
    %4531 = vmatpush.msra.mxu0 0.0
    %4532 = vmatpush.msra.mxu0 0.0
    %4533 = vmatpush.msra.mxu0 0.0
    %4534 = vmatpush.msra.mxu0 0.0
    %4535 = vmatpush.msra.mxu0 0.0
    %4536 = vmatpush.msra.mxu0 0.0
    %4537 = vmatpush.msra.mxu0 0.0
    %4538 = vmatpush.msra.mxu0 0.0
    %4539 = vmatpush.msra.mxu0 0.0
    %4540 = vmatpush.msra.mxu0 0.0
    %4541 = vmatpush.msra.mxu0 0.0
    %4542 = vmatpush.msra.mxu0 %v3979
    %4543 = vmatpush.msra.mxu0 %v3978
    %4544 = vmatmul.f32.gmra.mxu0 %v4526
    %v4545 = vpop.f32.mrf.mxu0
    %v4546 = vadd.f32 0.0, %v4545
    %4547 = vdwg.mxu0
    %v4548 = vadd.f32 %v4123, %v4546
    %v4549 = vxor.u32 %v4548, 2147483648
    %v4550 = vmul.f32 %v4549, 1.442695
    %v4551 = vpow.pop %v4550
    %v4552 = vadd.f32 %v4551, 1.0
    %v4553 = vrcp.pop %v4552
    %v4554 = vmul.f32 %v4552, %v4553
    %v4555 = vsub.f32 1.0, %v4554
    %v4556 = vmul.f32 %v4553, %v4555
    %v4557 = vadd.f32 %v4553, %v4556
    %vm4558 = vweird.f32 %v4552
    %vm4559 = vweird.f32 %v4553
    %vm4560 = vmor %vm4558, %vm4559
    %v4561 = vsel %vm4560, %v4553, %v4557
    %v4562 = vand.u32 2147483647, %v4552
    %vm4563 = vcmp.eq.f32.partialorder %v4562, 8.507059e+37
    %v4564 = vand.u32 %v4552, 2147483648
    %v4565 = vor.u32 1.1754944e-38, %v4564
    %v4566 = vsel %vm4563, %v4565, %v4561
    %v4567 = vmul.f32 1.0, %v4566
    %v4568 = vtanh.pop %v4548
    %v4569 = vmul.f32 %v4567, %v4516
    %4571 = vrot.lane.b32.xlu0 %v4568, 96
    %v4572 = vpop.permute.xlu0 %4571
    %v4574 = vmul.f32 %v4567, %v4572
    %4576 = vrot.lane.b32.xlu0 %v4574, 16
    %v4577 = vpop.permute.xlu0 %4576
    %v4579 = vadd.f32 %v4569, %v4577
    %v4580 = vtanh.pop %v4579
    %4582 = vrot.lane.b32.xlu0 %v4580, 32
    %v4583 = vpop.permute.xlu0 %4582
    %v4585 = vmul.f32 %v4567, %v4583
    %4587 = vrot.lane.b32.xlu0 %v4585, 80
    %v4588 = vpop.permute.xlu0 %4587
    %v4589 = vsel %vm132, %v4588, 0
    %4591 = vmatpush.msra.mxu0 0.0
    %4592 = vmatpush.msra.mxu0 0.0
    %4593 = vmatpush.msra.mxu0 0.0
    %4594 = vmatpush.msra.mxu0 0.0
    %4595 = vmatpush.msra.mxu0 0.0
    %4596 = vmatpush.msra.mxu0 0.0
    %4597 = vmatpush.msra.mxu0 0.0
    %4598 = vmatpush.msra.mxu0 0.0
    %4599 = vmatpush.msra.mxu0 0.0
    %4600 = vmatpush.msra.mxu0 0.0
    %4601 = vmatpush.msra.mxu0 0.0
    %4602 = vmatpush.msra.mxu0 0.0
    %4603 = vmatpush.msra.mxu0 0.0
    %4604 = vmatpush.msra.mxu0 0.0
    %4605 = vmatpush.msra.mxu0 %v3979
    %4606 = vmatpush.msra.mxu0 %v3978
    %4607 = vmatmul.f32.gmra.mxu0 %v4589
    %v4608 = vpop.f32.mrf.mxu0
    %v4609 = vadd.f32 0.0, %v4608
    %4610 = vdwg.mxu0
    %v4611 = vadd.f32 %v4148, %v4609
    %v4612 = vxor.u32 %v4611, 2147483648
    %v4613 = vmul.f32 %v4612, 1.442695
    %v4614 = vpow.pop %v4613
    %v4615 = vadd.f32 %v4614, 1.0
    %v4616 = vrcp.pop %v4615
    %v4617 = vmul.f32 %v4615, %v4616
    %v4618 = vsub.f32 1.0, %v4617
    %v4619 = vmul.f32 %v4616, %v4618
    %v4620 = vadd.f32 %v4616, %v4619
    %vm4621 = vweird.f32 %v4615
    %vm4622 = vweird.f32 %v4616
    %vm4623 = vmor %vm4621, %vm4622
    %v4624 = vsel %vm4623, %v4616, %v4620
    %v4625 = vand.u32 2147483647, %v4615
    %vm4626 = vcmp.eq.f32.partialorder %v4625, 8.507059e+37
    %v4627 = vand.u32 %v4615, 2147483648
    %v4628 = vor.u32 1.1754944e-38, %v4627
    %v4629 = vsel %vm4626, %v4628, %v4624
    %v4630 = vmul.f32 1.0, %v4629
    %v4631 = vtanh.pop %v4611
    %v4632 = vmul.f32 %v4630, %v4579
    %4634 = vrot.lane.b32.xlu0 %v4631, 96
    %v4635 = vpop.permute.xlu0 %4634
    %v4637 = vmul.f32 %v4630, %v4635
    %4639 = vrot.lane.b32.xlu0 %v4637, 16
    %v4640 = vpop.permute.xlu0 %4639
    %v4642 = vadd.f32 %v4632, %v4640
    %v4643 = vtanh.pop %v4642
    %4645 = vrot.lane.b32.xlu0 %v4643, 32
    %v4646 = vpop.permute.xlu0 %4645
    %v4648 = vmul.f32 %v4630, %v4646
    %v4649 = vld [vmem:[#allocation7] sm:$0xff]
    %v4650 = vld [vmem:[#allocation7 + $0x8] sm:$0xff]
    %v4651 = vld [vmem:[#allocation9] sm:$0xff]
    %v4652 = vld [vmem:[#allocation9 + $0x8] sm:$0xff]
    %v4653 = vld [vmem:[%s6] sm:$0x1]
    %v4655 = vperm.slane %v4653, 0
    %4657 = vmatpush.msra.mxu0 0.0
    %4658 = vmatpush.msra.mxu0 0.0
    %4659 = vmatpush.msra.mxu0 0.0
    %4660 = vmatpush.msra.mxu0 0.0
    %4661 = vmatpush.msra.mxu0 0.0
    %4662 = vmatpush.msra.mxu0 0.0
    %4663 = vmatpush.msra.mxu0 0.0
    %4664 = vmatpush.msra.mxu0 0.0
    %4665 = vmatpush.msra.mxu0 0.0
    %4666 = vmatpush.msra.mxu0 0.0
    %4667 = vmatpush.msra.mxu0 0.0
    %4668 = vmatpush.msra.mxu0 0.0
    %4669 = vmatpush.msra.mxu0 0.0
    %4670 = vmatpush.msra.mxu0 0.0
    %4671 = vmatpush.msra.mxu0 %v4650
    %4672 = vmatpush.msra.mxu0 %v4649
    %4673 = vmatmul.f32.gmra.mxu0 %v4211
    %v4674 = vpop.f32.mrf.mxu0
    %v4675 = vadd.f32 %v4655, %v4674
    %4676 = vdwg.mxu0
    %4677 = vmatpush.msra.mxu0 0.0
    %4678 = vmatpush.msra.mxu0 0.0
    %4679 = vmatpush.msra.mxu0 0.0
    %4680 = vmatpush.msra.mxu0 0.0
    %4681 = vmatpush.msra.mxu0 0.0
    %4682 = vmatpush.msra.mxu0 0.0
    %4683 = vmatpush.msra.mxu0 0.0
    %4684 = vmatpush.msra.mxu0 0.0
    %4685 = vmatpush.msra.mxu0 0.0
    %4686 = vmatpush.msra.mxu0 0.0
    %4687 = vmatpush.msra.mxu0 0.0
    %4688 = vmatpush.msra.mxu0 0.0
    %4689 = vmatpush.msra.mxu0 0.0
    %4690 = vmatpush.msra.mxu0 0.0
    %4691 = vmatpush.msra.mxu0 %v4650
    %4692 = vmatpush.msra.mxu0 %v4649
    %4693 = vmatmul.f32.gmra.mxu0 %v4274
    %v4694 = vpop.f32.mrf.mxu0
    %v4695 = vadd.f32 %v4655, %v4694
    %4696 = vdwg.mxu0
    %4697 = vmatpush.msra.mxu0 0.0
    %4698 = vmatpush.msra.mxu0 0.0
    %4699 = vmatpush.msra.mxu0 0.0
    %4700 = vmatpush.msra.mxu0 0.0
    %4701 = vmatpush.msra.mxu0 0.0
    %4702 = vmatpush.msra.mxu0 0.0
    %4703 = vmatpush.msra.mxu0 0.0
    %4704 = vmatpush.msra.mxu0 0.0
    %4705 = vmatpush.msra.mxu0 0.0
    %4706 = vmatpush.msra.mxu0 0.0
    %4707 = vmatpush.msra.mxu0 0.0
    %4708 = vmatpush.msra.mxu0 0.0
    %4709 = vmatpush.msra.mxu0 0.0
    %4710 = vmatpush.msra.mxu0 0.0
    %4711 = vmatpush.msra.mxu0 %v4650
    %4712 = vmatpush.msra.mxu0 %v4649
    %4713 = vmatmul.f32.gmra.mxu0 %v4337
    %v4714 = vpop.f32.mrf.mxu0
    %v4715 = vadd.f32 %v4655, %v4714
    %4716 = vdwg.mxu0
    %4717 = vmatpush.msra.mxu0 0.0
    %4718 = vmatpush.msra.mxu0 0.0
    %4719 = vmatpush.msra.mxu0 0.0
    %4720 = vmatpush.msra.mxu0 0.0
    %4721 = vmatpush.msra.mxu0 0.0
    %4722 = vmatpush.msra.mxu0 0.0
    %4723 = vmatpush.msra.mxu0 0.0
    %4724 = vmatpush.msra.mxu0 0.0
    %4725 = vmatpush.msra.mxu0 0.0
    %4726 = vmatpush.msra.mxu0 0.0
    %4727 = vmatpush.msra.mxu0 0.0
    %4728 = vmatpush.msra.mxu0 0.0
    %4729 = vmatpush.msra.mxu0 0.0
    %4730 = vmatpush.msra.mxu0 0.0
    %4731 = vmatpush.msra.mxu0 %v4650
    %4732 = vmatpush.msra.mxu0 %v4649
    %4733 = vmatmul.f32.gmra.mxu0 %v4400
    %v4734 = vpop.f32.mrf.mxu0
    %v4735 = vadd.f32 %v4655, %v4734
    %4736 = vdwg.mxu0
    %4737 = vmatpush.msra.mxu0 0.0
    %4738 = vmatpush.msra.mxu0 0.0
    %4739 = vmatpush.msra.mxu0 0.0
    %4740 = vmatpush.msra.mxu0 0.0
    %4741 = vmatpush.msra.mxu0 0.0
    %4742 = vmatpush.msra.mxu0 0.0
    %4743 = vmatpush.msra.mxu0 0.0
    %4744 = vmatpush.msra.mxu0 0.0
    %4745 = vmatpush.msra.mxu0 0.0
    %4746 = vmatpush.msra.mxu0 0.0
    %4747 = vmatpush.msra.mxu0 0.0
    %4748 = vmatpush.msra.mxu0 0.0
    %4749 = vmatpush.msra.mxu0 0.0
    %4750 = vmatpush.msra.mxu0 0.0
    %4751 = vmatpush.msra.mxu0 %v4650
    %4752 = vmatpush.msra.mxu0 %v4649
    %4753 = vmatmul.f32.gmra.mxu0 %v4463
    %v4754 = vpop.f32.mrf.mxu0
    %v4755 = vadd.f32 %v4655, %v4754
    %4756 = vdwg.mxu0
    %4757 = vmatpush.msra.mxu0 0.0
    %4758 = vmatpush.msra.mxu0 0.0
    %4759 = vmatpush.msra.mxu0 0.0
    %4760 = vmatpush.msra.mxu0 0.0
    %4761 = vmatpush.msra.mxu0 0.0
    %4762 = vmatpush.msra.mxu0 0.0
    %4763 = vmatpush.msra.mxu0 0.0
    %4764 = vmatpush.msra.mxu0 0.0
    %4765 = vmatpush.msra.mxu0 0.0
    %4766 = vmatpush.msra.mxu0 0.0
    %4767 = vmatpush.msra.mxu0 0.0
    %4768 = vmatpush.msra.mxu0 0.0
    %4769 = vmatpush.msra.mxu0 0.0
    %4770 = vmatpush.msra.mxu0 0.0
    %4771 = vmatpush.msra.mxu0 %v4650
    %4772 = vmatpush.msra.mxu0 %v4649
    %4773 = vmatmul.f32.gmra.mxu0 %v4526
    %v4774 = vpop.f32.mrf.mxu0
    %v4775 = vadd.f32 %v4655, %v4774
    %4776 = vdwg.mxu0
    %4777 = vmatpush.msra.mxu0 0.0
    %4778 = vmatpush.msra.mxu0 0.0
    %4779 = vmatpush.msra.mxu0 0.0
    %4780 = vmatpush.msra.mxu0 0.0
    %4781 = vmatpush.msra.mxu0 0.0
    %4782 = vmatpush.msra.mxu0 0.0
    %4783 = vmatpush.msra.mxu0 0.0
    %4784 = vmatpush.msra.mxu0 0.0
    %4785 = vmatpush.msra.mxu0 0.0
    %4786 = vmatpush.msra.mxu0 0.0
    %4787 = vmatpush.msra.mxu0 0.0
    %4788 = vmatpush.msra.mxu0 0.0
    %4789 = vmatpush.msra.mxu0 0.0
    %4790 = vmatpush.msra.mxu0 0.0
    %4791 = vmatpush.msra.mxu0 %v4650
    %4792 = vmatpush.msra.mxu0 %v4649
    %4793 = vmatmul.f32.gmra.mxu0 %v4589
    %v4794 = vpop.f32.mrf.mxu0
    %v4795 = vadd.f32 %v4655, %v4794
    %4796 = vdwg.mxu0
    %4798 = vrot.lane.b32.xlu0 %v4648, 80
    %v4799 = vpop.permute.xlu0 %4798
    %v4800 = vsel %vm132, %v4799, 0
    %4802 = vmatpush.msra.mxu0 0.0
    %4803 = vmatpush.msra.mxu0 0.0
    %4804 = vmatpush.msra.mxu0 0.0
    %4805 = vmatpush.msra.mxu0 0.0
    %4806 = vmatpush.msra.mxu0 0.0
    %4807 = vmatpush.msra.mxu0 0.0
    %4808 = vmatpush.msra.mxu0 0.0
    %4809 = vmatpush.msra.mxu0 0.0
    %4810 = vmatpush.msra.mxu0 0.0
    %4811 = vmatpush.msra.mxu0 0.0
    %4812 = vmatpush.msra.mxu0 0.0
    %4813 = vmatpush.msra.mxu0 0.0
    %4814 = vmatpush.msra.mxu0 0.0
    %4815 = vmatpush.msra.mxu0 0.0
    %4816 = vmatpush.msra.mxu0 %v4650
    %4817 = vmatpush.msra.mxu0 %v4649
    %4818 = vmatmul.f32.gmra.mxu0 %v4800
    %v4819 = vpop.f32.mrf.mxu0
    %v4820 = vadd.f32 %v4655, %v4819
    %4821 = vdwg.mxu0
    %4822 = vmatpush.msra.mxu0 0.0
    %4823 = vmatpush.msra.mxu0 0.0
    %4824 = vmatpush.msra.mxu0 0.0
    %4825 = vmatpush.msra.mxu0 0.0
    %4826 = vmatpush.msra.mxu0 0.0
    %4827 = vmatpush.msra.mxu0 0.0
    %4828 = vmatpush.msra.mxu0 0.0
    %4829 = vmatpush.msra.mxu0 0.0
    %4830 = vmatpush.msra.mxu0 0.0
    %4831 = vmatpush.msra.mxu0 0.0
    %4832 = vmatpush.msra.mxu0 0.0
    %4833 = vmatpush.msra.mxu0 0.0
    %4834 = vmatpush.msra.mxu0 0.0
    %4835 = vmatpush.msra.mxu0 0.0
    %4836 = vmatpush.msra.mxu0 %v4652
    %4837 = vmatpush.msra.mxu0 %v4651
    %4838 = vmatmul.f32.gmra.mxu0 %v3453
    %v4839 = vpop.f32.mrf.mxu0
    %v4840 = vadd.f32 0.0, %v4839
    %4841 = vdwg.mxu0
    %v4842 = vadd.f32 %v4675, %v4840
    %v4843 = vxor.u32 %v4842, 2147483648
    %v4844 = vmul.f32 %v4843, 1.442695
    %v4845 = vpow.pop %v4844
    %v4846 = vadd.f32 %v4845, 1.0
    %v4847 = vrcp.pop %v4846
    %v4848 = vmul.f32 %v4846, %v4847
    %v4849 = vsub.f32 1.0, %v4848
    %v4850 = vmul.f32 %v4847, %v4849
    %v4851 = vadd.f32 %v4847, %v4850
    %vm4852 = vweird.f32 %v4846
    %vm4853 = vweird.f32 %v4847
    %vm4854 = vmor %vm4852, %vm4853
    %v4855 = vsel %vm4854, %v4847, %v4851
    %v4856 = vand.u32 2147483647, %v4846
    %vm4857 = vcmp.eq.f32.partialorder %v4856, 8.507059e+37
    %v4858 = vand.u32 %v4846, 2147483648
    %v4859 = vor.u32 1.1754944e-38, %v4858
    %v4860 = vsel %vm4857, %v4859, %v4855
    %v4861 = vmul.f32 1.0, %v4860
    %v4862 = vtanh.pop %v4842
    %v4871 = vrot.slane %v3222, 7
    %v4872 = vrot.slane %v3223, 6
    %v4873 = vsel %vm550, %v4872, %v4871
    %v4874 = vrot.slane %v3224, 5
    %v4875 = vsel %vm553, %v4874, %v4873
    %v4876 = vrot.slane %v3225, 4
    %v4877 = vsel %vm556, %v4876, %v4875
    %v4878 = vrot.slane %v3226, 3
    %v4879 = vsel %vm559, %v4878, %v4877
    %v4880 = vrot.slane %v3227, 2
    %v4881 = vsel %vm562, %v4880, %v4879
    %v4882 = vrot.slane %v3228, 1
    %v4883 = vsel %vm565, %v4882, %v4881
    %v4884 = vsel %vm568, %v3229, %v4883
    %v4886 = vmul.f32 %v4861, %v4884
    %4888 = vrot.lane.b32.xlu0 %v4862, 96
    %v4889 = vpop.permute.xlu0 %4888
    %v4891 = vmul.f32 %v4861, %v4889
    %4893 = vrot.lane.b32.xlu0 %v4891, 16
    %v4894 = vpop.permute.xlu0 %4893
    %v4896 = vadd.f32 %v4886, %v4894
    %v4897 = vtanh.pop %v4896
    %4899 = vrot.lane.b32.xlu0 %v4897, 32
    %v4900 = vpop.permute.xlu0 %4899
    %v4902 = vmul.f32 %v4861, %v4900
    %4904 = vrot.lane.b32.xlu0 %v4902, 80
    %v4905 = vpop.permute.xlu0 %4904
    %v4906 = vsel %vm132, %v4905, 0
    %4908 = vmatpush.msra.mxu0 0.0
    %4909 = vmatpush.msra.mxu0 0.0
    %4910 = vmatpush.msra.mxu0 0.0
    %4911 = vmatpush.msra.mxu0 0.0
    %4912 = vmatpush.msra.mxu0 0.0
    %4913 = vmatpush.msra.mxu0 0.0
    %4914 = vmatpush.msra.mxu0 0.0
    %4915 = vmatpush.msra.mxu0 0.0
    %4916 = vmatpush.msra.mxu0 0.0
    %4917 = vmatpush.msra.mxu0 0.0
    %4918 = vmatpush.msra.mxu0 0.0
    %4919 = vmatpush.msra.mxu0 0.0
    %4920 = vmatpush.msra.mxu0 0.0
    %4921 = vmatpush.msra.mxu0 0.0
    %4922 = vmatpush.msra.mxu0 %v4652
    %4923 = vmatpush.msra.mxu0 %v4651
    %4924 = vmatmul.f32.gmra.mxu0 %v4906
    %v4925 = vpop.f32.mrf.mxu0
    %v4926 = vadd.f32 0.0, %v4925
    %4927 = vdwg.mxu0
    %v4928 = vadd.f32 %v4695, %v4926
    %v4929 = vxor.u32 %v4928, 2147483648
    %v4930 = vmul.f32 %v4929, 1.442695
    %v4931 = vpow.pop %v4930
    %v4932 = vadd.f32 %v4931, 1.0
    %v4933 = vrcp.pop %v4932
    %v4934 = vmul.f32 %v4932, %v4933
    %v4935 = vsub.f32 1.0, %v4934
    %v4936 = vmul.f32 %v4933, %v4935
    %v4937 = vadd.f32 %v4933, %v4936
    %vm4938 = vweird.f32 %v4932
    %vm4939 = vweird.f32 %v4933
    %vm4940 = vmor %vm4938, %vm4939
    %v4941 = vsel %vm4940, %v4933, %v4937
    %v4942 = vand.u32 2147483647, %v4932
    %vm4943 = vcmp.eq.f32.partialorder %v4942, 8.507059e+37
    %v4944 = vand.u32 %v4932, 2147483648
    %v4945 = vor.u32 1.1754944e-38, %v4944
    %v4946 = vsel %vm4943, %v4945, %v4941
    %v4947 = vmul.f32 1.0, %v4946
    %v4948 = vtanh.pop %v4928
    %v4949 = vmul.f32 %v4947, %v4896
    %4951 = vrot.lane.b32.xlu0 %v4948, 96
    %v4952 = vpop.permute.xlu0 %4951
    %v4954 = vmul.f32 %v4947, %v4952
    %4956 = vrot.lane.b32.xlu0 %v4954, 16
    %v4957 = vpop.permute.xlu0 %4956
    %v4959 = vadd.f32 %v4949, %v4957
    %v4960 = vtanh.pop %v4959
    %4962 = vrot.lane.b32.xlu0 %v4960, 32
    %v4963 = vpop.permute.xlu0 %4962
    %v4965 = vmul.f32 %v4947, %v4963
    %4967 = vrot.lane.b32.xlu0 %v4965, 80
    %v4968 = vpop.permute.xlu0 %4967
    %v4969 = vsel %vm132, %v4968, 0
    %4971 = vmatpush.msra.mxu0 0.0
    %4972 = vmatpush.msra.mxu0 0.0
    %4973 = vmatpush.msra.mxu0 0.0
    %4974 = vmatpush.msra.mxu0 0.0
    %4975 = vmatpush.msra.mxu0 0.0
    %4976 = vmatpush.msra.mxu0 0.0
    %4977 = vmatpush.msra.mxu0 0.0
    %4978 = vmatpush.msra.mxu0 0.0
    %4979 = vmatpush.msra.mxu0 0.0
    %4980 = vmatpush.msra.mxu0 0.0
    %4981 = vmatpush.msra.mxu0 0.0
    %4982 = vmatpush.msra.mxu0 0.0
    %4983 = vmatpush.msra.mxu0 0.0
    %4984 = vmatpush.msra.mxu0 0.0
    %4985 = vmatpush.msra.mxu0 %v4652
    %4986 = vmatpush.msra.mxu0 %v4651
    %4987 = vmatmul.f32.gmra.mxu0 %v4969
    %v4988 = vpop.f32.mrf.mxu0
    %v4989 = vadd.f32 0.0, %v4988
    %4990 = vdwg.mxu0
    %v4991 = vadd.f32 %v4715, %v4989
    %v4992 = vxor.u32 %v4991, 2147483648
    %v4993 = vmul.f32 %v4992, 1.442695
    %v4994 = vpow.pop %v4993
    %v4995 = vadd.f32 %v4994, 1.0
    %v4996 = vrcp.pop %v4995
    %v4997 = vmul.f32 %v4995, %v4996
    %v4998 = vsub.f32 1.0, %v4997
    %v4999 = vmul.f32 %v4996, %v4998
    %v5000 = vadd.f32 %v4996, %v4999
    %vm5001 = vweird.f32 %v4995
    %vm5002 = vweird.f32 %v4996
    %vm5003 = vmor %vm5001, %vm5002
    %v5004 = vsel %vm5003, %v4996, %v5000
    %v5005 = vand.u32 2147483647, %v4995
    %vm5006 = vcmp.eq.f32.partialorder %v5005, 8.507059e+37
    %v5007 = vand.u32 %v4995, 2147483648
    %v5008 = vor.u32 1.1754944e-38, %v5007
    %v5009 = vsel %vm5006, %v5008, %v5004
    %v5010 = vmul.f32 1.0, %v5009
    %v5011 = vtanh.pop %v4991
    %v5012 = vmul.f32 %v5010, %v4959
    %5014 = vrot.lane.b32.xlu0 %v5011, 96
    %v5015 = vpop.permute.xlu0 %5014
    %v5017 = vmul.f32 %v5010, %v5015
    %5019 = vrot.lane.b32.xlu0 %v5017, 16
    %v5020 = vpop.permute.xlu0 %5019
    %v5022 = vadd.f32 %v5012, %v5020
    %v5023 = vtanh.pop %v5022
    %5025 = vrot.lane.b32.xlu0 %v5023, 32
    %v5026 = vpop.permute.xlu0 %5025
    %v5028 = vmul.f32 %v5010, %v5026
    %5030 = vrot.lane.b32.xlu0 %v5028, 80
    %v5031 = vpop.permute.xlu0 %5030
    %v5032 = vsel %vm132, %v5031, 0
    %5034 = vmatpush.msra.mxu0 0.0
    %5035 = vmatpush.msra.mxu0 0.0
    %5036 = vmatpush.msra.mxu0 0.0
    %5037 = vmatpush.msra.mxu0 0.0
    %5038 = vmatpush.msra.mxu0 0.0
    %5039 = vmatpush.msra.mxu0 0.0
    %5040 = vmatpush.msra.mxu0 0.0
    %5041 = vmatpush.msra.mxu0 0.0
    %5042 = vmatpush.msra.mxu0 0.0
    %5043 = vmatpush.msra.mxu0 0.0
    %5044 = vmatpush.msra.mxu0 0.0
    %5045 = vmatpush.msra.mxu0 0.0
    %5046 = vmatpush.msra.mxu0 0.0
    %5047 = vmatpush.msra.mxu0 0.0
    %5048 = vmatpush.msra.mxu0 %v4652
    %5049 = vmatpush.msra.mxu0 %v4651
    %5050 = vmatmul.f32.gmra.mxu0 %v5032
    %v5051 = vpop.f32.mrf.mxu0
    %v5052 = vadd.f32 0.0, %v5051
    %5053 = vdwg.mxu0
    %v5054 = vadd.f32 %v4735, %v5052
    %v5055 = vxor.u32 %v5054, 2147483648
    %v5056 = vmul.f32 %v5055, 1.442695
    %v5057 = vpow.pop %v5056
    %v5058 = vadd.f32 %v5057, 1.0
    %v5059 = vrcp.pop %v5058
    %v5060 = vmul.f32 %v5058, %v5059
    %v5061 = vsub.f32 1.0, %v5060
    %v5062 = vmul.f32 %v5059, %v5061
    %v5063 = vadd.f32 %v5059, %v5062
    %vm5064 = vweird.f32 %v5058
    %vm5065 = vweird.f32 %v5059
    %vm5066 = vmor %vm5064, %vm5065
    %v5067 = vsel %vm5066, %v5059, %v5063
    %v5068 = vand.u32 2147483647, %v5058
    %vm5069 = vcmp.eq.f32.partialorder %v5068, 8.507059e+37
    %v5070 = vand.u32 %v5058, 2147483648
    %v5071 = vor.u32 1.1754944e-38, %v5070
    %v5072 = vsel %vm5069, %v5071, %v5067
    %v5073 = vmul.f32 1.0, %v5072
    %v5074 = vtanh.pop %v5054
    %v5075 = vmul.f32 %v5073, %v5022
    %5077 = vrot.lane.b32.xlu0 %v5074, 96
    %v5078 = vpop.permute.xlu0 %5077
    %v5080 = vmul.f32 %v5073, %v5078
    %5082 = vrot.lane.b32.xlu0 %v5080, 16
    %v5083 = vpop.permute.xlu0 %5082
    %v5085 = vadd.f32 %v5075, %v5083
    %v5086 = vtanh.pop %v5085
    %5088 = vrot.lane.b32.xlu0 %v5086, 32
    %v5089 = vpop.permute.xlu0 %5088
    %v5091 = vmul.f32 %v5073, %v5089
    %5093 = vrot.lane.b32.xlu0 %v5091, 80
    %v5094 = vpop.permute.xlu0 %5093
    %v5095 = vsel %vm132, %v5094, 0
    %5097 = vmatpush.msra.mxu0 0.0
    %5098 = vmatpush.msra.mxu0 0.0
    %5099 = vmatpush.msra.mxu0 0.0
    %5100 = vmatpush.msra.mxu0 0.0
    %5101 = vmatpush.msra.mxu0 0.0
    %5102 = vmatpush.msra.mxu0 0.0
    %5103 = vmatpush.msra.mxu0 0.0
    %5104 = vmatpush.msra.mxu0 0.0
    %5105 = vmatpush.msra.mxu0 0.0
    %5106 = vmatpush.msra.mxu0 0.0
    %5107 = vmatpush.msra.mxu0 0.0
    %5108 = vmatpush.msra.mxu0 0.0
    %5109 = vmatpush.msra.mxu0 0.0
    %5110 = vmatpush.msra.mxu0 0.0
    %5111 = vmatpush.msra.mxu0 %v4652
    %5112 = vmatpush.msra.mxu0 %v4651
    %5113 = vmatmul.f32.gmra.mxu0 %v5095
    %v5114 = vpop.f32.mrf.mxu0
    %v5115 = vadd.f32 0.0, %v5114
    %5116 = vdwg.mxu0
    %v5117 = vadd.f32 %v4755, %v5115
    %v5118 = vxor.u32 %v5117, 2147483648
    %v5119 = vmul.f32 %v5118, 1.442695
    %v5120 = vpow.pop %v5119
    %v5121 = vadd.f32 %v5120, 1.0
    %v5122 = vrcp.pop %v5121
    %v5123 = vmul.f32 %v5121, %v5122
    %v5124 = vsub.f32 1.0, %v5123
    %v5125 = vmul.f32 %v5122, %v5124
    %v5126 = vadd.f32 %v5122, %v5125
    %vm5127 = vweird.f32 %v5121
    %vm5128 = vweird.f32 %v5122
    %vm5129 = vmor %vm5127, %vm5128
    %v5130 = vsel %vm5129, %v5122, %v5126
    %v5131 = vand.u32 2147483647, %v5121
    %vm5132 = vcmp.eq.f32.partialorder %v5131, 8.507059e+37
    %v5133 = vand.u32 %v5121, 2147483648
    %v5134 = vor.u32 1.1754944e-38, %v5133
    %v5135 = vsel %vm5132, %v5134, %v5130
    %v5136 = vmul.f32 1.0, %v5135
    %v5137 = vtanh.pop %v5117
    %v5138 = vmul.f32 %v5136, %v5085
    %5140 = vrot.lane.b32.xlu0 %v5137, 96
    %v5141 = vpop.permute.xlu0 %5140
    %v5143 = vmul.f32 %v5136, %v5141
    %5145 = vrot.lane.b32.xlu0 %v5143, 16
    %v5146 = vpop.permute.xlu0 %5145
    %v5148 = vadd.f32 %v5138, %v5146
    %v5149 = vtanh.pop %v5148
    %5151 = vrot.lane.b32.xlu0 %v5149, 32
    %v5152 = vpop.permute.xlu0 %5151
    %v5154 = vmul.f32 %v5136, %v5152
    %5156 = vrot.lane.b32.xlu0 %v5154, 80
    %v5157 = vpop.permute.xlu0 %5156
    %v5158 = vsel %vm132, %v5157, 0
    %5160 = vmatpush.msra.mxu0 0.0
    %5161 = vmatpush.msra.mxu0 0.0
    %5162 = vmatpush.msra.mxu0 0.0
    %5163 = vmatpush.msra.mxu0 0.0
    %5164 = vmatpush.msra.mxu0 0.0
    %5165 = vmatpush.msra.mxu0 0.0
    %5166 = vmatpush.msra.mxu0 0.0
    %5167 = vmatpush.msra.mxu0 0.0
    %5168 = vmatpush.msra.mxu0 0.0
    %5169 = vmatpush.msra.mxu0 0.0
    %5170 = vmatpush.msra.mxu0 0.0
    %5171 = vmatpush.msra.mxu0 0.0
    %5172 = vmatpush.msra.mxu0 0.0
    %5173 = vmatpush.msra.mxu0 0.0
    %5174 = vmatpush.msra.mxu0 %v4652
    %5175 = vmatpush.msra.mxu0 %v4651
    %5176 = vmatmul.f32.gmra.mxu0 %v5158
    %v5177 = vpop.f32.mrf.mxu0
    %v5178 = vadd.f32 0.0, %v5177
    %5179 = vdwg.mxu0
    %v5180 = vadd.f32 %v4775, %v5178
    %v5181 = vxor.u32 %v5180, 2147483648
    %v5182 = vmul.f32 %v5181, 1.442695
    %v5183 = vpow.pop %v5182
    %v5184 = vadd.f32 %v5183, 1.0
    %v5185 = vrcp.pop %v5184
    %v5186 = vmul.f32 %v5184, %v5185
    %v5187 = vsub.f32 1.0, %v5186
    %v5188 = vmul.f32 %v5185, %v5187
    %v5189 = vadd.f32 %v5185, %v5188
    %vm5190 = vweird.f32 %v5184
    %vm5191 = vweird.f32 %v5185
    %vm5192 = vmor %vm5190, %vm5191
    %v5193 = vsel %vm5192, %v5185, %v5189
    %v5194 = vand.u32 2147483647, %v5184
    %vm5195 = vcmp.eq.f32.partialorder %v5194, 8.507059e+37
    %v5196 = vand.u32 %v5184, 2147483648
    %v5197 = vor.u32 1.1754944e-38, %v5196
    %v5198 = vsel %vm5195, %v5197, %v5193
    %v5199 = vmul.f32 1.0, %v5198
    %v5200 = vtanh.pop %v5180
    %v5201 = vmul.f32 %v5199, %v5148
    %5203 = vrot.lane.b32.xlu0 %v5200, 96
    %v5204 = vpop.permute.xlu0 %5203
    %v5206 = vmul.f32 %v5199, %v5204
    %5208 = vrot.lane.b32.xlu0 %v5206, 16
    %v5209 = vpop.permute.xlu0 %5208
    %v5211 = vadd.f32 %v5201, %v5209
    %v5212 = vtanh.pop %v5211
    %5214 = vrot.lane.b32.xlu0 %v5212, 32
    %v5215 = vpop.permute.xlu0 %5214
    %v5217 = vmul.f32 %v5199, %v5215
    %5219 = vrot.lane.b32.xlu0 %v5217, 80
    %v5220 = vpop.permute.xlu0 %5219
    %v5221 = vsel %vm132, %v5220, 0
    %5223 = vmatpush.msra.mxu0 0.0
    %5224 = vmatpush.msra.mxu0 0.0
    %5225 = vmatpush.msra.mxu0 0.0
    %5226 = vmatpush.msra.mxu0 0.0
    %5227 = vmatpush.msra.mxu0 0.0
    %5228 = vmatpush.msra.mxu0 0.0
    %5229 = vmatpush.msra.mxu0 0.0
    %5230 = vmatpush.msra.mxu0 0.0
    %5231 = vmatpush.msra.mxu0 0.0
    %5232 = vmatpush.msra.mxu0 0.0
    %5233 = vmatpush.msra.mxu0 0.0
    %5234 = vmatpush.msra.mxu0 0.0
    %5235 = vmatpush.msra.mxu0 0.0
    %5236 = vmatpush.msra.mxu0 0.0
    %5237 = vmatpush.msra.mxu0 %v4652
    %5238 = vmatpush.msra.mxu0 %v4651
    %5239 = vmatmul.f32.gmra.mxu0 %v5221
    %v5240 = vpop.f32.mrf.mxu0
    %v5241 = vadd.f32 0.0, %v5240
    %5242 = vdwg.mxu0
    %v5243 = vadd.f32 %v4795, %v5241
    %v5244 = vxor.u32 %v5243, 2147483648
    %v5245 = vmul.f32 %v5244, 1.442695
    %v5246 = vpow.pop %v5245
    %v5247 = vadd.f32 %v5246, 1.0
    %v5248 = vrcp.pop %v5247
    %v5249 = vmul.f32 %v5247, %v5248
    %v5250 = vsub.f32 1.0, %v5249
    %v5251 = vmul.f32 %v5248, %v5250
    %v5252 = vadd.f32 %v5248, %v5251
    %vm5253 = vweird.f32 %v5247
    %vm5254 = vweird.f32 %v5248
    %vm5255 = vmor %vm5253, %vm5254
    %v5256 = vsel %vm5255, %v5248, %v5252
    %v5257 = vand.u32 2147483647, %v5247
    %vm5258 = vcmp.eq.f32.partialorder %v5257, 8.507059e+37
    %v5259 = vand.u32 %v5247, 2147483648
    %v5260 = vor.u32 1.1754944e-38, %v5259
    %v5261 = vsel %vm5258, %v5260, %v5256
    %v5262 = vmul.f32 1.0, %v5261
    %v5263 = vtanh.pop %v5243
    %v5264 = vmul.f32 %v5262, %v5211
    %5266 = vrot.lane.b32.xlu0 %v5263, 96
    %v5267 = vpop.permute.xlu0 %5266
    %v5269 = vmul.f32 %v5262, %v5267
    %5271 = vrot.lane.b32.xlu0 %v5269, 16
    %v5272 = vpop.permute.xlu0 %5271
    %v5274 = vadd.f32 %v5264, %v5272
    %v5275 = vtanh.pop %v5274
    %5277 = vrot.lane.b32.xlu0 %v5275, 32
    %v5278 = vpop.permute.xlu0 %5277
    %v5280 = vmul.f32 %v5262, %v5278
    %5282 = vrot.lane.b32.xlu0 %v5280, 80
    %v5283 = vpop.permute.xlu0 %5282
    %v5284 = vsel %vm132, %v5283, 0
    %5286 = vmatpush.msra.mxu0 0.0
    %5287 = vmatpush.msra.mxu0 0.0
    %5288 = vmatpush.msra.mxu0 0.0
    %5289 = vmatpush.msra.mxu0 0.0
    %5290 = vmatpush.msra.mxu0 0.0
    %5291 = vmatpush.msra.mxu0 0.0
    %5292 = vmatpush.msra.mxu0 0.0
    %5293 = vmatpush.msra.mxu0 0.0
    %5294 = vmatpush.msra.mxu0 0.0
    %5295 = vmatpush.msra.mxu0 0.0
    %5296 = vmatpush.msra.mxu0 0.0
    %5297 = vmatpush.msra.mxu0 0.0
    %5298 = vmatpush.msra.mxu0 0.0
    %5299 = vmatpush.msra.mxu0 0.0
    %5300 = vmatpush.msra.mxu0 %v4652
    %5301 = vmatpush.msra.mxu0 %v4651
    %5302 = vmatmul.f32.gmra.mxu0 %v5284
    %v5303 = vpop.f32.mrf.mxu0
    %v5304 = vadd.f32 0.0, %v5303
    %5305 = vdwg.mxu0
    %v5306 = vadd.f32 %v4820, %v5304
    %v5307 = vxor.u32 %v5306, 2147483648
    %v5308 = vmul.f32 %v5307, 1.442695
    %v5309 = vpow.pop %v5308
    %v5310 = vadd.f32 %v5309, 1.0
    %v5311 = vrcp.pop %v5310
    %v5312 = vmul.f32 %v5310, %v5311
    %v5313 = vsub.f32 1.0, %v5312
    %v5314 = vmul.f32 %v5311, %v5313
    %v5315 = vadd.f32 %v5311, %v5314
    %vm5316 = vweird.f32 %v5310
    %vm5317 = vweird.f32 %v5311
    %vm5318 = vmor %vm5316, %vm5317
    %v5319 = vsel %vm5318, %v5311, %v5315
    %v5320 = vand.u32 2147483647, %v5310
    %vm5321 = vcmp.eq.f32.partialorder %v5320, 8.507059e+37
    %v5322 = vand.u32 %v5310, 2147483648
    %v5323 = vor.u32 1.1754944e-38, %v5322
    %v5324 = vsel %vm5321, %v5323, %v5319
    %v5325 = vmul.f32 1.0, %v5324
    %v5326 = vtanh.pop %v5306
    %v5327 = vmul.f32 %v5325, %v5274
    %5329 = vrot.lane.b32.xlu0 %v5326, 96
    %v5330 = vpop.permute.xlu0 %5329
    %v5332 = vmul.f32 %v5325, %v5330
    %5334 = vrot.lane.b32.xlu0 %v5332, 16
    %v5335 = vpop.permute.xlu0 %5334
    %v5337 = vadd.f32 %v5327, %v5335
    %v5338 = vtanh.pop %v5337
    %5340 = vrot.lane.b32.xlu0 %v5338, 32
    %v5341 = vpop.permute.xlu0 %5340
    %v5343 = vmul.f32 %v5325, %v5341
    %s5344 = scalar_lea.vmem [#allocation7], 16
    %v5345 = vld [vmem:[%s5344] sm:$0xff]
    %v5346 = vld [vmem:[%s5344 + $0x8] sm:$0xff]
    %s5347 = scalar_lea.vmem [#allocation9], 16
    %v5348 = vld [vmem:[%s5347] sm:$0xff]
    %v5349 = vld [vmem:[%s5347 + $0x8] sm:$0xff]
    %s5350 = scalar_lea.vmem %s6, 1
    %v5351 = vld [vmem:[%s5350] sm:$0x1]
    %v5353 = vperm.slane %v5351, 0
    %5355 = vmatpush.msra.mxu0 0.0
    %5356 = vmatpush.msra.mxu0 0.0
    %5357 = vmatpush.msra.mxu0 0.0
    %5358 = vmatpush.msra.mxu0 0.0
    %5359 = vmatpush.msra.mxu0 0.0
    %5360 = vmatpush.msra.mxu0 0.0
    %5361 = vmatpush.msra.mxu0 0.0
    %5362 = vmatpush.msra.mxu0 0.0
    %5363 = vmatpush.msra.mxu0 0.0
    %5364 = vmatpush.msra.mxu0 0.0
    %5365 = vmatpush.msra.mxu0 0.0
    %5366 = vmatpush.msra.mxu0 0.0
    %5367 = vmatpush.msra.mxu0 0.0
    %5368 = vmatpush.msra.mxu0 0.0
    %5369 = vmatpush.msra.mxu0 %v5346
    %5370 = vmatpush.msra.mxu0 %v5345
    %5371 = vmatmul.f32.gmra.mxu0 %v4906
    %v5372 = vpop.f32.mrf.mxu0
    %v5373 = vadd.f32 %v5353, %v5372
    %5374 = vdwg.mxu0
    %5375 = vmatpush.msra.mxu0 0.0
    %5376 = vmatpush.msra.mxu0 0.0
    %5377 = vmatpush.msra.mxu0 0.0
    %5378 = vmatpush.msra.mxu0 0.0
    %5379 = vmatpush.msra.mxu0 0.0
    %5380 = vmatpush.msra.mxu0 0.0
    %5381 = vmatpush.msra.mxu0 0.0
    %5382 = vmatpush.msra.mxu0 0.0
    %5383 = vmatpush.msra.mxu0 0.0
    %5384 = vmatpush.msra.mxu0 0.0
    %5385 = vmatpush.msra.mxu0 0.0
    %5386 = vmatpush.msra.mxu0 0.0
    %5387 = vmatpush.msra.mxu0 0.0
    %5388 = vmatpush.msra.mxu0 0.0
    %5389 = vmatpush.msra.mxu0 %v5346
    %5390 = vmatpush.msra.mxu0 %v5345
    %5391 = vmatmul.f32.gmra.mxu0 %v4969
    %v5392 = vpop.f32.mrf.mxu0
    %v5393 = vadd.f32 %v5353, %v5392
    %5394 = vdwg.mxu0
    %5395 = vmatpush.msra.mxu0 0.0
    %5396 = vmatpush.msra.mxu0 0.0
    %5397 = vmatpush.msra.mxu0 0.0
    %5398 = vmatpush.msra.mxu0 0.0
    %5399 = vmatpush.msra.mxu0 0.0
    %5400 = vmatpush.msra.mxu0 0.0
    %5401 = vmatpush.msra.mxu0 0.0
    %5402 = vmatpush.msra.mxu0 0.0
    %5403 = vmatpush.msra.mxu0 0.0
    %5404 = vmatpush.msra.mxu0 0.0
    %5405 = vmatpush.msra.mxu0 0.0
    %5406 = vmatpush.msra.mxu0 0.0
    %5407 = vmatpush.msra.mxu0 0.0
    %5408 = vmatpush.msra.mxu0 0.0
    %5409 = vmatpush.msra.mxu0 %v5346
    %5410 = vmatpush.msra.mxu0 %v5345
    %5411 = vmatmul.f32.gmra.mxu0 %v5032
    %v5412 = vpop.f32.mrf.mxu0
    %v5413 = vadd.f32 %v5353, %v5412
    %5414 = vdwg.mxu0
    %5415 = vmatpush.msra.mxu0 0.0
    %5416 = vmatpush.msra.mxu0 0.0
    %5417 = vmatpush.msra.mxu0 0.0
    %5418 = vmatpush.msra.mxu0 0.0
    %5419 = vmatpush.msra.mxu0 0.0
    %5420 = vmatpush.msra.mxu0 0.0
    %5421 = vmatpush.msra.mxu0 0.0
    %5422 = vmatpush.msra.mxu0 0.0
    %5423 = vmatpush.msra.mxu0 0.0
    %5424 = vmatpush.msra.mxu0 0.0
    %5425 = vmatpush.msra.mxu0 0.0
    %5426 = vmatpush.msra.mxu0 0.0
    %5427 = vmatpush.msra.mxu0 0.0
    %5428 = vmatpush.msra.mxu0 0.0
    %5429 = vmatpush.msra.mxu0 %v5346
    %5430 = vmatpush.msra.mxu0 %v5345
    %5431 = vmatmul.f32.gmra.mxu0 %v5095
    %v5432 = vpop.f32.mrf.mxu0
    %v5433 = vadd.f32 %v5353, %v5432
    %5434 = vdwg.mxu0
    %5435 = vmatpush.msra.mxu0 0.0
    %5436 = vmatpush.msra.mxu0 0.0
    %5437 = vmatpush.msra.mxu0 0.0
    %5438 = vmatpush.msra.mxu0 0.0
    %5439 = vmatpush.msra.mxu0 0.0
    %5440 = vmatpush.msra.mxu0 0.0
    %5441 = vmatpush.msra.mxu0 0.0
    %5442 = vmatpush.msra.mxu0 0.0
    %5443 = vmatpush.msra.mxu0 0.0
    %5444 = vmatpush.msra.mxu0 0.0
    %5445 = vmatpush.msra.mxu0 0.0
    %5446 = vmatpush.msra.mxu0 0.0
    %5447 = vmatpush.msra.mxu0 0.0
    %5448 = vmatpush.msra.mxu0 0.0
    %5449 = vmatpush.msra.mxu0 %v5346
    %5450 = vmatpush.msra.mxu0 %v5345
    %5451 = vmatmul.f32.gmra.mxu0 %v5158
    %v5452 = vpop.f32.mrf.mxu0
    %v5453 = vadd.f32 %v5353, %v5452
    %5454 = vdwg.mxu0
    %5455 = vmatpush.msra.mxu0 0.0
    %5456 = vmatpush.msra.mxu0 0.0
    %5457 = vmatpush.msra.mxu0 0.0
    %5458 = vmatpush.msra.mxu0 0.0
    %5459 = vmatpush.msra.mxu0 0.0
    %5460 = vmatpush.msra.mxu0 0.0
    %5461 = vmatpush.msra.mxu0 0.0
    %5462 = vmatpush.msra.mxu0 0.0
    %5463 = vmatpush.msra.mxu0 0.0
    %5464 = vmatpush.msra.mxu0 0.0
    %5465 = vmatpush.msra.mxu0 0.0
    %5466 = vmatpush.msra.mxu0 0.0
    %5467 = vmatpush.msra.mxu0 0.0
    %5468 = vmatpush.msra.mxu0 0.0
    %5469 = vmatpush.msra.mxu0 %v5346
    %5470 = vmatpush.msra.mxu0 %v5345
    %5471 = vmatmul.f32.gmra.mxu0 %v5221
    %v5472 = vpop.f32.mrf.mxu0
    %v5473 = vadd.f32 %v5353, %v5472
    %5474 = vdwg.mxu0
    %5475 = vmatpush.msra.mxu0 0.0
    %5476 = vmatpush.msra.mxu0 0.0
    %5477 = vmatpush.msra.mxu0 0.0
    %5478 = vmatpush.msra.mxu0 0.0
    %5479 = vmatpush.msra.mxu0 0.0
    %5480 = vmatpush.msra.mxu0 0.0
    %5481 = vmatpush.msra.mxu0 0.0
    %5482 = vmatpush.msra.mxu0 0.0
    %5483 = vmatpush.msra.mxu0 0.0
    %5484 = vmatpush.msra.mxu0 0.0
    %5485 = vmatpush.msra.mxu0 0.0
    %5486 = vmatpush.msra.mxu0 0.0
    %5487 = vmatpush.msra.mxu0 0.0
    %5488 = vmatpush.msra.mxu0 0.0
    %5489 = vmatpush.msra.mxu0 %v5346
    %5490 = vmatpush.msra.mxu0 %v5345
    %5491 = vmatmul.f32.gmra.mxu0 %v5284
    %v5492 = vpop.f32.mrf.mxu0
    %v5493 = vadd.f32 %v5353, %v5492
    %5494 = vdwg.mxu0
    %5496 = vrot.lane.b32.xlu0 %v5343, 80
    %v5497 = vpop.permute.xlu0 %5496
    %v5498 = vsel %vm132, %v5497, 0
    %5500 = vmatpush.msra.mxu0 0.0
    %5501 = vmatpush.msra.mxu0 0.0
    %5502 = vmatpush.msra.mxu0 0.0
    %5503 = vmatpush.msra.mxu0 0.0
    %5504 = vmatpush.msra.mxu0 0.0
    %5505 = vmatpush.msra.mxu0 0.0
    %5506 = vmatpush.msra.mxu0 0.0
    %5507 = vmatpush.msra.mxu0 0.0
    %5508 = vmatpush.msra.mxu0 0.0
    %5509 = vmatpush.msra.mxu0 0.0
    %5510 = vmatpush.msra.mxu0 0.0
    %5511 = vmatpush.msra.mxu0 0.0
    %5512 = vmatpush.msra.mxu0 0.0
    %5513 = vmatpush.msra.mxu0 0.0
    %5514 = vmatpush.msra.mxu0 %v5346
    %5515 = vmatpush.msra.mxu0 %v5345
    %5516 = vmatmul.f32.gmra.mxu0 %v5498
    %v5517 = vpop.f32.mrf.mxu0
    %v5518 = vadd.f32 %v5353, %v5517
    %5519 = vdwg.mxu0
    %5520 = vmatpush.msra.mxu0 0.0
    %5521 = vmatpush.msra.mxu0 0.0
    %5522 = vmatpush.msra.mxu0 0.0
    %5523 = vmatpush.msra.mxu0 0.0
    %5524 = vmatpush.msra.mxu0 0.0
    %5525 = vmatpush.msra.mxu0 0.0
    %5526 = vmatpush.msra.mxu0 0.0
    %5527 = vmatpush.msra.mxu0 0.0
    %5528 = vmatpush.msra.mxu0 0.0
    %5529 = vmatpush.msra.mxu0 0.0
    %5530 = vmatpush.msra.mxu0 0.0
    %5531 = vmatpush.msra.mxu0 0.0
    %5532 = vmatpush.msra.mxu0 0.0
    %5533 = vmatpush.msra.mxu0 0.0
    %5534 = vmatpush.msra.mxu0 %v5349
    %5535 = vmatpush.msra.mxu0 %v5348
    %5536 = vmatmul.f32.gmra.mxu0 %v4128
    %v5537 = vpop.f32.mrf.mxu0
    %v5538 = vadd.f32 0.0, %v5537
    %5539 = vdwg.mxu0
    %v5540 = vadd.f32 %v5373, %v5538
    %v5541 = vxor.u32 %v5540, 2147483648
    %v5542 = vmul.f32 %v5541, 1.442695
    %v5543 = vpow.pop %v5542
    %v5544 = vadd.f32 %v5543, 1.0
    %v5545 = vrcp.pop %v5544
    %v5546 = vmul.f32 %v5544, %v5545
    %v5547 = vsub.f32 1.0, %v5546
    %v5548 = vmul.f32 %v5545, %v5547
    %v5549 = vadd.f32 %v5545, %v5548
    %vm5550 = vweird.f32 %v5544
    %vm5551 = vweird.f32 %v5545
    %vm5552 = vmor %vm5550, %vm5551
    %v5553 = vsel %vm5552, %v5545, %v5549
    %v5554 = vand.u32 2147483647, %v5544
    %vm5555 = vcmp.eq.f32.partialorder %v5554, 8.507059e+37
    %v5556 = vand.u32 %v5544, 2147483648
    %v5557 = vor.u32 1.1754944e-38, %v5556
    %v5558 = vsel %vm5555, %v5557, %v5553
    %v5559 = vmul.f32 1.0, %v5558
    %v5560 = vtanh.pop %v5540
    %v5561 = vmul.f32 %v5559, %v3967
    %5563 = vrot.lane.b32.xlu0 %v5560, 96
    %v5564 = vpop.permute.xlu0 %5563
    %v5566 = vmul.f32 %v5559, %v5564
    %5568 = vrot.lane.b32.xlu0 %v5566, 16
    %v5569 = vpop.permute.xlu0 %5568
    %v5571 = vadd.f32 %v5561, %v5569
    %v5572 = vtanh.pop %v5571
    %5574 = vrot.lane.b32.xlu0 %v5572, 32
    %v5575 = vpop.permute.xlu0 %5574
    %v5577 = vmul.f32 %v5559, %v5575
    %5579 = vrot.lane.b32.xlu0 %v5577, 80
    %v5580 = vpop.permute.xlu0 %5579
    %v5581 = vsel %vm132, %v5580, 0
    %5583 = vmatpush.msra.mxu0 0.0
    %5584 = vmatpush.msra.mxu0 0.0
    %5585 = vmatpush.msra.mxu0 0.0
    %5586 = vmatpush.msra.mxu0 0.0
    %5587 = vmatpush.msra.mxu0 0.0
    %5588 = vmatpush.msra.mxu0 0.0
    %5589 = vmatpush.msra.mxu0 0.0
    %5590 = vmatpush.msra.mxu0 0.0
    %5591 = vmatpush.msra.mxu0 0.0
    %5592 = vmatpush.msra.mxu0 0.0
    %5593 = vmatpush.msra.mxu0 0.0
    %5594 = vmatpush.msra.mxu0 0.0
    %5595 = vmatpush.msra.mxu0 0.0
    %5596 = vmatpush.msra.mxu0 0.0
    %5597 = vmatpush.msra.mxu0 %v5349
    %5598 = vmatpush.msra.mxu0 %v5348
    %5599 = vmatmul.f32.gmra.mxu0 %v5581
    %v5600 = vpop.f32.mrf.mxu0
    %v5601 = vadd.f32 0.0, %v5600
    %5602 = vdwg.mxu0
    %v5603 = vadd.f32 %v5393, %v5601
    %v5604 = vxor.u32 %v5603, 2147483648
    %v5605 = vmul.f32 %v5604, 1.442695
    %v5606 = vpow.pop %v5605
    %v5607 = vadd.f32 %v5606, 1.0
    %v5608 = vrcp.pop %v5607
    %v5609 = vmul.f32 %v5607, %v5608
    %v5610 = vsub.f32 1.0, %v5609
    %v5611 = vmul.f32 %v5608, %v5610
    %v5612 = vadd.f32 %v5608, %v5611
    %vm5613 = vweird.f32 %v5607
    %vm5614 = vweird.f32 %v5608
    %vm5615 = vmor %vm5613, %vm5614
    %v5616 = vsel %vm5615, %v5608, %v5612
    %v5617 = vand.u32 2147483647, %v5607
    %vm5618 = vcmp.eq.f32.partialorder %v5617, 8.507059e+37
    %v5619 = vand.u32 %v5607, 2147483648
    %v5620 = vor.u32 1.1754944e-38, %v5619
    %v5621 = vsel %vm5618, %v5620, %v5616
    %v5622 = vmul.f32 1.0, %v5621
    %v5623 = vtanh.pop %v5603
    %v5624 = vmul.f32 %v5622, %v5571
    %5626 = vrot.lane.b32.xlu0 %v5623, 96
    %v5627 = vpop.permute.xlu0 %5626
    %v5629 = vmul.f32 %v5622, %v5627
    %5631 = vrot.lane.b32.xlu0 %v5629, 16
    %v5632 = vpop.permute.xlu0 %5631
    %v5634 = vadd.f32 %v5624, %v5632
    %v5635 = vtanh.pop %v5634
    %5637 = vrot.lane.b32.xlu0 %v5635, 32
    %v5638 = vpop.permute.xlu0 %5637
    %v5640 = vmul.f32 %v5622, %v5638
    %5642 = vrot.lane.b32.xlu0 %v5640, 80
    %v5643 = vpop.permute.xlu0 %5642
    %v5644 = vsel %vm132, %v5643, 0
    %5646 = vmatpush.msra.mxu0 0.0
    %5647 = vmatpush.msra.mxu0 0.0
    %5648 = vmatpush.msra.mxu0 0.0
    %5649 = vmatpush.msra.mxu0 0.0
    %5650 = vmatpush.msra.mxu0 0.0
    %5651 = vmatpush.msra.mxu0 0.0
    %5652 = vmatpush.msra.mxu0 0.0
    %5653 = vmatpush.msra.mxu0 0.0
    %5654 = vmatpush.msra.mxu0 0.0
    %5655 = vmatpush.msra.mxu0 0.0
    %5656 = vmatpush.msra.mxu0 0.0
    %5657 = vmatpush.msra.mxu0 0.0
    %5658 = vmatpush.msra.mxu0 0.0
    %5659 = vmatpush.msra.mxu0 0.0
    %5660 = vmatpush.msra.mxu0 %v5349
    %5661 = vmatpush.msra.mxu0 %v5348
    %5662 = vmatmul.f32.gmra.mxu0 %v5644
    %v5663 = vpop.f32.mrf.mxu0
    %v5664 = vadd.f32 0.0, %v5663
    %5665 = vdwg.mxu0
    %v5666 = vadd.f32 %v5413, %v5664
    %v5667 = vxor.u32 %v5666, 2147483648
    %v5668 = vmul.f32 %v5667, 1.442695
    %v5669 = vpow.pop %v5668
    %v5670 = vadd.f32 %v5669, 1.0
    %v5671 = vrcp.pop %v5670
    %v5672 = vmul.f32 %v5670, %v5671
    %v5673 = vsub.f32 1.0, %v5672
    %v5674 = vmul.f32 %v5671, %v5673
    %v5675 = vadd.f32 %v5671, %v5674
    %vm5676 = vweird.f32 %v5670
    %vm5677 = vweird.f32 %v5671
    %vm5678 = vmor %vm5676, %vm5677
    %v5679 = vsel %vm5678, %v5671, %v5675
    %v5680 = vand.u32 2147483647, %v5670
    %vm5681 = vcmp.eq.f32.partialorder %v5680, 8.507059e+37
    %v5682 = vand.u32 %v5670, 2147483648
    %v5683 = vor.u32 1.1754944e-38, %v5682
    %v5684 = vsel %vm5681, %v5683, %v5679
    %v5685 = vmul.f32 1.0, %v5684
    %v5686 = vtanh.pop %v5666
    %v5687 = vmul.f32 %v5685, %v5634
    %5689 = vrot.lane.b32.xlu0 %v5686, 96
    %v5690 = vpop.permute.xlu0 %5689
    %v5692 = vmul.f32 %v5685, %v5690
    %5694 = vrot.lane.b32.xlu0 %v5692, 16
    %v5695 = vpop.permute.xlu0 %5694
    %v5697 = vadd.f32 %v5687, %v5695
    %v5698 = vtanh.pop %v5697
    %5700 = vrot.lane.b32.xlu0 %v5698, 32
    %v5701 = vpop.permute.xlu0 %5700
    %v5703 = vmul.f32 %v5685, %v5701
    %5705 = vrot.lane.b32.xlu0 %v5703, 80
    %v5706 = vpop.permute.xlu0 %5705
    %v5707 = vsel %vm132, %v5706, 0
    %5709 = vmatpush.msra.mxu0 0.0
    %5710 = vmatpush.msra.mxu0 0.0
    %5711 = vmatpush.msra.mxu0 0.0
    %5712 = vmatpush.msra.mxu0 0.0
    %5713 = vmatpush.msra.mxu0 0.0
    %5714 = vmatpush.msra.mxu0 0.0
    %5715 = vmatpush.msra.mxu0 0.0
    %5716 = vmatpush.msra.mxu0 0.0
    %5717 = vmatpush.msra.mxu0 0.0
    %5718 = vmatpush.msra.mxu0 0.0
    %5719 = vmatpush.msra.mxu0 0.0
    %5720 = vmatpush.msra.mxu0 0.0
    %5721 = vmatpush.msra.mxu0 0.0
    %5722 = vmatpush.msra.mxu0 0.0
    %5723 = vmatpush.msra.mxu0 %v5349
    %5724 = vmatpush.msra.mxu0 %v5348
    %5725 = vmatmul.f32.gmra.mxu0 %v5707
    %v5726 = vpop.f32.mrf.mxu0
    %v5727 = vadd.f32 0.0, %v5726
    %5728 = vdwg.mxu0
    %v5729 = vadd.f32 %v5433, %v5727
    %v5730 = vxor.u32 %v5729, 2147483648
    %v5731 = vmul.f32 %v5730, 1.442695
    %v5732 = vpow.pop %v5731
    %v5733 = vadd.f32 %v5732, 1.0
    %v5734 = vrcp.pop %v5733
    %v5735 = vmul.f32 %v5733, %v5734
    %v5736 = vsub.f32 1.0, %v5735
    %v5737 = vmul.f32 %v5734, %v5736
    %v5738 = vadd.f32 %v5734, %v5737
    %vm5739 = vweird.f32 %v5733
    %vm5740 = vweird.f32 %v5734
    %vm5741 = vmor %vm5739, %vm5740
    %v5742 = vsel %vm5741, %v5734, %v5738
    %v5743 = vand.u32 2147483647, %v5733
    %vm5744 = vcmp.eq.f32.partialorder %v5743, 8.507059e+37
    %v5745 = vand.u32 %v5733, 2147483648
    %v5746 = vor.u32 1.1754944e-38, %v5745
    %v5747 = vsel %vm5744, %v5746, %v5742
    %v5748 = vmul.f32 1.0, %v5747
    %v5749 = vtanh.pop %v5729
    %v5750 = vmul.f32 %v5748, %v5697
    %5752 = vrot.lane.b32.xlu0 %v5749, 96
    %v5753 = vpop.permute.xlu0 %5752
    %v5755 = vmul.f32 %v5748, %v5753
    %5757 = vrot.lane.b32.xlu0 %v5755, 16
    %v5758 = vpop.permute.xlu0 %5757
    %v5760 = vadd.f32 %v5750, %v5758
    %v5761 = vtanh.pop %v5760
    %5763 = vrot.lane.b32.xlu0 %v5761, 32
    %v5764 = vpop.permute.xlu0 %5763
    %v5766 = vmul.f32 %v5748, %v5764
    %5768 = vrot.lane.b32.xlu0 %v5766, 80
    %v5769 = vpop.permute.xlu0 %5768
    %v5770 = vsel %vm132, %v5769, 0
    %5772 = vmatpush.msra.mxu0 0.0
    %5773 = vmatpush.msra.mxu0 0.0
    %5774 = vmatpush.msra.mxu0 0.0
    %5775 = vmatpush.msra.mxu0 0.0
    %5776 = vmatpush.msra.mxu0 0.0
    %5777 = vmatpush.msra.mxu0 0.0
    %5778 = vmatpush.msra.mxu0 0.0
    %5779 = vmatpush.msra.mxu0 0.0
    %5780 = vmatpush.msra.mxu0 0.0
    %5781 = vmatpush.msra.mxu0 0.0
    %5782 = vmatpush.msra.mxu0 0.0
    %5783 = vmatpush.msra.mxu0 0.0
    %5784 = vmatpush.msra.mxu0 0.0
    %5785 = vmatpush.msra.mxu0 0.0
    %5786 = vmatpush.msra.mxu0 %v5349
    %5787 = vmatpush.msra.mxu0 %v5348
    %5788 = vmatmul.f32.gmra.mxu0 %v5770
    %v5789 = vpop.f32.mrf.mxu0
    %v5790 = vadd.f32 0.0, %v5789
    %5791 = vdwg.mxu0
    %v5792 = vadd.f32 %v5453, %v5790
    %v5793 = vxor.u32 %v5792, 2147483648
    %v5794 = vmul.f32 %v5793, 1.442695
    %v5795 = vpow.pop %v5794
    %v5796 = vadd.f32 %v5795, 1.0
    %v5797 = vrcp.pop %v5796
    %v5798 = vmul.f32 %v5796, %v5797
    %v5799 = vsub.f32 1.0, %v5798
    %v5800 = vmul.f32 %v5797, %v5799
    %v5801 = vadd.f32 %v5797, %v5800
    %vm5802 = vweird.f32 %v5796
    %vm5803 = vweird.f32 %v5797
    %vm5804 = vmor %vm5802, %vm5803
    %v5805 = vsel %vm5804, %v5797, %v5801
    %v5806 = vand.u32 2147483647, %v5796
    %vm5807 = vcmp.eq.f32.partialorder %v5806, 8.507059e+37
    %v5808 = vand.u32 %v5796, 2147483648
    %v5809 = vor.u32 1.1754944e-38, %v5808
    %v5810 = vsel %vm5807, %v5809, %v5805
    %v5811 = vmul.f32 1.0, %v5810
    %v5812 = vtanh.pop %v5792
    %v5813 = vmul.f32 %v5811, %v5760
    %5815 = vrot.lane.b32.xlu0 %v5812, 96
    %v5816 = vpop.permute.xlu0 %5815
    %v5818 = vmul.f32 %v5811, %v5816
    %5820 = vrot.lane.b32.xlu0 %v5818, 16
    %v5821 = vpop.permute.xlu0 %5820
    %v5823 = vadd.f32 %v5813, %v5821
    %v5824 = vtanh.pop %v5823
    %5826 = vrot.lane.b32.xlu0 %v5824, 32
    %v5827 = vpop.permute.xlu0 %5826
    %v5829 = vmul.f32 %v5811, %v5827
    %5831 = vrot.lane.b32.xlu0 %v5829, 80
    %v5832 = vpop.permute.xlu0 %5831
    %v5833 = vsel %vm132, %v5832, 0
    %5835 = vmatpush.msra.mxu0 0.0
    %5836 = vmatpush.msra.mxu0 0.0
    %5837 = vmatpush.msra.mxu0 0.0
    %5838 = vmatpush.msra.mxu0 0.0
    %5839 = vmatpush.msra.mxu0 0.0
    %5840 = vmatpush.msra.mxu0 0.0
    %5841 = vmatpush.msra.mxu0 0.0
    %5842 = vmatpush.msra.mxu0 0.0
    %5843 = vmatpush.msra.mxu0 0.0
    %5844 = vmatpush.msra.mxu0 0.0
    %5845 = vmatpush.msra.mxu0 0.0
    %5846 = vmatpush.msra.mxu0 0.0
    %5847 = vmatpush.msra.mxu0 0.0
    %5848 = vmatpush.msra.mxu0 0.0
    %5849 = vmatpush.msra.mxu0 %v5349
    %5850 = vmatpush.msra.mxu0 %v5348
    %5851 = vmatmul.f32.gmra.mxu0 %v5833
    %v5852 = vpop.f32.mrf.mxu0
    %v5853 = vadd.f32 0.0, %v5852
    %5854 = vdwg.mxu0
    %v5855 = vadd.f32 %v5473, %v5853
    %v5856 = vxor.u32 %v5855, 2147483648
    %v5857 = vmul.f32 %v5856, 1.442695
    %v5858 = vpow.pop %v5857
    %v5859 = vadd.f32 %v5858, 1.0
    %v5860 = vrcp.pop %v5859
    %v5861 = vmul.f32 %v5859, %v5860
    %v5862 = vsub.f32 1.0, %v5861
    %v5863 = vmul.f32 %v5860, %v5862
    %v5864 = vadd.f32 %v5860, %v5863
    %vm5865 = vweird.f32 %v5859
    %vm5866 = vweird.f32 %v5860
    %vm5867 = vmor %vm5865, %vm5866
    %v5868 = vsel %vm5867, %v5860, %v5864
    %v5869 = vand.u32 2147483647, %v5859
    %vm5870 = vcmp.eq.f32.partialorder %v5869, 8.507059e+37
    %v5871 = vand.u32 %v5859, 2147483648
    %v5872 = vor.u32 1.1754944e-38, %v5871
    %v5873 = vsel %vm5870, %v5872, %v5868
    %v5874 = vmul.f32 1.0, %v5873
    %v5875 = vtanh.pop %v5855
    %v5876 = vmul.f32 %v5874, %v5823
    %5878 = vrot.lane.b32.xlu0 %v5875, 96
    %v5879 = vpop.permute.xlu0 %5878
    %v5881 = vmul.f32 %v5874, %v5879
    %5883 = vrot.lane.b32.xlu0 %v5881, 16
    %v5884 = vpop.permute.xlu0 %5883
    %v5886 = vadd.f32 %v5876, %v5884
    %v5887 = vtanh.pop %v5886
    %5889 = vrot.lane.b32.xlu0 %v5887, 32
    %v5890 = vpop.permute.xlu0 %5889
    %v5892 = vmul.f32 %v5874, %v5890
    %5894 = vrot.lane.b32.xlu0 %v5892, 80
    %v5895 = vpop.permute.xlu0 %5894
    %v5896 = vsel %vm132, %v5895, 0
    %5898 = vmatpush.msra.mxu0 0.0
    %5899 = vmatpush.msra.mxu0 0.0
    %5900 = vmatpush.msra.mxu0 0.0
    %5901 = vmatpush.msra.mxu0 0.0
    %5902 = vmatpush.msra.mxu0 0.0
    %5903 = vmatpush.msra.mxu0 0.0
    %5904 = vmatpush.msra.mxu0 0.0
    %5905 = vmatpush.msra.mxu0 0.0
    %5906 = vmatpush.msra.mxu0 0.0
    %5907 = vmatpush.msra.mxu0 0.0
    %5908 = vmatpush.msra.mxu0 0.0
    %5909 = vmatpush.msra.mxu0 0.0
    %5910 = vmatpush.msra.mxu0 0.0
    %5911 = vmatpush.msra.mxu0 0.0
    %5912 = vmatpush.msra.mxu0 %v5349
    %5913 = vmatpush.msra.mxu0 %v5348
    %5914 = vmatmul.f32.gmra.mxu0 %v5896
    %v5915 = vpop.f32.mrf.mxu0
    %v5916 = vadd.f32 0.0, %v5915
    %5917 = vdwg.mxu0
    %v5918 = vadd.f32 %v5493, %v5916
    %v5919 = vxor.u32 %v5918, 2147483648
    %v5920 = vmul.f32 %v5919, 1.442695
    %v5921 = vpow.pop %v5920
    %v5922 = vadd.f32 %v5921, 1.0
    %v5923 = vrcp.pop %v5922
    %v5924 = vmul.f32 %v5922, %v5923
    %v5925 = vsub.f32 1.0, %v5924
    %v5926 = vmul.f32 %v5923, %v5925
    %v5927 = vadd.f32 %v5923, %v5926
    %vm5928 = vweird.f32 %v5922
    %vm5929 = vweird.f32 %v5923
    %vm5930 = vmor %vm5928, %vm5929
    %v5931 = vsel %vm5930, %v5923, %v5927
    %v5932 = vand.u32 2147483647, %v5922
    %vm5933 = vcmp.eq.f32.partialorder %v5932, 8.507059e+37
    %v5934 = vand.u32 %v5922, 2147483648
    %v5935 = vor.u32 1.1754944e-38, %v5934
    %v5936 = vsel %vm5933, %v5935, %v5931
    %v5937 = vmul.f32 1.0, %v5936
    %v5938 = vtanh.pop %v5918
    %v5939 = vmul.f32 %v5937, %v5886
    %5941 = vrot.lane.b32.xlu0 %v5938, 96
    %v5942 = vpop.permute.xlu0 %5941
    %v5944 = vmul.f32 %v5937, %v5942
    %5946 = vrot.lane.b32.xlu0 %v5944, 16
    %v5947 = vpop.permute.xlu0 %5946
    %v5949 = vadd.f32 %v5939, %v5947
    %v5950 = vtanh.pop %v5949
    %5952 = vrot.lane.b32.xlu0 %v5950, 32
    %v5953 = vpop.permute.xlu0 %5952
    %v5955 = vmul.f32 %v5937, %v5953
    %5957 = vrot.lane.b32.xlu0 %v5955, 80
    %v5958 = vpop.permute.xlu0 %5957
    %v5959 = vsel %vm132, %v5958, 0
    %5961 = vmatpush.msra.mxu0 0.0
    %5962 = vmatpush.msra.mxu0 0.0
    %5963 = vmatpush.msra.mxu0 0.0
    %5964 = vmatpush.msra.mxu0 0.0
    %5965 = vmatpush.msra.mxu0 0.0
    %5966 = vmatpush.msra.mxu0 0.0
    %5967 = vmatpush.msra.mxu0 0.0
    %5968 = vmatpush.msra.mxu0 0.0
    %5969 = vmatpush.msra.mxu0 0.0
    %5970 = vmatpush.msra.mxu0 0.0
    %5971 = vmatpush.msra.mxu0 0.0
    %5972 = vmatpush.msra.mxu0 0.0
    %5973 = vmatpush.msra.mxu0 0.0
    %5974 = vmatpush.msra.mxu0 0.0
    %5975 = vmatpush.msra.mxu0 %v5349
    %5976 = vmatpush.msra.mxu0 %v5348
    %5977 = vmatmul.f32.gmra.mxu0 %v5959
    %v5978 = vpop.f32.mrf.mxu0
    %v5979 = vadd.f32 0.0, %v5978
    %5980 = vdwg.mxu0
    %v5981 = vadd.f32 %v5518, %v5979
    %v5982 = vxor.u32 %v5981, 2147483648
    %v5983 = vmul.f32 %v5982, 1.442695
    %v5984 = vpow.pop %v5983
    %v5985 = vadd.f32 %v5984, 1.0
    %v5986 = vrcp.pop %v5985
    %v5987 = vmul.f32 %v5985, %v5986
    %v5988 = vsub.f32 1.0, %v5987
    %v5989 = vmul.f32 %v5986, %v5988
    %v5990 = vadd.f32 %v5986, %v5989
    %vm5991 = vweird.f32 %v5985
    %vm5992 = vweird.f32 %v5986
    %vm5993 = vmor %vm5991, %vm5992
    %v5994 = vsel %vm5993, %v5986, %v5990
    %v5995 = vand.u32 2147483647, %v5985
    %vm5996 = vcmp.eq.f32.partialorder %v5995, 8.507059e+37
    %v5997 = vand.u32 %v5985, 2147483648
    %v5998 = vor.u32 1.1754944e-38, %v5997
    %v5999 = vsel %vm5996, %v5998, %v5994
    %v6000 = vmul.f32 1.0, %v5999
    %v6001 = vtanh.pop %v5981
    %v6002 = vmul.f32 %v6000, %v5949
    %6004 = vrot.lane.b32.xlu0 %v6001, 96
    %v6005 = vpop.permute.xlu0 %6004
    %v6007 = vmul.f32 %v6000, %v6005
    %6009 = vrot.lane.b32.xlu0 %v6007, 16
    %v6010 = vpop.permute.xlu0 %6009
    %v6012 = vadd.f32 %v6002, %v6010
    %v6013 = vtanh.pop %v6012
    %6015 = vrot.lane.b32.xlu0 %v6013, 32
    %v6016 = vpop.permute.xlu0 %6015
    %v6018 = vmul.f32 %v6000, %v6016
    %s6019 = scalar_lea.vmem [#allocation7], 32
    %v6020 = vld [vmem:[%s6019] sm:$0xff]
    %v6021 = vld [vmem:[%s6019 + $0x8] sm:$0xff]
    %s6022 = scalar_lea.vmem [#allocation9], 32
    %v6023 = vld [vmem:[%s6022] sm:$0xff]
    %v6024 = vld [vmem:[%s6022 + $0x8] sm:$0xff]
    %s6025 = scalar_lea.vmem %s6, 2
    %v6026 = vld [vmem:[%s6025] sm:$0x1]
    %v6028 = vperm.slane %v6026, 0
    %6030 = vmatpush.msra.mxu0 0.0
    %6031 = vmatpush.msra.mxu0 0.0
    %6032 = vmatpush.msra.mxu0 0.0
    %6033 = vmatpush.msra.mxu0 0.0
    %6034 = vmatpush.msra.mxu0 0.0
    %6035 = vmatpush.msra.mxu0 0.0
    %6036 = vmatpush.msra.mxu0 0.0
    %6037 = vmatpush.msra.mxu0 0.0
    %6038 = vmatpush.msra.mxu0 0.0
    %6039 = vmatpush.msra.mxu0 0.0
    %6040 = vmatpush.msra.mxu0 0.0
    %6041 = vmatpush.msra.mxu0 0.0
    %6042 = vmatpush.msra.mxu0 0.0
    %6043 = vmatpush.msra.mxu0 0.0
    %6044 = vmatpush.msra.mxu0 %v6021
    %6045 = vmatpush.msra.mxu0 %v6020
    %6046 = vmatmul.f32.gmra.mxu0 %v5581
    %v6047 = vpop.f32.mrf.mxu0
    %v6048 = vadd.f32 %v6028, %v6047
    %6049 = vdwg.mxu0
    %6050 = vmatpush.msra.mxu0 0.0
    %6051 = vmatpush.msra.mxu0 0.0
    %6052 = vmatpush.msra.mxu0 0.0
    %6053 = vmatpush.msra.mxu0 0.0
    %6054 = vmatpush.msra.mxu0 0.0
    %6055 = vmatpush.msra.mxu0 0.0
    %6056 = vmatpush.msra.mxu0 0.0
    %6057 = vmatpush.msra.mxu0 0.0
    %6058 = vmatpush.msra.mxu0 0.0
    %6059 = vmatpush.msra.mxu0 0.0
    %6060 = vmatpush.msra.mxu0 0.0
    %6061 = vmatpush.msra.mxu0 0.0
    %6062 = vmatpush.msra.mxu0 0.0
    %6063 = vmatpush.msra.mxu0 0.0
    %6064 = vmatpush.msra.mxu0 %v6021
    %6065 = vmatpush.msra.mxu0 %v6020
    %6066 = vmatmul.f32.gmra.mxu0 %v5644
    %v6067 = vpop.f32.mrf.mxu0
    %v6068 = vadd.f32 %v6028, %v6067
    %6069 = vdwg.mxu0
    %6070 = vmatpush.msra.mxu0 0.0
    %6071 = vmatpush.msra.mxu0 0.0
    %6072 = vmatpush.msra.mxu0 0.0
    %6073 = vmatpush.msra.mxu0 0.0
    %6074 = vmatpush.msra.mxu0 0.0
    %6075 = vmatpush.msra.mxu0 0.0
    %6076 = vmatpush.msra.mxu0 0.0
    %6077 = vmatpush.msra.mxu0 0.0
    %6078 = vmatpush.msra.mxu0 0.0
    %6079 = vmatpush.msra.mxu0 0.0
    %6080 = vmatpush.msra.mxu0 0.0
    %6081 = vmatpush.msra.mxu0 0.0
    %6082 = vmatpush.msra.mxu0 0.0
    %6083 = vmatpush.msra.mxu0 0.0
    %6084 = vmatpush.msra.mxu0 %v6021
    %6085 = vmatpush.msra.mxu0 %v6020
    %6086 = vmatmul.f32.gmra.mxu0 %v5707
    %v6087 = vpop.f32.mrf.mxu0
    %v6088 = vadd.f32 %v6028, %v6087
    %6089 = vdwg.mxu0
    %6090 = vmatpush.msra.mxu0 0.0
    %6091 = vmatpush.msra.mxu0 0.0
    %6092 = vmatpush.msra.mxu0 0.0
    %6093 = vmatpush.msra.mxu0 0.0
    %6094 = vmatpush.msra.mxu0 0.0
    %6095 = vmatpush.msra.mxu0 0.0
    %6096 = vmatpush.msra.mxu0 0.0
    %6097 = vmatpush.msra.mxu0 0.0
    %6098 = vmatpush.msra.mxu0 0.0
    %6099 = vmatpush.msra.mxu0 0.0
    %6100 = vmatpush.msra.mxu0 0.0
    %6101 = vmatpush.msra.mxu0 0.0
    %6102 = vmatpush.msra.mxu0 0.0
    %6103 = vmatpush.msra.mxu0 0.0
    %6104 = vmatpush.msra.mxu0 %v6021
    %6105 = vmatpush.msra.mxu0 %v6020
    %6106 = vmatmul.f32.gmra.mxu0 %v5770
    %v6107 = vpop.f32.mrf.mxu0
    %v6108 = vadd.f32 %v6028, %v6107
    %6109 = vdwg.mxu0
    %6110 = vmatpush.msra.mxu0 0.0
    %6111 = vmatpush.msra.mxu0 0.0
    %6112 = vmatpush.msra.mxu0 0.0
    %6113 = vmatpush.msra.mxu0 0.0
    %6114 = vmatpush.msra.mxu0 0.0
    %6115 = vmatpush.msra.mxu0 0.0
    %6116 = vmatpush.msra.mxu0 0.0
    %6117 = vmatpush.msra.mxu0 0.0
    %6118 = vmatpush.msra.mxu0 0.0
    %6119 = vmatpush.msra.mxu0 0.0
    %6120 = vmatpush.msra.mxu0 0.0
    %6121 = vmatpush.msra.mxu0 0.0
    %6122 = vmatpush.msra.mxu0 0.0
    %6123 = vmatpush.msra.mxu0 0.0
    %6124 = vmatpush.msra.mxu0 %v6021
    %6125 = vmatpush.msra.mxu0 %v6020
    %6126 = vmatmul.f32.gmra.mxu0 %v5833
    %v6127 = vpop.f32.mrf.mxu0
    %v6128 = vadd.f32 %v6028, %v6127
    %6129 = vdwg.mxu0
    %6130 = vmatpush.msra.mxu0 0.0
    %6131 = vmatpush.msra.mxu0 0.0
    %6132 = vmatpush.msra.mxu0 0.0
    %6133 = vmatpush.msra.mxu0 0.0
    %6134 = vmatpush.msra.mxu0 0.0
    %6135 = vmatpush.msra.mxu0 0.0
    %6136 = vmatpush.msra.mxu0 0.0
    %6137 = vmatpush.msra.mxu0 0.0
    %6138 = vmatpush.msra.mxu0 0.0
    %6139 = vmatpush.msra.mxu0 0.0
    %6140 = vmatpush.msra.mxu0 0.0
    %6141 = vmatpush.msra.mxu0 0.0
    %6142 = vmatpush.msra.mxu0 0.0
    %6143 = vmatpush.msra.mxu0 0.0
    %6144 = vmatpush.msra.mxu0 %v6021
    %6145 = vmatpush.msra.mxu0 %v6020
    %6146 = vmatmul.f32.gmra.mxu0 %v5896
    %v6147 = vpop.f32.mrf.mxu0
    %v6148 = vadd.f32 %v6028, %v6147
    %6149 = vdwg.mxu0
    %6150 = vmatpush.msra.mxu0 0.0
    %6151 = vmatpush.msra.mxu0 0.0
    %6152 = vmatpush.msra.mxu0 0.0
    %6153 = vmatpush.msra.mxu0 0.0
    %6154 = vmatpush.msra.mxu0 0.0
    %6155 = vmatpush.msra.mxu0 0.0
    %6156 = vmatpush.msra.mxu0 0.0
    %6157 = vmatpush.msra.mxu0 0.0
    %6158 = vmatpush.msra.mxu0 0.0
    %6159 = vmatpush.msra.mxu0 0.0
    %6160 = vmatpush.msra.mxu0 0.0
    %6161 = vmatpush.msra.mxu0 0.0
    %6162 = vmatpush.msra.mxu0 0.0
    %6163 = vmatpush.msra.mxu0 0.0
    %6164 = vmatpush.msra.mxu0 %v6021
    %6165 = vmatpush.msra.mxu0 %v6020
    %6166 = vmatmul.f32.gmra.mxu0 %v5959
    %v6167 = vpop.f32.mrf.mxu0
    %v6168 = vadd.f32 %v6028, %v6167
    %6169 = vdwg.mxu0
    %6171 = vrot.lane.b32.xlu0 %v6018, 80
    %v6172 = vpop.permute.xlu0 %6171
    %v6173 = vsel %vm132, %v6172, 0
    %6175 = vmatpush.msra.mxu0 0.0
    %6176 = vmatpush.msra.mxu0 0.0
    %6177 = vmatpush.msra.mxu0 0.0
    %6178 = vmatpush.msra.mxu0 0.0
    %6179 = vmatpush.msra.mxu0 0.0
    %6180 = vmatpush.msra.mxu0 0.0
    %6181 = vmatpush.msra.mxu0 0.0
    %6182 = vmatpush.msra.mxu0 0.0
    %6183 = vmatpush.msra.mxu0 0.0
    %6184 = vmatpush.msra.mxu0 0.0
    %6185 = vmatpush.msra.mxu0 0.0
    %6186 = vmatpush.msra.mxu0 0.0
    %6187 = vmatpush.msra.mxu0 0.0
    %6188 = vmatpush.msra.mxu0 0.0
    %6189 = vmatpush.msra.mxu0 %v6021
    %6190 = vmatpush.msra.mxu0 %v6020
    %6191 = vmatmul.f32.gmra.mxu0 %v6173
    %v6192 = vpop.f32.mrf.mxu0
    %v6193 = vadd.f32 %v6028, %v6192
    %6194 = vdwg.mxu0
    %6195 = vmatpush.msra.mxu0 0.0
    %6196 = vmatpush.msra.mxu0 0.0
    %6197 = vmatpush.msra.mxu0 0.0
    %6198 = vmatpush.msra.mxu0 0.0
    %6199 = vmatpush.msra.mxu0 0.0
    %6200 = vmatpush.msra.mxu0 0.0
    %6201 = vmatpush.msra.mxu0 0.0
    %6202 = vmatpush.msra.mxu0 0.0
    %6203 = vmatpush.msra.mxu0 0.0
    %6204 = vmatpush.msra.mxu0 0.0
    %6205 = vmatpush.msra.mxu0 0.0
    %6206 = vmatpush.msra.mxu0 0.0
    %6207 = vmatpush.msra.mxu0 0.0
    %6208 = vmatpush.msra.mxu0 0.0
    %6209 = vmatpush.msra.mxu0 %v6024
    %6210 = vmatpush.msra.mxu0 %v6023
    %6211 = vmatmul.f32.gmra.mxu0 %v4800
    %v6212 = vpop.f32.mrf.mxu0
    %v6213 = vadd.f32 0.0, %v6212
    %6214 = vdwg.mxu0
    %v6215 = vadd.f32 %v6048, %v6213
    %v6216 = vxor.u32 %v6215, 2147483648
    %v6217 = vmul.f32 %v6216, 1.442695
    %v6218 = vpow.pop %v6217
    %v6219 = vadd.f32 %v6218, 1.0
    %v6220 = vrcp.pop %v6219
    %v6221 = vmul.f32 %v6219, %v6220
    %v6222 = vsub.f32 1.0, %v6221
    %v6223 = vmul.f32 %v6220, %v6222
    %v6224 = vadd.f32 %v6220, %v6223
    %vm6225 = vweird.f32 %v6219
    %vm6226 = vweird.f32 %v6220
    %vm6227 = vmor %vm6225, %vm6226
    %v6228 = vsel %vm6227, %v6220, %v6224
    %v6229 = vand.u32 2147483647, %v6219
    %vm6230 = vcmp.eq.f32.partialorder %v6229, 8.507059e+37
    %v6231 = vand.u32 %v6219, 2147483648
    %v6232 = vor.u32 1.1754944e-38, %v6231
    %v6233 = vsel %vm6230, %v6232, %v6228
    %v6234 = vmul.f32 1.0, %v6233
    %v6235 = vtanh.pop %v6215
    %v6236 = vmul.f32 %v6234, %v4642
    %6238 = vrot.lane.b32.xlu0 %v6235, 96
    %v6239 = vpop.permute.xlu0 %6238
    %v6241 = vmul.f32 %v6234, %v6239
    %6243 = vrot.lane.b32.xlu0 %v6241, 16
    %v6244 = vpop.permute.xlu0 %6243
    %v6246 = vadd.f32 %v6236, %v6244
    %v6247 = vtanh.pop %v6246
    %6249 = vrot.lane.b32.xlu0 %v6247, 32
    %v6250 = vpop.permute.xlu0 %6249
    %v6252 = vmul.f32 %v6234, %v6250
    %6254 = vrot.lane.b32.xlu0 %v6252, 80
    %v6255 = vpop.permute.xlu0 %6254
    %v6256 = vsel %vm132, %v6255, 0
    %6258 = vmatpush.msra.mxu0 0.0
    %6259 = vmatpush.msra.mxu0 0.0
    %6260 = vmatpush.msra.mxu0 0.0
    %6261 = vmatpush.msra.mxu0 0.0
    %6262 = vmatpush.msra.mxu0 0.0
    %6263 = vmatpush.msra.mxu0 0.0
    %6264 = vmatpush.msra.mxu0 0.0
    %6265 = vmatpush.msra.mxu0 0.0
    %6266 = vmatpush.msra.mxu0 0.0
    %6267 = vmatpush.msra.mxu0 0.0
    %6268 = vmatpush.msra.mxu0 0.0
    %6269 = vmatpush.msra.mxu0 0.0
    %6270 = vmatpush.msra.mxu0 0.0
    %6271 = vmatpush.msra.mxu0 0.0
    %6272 = vmatpush.msra.mxu0 %v6024
    %6273 = vmatpush.msra.mxu0 %v6023
    %6274 = vmatmul.f32.gmra.mxu0 %v6256
    %v6275 = vpop.f32.mrf.mxu0
    %v6276 = vadd.f32 0.0, %v6275
    %6277 = vdwg.mxu0
    %v6278 = vadd.f32 %v6068, %v6276
    %v6279 = vxor.u32 %v6278, 2147483648
    %v6280 = vmul.f32 %v6279, 1.442695
    %v6281 = vpow.pop %v6280
    %v6282 = vadd.f32 %v6281, 1.0
    %v6283 = vrcp.pop %v6282
    %v6284 = vmul.f32 %v6282, %v6283
    %v6285 = vsub.f32 1.0, %v6284
    %v6286 = vmul.f32 %v6283, %v6285
    %v6287 = vadd.f32 %v6283, %v6286
    %vm6288 = vweird.f32 %v6282
    %vm6289 = vweird.f32 %v6283
    %vm6290 = vmor %vm6288, %vm6289
    %v6291 = vsel %vm6290, %v6283, %v6287
    %v6292 = vand.u32 2147483647, %v6282
    %vm6293 = vcmp.eq.f32.partialorder %v6292, 8.507059e+37
    %v6294 = vand.u32 %v6282, 2147483648
    %v6295 = vor.u32 1.1754944e-38, %v6294
    %v6296 = vsel %vm6293, %v6295, %v6291
    %v6297 = vmul.f32 1.0, %v6296
    %v6298 = vtanh.pop %v6278
    %v6299 = vmul.f32 %v6297, %v6246
    %6301 = vrot.lane.b32.xlu0 %v6298, 96
    %v6302 = vpop.permute.xlu0 %6301
    %v6304 = vmul.f32 %v6297, %v6302
    %6306 = vrot.lane.b32.xlu0 %v6304, 16
    %v6307 = vpop.permute.xlu0 %6306
    %v6309 = vadd.f32 %v6299, %v6307
    %v6310 = vtanh.pop %v6309
    %6312 = vrot.lane.b32.xlu0 %v6310, 32
    %v6313 = vpop.permute.xlu0 %6312
    %v6315 = vmul.f32 %v6297, %v6313
    %6317 = vrot.lane.b32.xlu0 %v6315, 80
    %v6318 = vpop.permute.xlu0 %6317
    %v6319 = vsel %vm132, %v6318, 0
    %6321 = vmatpush.msra.mxu0 0.0
    %6322 = vmatpush.msra.mxu0 0.0
    %6323 = vmatpush.msra.mxu0 0.0
    %6324 = vmatpush.msra.mxu0 0.0
    %6325 = vmatpush.msra.mxu0 0.0
    %6326 = vmatpush.msra.mxu0 0.0
    %6327 = vmatpush.msra.mxu0 0.0
    %6328 = vmatpush.msra.mxu0 0.0
    %6329 = vmatpush.msra.mxu0 0.0
    %6330 = vmatpush.msra.mxu0 0.0
    %6331 = vmatpush.msra.mxu0 0.0
    %6332 = vmatpush.msra.mxu0 0.0
    %6333 = vmatpush.msra.mxu0 0.0
    %6334 = vmatpush.msra.mxu0 0.0
    %6335 = vmatpush.msra.mxu0 %v6024
    %6336 = vmatpush.msra.mxu0 %v6023
    %6337 = vmatmul.f32.gmra.mxu0 %v6319
    %v6338 = vpop.f32.mrf.mxu0
    %v6339 = vadd.f32 0.0, %v6338
    %6340 = vdwg.mxu0
    %v6341 = vadd.f32 %v6088, %v6339
    %v6342 = vxor.u32 %v6341, 2147483648
    %v6343 = vmul.f32 %v6342, 1.442695
    %v6344 = vpow.pop %v6343
    %v6345 = vadd.f32 %v6344, 1.0
    %v6346 = vrcp.pop %v6345
    %v6347 = vmul.f32 %v6345, %v6346
    %v6348 = vsub.f32 1.0, %v6347
    %v6349 = vmul.f32 %v6346, %v6348
    %v6350 = vadd.f32 %v6346, %v6349
    %vm6351 = vweird.f32 %v6345
    %vm6352 = vweird.f32 %v6346
    %vm6353 = vmor %vm6351, %vm6352
    %v6354 = vsel %vm6353, %v6346, %v6350
    %v6355 = vand.u32 2147483647, %v6345
    %vm6356 = vcmp.eq.f32.partialorder %v6355, 8.507059e+37
    %v6357 = vand.u32 %v6345, 2147483648
    %v6358 = vor.u32 1.1754944e-38, %v6357
    %v6359 = vsel %vm6356, %v6358, %v6354
    %v6360 = vmul.f32 1.0, %v6359
    %v6361 = vtanh.pop %v6341
    %v6362 = vmul.f32 %v6360, %v6309
    %6364 = vrot.lane.b32.xlu0 %v6361, 96
    %v6365 = vpop.permute.xlu0 %6364
    %v6367 = vmul.f32 %v6360, %v6365
    %6369 = vrot.lane.b32.xlu0 %v6367, 16
    %v6370 = vpop.permute.xlu0 %6369
    %v6372 = vadd.f32 %v6362, %v6370
    %v6373 = vtanh.pop %v6372
    %6375 = vrot.lane.b32.xlu0 %v6373, 32
    %v6376 = vpop.permute.xlu0 %6375
    %v6378 = vmul.f32 %v6360, %v6376
    %6380 = vrot.lane.b32.xlu0 %v6378, 80
    %v6381 = vpop.permute.xlu0 %6380
    %v6382 = vsel %vm132, %v6381, 0
    %6384 = vmatpush.msra.mxu0 0.0
    %6385 = vmatpush.msra.mxu0 0.0
    %6386 = vmatpush.msra.mxu0 0.0
    %6387 = vmatpush.msra.mxu0 0.0
    %6388 = vmatpush.msra.mxu0 0.0
    %6389 = vmatpush.msra.mxu0 0.0
    %6390 = vmatpush.msra.mxu0 0.0
    %6391 = vmatpush.msra.mxu0 0.0
    %6392 = vmatpush.msra.mxu0 0.0
    %6393 = vmatpush.msra.mxu0 0.0
    %6394 = vmatpush.msra.mxu0 0.0
    %6395 = vmatpush.msra.mxu0 0.0
    %6396 = vmatpush.msra.mxu0 0.0
    %6397 = vmatpush.msra.mxu0 0.0
    %6398 = vmatpush.msra.mxu0 %v6024
    %6399 = vmatpush.msra.mxu0 %v6023
    %6400 = vmatmul.f32.gmra.mxu0 %v6382
    %v6401 = vpop.f32.mrf.mxu0
    %v6402 = vadd.f32 0.0, %v6401
    %6403 = vdwg.mxu0
    %v6404 = vadd.f32 %v6108, %v6402
    %v6405 = vxor.u32 %v6404, 2147483648
    %v6406 = vmul.f32 %v6405, 1.442695
    %v6407 = vpow.pop %v6406
    %v6408 = vadd.f32 %v6407, 1.0
    %v6409 = vrcp.pop %v6408
    %v6410 = vmul.f32 %v6408, %v6409
    %v6411 = vsub.f32 1.0, %v6410
    %v6412 = vmul.f32 %v6409, %v6411
    %v6413 = vadd.f32 %v6409, %v6412
    %vm6414 = vweird.f32 %v6408
    %vm6415 = vweird.f32 %v6409
    %vm6416 = vmor %vm6414, %vm6415
    %v6417 = vsel %vm6416, %v6409, %v6413
    %v6418 = vand.u32 2147483647, %v6408
    %vm6419 = vcmp.eq.f32.partialorder %v6418, 8.507059e+37
    %v6420 = vand.u32 %v6408, 2147483648
    %v6421 = vor.u32 1.1754944e-38, %v6420
    %v6422 = vsel %vm6419, %v6421, %v6417
    %v6423 = vmul.f32 1.0, %v6422
    %v6424 = vtanh.pop %v6404
    %v6425 = vmul.f32 %v6423, %v6372
    %6427 = vrot.lane.b32.xlu0 %v6424, 96
    %v6428 = vpop.permute.xlu0 %6427
    %v6430 = vmul.f32 %v6423, %v6428
    %6432 = vrot.lane.b32.xlu0 %v6430, 16
    %v6433 = vpop.permute.xlu0 %6432
    %v6435 = vadd.f32 %v6425, %v6433
    %v6436 = vtanh.pop %v6435
    %6438 = vrot.lane.b32.xlu0 %v6436, 32
    %v6439 = vpop.permute.xlu0 %6438
    %v6441 = vmul.f32 %v6423, %v6439
    %6443 = vrot.lane.b32.xlu0 %v6441, 80
    %v6444 = vpop.permute.xlu0 %6443
    %v6445 = vsel %vm132, %v6444, 0
    %6447 = vmatpush.msra.mxu0 0.0
    %6448 = vmatpush.msra.mxu0 0.0
    %6449 = vmatpush.msra.mxu0 0.0
    %6450 = vmatpush.msra.mxu0 0.0
    %6451 = vmatpush.msra.mxu0 0.0
    %6452 = vmatpush.msra.mxu0 0.0
    %6453 = vmatpush.msra.mxu0 0.0
    %6454 = vmatpush.msra.mxu0 0.0
    %6455 = vmatpush.msra.mxu0 0.0
    %6456 = vmatpush.msra.mxu0 0.0
    %6457 = vmatpush.msra.mxu0 0.0
    %6458 = vmatpush.msra.mxu0 0.0
    %6459 = vmatpush.msra.mxu0 0.0
    %6460 = vmatpush.msra.mxu0 0.0
    %6461 = vmatpush.msra.mxu0 %v6024
    %6462 = vmatpush.msra.mxu0 %v6023
    %6463 = vmatmul.f32.gmra.mxu0 %v6445
    %v6464 = vpop.f32.mrf.mxu0
    %v6465 = vadd.f32 0.0, %v6464
    %6466 = vdwg.mxu0
    %v6467 = vadd.f32 %v6128, %v6465
    %v6468 = vxor.u32 %v6467, 2147483648
    %v6469 = vmul.f32 %v6468, 1.442695
    %v6470 = vpow.pop %v6469
    %v6471 = vadd.f32 %v6470, 1.0
    %v6472 = vrcp.pop %v6471
    %v6473 = vmul.f32 %v6471, %v6472
    %v6474 = vsub.f32 1.0, %v6473
    %v6475 = vmul.f32 %v6472, %v6474
    %v6476 = vadd.f32 %v6472, %v6475
    %vm6477 = vweird.f32 %v6471
    %vm6478 = vweird.f32 %v6472
    %vm6479 = vmor %vm6477, %vm6478
    %v6480 = vsel %vm6479, %v6472, %v6476
    %v6481 = vand.u32 2147483647, %v6471
    %vm6482 = vcmp.eq.f32.partialorder %v6481, 8.507059e+37
    %v6483 = vand.u32 %v6471, 2147483648
    %v6484 = vor.u32 1.1754944e-38, %v6483
    %v6485 = vsel %vm6482, %v6484, %v6480
    %v6486 = vmul.f32 1.0, %v6485
    %v6487 = vtanh.pop %v6467
    %v6488 = vmul.f32 %v6486, %v6435
    %6490 = vrot.lane.b32.xlu0 %v6487, 96
    %v6491 = vpop.permute.xlu0 %6490
    %v6493 = vmul.f32 %v6486, %v6491
    %6495 = vrot.lane.b32.xlu0 %v6493, 16
    %v6496 = vpop.permute.xlu0 %6495
    %v6498 = vadd.f32 %v6488, %v6496
    %v6499 = vtanh.pop %v6498
    %6501 = vrot.lane.b32.xlu0 %v6499, 32
    %v6502 = vpop.permute.xlu0 %6501
    %v6504 = vmul.f32 %v6486, %v6502
    %6506 = vrot.lane.b32.xlu0 %v6504, 80
    %v6507 = vpop.permute.xlu0 %6506
    %v6508 = vsel %vm132, %v6507, 0
    %6510 = vmatpush.msra.mxu0 0.0
    %6511 = vmatpush.msra.mxu0 0.0
    %6512 = vmatpush.msra.mxu0 0.0
    %6513 = vmatpush.msra.mxu0 0.0
    %6514 = vmatpush.msra.mxu0 0.0
    %6515 = vmatpush.msra.mxu0 0.0
    %6516 = vmatpush.msra.mxu0 0.0
    %6517 = vmatpush.msra.mxu0 0.0
    %6518 = vmatpush.msra.mxu0 0.0
    %6519 = vmatpush.msra.mxu0 0.0
    %6520 = vmatpush.msra.mxu0 0.0
    %6521 = vmatpush.msra.mxu0 0.0
    %6522 = vmatpush.msra.mxu0 0.0
    %6523 = vmatpush.msra.mxu0 0.0
    %6524 = vmatpush.msra.mxu0 %v6024
    %6525 = vmatpush.msra.mxu0 %v6023
    %6526 = vmatmul.f32.gmra.mxu0 %v6508
    %v6527 = vpop.f32.mrf.mxu0
    %v6528 = vadd.f32 0.0, %v6527
    %6529 = vdwg.mxu0
    %v6530 = vadd.f32 %v6148, %v6528
    %v6531 = vxor.u32 %v6530, 2147483648
    %v6532 = vmul.f32 %v6531, 1.442695
    %v6533 = vpow.pop %v6532
    %v6534 = vadd.f32 %v6533, 1.0
    %v6535 = vrcp.pop %v6534
    %v6536 = vmul.f32 %v6534, %v6535
    %v6537 = vsub.f32 1.0, %v6536
    %v6538 = vmul.f32 %v6535, %v6537
    %v6539 = vadd.f32 %v6535, %v6538
    %vm6540 = vweird.f32 %v6534
    %vm6541 = vweird.f32 %v6535
    %vm6542 = vmor %vm6540, %vm6541
    %v6543 = vsel %vm6542, %v6535, %v6539
    %v6544 = vand.u32 2147483647, %v6534
    %vm6545 = vcmp.eq.f32.partialorder %v6544, 8.507059e+37
    %v6546 = vand.u32 %v6534, 2147483648
    %v6547 = vor.u32 1.1754944e-38, %v6546
    %v6548 = vsel %vm6545, %v6547, %v6543
    %v6549 = vmul.f32 1.0, %v6548
    %v6550 = vtanh.pop %v6530
    %v6551 = vmul.f32 %v6549, %v6498
    %6553 = vrot.lane.b32.xlu0 %v6550, 96
    %v6554 = vpop.permute.xlu0 %6553
    %v6556 = vmul.f32 %v6549, %v6554
    %6558 = vrot.lane.b32.xlu0 %v6556, 16
    %v6559 = vpop.permute.xlu0 %6558
    %v6561 = vadd.f32 %v6551, %v6559
    %v6562 = vtanh.pop %v6561
    %6564 = vrot.lane.b32.xlu0 %v6562, 32
    %v6565 = vpop.permute.xlu0 %6564
    %v6567 = vmul.f32 %v6549, %v6565
    %6569 = vrot.lane.b32.xlu0 %v6567, 80
    %v6570 = vpop.permute.xlu0 %6569
    %v6571 = vsel %vm132, %v6570, 0
    %6573 = vmatpush.msra.mxu0 0.0
    %6574 = vmatpush.msra.mxu0 0.0
    %6575 = vmatpush.msra.mxu0 0.0
    %6576 = vmatpush.msra.mxu0 0.0
    %6577 = vmatpush.msra.mxu0 0.0
    %6578 = vmatpush.msra.mxu0 0.0
    %6579 = vmatpush.msra.mxu0 0.0
    %6580 = vmatpush.msra.mxu0 0.0
    %6581 = vmatpush.msra.mxu0 0.0
    %6582 = vmatpush.msra.mxu0 0.0
    %6583 = vmatpush.msra.mxu0 0.0
    %6584 = vmatpush.msra.mxu0 0.0
    %6585 = vmatpush.msra.mxu0 0.0
    %6586 = vmatpush.msra.mxu0 0.0
    %6587 = vmatpush.msra.mxu0 %v6024
    %6588 = vmatpush.msra.mxu0 %v6023
    %6589 = vmatmul.f32.gmra.mxu0 %v6571
    %v6590 = vpop.f32.mrf.mxu0
    %v6591 = vadd.f32 0.0, %v6590
    %6592 = vdwg.mxu0
    %v6593 = vadd.f32 %v6168, %v6591
    %v6594 = vxor.u32 %v6593, 2147483648
    %v6595 = vmul.f32 %v6594, 1.442695
    %v6596 = vpow.pop %v6595
    %v6597 = vadd.f32 %v6596, 1.0
    %v6598 = vrcp.pop %v6597
    %v6599 = vmul.f32 %v6597, %v6598
    %v6600 = vsub.f32 1.0, %v6599
    %v6601 = vmul.f32 %v6598, %v6600
    %v6602 = vadd.f32 %v6598, %v6601
    %vm6603 = vweird.f32 %v6597
    %vm6604 = vweird.f32 %v6598
    %vm6605 = vmor %vm6603, %vm6604
    %v6606 = vsel %vm6605, %v6598, %v6602
    %v6607 = vand.u32 2147483647, %v6597
    %vm6608 = vcmp.eq.f32.partialorder %v6607, 8.507059e+37
    %v6609 = vand.u32 %v6597, 2147483648
    %v6610 = vor.u32 1.1754944e-38, %v6609
    %v6611 = vsel %vm6608, %v6610, %v6606
    %v6612 = vmul.f32 1.0, %v6611
    %v6613 = vtanh.pop %v6593
    %v6614 = vmul.f32 %v6612, %v6561
    %6616 = vrot.lane.b32.xlu0 %v6613, 96
    %v6617 = vpop.permute.xlu0 %6616
    %v6619 = vmul.f32 %v6612, %v6617
    %6621 = vrot.lane.b32.xlu0 %v6619, 16
    %v6622 = vpop.permute.xlu0 %6621
    %v6624 = vadd.f32 %v6614, %v6622
    %v6625 = vtanh.pop %v6624
    %6627 = vrot.lane.b32.xlu0 %v6625, 32
    %v6628 = vpop.permute.xlu0 %6627
    %v6630 = vmul.f32 %v6612, %v6628
    %6632 = vrot.lane.b32.xlu0 %v6630, 80
    %v6633 = vpop.permute.xlu0 %6632
    %v6634 = vsel %vm132, %v6633, 0
    %6636 = vmatpush.msra.mxu0 0.0
    %6637 = vmatpush.msra.mxu0 0.0
    %6638 = vmatpush.msra.mxu0 0.0
    %6639 = vmatpush.msra.mxu0 0.0
    %6640 = vmatpush.msra.mxu0 0.0
    %6641 = vmatpush.msra.mxu0 0.0
    %6642 = vmatpush.msra.mxu0 0.0
    %6643 = vmatpush.msra.mxu0 0.0
    %6644 = vmatpush.msra.mxu0 0.0
    %6645 = vmatpush.msra.mxu0 0.0
    %6646 = vmatpush.msra.mxu0 0.0
    %6647 = vmatpush.msra.mxu0 0.0
    %6648 = vmatpush.msra.mxu0 0.0
    %6649 = vmatpush.msra.mxu0 0.0
    %6650 = vmatpush.msra.mxu0 %v6024
    %6651 = vmatpush.msra.mxu0 %v6023
    %6652 = vmatmul.f32.gmra.mxu0 %v6634
    %v6653 = vpop.f32.mrf.mxu0
    %v6654 = vadd.f32 0.0, %v6653
    %6655 = vdwg.mxu0
    %v6656 = vadd.f32 %v6193, %v6654
    %v6657 = vxor.u32 %v6656, 2147483648
    %v6658 = vmul.f32 %v6657, 1.442695
    %v6659 = vpow.pop %v6658
    %v6660 = vadd.f32 %v6659, 1.0
    %v6661 = vrcp.pop %v6660
    %v6662 = vmul.f32 %v6660, %v6661
    %v6663 = vsub.f32 1.0, %v6662
    %v6664 = vmul.f32 %v6661, %v6663
    %v6665 = vadd.f32 %v6661, %v6664
    %vm6666 = vweird.f32 %v6660
    %vm6667 = vweird.f32 %v6661
    %vm6668 = vmor %vm6666, %vm6667
    %v6669 = vsel %vm6668, %v6661, %v6665
    %v6670 = vand.u32 2147483647, %v6660
    %vm6671 = vcmp.eq.f32.partialorder %v6670, 8.507059e+37
    %v6672 = vand.u32 %v6660, 2147483648
    %v6673 = vor.u32 1.1754944e-38, %v6672
    %v6674 = vsel %vm6671, %v6673, %v6669
    %v6675 = vmul.f32 1.0, %v6674
    %v6676 = vtanh.pop %v6656
    %v6677 = vmul.f32 %v6675, %v6624
    %6679 = vrot.lane.b32.xlu0 %v6676, 96
    %v6680 = vpop.permute.xlu0 %6679
    %v6682 = vmul.f32 %v6675, %v6680
    %6684 = vrot.lane.b32.xlu0 %v6682, 16
    %v6685 = vpop.permute.xlu0 %6684
    %v6687 = vadd.f32 %v6677, %v6685
    %v6688 = vtanh.pop %v6687
    %6690 = vrot.lane.b32.xlu0 %v6688, 32
    %v6691 = vpop.permute.xlu0 %6690
    %v6693 = vmul.f32 %v6675, %v6691
    %v6694 = vrot.slane %v116, 7
    %v6695 = vrot.slane %v117, 6
    %v6696 = vsel %vm550, %v6695, %v6694
    %v6697 = vrot.slane %v118, 5
    %v6698 = vsel %vm553, %v6697, %v6696
    %v6699 = vrot.slane %v119, 4
    %v6700 = vsel %vm556, %v6699, %v6698
    %v6701 = vrot.slane %v120, 3
    %v6702 = vsel %vm559, %v6701, %v6700
    %v6703 = vrot.slane %v121, 2
    %v6704 = vsel %vm562, %v6703, %v6702
    %v6705 = vrot.slane %v122, 1
    %v6706 = vsel %vm565, %v6705, %v6704
    %v6707 = vsel %vm568, %v123, %v6706
    %6708 = vrot.lane.b32.xlu0 %v6707, 48
    %v6709 = vpop.permute.xlu0 %6708
    %v6711 = vadd.f32 %v6693, %v6709
    %v6712 = vld [vmem:[%s7] sm:$0xff]
    %v6713 = vld [vmem:[%s7 + $0x8] sm:$0xff]
    %v6714 = vld [vmem:[%s8] sm:$0x1]
    %v6716 = vperm.slane %v6714, 0
    %6719 = vrot.lane.b32.xlu0 %v6711, 80
    %v6720 = vpop.permute.xlu0 %6719
    %v6721 = vsel %vm132, %v6720, 0
    %6723 = vmatpush.msra.mxu0 0.0
    %6724 = vmatpush.msra.mxu0 0.0
    %6725 = vmatpush.msra.mxu0 0.0
    %6726 = vmatpush.msra.mxu0 0.0
    %6727 = vmatpush.msra.mxu0 0.0
    %6728 = vmatpush.msra.mxu0 0.0
    %6729 = vmatpush.msra.mxu0 0.0
    %6730 = vmatpush.msra.mxu0 0.0
    %6731 = vmatpush.msra.mxu0 0.0
    %6732 = vmatpush.msra.mxu0 0.0
    %6733 = vmatpush.msra.mxu0 0.0
    %6734 = vmatpush.msra.mxu0 0.0
    %6735 = vmatpush.msra.mxu0 0.0
    %6736 = vmatpush.msra.mxu0 0.0
    %6737 = vmatpush.msra.mxu0 %v6713
    %6738 = vmatpush.msra.mxu0 %v6712
    %6739 = vmatmul.f32.gmra.mxu0 %v6721
    %v6740 = vpop.f32.mrf.mxu0
    %v6741 = vadd.f32 %v6716, %v6740
    %6742 = vdwg.mxu0
    %v6743 = vxor.u32 %v6741, 2147483648
    %v6744 = vmul.f32 %v6743, 1.442695
    %v6745 = vpow.pop %v6744
    %v6746 = vadd.f32 %v6745, 1.0
    %v6747 = vrcp.pop %v6746
    %v6748 = vmul.f32 %v6746, %v6747
    %v6749 = vsub.f32 1.0, %v6748
    %v6750 = vmul.f32 %v6747, %v6749
    %v6751 = vadd.f32 %v6747, %v6750
    %vm6752 = vweird.f32 %v6746
    %vm6753 = vweird.f32 %v6747
    %vm6754 = vmor %vm6752, %vm6753
    %v6755 = vsel %vm6754, %v6747, %v6751
    %v6756 = vand.u32 2147483647, %v6746
    %vm6757 = vcmp.eq.f32.partialorder %v6756, 8.507059e+37
    %v6758 = vand.u32 %v6746, 2147483648
    %v6759 = vor.u32 1.1754944e-38, %v6758
    %v6760 = vsel %vm6757, %v6759, %v6755
    %v6761 = vmul.f32 1.0, %v6760
    %v6762 = vmul.f32 %v6741, %v6761
    %v6763 = vld [vmem:[%s9] sm:$0xff]
    %v6764 = vld [vmem:[%s10] sm:$0x1]
    %v6766 = vperm.slane %v6764, 0
    %vm6768 = vcmask 64512
    %v6770 = vsel %vm6768, %v6762, 0
    %6772 = vmatpush.msra.mxu0 0.0
    %6773 = vmatpush.msra.mxu0 0.0
    %6774 = vmatpush.msra.mxu0 0.0
    %6775 = vmatpush.msra.mxu0 0.0
    %6776 = vmatpush.msra.mxu0 0.0
    %6777 = vmatpush.msra.mxu0 0.0
    %6778 = vmatpush.msra.mxu0 0.0
    %6779 = vmatpush.msra.mxu0 0.0
    %6780 = vmatpush.msra.mxu0 0.0
    %6781 = vmatpush.msra.mxu0 0.0
    %6782 = vmatpush.msra.mxu0 0.0
    %6783 = vmatpush.msra.mxu0 0.0
    %6784 = vmatpush.msra.mxu0 0.0
    %6785 = vmatpush.msra.mxu0 0.0
    %6786 = vmatpush.msra.mxu0 0.0
    %6787 = vmatpush.msra.mxu0 %v6763
    %6788 = vmatmul.f32.gmra.mxu0 %v6770
    %v6789 = vpop.f32.mrf.mxu0
    %v6790 = vadd.f32 %v6766, %v6789
    %6791 = vdwg.mxu0
    %vm6792 = vcmask 15360
    %6793 = vst.msk [vmem:[%s11] sm:$0xff] %vm6792, %v6790
    // Predicated region
    $region66: #{forecast_pnn_forward.1} parent=1 // pred_check
      _
    $region67: #{forecast_pnn_forward.1} parent=1 // pred_check_branch
      %6795 = sbr.rel (0) target = $region69
    $region68: #{forecast_pnn_forward.1} parent=1 // pred_region
      _
    $region69: #{forecast_pnn_forward.1} parent=1 // pred_fallthru
      _
    // Predicated region
    $region70: #{forecast_pnn_forward.1} parent=1 // pred_check
      _
    $region71: #{forecast_pnn_forward.1} parent=1 // pred_check_branch
      %6797 = sbr.rel (0) target = $region73
    $region72: #{forecast_pnn_forward.1} parent=1 // pred_region
      _
    $region73: #{forecast_pnn_forward.1} parent=1 // pred_fallthru
      _
    %6798 = vsyncpa [#allocation3], 1
    %6799 = vsyncpa [#allocation5], 1
    %6800 = vsyncpa [#allocation8], 1

</llo_original>
